<compile_context>
chip_gen: v7x
topology: tpu7x:2x2x1
jax: 0.10.0
libtpu: 0.0.40
codegen_flags: <defaults>
</compile_context>

<pallas_src>
import functools

import jax
import jax.numpy as jnp
from jax.experimental import pallas as pl
from jax.experimental.pallas import tpu as pltpu

# ---------------- model hyper-parameters (small, deterministic) ----------------
NODE_DIM = 6
EDGE_DIM = 4
LATENT = 32
N_LAYER = 2

# batched-graph sizes (disjoint union of N_GRAPHS equal-size graphs)
N_GRAPHS = 8
N_PER_GRAPH = 16
E_PER_GRAPH = 48
N_NODES = N_GRAPHS * N_PER_GRAPH      # 128  -> lane/sublane-dense node activations
N_EDGES = N_GRAPHS * E_PER_GRAPH      # 384

# ---------------- packed-parameter layout (static offsets, 128 lanes) ----------
D = LATENT
W_LANES = 4 * D                       # 128 lanes: four [D, D] slots per row block
_SLOT_NAMES = (["wne", "wee", "wp1", "wp2t"]
               + [f"{nm}_{l}" for l in range(N_LAYER)
                  for nm in ("we_s", "we_d", "we_e", "wn_h", "wn_a")])
_SLOT = {nm: (D * (i // 4), D * (i % 4)) for i, nm in enumerate(_SLOT_NAMES)}
W_ROWS = D * ((len(_SLOT_NAMES) + 3) // 4)        # 128 rows for N_LAYER=2

B_NE, B_EE = 0, 1                     # bias rows in b_pack [B_ROWS, D]
B_P1 = 2 + 2 * N_LAYER                # 6
B_P2 = B_P1 + 1                       # 7
B_ROWS = B_P2 + 1                     # 8


def _relu(x):
    return jnp.maximum(x, 0.0)


# --------------------------------- Pallas kernel --------------------------------
def agent_kernel(nf_ref, ef_ref, eidx_ref, dstr_ref, w_ref, b_ref, out_ref):
    dot = functools.partial(jnp.dot, preferred_element_type=jnp.float32)
    nt = nf_ref.shape[0]                                                 # total nodes
    et = ef_ref.shape[0]                                                 # total edges

    def wmat(name, rows=D, cols=D):
        r, c = _SLOT[name]                                               # static slice
        return w_ref[r:r + rows, c:c + cols]

    bias = b_ref[...]                                                    # [B_ROWS, D]

    # ---- one-hot gather / scatter matrices built on the VPU (compares only) ----
    # Edge indices are already offset per graph on the host, so these matrices are
    # block-diagonal over the batched (disjoint-union) graph. Out-of-range indices
    # would silently drop contributions; host keeps them in [0, nt).
    idx = eidx_ref[...]                                                  # [E, 2] int32
    lane_nodes = jax.lax.broadcasted_iota(jnp.int32, (et, nt), 1)
    src_oh = (idx[:, 0:1] == lane_nodes).astype(jnp.float32)             # [E, N]
    dst_oh = (idx[:, 1:2] == lane_nodes).astype(jnp.float32)             # [E, N]
    sub_nodes = jax.lax.broadcasted_iota(jnp.int32, (nt, et), 0)
    dstT_oh = (dstr_ref[...] == sub_nodes).astype(jnp.float32)           # [N, E]

    # ---- encoders ----
    h = _relu(dot(nf_ref[...], wmat("wne", rows=NODE_DIM))
              + bias[B_NE:B_NE + 1, :])                                  # [N, D]
    e = _relu(dot(ef_ref[...], wmat("wee", rows=EDGE_DIM))
              + bias[B_EE:B_EE + 1, :])                                  # [E, D]

    # ---- N_LAYER rounds of message passing (static Python loop -> unrolled) ----
    for l in range(N_LAYER):
        # edge update: project once at M=N, gather per endpoint, sum on the MXU/VPU
        hs = dot(h, wmat(f"we_s_{l}"))                                   # [N, D]
        hd = dot(h, wmat(f"we_d_{l}"))                                   # [N, D]
        e = _relu(dot(src_oh, hs) + dot(dst_oh, hd)
                  + dot(e, wmat(f"we_e_{l}"))
                  + bias[2 + 2 * l:3 + 2 * l, :])                        # [E, D]

        # scatter-add onto destination nodes, then node update (no concat)
        agg = dot(dstT_oh, e)                                            # [N, D]
        h = _relu(dot(h, wmat(f"wn_h_{l}")) + dot(agg, wmat(f"wn_a_{l}"))
                  + bias[3 + 2 * l:4 + 2 * l, :])                        # [N, D]

    # ---- policy MLP + Sigmoid, emitted as a lane-dense [1, N] row ----
    hid = _relu(dot(h, wmat("wp1")) + bias[B_P1:B_P1 + 1, :])            # [N, D]
    wp2t = wmat("wp2t", rows=1)                                          # [1, D]
    logits = jax.lax.dot_general(                                        # [1, N] = wp2t @ hid^T
        wp2t, hid, (((1,), (1,)), ((), ())),
        preferred_element_type=jnp.float32)
    out_ref[...] = jax.nn.sigmoid(logits + bias[B_P2:B_P2 + 1, 0:1])


# --------------------------------- host wrapper ----------------------------------
@jax.jit
def independent_bc_agent_forward(node_feat, edge_feat, edge_src, edge_dst,
                                 w_pack, b_pack):
    n = node_feat.shape[0]
    e = edge_feat.shape[0]

    # tiny int32 index operands; one-hots are built inside the kernel
    eidx = jnp.stack([edge_src, edge_dst], axis=1).astype(jnp.int32)     # [E, 2]
    dst_row = edge_dst.astype(jnp.int32).reshape(1, e)                   # [1, E]

    vmem = pl.BlockSpec(memory_space=pltpu.MemorySpace.VMEM)
    probs_row = pl.pallas_call(
        agent_kernel,
        out_shape=jax.ShapeDtypeStruct((1, n), jnp.float32),             # lane-dense
        in_specs=[vmem] * 6,
        out_specs=vmem,
    )(node_feat, edge_feat, eidx, dst_row, w_pack, b_pack)
    return probs_row.reshape(n, 1)                                       # per-node [N, 1]


def get_batch_probs(probs):
    # Equal-size graphs only: [N_GRAPHS, N_PER_GRAPH].
    # TODO(synk): variable-size DGL batched graphs (batch_num_nodes + pad_sequence)
    # and get_batch_probs_penalty have no clean single-kernel Pallas equivalent.
    return probs.reshape(N_GRAPHS, N_PER_GRAPH)


# --------------------------- parameter packing (host, once) ----------------------
def pack_params(p):
    def put(buf, name, mat):
        r, c = _SLOT[name]
        return buf.at[r:r + mat.shape[0], c:c + mat.shape[1]].set(mat)

    w = jnp.zeros((W_ROWS, W_LANES), jnp.float32)
    w = put(w, "wne", p["wne"])
    w = put(w, "wee", p["wee"])
    w = put(w, "wp1", p["wp1"])
    w = put(w, "wp2t", p["wp2"].T)                                       # [1, D]
    for l in range(N_LAYER):
        w = put(w, f"we_s_{l}", p["we_s"][l])
        w = put(w, f"we_d_{l}", p["we_d"][l])
        w = put(w, f"we_e_{l}", p["we_e"][l])
        w = put(w, f"wn_h_{l}", p["wn_h"][l])
        w = put(w, f"wn_a_{l}", p["wn_a"][l])

    b = jnp.zeros((B_ROWS, D), jnp.float32)
    b = b.at[B_NE:B_NE + 1, :].set(p["bne"])
    b = b.at[B_EE:B_EE + 1, :].set(p["bee"])
    for l in range(N_LAYER):
        b = b.at[2 + 2 * l:3 + 2 * l, :].set(p["be"][l])
        b = b.at[3 + 2 * l:4 + 2 * l, :].set(p["bn"][l])
    b = b.at[B_P1:B_P1 + 1, :].set(p["bp1"])
    b = b.at[B_P2:B_P2 + 1, 0:1].set(p["bp2"])
    return w, b


# --------------------------- deterministic parameter init ------------------------
def init_params(key):
    ks = jax.random.split(key, 16)

    def w(k, shape, scale=0.2):
        return (scale * jax.random.normal(k, shape)).astype(jnp.float32)

    return {
        "wne": w(ks[0], (NODE_DIM, D)),
        "bne": jnp.zeros((1, D), jnp.float32),
        "wee": w(ks[1], (EDGE_DIM, D)),
        "bee": jnp.zeros((1, D), jnp.float32),
        "we_s": w(ks[2], (N_LAYER, D, D)),
        "we_d": w(ks[3], (N_LAYER, D, D)),
        "we_e": w(ks[4], (N_LAYER, D, D)),
        "be": jnp.zeros((N_LAYER, 1, D), jnp.float32),
        "wn_h": w(ks[5], (N_LAYER, D, D)),
        "wn_a": w(ks[6], (N_LAYER, D, D)),
        "bn": jnp.zeros((N_LAYER, 1, D), jnp.float32),
        "wp1": w(ks[7], (D, D)),
        "bp1": jnp.zeros((1, D), jnp.float32),
        "wp2": w(ks[8], (D, 1)),
        "bp2": jnp.zeros((1, 1), jnp.float32),
    }


# ------------------------------- pure-JAX reference -------------------------------
def reference_forward(node_feat, edge_feat, edge_src, edge_dst, p):
    n = node_feat.shape[0]
    src_oh = jax.nn.one_hot(edge_src, n, dtype=jnp.float32)
    dst_oh = jax.nn.one_hot(edge_dst, n, dtype=jnp.float32)
    h = _relu(node_feat @ p["wne"] + p["bne"])
    e = _relu(edge_feat @ p["wee"] + p["bee"])
    for l in range(N_LAYER):
        h_src, h_dst = src_oh @ h, dst_oh @ h
        e = _relu(h_src @ p["we_s"][l] + h_dst @ p["we_d"][l]
                  + e @ p["we_e"][l] + p["be"][l])
        agg = dst_oh.T @ e
        h = _relu(h @ p["wn_h"][l] + agg @ p["wn_a"][l] + p["bn"][l])
    hid = _relu(h @ p["wp1"] + p["bp1"])
    return jax.nn.sigmoid(hid @ p["wp2"] + p["bp2"])


if __name__ == "__main__":
    key = jax.random.PRNGKey(0)
    k_nf, k_ef, k_src, k_dst, k_par = jax.random.split(key, 5)

    # batch of N_GRAPHS equal-size graphs stacked as one disjoint-union graph
    node_feat = jax.random.normal(k_nf, (N_NODES, NODE_DIM), dtype=jnp.float32)
    edge_feat = jax.random.normal(k_ef, (N_EDGES, EDGE_DIM), dtype=jnp.float32)
    src_local = jax.random.randint(k_src, (N_GRAPHS, E_PER_GRAPH), 0, N_PER_GRAPH)
    dst_local = jax.random.randint(k_dst, (N_GRAPHS, E_PER_GRAPH), 0, N_PER_GRAPH)
    graph_off = (jnp.arange(N_GRAPHS, dtype=jnp.int32) * N_PER_GRAPH)[:, None]
    edge_src = (src_local + graph_off).reshape(-1)                       # global node ids
    edge_dst = (dst_local + graph_off).reshape(-1)

    params = init_params(k_par)
    w_pack, b_pack = pack_params(params)

    probs = independent_bc_agent_forward(node_feat, edge_feat, edge_src, edge_dst,
                                         w_pack, b_pack)
    probs = jax.block_until_ready(probs)

    ref = reference_forward(node_feat, edge_feat, edge_src, edge_dst, params)
    assert probs.shape == (N_NODES, 1)
    assert bool(jnp.all((probs >= 0.0) & (probs <= 1.0)))
    assert bool(jnp.allclose(probs, ref, atol=1e-5, rtol=1e-5))
    assert get_batch_probs(probs).shape == (N_GRAPHS, N_PER_GRAPH)

    print("KERNEL_OK")
</pallas_src>

<mosaic_0001>
module attributes {stable_mosaic.version = 11 : i64} {
  func.func @agent_kernel(%arg0: memref<128x6xf32, #tpu.memory_space<vmem>>, %arg1: memref<384x4xf32, #tpu.memory_space<vmem>>, %arg2: memref<384x2xi32, #tpu.memory_space<vmem>>, %arg3: memref<1x384xi32, #tpu.memory_space<vmem>>, %arg4: memref<128x128xf32, #tpu.memory_space<vmem>>, %arg5: memref<8x32xf32, #tpu.memory_space<vmem>>, %arg6: memref<1x128xf32, #tpu.memory_space<vmem>>) attributes {dimension_semantics = [], scalar_prefetch = 0 : i64, scratch_operands = 0 : i64, tpu.core_type = #tpu.core_type<tc>} {
    %c0 = arith.constant 0 : index
    %c0_0 = arith.constant 0 : index
    %0 = vector.load %arg5[%c0, %c0_0] : memref<8x32xf32, #tpu.memory_space<vmem>>, vector<8x32xf32>
    %c0_1 = arith.constant 0 : index
    %c0_2 = arith.constant 0 : index
    %1 = vector.load %arg2[%c0_1, %c0_2] : memref<384x2xi32, #tpu.memory_space<vmem>>, vector<384x2xi32>
    %2 = tpu.iota {dimensions = array<i32: 1>} : vector<384x128xi32>
    %3 = vector.extract_strided_slice %1 {offsets = [0, 0], sizes = [384, 1], strides = [1, 1]} : vector<384x2xi32> to vector<384x1xi32>
    %4 = vector.broadcast %3 : vector<384x1xi32> to vector<384x128xi32>
    %5 = arith.cmpi eq, %4, %2 : vector<384x128xi32>
    %6 = arith.extui %5 : vector<384x128xi1> to vector<384x128xi32>
    %7 = arith.sitofp %6 : vector<384x128xi32> to vector<384x128xf32>
    %8 = vector.extract_strided_slice %1 {offsets = [0, 1], sizes = [384, 1], strides = [1, 1]} : vector<384x2xi32> to vector<384x1xi32>
    %9 = vector.broadcast %8 : vector<384x1xi32> to vector<384x128xi32>
    %10 = arith.cmpi eq, %9, %2 : vector<384x128xi32>
    %11 = arith.extui %10 : vector<384x128xi1> to vector<384x128xi32>
    %12 = arith.sitofp %11 : vector<384x128xi32> to vector<384x128xf32>
    %13 = tpu.iota {dimensions = array<i32: 0>} : vector<128x384xi32>
    %c0_3 = arith.constant 0 : index
    %c0_4 = arith.constant 0 : index
    %14 = vector.load %arg3[%c0_3, %c0_4] : memref<1x384xi32, #tpu.memory_space<vmem>>, vector<1x384xi32>
    %15 = vector.broadcast %14 : vector<1x384xi32> to vector<128x384xi32>
    %16 = arith.cmpi eq, %15, %13 : vector<128x384xi32>
    %17 = arith.extui %16 : vector<128x384xi1> to vector<128x384xi32>
    %18 = arith.sitofp %17 : vector<128x384xi32> to vector<128x384xf32>
    %c0_5 = arith.constant 0 : index
    %c0_6 = arith.constant 0 : index
    %19 = vector.load %arg0[%c0_5, %c0_6] : memref<128x6xf32, #tpu.memory_space<vmem>>, vector<128x6xf32>
    %c0_7 = arith.constant 0 : index
    %c0_8 = arith.constant 0 : index
    %20 = vector.load %arg4[%c0_7, %c0_8] : memref<128x128xf32, #tpu.memory_space<vmem>>, vector<6x32xf32>
    %cst = arith.constant dense<0.000000e+00> : vector<128x32xf32>
    %21 = tpu.matmul %19, %20, %cst {dimension_numbers = #tpu.dot_dimension_numbers<[1], [0], [0], [1], [0, 0, 1, 1], [], []>} : vector<128x6xf32>, vector<6x32xf32>, vector<128x32xf32> -> vector<128x32xf32>
    %22 = vector.extract_strided_slice %0 {offsets = [0, 0], sizes = [1, 32], strides = [1, 1]} : vector<8x32xf32> to vector<1x32xf32>
    %23 = vector.broadcast %22 : vector<1x32xf32> to vector<128x32xf32>
    %24 = arith.addf %21, %23 : vector<128x32xf32>
    %cst_9 = arith.constant 0.000000e+00 : f32
    %25 = vector.broadcast %cst_9 : f32 to vector<128x32xf32>
    %26 = arith.maximumf %24, %25 : vector<128x32xf32>
    %c0_10 = arith.constant 0 : index
    %c0_11 = arith.constant 0 : index
    %27 = vector.load %arg1[%c0_10, %c0_11] : memref<384x4xf32, #tpu.memory_space<vmem>>, vector<384x4xf32>
    %c0_12 = arith.constant 0 : index
    %c32 = arith.constant 32 : index
    %28 = vector.load %arg4[%c0_12, %c32] : memref<128x128xf32, #tpu.memory_space<vmem>>, vector<4x32xf32>
    %cst_13 = arith.constant dense<0.000000e+00> : vector<384x32xf32>
    %29 = tpu.matmul %27, %28, %cst_13 {dimension_numbers = #tpu.dot_dimension_numbers<[1], [0], [0], [1], [0, 0, 1, 1], [], []>} : vector<384x4xf32>, vector<4x32xf32>, vector<384x32xf32> -> vector<384x32xf32>
    %30 = vector.extract_strided_slice %0 {offsets = [1, 0], sizes = [1, 32], strides = [1, 1]} : vector<8x32xf32> to vector<1x32xf32>
    %31 = vector.broadcast %30 : vector<1x32xf32> to vector<384x32xf32>
    %32 = arith.addf %29, %31 : vector<384x32xf32>
    %cst_14 = arith.constant 0.000000e+00 : f32
    %33 = vector.broadcast %cst_14 : f32 to vector<384x32xf32>
    %34 = arith.maximumf %32, %33 : vector<384x32xf32>
    %c32_15 = arith.constant 32 : index
    %c0_16 = arith.constant 0 : index
    %35 = vector.load %arg4[%c32_15, %c0_16] : memref<128x128xf32, #tpu.memory_space<vmem>>, vector<32x32xf32>
    %cst_17 = arith.constant dense<0.000000e+00> : vector<128x32xf32>
    %36 = tpu.matmul %26, %35, %cst_17 {dimension_numbers = #tpu.dot_dimension_numbers<[1], [0], [0], [1], [0, 0, 1, 1], [], []>} : vector<128x32xf32>, vector<32x32xf32>, vector<128x32xf32> -> vector<128x32xf32>
    %c32_18 = arith.constant 32 : index
    %c32_19 = arith.constant 32 : index
    %37 = vector.load %arg4[%c32_18, %c32_19] : memref<128x128xf32, #tpu.memory_space<vmem>>, vector<32x32xf32>
    %cst_20 = arith.constant dense<0.000000e+00> : vector<128x32xf32>
    %38 = tpu.matmul %26, %37, %cst_20 {dimension_numbers = #tpu.dot_dimension_numbers<[1], [0], [0], [1], [0, 0, 1, 1], [], []>} : vector<128x32xf32>, vector<32x32xf32>, vector<128x32xf32> -> vector<128x32xf32>
    %cst_21 = arith.constant dense<0.000000e+00> : vector<384x32xf32>
    %39 = tpu.matmul %7, %36, %cst_21 {dimension_numbers = #tpu.dot_dimension_numbers<[1], [0], [0], [1], [0, 0, 1, 1], [], []>} : vector<384x128xf32>, vector<128x32xf32>, vector<384x32xf32> -> vector<384x32xf32>
    %cst_22 = arith.constant dense<0.000000e+00> : vector<384x32xf32>
    %40 = tpu.matmul %12, %38, %cst_22 {dimension_numbers = #tpu.dot_dimension_numbers<[1], [0], [0], [1], [0, 0, 1, 1], [], []>} : vector<384x128xf32>, vector<128x32xf32>, vector<384x32xf32> -> vector<384x32xf32>
    %41 = arith.addf %39, %40 : vector<384x32xf32>
    %c32_23 = arith.constant 32 : index
    %c64 = arith.constant 64 : index
    %42 = vector.load %arg4[%c32_23, %c64] : memref<128x128xf32, #tpu.memory_space<vmem>>, vector<32x32xf32>
    %cst_24 = arith.constant dense<0.000000e+00> : vector<384x32xf32>
    %43 = tpu.matmul %34, %42, %cst_24 {dimension_numbers = #tpu.dot_dimension_numbers<[1], [0], [0], [1], [0, 0, 1, 1], [], []>} : vector<384x32xf32>, vector<32x32xf32>, vector<384x32xf32> -> vector<384x32xf32>
    %44 = arith.addf %41, %43 : vector<384x32xf32>
    %45 = vector.extract_strided_slice %0 {offsets = [2, 0], sizes = [1, 32], strides = [1, 1]} : vector<8x32xf32> to vector<1x32xf32>
    %46 = vector.broadcast %45 : vector<1x32xf32> to vector<384x32xf32>
    %47 = arith.addf %44, %46 : vector<384x32xf32>
    %cst_25 = arith.constant 0.000000e+00 : f32
    %48 = vector.broadcast %cst_25 : f32 to vector<384x32xf32>
    %49 = arith.maximumf %47, %48 : vector<384x32xf32>
    %cst_26 = arith.constant dense<0.000000e+00> : vector<128x32xf32>
    %50 = tpu.matmul %18, %49, %cst_26 {dimension_numbers = #tpu.dot_dimension_numbers<[1], [0], [0], [1], [0, 0, 1, 1], [], []>} : vector<128x384xf32>, vector<384x32xf32>, vector<128x32xf32> -> vector<128x32xf32>
    %c32_27 = arith.constant 32 : index
    %c96 = arith.constant 96 : index
    %51 = vector.load %arg4[%c32_27, %c96] : memref<128x128xf32, #tpu.memory_space<vmem>>, vector<32x32xf32>
    %cst_28 = arith.constant dense<0.000000e+00> : vector<128x32xf32>
    %52 = tpu.matmul %26, %51, %cst_28 {dimension_numbers = #tpu.dot_dimension_numbers<[1], [0], [0], [1], [0, 0, 1, 1], [], []>} : vector<128x32xf32>, vector<32x32xf32>, vector<128x32xf32> -> vector<128x32xf32>
    %c64_29 = arith.constant 64 : index
    %c0_30 = arith.constant 0 : index
    %53 = vector.load %arg4[%c64_29, %c0_30] : memref<128x128xf32, #tpu.memory_space<vmem>>, vector<32x32xf32>
    %cst_31 = arith.constant dense<0.000000e+00> : vector<128x32xf32>
    %54 = tpu.matmul %50, %53, %cst_31 {dimension_numbers = #tpu.dot_dimension_numbers<[1], [0], [0], [1], [0, 0, 1, 1], [], []>} : vector<128x32xf32>, vector<32x32xf32>, vector<128x32xf32> -> vector<128x32xf32>
    %55 = arith.addf %52, %54 : vector<128x32xf32>
    %56 = vector.extract_strided_slice %0 {offsets = [3, 0], sizes = [1, 32], strides = [1, 1]} : vector<8x32xf32> to vector<1x32xf32>
    %57 = vector.broadcast %56 : vector<1x32xf32> to vector<128x32xf32>
    %58 = arith.addf %55, %57 : vector<128x32xf32>
    %cst_32 = arith.constant 0.000000e+00 : f32
    %59 = vector.broadcast %cst_32 : f32 to vector<128x32xf32>
    %60 = arith.maximumf %58, %59 : vector<128x32xf32>
    %c64_33 = arith.constant 64 : index
    %c32_34 = arith.constant 32 : index
    %61 = vector.load %arg4[%c64_33, %c32_34] : memref<128x128xf32, #tpu.memory_space<vmem>>, vector<32x32xf32>
    %cst_35 = arith.constant dense<0.000000e+00> : vector<128x32xf32>
    %62 = tpu.matmul %60, %61, %cst_35 {dimension_numbers = #tpu.dot_dimension_numbers<[1], [0], [0], [1], [0, 0, 1, 1], [], []>} : vector<128x32xf32>, vector<32x32xf32>, vector<128x32xf32> -> vector<128x32xf32>
    %c64_36 = arith.constant 64 : index
    %c64_37 = arith.constant 64 : index
    %63 = vector.load %arg4[%c64_36, %c64_37] : memref<128x128xf32, #tpu.memory_space<vmem>>, vector<32x32xf32>
    %cst_38 = arith.constant dense<0.000000e+00> : vector<128x32xf32>
    %64 = tpu.matmul %60, %63, %cst_38 {dimension_numbers = #tpu.dot_dimension_numbers<[1], [0], [0], [1], [0, 0, 1, 1], [], []>} : vector<128x32xf32>, vector<32x32xf32>, vector<128x32xf32> -> vector<128x32xf32>
    %cst_39 = arith.constant dense<0.000000e+00> : vector<384x32xf32>
    %65 = tpu.matmul %7, %62, %cst_39 {dimension_numbers = #tpu.dot_dimension_numbers<[1], [0], [0], [1], [0, 0, 1, 1], [], []>} : vector<384x128xf32>, vector<128x32xf32>, vector<384x32xf32> -> vector<384x32xf32>
    %cst_40 = arith.constant dense<0.000000e+00> : vector<384x32xf32>
    %66 = tpu.matmul %12, %64, %cst_40 {dimension_numbers = #tpu.dot_dimension_numbers<[1], [0], [0], [1], [0, 0, 1, 1], [], []>} : vector<384x128xf32>, vector<128x32xf32>, vector<384x32xf32> -> vector<384x32xf32>
    %67 = arith.addf %65, %66 : vector<384x32xf32>
    %c64_41 = arith.constant 64 : index
    %c96_42 = arith.constant 96 : index
    %68 = vector.load %arg4[%c64_41, %c96_42] : memref<128x128xf32, #tpu.memory_space<vmem>>, vector<32x32xf32>
    %cst_43 = arith.constant dense<0.000000e+00> : vector<384x32xf32>
    %69 = tpu.matmul %49, %68, %cst_43 {dimension_numbers = #tpu.dot_dimension_numbers<[1], [0], [0], [1], [0, 0, 1, 1], [], []>} : vector<384x32xf32>, vector<32x32xf32>, vector<384x32xf32> -> vector<384x32xf32>
    %70 = arith.addf %67, %69 : vector<384x32xf32>
    %71 = vector.extract_strided_slice %0 {offsets = [4, 0], sizes = [1, 32], strides = [1, 1]} : vector<8x32xf32> to vector<1x32xf32>
    %72 = vector.broadcast %71 : vector<1x32xf32> to vector<384x32xf32>
    %73 = arith.addf %70, %72 : vector<384x32xf32>
    %cst_44 = arith.constant 0.000000e+00 : f32
    %74 = vector.broadcast %cst_44 : f32 to vector<384x32xf32>
    %75 = arith.maximumf %73, %74 : vector<384x32xf32>
    %cst_45 = arith.constant dense<0.000000e+00> : vector<128x32xf32>
    %76 = tpu.matmul %18, %75, %cst_45 {dimension_numbers = #tpu.dot_dimension_numbers<[1], [0], [0], [1], [0, 0, 1, 1], [], []>} : vector<128x384xf32>, vector<384x32xf32>, vector<128x32xf32> -> vector<128x32xf32>
    %c96_46 = arith.constant 96 : index
    %c0_47 = arith.constant 0 : index
    %77 = vector.load %arg4[%c96_46, %c0_47] : memref<128x128xf32, #tpu.memory_space<vmem>>, vector<32x32xf32>
    %cst_48 = arith.constant dense<0.000000e+00> : vector<128x32xf32>
    %78 = tpu.matmul %60, %77, %cst_48 {dimension_numbers = #tpu.dot_dimension_numbers<[1], [0], [0], [1], [0, 0, 1, 1], [], []>} : vector<128x32xf32>, vector<32x32xf32>, vector<128x32xf32> -> vector<128x32xf32>
    %c96_49 = arith.constant 96 : index
    %c32_50 = arith.constant 32 : index
    %79 = vector.load %arg4[%c96_49, %c32_50] : memref<128x128xf32, #tpu.memory_space<vmem>>, vector<32x32xf32>
    %cst_51 = arith.constant dense<0.000000e+00> : vector<128x32xf32>
    %80 = tpu.matmul %76, %79, %cst_51 {dimension_numbers = #tpu.dot_dimension_numbers<[1], [0], [0], [1], [0, 0, 1, 1], [], []>} : vector<128x32xf32>, vector<32x32xf32>, vector<128x32xf32> -> vector<128x32xf32>
    %81 = arith.addf %78, %80 : vector<128x32xf32>
    %82 = vector.extract_strided_slice %0 {offsets = [5, 0], sizes = [1, 32], strides = [1, 1]} : vector<8x32xf32> to vector<1x32xf32>
    %83 = vector.broadcast %82 : vector<1x32xf32> to vector<128x32xf32>
    %84 = arith.addf %81, %83 : vector<128x32xf32>
    %cst_52 = arith.constant 0.000000e+00 : f32
    %85 = vector.broadcast %cst_52 : f32 to vector<128x32xf32>
    %86 = arith.maximumf %84, %85 : vector<128x32xf32>
    %c0_53 = arith.constant 0 : index
    %c64_54 = arith.constant 64 : index
    %87 = vector.load %arg4[%c0_53, %c64_54] : memref<128x128xf32, #tpu.memory_space<vmem>>, vector<32x32xf32>
    %cst_55 = arith.constant dense<0.000000e+00> : vector<128x32xf32>
    %88 = tpu.matmul %86, %87, %cst_55 {dimension_numbers = #tpu.dot_dimension_numbers<[1], [0], [0], [1], [0, 0, 1, 1], [], []>} : vector<128x32xf32>, vector<32x32xf32>, vector<128x32xf32> -> vector<128x32xf32>
    %89 = vector.extract_strided_slice %0 {offsets = [6, 0], sizes = [1, 32], strides = [1, 1]} : vector<8x32xf32> to vector<1x32xf32>
    %90 = vector.broadcast %89 : vector<1x32xf32> to vector<128x32xf32>
    %91 = arith.addf %88, %90 : vector<128x32xf32>
    %cst_56 = arith.constant 0.000000e+00 : f32
    %92 = vector.broadcast %cst_56 : f32 to vector<128x32xf32>
    %93 = arith.maximumf %91, %92 : vector<128x32xf32>
    %c0_57 = arith.constant 0 : index
    %c96_58 = arith.constant 96 : index
    %94 = vector.load %arg4[%c0_57, %c96_58] : memref<128x128xf32, #tpu.memory_space<vmem>>, vector<1x32xf32>
    %cst_59 = arith.constant dense<0.000000e+00> : vector<1x128xf32>
    %95 = tpu.matmul %94, %93, %cst_59 {dimension_numbers = #tpu.dot_dimension_numbers<[1], [1], [0], [0], [0, 0, 1, 0], [], []>} : vector<1x32xf32>, vector<128x32xf32>, vector<1x128xf32> -> vector<1x128xf32>
    %96 = vector.extract_strided_slice %0 {offsets = [7, 0], sizes = [1, 1], strides = [1, 1]} : vector<8x32xf32> to vector<1x1xf32>
    %97 = vector.broadcast %96 : vector<1x1xf32> to vector<1x128xf32>
    %98 = arith.addf %95, %97 : vector<1x128xf32>
    %99 = arith.negf %98 : vector<1x128xf32>
    %100 = math.exp %99 : vector<1x128xf32>
    %cst_60 = arith.constant 1.000000e+00 : f32
    %101 = vector.broadcast %cst_60 : f32 to vector<1x128xf32>
    %102 = arith.addf %101, %100 : vector<1x128xf32>
    %103 = arith.divf %101, %102 : vector<1x128xf32>
    %c0_61 = arith.constant 0 : index
    %c0_62 = arith.constant 0 : index
    %104 = vector.load %arg6[%c0_61, %c0_62] : memref<1x128xf32, #tpu.memory_space<vmem>>, vector<1x128xf32>
    tpu.vector_store %arg6[%c0_61, %c0_62], %103 {strides = array<i32>} : memref<1x128xf32, #tpu.memory_space<vmem>>, vector<1x128xf32>,
    return
  }
}

</mosaic_0001>

<llo_original>
// kernel: independent_bc_agent_forward.1
$region0: #{independent_bc_agent_forward.1}
  #allocation0 [shape = 'u32[]', space=smem, size = 0x4, offset = 0x4, fixed_abs, tag = 'smem constant byte address 0x4 - core index']
  #allocation1 [shape = 'u32[144,128]{1,0:T(1,128)}', space=vmem, size = 0x12000, scoped, tag = 'internal scratch']
  %s0 = inlined_call_operand.vmem [shape: f32[128,6], index: 0, kind: input, shape index: {}]
  %s1 = inlined_call_operand.vmem [shape: f32[384,4], index: 1, kind: input, shape index: {}]
  %s2 = inlined_call_operand.vmem [shape: s32[384,2], index: 2, kind: input, shape index: {}]
  %s3 = inlined_call_operand.vmem [shape: s32[1,384], index: 3, kind: input, shape index: {}]
  %s4 = inlined_call_operand.vmem [shape: f32[128,128], index: 4, kind: input, shape index: {}]
  %s5 = inlined_call_operand.vmem [shape: f32[8,32], index: 5, kind: input, shape index: {}]
  %s6 = inlined_call_operand.hbm [shape: f32[1,128], index: 6, kind: output, shape index: {}]
  %s7 = sld [smem:[#allocation0]]
  $region34: #{independent_bc_agent_forward.1} parent=0
    _
  %s9 = ssub.s32 1, %s7
  %s10 = scalar_select 0, %s9, %s7
  $region1: #{independent_bc_agent_forward.1} parent=0
    #allocation2 [shape = 'u8[512]{0}', space=vmem, size = 0x400, scoped, tag = 'output window, operand 0, single buffered']
    #allocation3 [shape = 's32[1]{0}', space=sflag, size = 0x4, scoped, tag = 'scoped memory for independent_bc_agent_forward.1']
    %11 = vsyncpa [#allocation3], 0
    // Predicated region
    $region2: #{independent_bc_agent_forward.1} parent=1 // pred_check
      _
    $region3: #{independent_bc_agent_forward.1} parent=1 // pred_check_branch
      %13 = sbr.rel (0) target = $region5
    $region4: #{independent_bc_agent_forward.1} parent=1 // pred_region
      _
    $region5: #{independent_bc_agent_forward.1} parent=1 // pred_fallthru
      _
    // Predicated region
    $region6: #{independent_bc_agent_forward.1} parent=1 // pred_check
      _
    $region7: #{independent_bc_agent_forward.1} parent=1 // pred_check_branch
      %15 = sbr.rel (0) target = $region9
    $region8: #{independent_bc_agent_forward.1} parent=1 // pred_region
      _
    $region9: #{independent_bc_agent_forward.1} parent=1 // pred_fallthru
      _
    // Predicated region
    $region10: #{independent_bc_agent_forward.1} parent=1 // pred_check
      _
    $region11: #{independent_bc_agent_forward.1} parent=1 // pred_check_branch
      %17 = sbr.rel (0) target = $region13
    $region12: #{independent_bc_agent_forward.1} parent=1 // pred_region
      _
    $region13: #{independent_bc_agent_forward.1} parent=1 // pred_fallthru
      _
    // Predicated region
    $region14: #{independent_bc_agent_forward.1} parent=1 // pred_check
      _
    $region15: #{independent_bc_agent_forward.1} parent=1 // pred_check_branch
      %19 = sbr.rel (0) target = $region17
    $region16: #{independent_bc_agent_forward.1} parent=1 // pred_region
      _
    $region17: #{independent_bc_agent_forward.1} parent=1 // pred_fallthru
      _
    // Predicated region
    $region18: #{independent_bc_agent_forward.1} parent=1 // pred_check
      _
    $region19: #{independent_bc_agent_forward.1} parent=1 // pred_check_branch
      %21 = sbr.rel (0) target = $region21
    $region20: #{independent_bc_agent_forward.1} parent=1 // pred_region
      _
    $region21: #{independent_bc_agent_forward.1} parent=1 // pred_fallthru
      _
    // Predicated region
    $region22: #{independent_bc_agent_forward.1} parent=1 // pred_check
      _
    $region23: #{independent_bc_agent_forward.1} parent=1 // pred_check_branch
      %23 = sbr.rel (0) target = $region25
    $region24: #{independent_bc_agent_forward.1} parent=1 // pred_region
      _
    $region25: #{independent_bc_agent_forward.1} parent=1 // pred_fallthru
      _
    %v24 = vld [vmem:[%s5] sm:$0xff]
    %v25 = vld [vmem:[%s2] sm:$0xff]
    %v26 = vld [vmem:[%s2 + $0x8] sm:$0xff]
    %v27 = vld [vmem:[%s2 + $0x10] sm:$0xff]
    %v28 = vld [vmem:[%s2 + $0x18] sm:$0xff]
    %v29 = vld [vmem:[%s2 + $0x20] sm:$0xff]
    %v30 = vld [vmem:[%s2 + $0x28] sm:$0xff]
    %v31 = vld [vmem:[%s2 + $0x30] sm:$0xff]
    %v32 = vld [vmem:[%s2 + $0x38] sm:$0xff]
    %v33 = vld [vmem:[%s2 + $0x40] sm:$0xff]
    %v34 = vld [vmem:[%s2 + $0x48] sm:$0xff]
    %v35 = vld [vmem:[%s2 + $0x50] sm:$0xff]
    %v36 = vld [vmem:[%s2 + $0x58] sm:$0xff]
    %v37 = vld [vmem:[%s2 + $0x60] sm:$0xff]
    %v38 = vld [vmem:[%s2 + $0x68] sm:$0xff]
    %v39 = vld [vmem:[%s2 + $0x70] sm:$0xff]
    %v40 = vld [vmem:[%s2 + $0x78] sm:$0xff]
    %v41 = vld [vmem:[%s2 + $0x80] sm:$0xff]
    %v42 = vld [vmem:[%s2 + $0x88] sm:$0xff]
    %v43 = vld [vmem:[%s2 + $0x90] sm:$0xff]
    %v44 = vld [vmem:[%s2 + $0x98] sm:$0xff]
    %v45 = vld [vmem:[%s2 + $0xa0] sm:$0xff]
    %v46 = vld [vmem:[%s2 + $0xa8] sm:$0xff]
    %v47 = vld [vmem:[%s2 + $0xb0] sm:$0xff]
    %v48 = vld [vmem:[%s2 + $0xb8] sm:$0xff]
    %v49 = vld [vmem:[%s2 + $0xc0] sm:$0xff]
    %v50 = vld [vmem:[%s2 + $0xc8] sm:$0xff]
    %v51 = vld [vmem:[%s2 + $0xd0] sm:$0xff]
    %v52 = vld [vmem:[%s2 + $0xd8] sm:$0xff]
    %v53 = vld [vmem:[%s2 + $0xe0] sm:$0xff]
    %v54 = vld [vmem:[%s2 + $0xe8] sm:$0xff]
    %v55 = vld [vmem:[%s2 + $0xf0] sm:$0xff]
    %v56 = vld [vmem:[%s2 + $0xf8] sm:$0xff]
    %v57 = vld [vmem:[%s2 + $0x100] sm:$0xff]
    %v58 = vld [vmem:[%s2 + $0x108] sm:$0xff]
    %v59 = vld [vmem:[%s2 + $0x110] sm:$0xff]
    %v60 = vld [vmem:[%s2 + $0x118] sm:$0xff]
    %v61 = vld [vmem:[%s2 + $0x120] sm:$0xff]
    %v62 = vld [vmem:[%s2 + $0x128] sm:$0xff]
    %v63 = vld [vmem:[%s2 + $0x130] sm:$0xff]
    %v64 = vld [vmem:[%s2 + $0x138] sm:$0xff]
    %v65 = vld [vmem:[%s2 + $0x140] sm:$0xff]
    %v66 = vld [vmem:[%s2 + $0x148] sm:$0xff]
    %v67 = vld [vmem:[%s2 + $0x150] sm:$0xff]
    %v68 = vld [vmem:[%s2 + $0x158] sm:$0xff]
    %v69 = vld [vmem:[%s2 + $0x160] sm:$0xff]
    %v70 = vld [vmem:[%s2 + $0x168] sm:$0xff]
    %v71 = vld [vmem:[%s2 + $0x170] sm:$0xff]
    %v72 = vld [vmem:[%s2 + $0x178] sm:$0xff]
    %v73 = vlaneseq
    %v74 = vand.u32 %v73, 127
    %75 = vset.pattern.permute.xlu0 0
    %76 = vperm.xlu0 %75, %v25
    %v77 = vpop.permute.xlu0 %76
    %78 = vset.pattern.permute.xlu0 0
    %79 = vperm.xlu0 %78, %v26
    %v80 = vpop.permute.xlu0 %79
    %81 = vset.pattern.permute.xlu0 0
    %82 = vperm.xlu0 %81, %v27
    %v83 = vpop.permute.xlu0 %82
    %84 = vset.pattern.permute.xlu0 0
    %85 = vperm.xlu0 %84, %v28
    %v86 = vpop.permute.xlu0 %85
    %87 = vset.pattern.permute.xlu0 0
    %88 = vperm.xlu0 %87, %v29
    %v89 = vpop.permute.xlu0 %88
    %90 = vset.pattern.permute.xlu0 0
    %91 = vperm.xlu0 %90, %v30
    %v92 = vpop.permute.xlu0 %91
    %93 = vset.pattern.permute.xlu0 0
    %94 = vperm.xlu0 %93, %v31
    %v95 = vpop.permute.xlu0 %94
    %96 = vset.pattern.permute.xlu0 0
    %97 = vperm.xlu0 %96, %v32
    %v98 = vpop.permute.xlu0 %97
    %99 = vset.pattern.permute.xlu0 0
    %100 = vperm.xlu0 %99, %v33
    %v101 = vpop.permute.xlu0 %100
    %102 = vset.pattern.permute.xlu0 0
    %103 = vperm.xlu0 %102, %v34
    %v104 = vpop.permute.xlu0 %103
    %105 = vset.pattern.permute.xlu0 0
    %106 = vperm.xlu0 %105, %v35
    %v107 = vpop.permute.xlu0 %106
    %108 = vset.pattern.permute.xlu0 0
    %109 = vperm.xlu0 %108, %v36
    %v110 = vpop.permute.xlu0 %109
    %111 = vset.pattern.permute.xlu0 0
    %112 = vperm.xlu0 %111, %v37
    %v113 = vpop.permute.xlu0 %112
    %114 = vset.pattern.permute.xlu0 0
    %115 = vperm.xlu0 %114, %v38
    %v116 = vpop.permute.xlu0 %115
    %117 = vset.pattern.permute.xlu0 0
    %118 = vperm.xlu0 %117, %v39
    %v119 = vpop.permute.xlu0 %118
    %120 = vset.pattern.permute.xlu0 0
    %121 = vperm.xlu0 %120, %v40
    %v122 = vpop.permute.xlu0 %121
    %123 = vset.pattern.permute.xlu0 0
    %124 = vperm.xlu0 %123, %v41
    %v125 = vpop.permute.xlu0 %124
    %126 = vset.pattern.permute.xlu0 0
    %127 = vperm.xlu0 %126, %v42
    %v128 = vpop.permute.xlu0 %127
    %129 = vset.pattern.permute.xlu0 0
    %130 = vperm.xlu0 %129, %v43
    %v131 = vpop.permute.xlu0 %130
    %132 = vset.pattern.permute.xlu0 0
    %133 = vperm.xlu0 %132, %v44
    %v134 = vpop.permute.xlu0 %133
    %135 = vset.pattern.permute.xlu0 0
    %136 = vperm.xlu0 %135, %v45
    %v137 = vpop.permute.xlu0 %136
    %138 = vset.pattern.permute.xlu0 0
    %139 = vperm.xlu0 %138, %v46
    %v140 = vpop.permute.xlu0 %139
    %141 = vset.pattern.permute.xlu0 0
    %142 = vperm.xlu0 %141, %v47
    %v143 = vpop.permute.xlu0 %142
    %144 = vset.pattern.permute.xlu0 0
    %145 = vperm.xlu0 %144, %v48
    %v146 = vpop.permute.xlu0 %145
    %147 = vset.pattern.permute.xlu0 0
    %148 = vperm.xlu0 %147, %v49
    %v149 = vpop.permute.xlu0 %148
    %150 = vset.pattern.permute.xlu0 0
    %151 = vperm.xlu0 %150, %v50
    %v152 = vpop.permute.xlu0 %151
    %153 = vset.pattern.permute.xlu0 0
    %154 = vperm.xlu0 %153, %v51
    %v155 = vpop.permute.xlu0 %154
    %156 = vset.pattern.permute.xlu0 0
    %157 = vperm.xlu0 %156, %v52
    %v158 = vpop.permute.xlu0 %157
    %159 = vset.pattern.permute.xlu0 0
    %160 = vperm.xlu0 %159, %v53
    %v161 = vpop.permute.xlu0 %160
    %162 = vset.pattern.permute.xlu0 0
    %163 = vperm.xlu0 %162, %v54
    %v164 = vpop.permute.xlu0 %163
    %165 = vset.pattern.permute.xlu0 0
    %166 = vperm.xlu0 %165, %v55
    %v167 = vpop.permute.xlu0 %166
    %168 = vset.pattern.permute.xlu0 0
    %169 = vperm.xlu0 %168, %v56
    %v170 = vpop.permute.xlu0 %169
    %171 = vset.pattern.permute.xlu0 0
    %172 = vperm.xlu0 %171, %v57
    %v173 = vpop.permute.xlu0 %172
    %174 = vset.pattern.permute.xlu0 0
    %175 = vperm.xlu0 %174, %v58
    %v176 = vpop.permute.xlu0 %175
    %177 = vset.pattern.permute.xlu0 0
    %178 = vperm.xlu0 %177, %v59
    %v179 = vpop.permute.xlu0 %178
    %180 = vset.pattern.permute.xlu0 0
    %181 = vperm.xlu0 %180, %v60
    %v182 = vpop.permute.xlu0 %181
    %183 = vset.pattern.permute.xlu0 0
    %184 = vperm.xlu0 %183, %v61
    %v185 = vpop.permute.xlu0 %184
    %186 = vset.pattern.permute.xlu0 0
    %187 = vperm.xlu0 %186, %v62
    %v188 = vpop.permute.xlu0 %187
    %189 = vset.pattern.permute.xlu0 0
    %190 = vperm.xlu0 %189, %v63
    %v191 = vpop.permute.xlu0 %190
    %192 = vset.pattern.permute.xlu0 0
    %193 = vperm.xlu0 %192, %v64
    %v194 = vpop.permute.xlu0 %193
    %195 = vset.pattern.permute.xlu0 0
    %196 = vperm.xlu0 %195, %v65
    %v197 = vpop.permute.xlu0 %196
    %198 = vset.pattern.permute.xlu0 0
    %199 = vperm.xlu0 %198, %v66
    %v200 = vpop.permute.xlu0 %199
    %201 = vset.pattern.permute.xlu0 0
    %202 = vperm.xlu0 %201, %v67
    %v203 = vpop.permute.xlu0 %202
    %204 = vset.pattern.permute.xlu0 0
    %205 = vperm.xlu0 %204, %v68
    %v206 = vpop.permute.xlu0 %205
    %207 = vset.pattern.permute.xlu0 0
    %208 = vperm.xlu0 %207, %v69
    %v209 = vpop.permute.xlu0 %208
    %210 = vset.pattern.permute.xlu0 0
    %211 = vperm.xlu0 %210, %v70
    %v212 = vpop.permute.xlu0 %211
    %213 = vset.pattern.permute.xlu0 0
    %214 = vperm.xlu0 %213, %v71
    %v215 = vpop.permute.xlu0 %214
    %216 = vset.pattern.permute.xlu0 0
    %217 = vperm.xlu0 %216, %v72
    %v218 = vpop.permute.xlu0 %217
    %vm219 = vcmp.eq.s32.totalorder %v77, %v74
    %vm220 = vcmp.eq.s32.totalorder %v80, %v74
    %vm221 = vcmp.eq.s32.totalorder %v83, %v74
    %vm222 = vcmp.eq.s32.totalorder %v86, %v74
    %vm223 = vcmp.eq.s32.totalorder %v89, %v74
    %vm224 = vcmp.eq.s32.totalorder %v92, %v74
    %vm225 = vcmp.eq.s32.totalorder %v95, %v74
    %vm226 = vcmp.eq.s32.totalorder %v98, %v74
    %vm227 = vcmp.eq.s32.totalorder %v101, %v74
    %vm228 = vcmp.eq.s32.totalorder %v104, %v74
    %vm229 = vcmp.eq.s32.totalorder %v107, %v74
    %vm230 = vcmp.eq.s32.totalorder %v110, %v74
    %vm231 = vcmp.eq.s32.totalorder %v113, %v74
    %vm232 = vcmp.eq.s32.totalorder %v116, %v74
    %vm233 = vcmp.eq.s32.totalorder %v119, %v74
    %vm234 = vcmp.eq.s32.totalorder %v122, %v74
    %vm235 = vcmp.eq.s32.totalorder %v125, %v74
    %vm236 = vcmp.eq.s32.totalorder %v128, %v74
    %vm237 = vcmp.eq.s32.totalorder %v131, %v74
    %vm238 = vcmp.eq.s32.totalorder %v134, %v74
    %vm239 = vcmp.eq.s32.totalorder %v137, %v74
    %vm240 = vcmp.eq.s32.totalorder %v140, %v74
    %vm241 = vcmp.eq.s32.totalorder %v143, %v74
    %vm242 = vcmp.eq.s32.totalorder %v146, %v74
    %vm243 = vcmp.eq.s32.totalorder %v149, %v74
    %vm244 = vcmp.eq.s32.totalorder %v152, %v74
    %vm245 = vcmp.eq.s32.totalorder %v155, %v74
    %vm246 = vcmp.eq.s32.totalorder %v158, %v74
    %vm247 = vcmp.eq.s32.totalorder %v161, %v74
    %vm248 = vcmp.eq.s32.totalorder %v164, %v74
    %vm249 = vcmp.eq.s32.totalorder %v167, %v74
    %vm250 = vcmp.eq.s32.totalorder %v170, %v74
    %vm251 = vcmp.eq.s32.totalorder %v173, %v74
    %vm252 = vcmp.eq.s32.totalorder %v176, %v74
    %vm253 = vcmp.eq.s32.totalorder %v179, %v74
    %vm254 = vcmp.eq.s32.totalorder %v182, %v74
    %vm255 = vcmp.eq.s32.totalorder %v185, %v74
    %vm256 = vcmp.eq.s32.totalorder %v188, %v74
    %vm257 = vcmp.eq.s32.totalorder %v191, %v74
    %vm258 = vcmp.eq.s32.totalorder %v194, %v74
    %vm259 = vcmp.eq.s32.totalorder %v197, %v74
    %vm260 = vcmp.eq.s32.totalorder %v200, %v74
    %vm261 = vcmp.eq.s32.totalorder %v203, %v74
    %vm262 = vcmp.eq.s32.totalorder %v206, %v74
    %vm263 = vcmp.eq.s32.totalorder %v209, %v74
    %vm264 = vcmp.eq.s32.totalorder %v212, %v74
    %vm265 = vcmp.eq.s32.totalorder %v215, %v74
    %vm266 = vcmp.eq.s32.totalorder %v218, %v74
    %v267 = vsel %vm219, 1, 0
    %v268 = vsel %vm220, 1, 0
    %v269 = vsel %vm221, 1, 0
    %v270 = vsel %vm222, 1, 0
    %v271 = vsel %vm223, 1, 0
    %v272 = vsel %vm224, 1, 0
    %v273 = vsel %vm225, 1, 0
    %v274 = vsel %vm226, 1, 0
    %v275 = vsel %vm227, 1, 0
    %v276 = vsel %vm228, 1, 0
    %v277 = vsel %vm229, 1, 0
    %v278 = vsel %vm230, 1, 0
    %v279 = vsel %vm231, 1, 0
    %v280 = vsel %vm232, 1, 0
    %v281 = vsel %vm233, 1, 0
    %v282 = vsel %vm234, 1, 0
    %v283 = vsel %vm235, 1, 0
    %v284 = vsel %vm236, 1, 0
    %v285 = vsel %vm237, 1, 0
    %v286 = vsel %vm238, 1, 0
    %v287 = vsel %vm239, 1, 0
    %v288 = vsel %vm240, 1, 0
    %v289 = vsel %vm241, 1, 0
    %v290 = vsel %vm242, 1, 0
    %v291 = vsel %vm243, 1, 0
    %v292 = vsel %vm244, 1, 0
    %v293 = vsel %vm245, 1, 0
    %v294 = vsel %vm246, 1, 0
    %v295 = vsel %vm247, 1, 0
    %v296 = vsel %vm248, 1, 0
    %v297 = vsel %vm249, 1, 0
    %v298 = vsel %vm250, 1, 0
    %v299 = vsel %vm251, 1, 0
    %v300 = vsel %vm252, 1, 0
    %v301 = vsel %vm253, 1, 0
    %v302 = vsel %vm254, 1, 0
    %v303 = vsel %vm255, 1, 0
    %v304 = vsel %vm256, 1, 0
    %v305 = vsel %vm257, 1, 0
    %v306 = vsel %vm258, 1, 0
    %v307 = vsel %vm259, 1, 0
    %v308 = vsel %vm260, 1, 0
    %v309 = vsel %vm261, 1, 0
    %v310 = vsel %vm262, 1, 0
    %v311 = vsel %vm263, 1, 0
    %v312 = vsel %vm264, 1, 0
    %v313 = vsel %vm265, 1, 0
    %v314 = vsel %vm266, 1, 0
    %v315 = vcvt.s32.f32 %v267
    %v316 = vcvt.s32.f32 %v268
    %v317 = vcvt.s32.f32 %v269
    %v318 = vcvt.s32.f32 %v270
    %v319 = vcvt.s32.f32 %v271
    %v320 = vcvt.s32.f32 %v272
    %v321 = vcvt.s32.f32 %v273
    %v322 = vcvt.s32.f32 %v274
    %v323 = vcvt.s32.f32 %v275
    %v324 = vcvt.s32.f32 %v276
    %v325 = vcvt.s32.f32 %v277
    %v326 = vcvt.s32.f32 %v278
    %v327 = vcvt.s32.f32 %v279
    %v328 = vcvt.s32.f32 %v280
    %v329 = vcvt.s32.f32 %v281
    %v330 = vcvt.s32.f32 %v282
    %v331 = vcvt.s32.f32 %v283
    %v332 = vcvt.s32.f32 %v284
    %v333 = vcvt.s32.f32 %v285
    %v334 = vcvt.s32.f32 %v286
    %v335 = vcvt.s32.f32 %v287
    %v336 = vcvt.s32.f32 %v288
    %v337 = vcvt.s32.f32 %v289
    %v338 = vcvt.s32.f32 %v290
    %v339 = vcvt.s32.f32 %v291
    %v340 = vcvt.s32.f32 %v292
    %v341 = vcvt.s32.f32 %v293
    %v342 = vcvt.s32.f32 %v294
    %v343 = vcvt.s32.f32 %v295
    %v344 = vcvt.s32.f32 %v296
    %v345 = vcvt.s32.f32 %v297
    %v346 = vcvt.s32.f32 %v298
    %v347 = vcvt.s32.f32 %v299
    %v348 = vcvt.s32.f32 %v300
    %v349 = vcvt.s32.f32 %v301
    %v350 = vcvt.s32.f32 %v302
    %v351 = vcvt.s32.f32 %v303
    %v352 = vcvt.s32.f32 %v304
    %v353 = vcvt.s32.f32 %v305
    %v354 = vcvt.s32.f32 %v306
    %v355 = vcvt.s32.f32 %v307
    %v356 = vcvt.s32.f32 %v308
    %v357 = vcvt.s32.f32 %v309
    %v358 = vcvt.s32.f32 %v310
    %v359 = vcvt.s32.f32 %v311
    %v360 = vcvt.s32.f32 %v312
    %v361 = vcvt.s32.f32 %v313
    %v362 = vcvt.s32.f32 %v314
    %363 = vset.pattern.permute.xlu0 1
    %364 = vperm.xlu0 %363, %v25
    %v365 = vpop.permute.xlu0 %364
    %366 = vset.pattern.permute.xlu0 1
    %367 = vperm.xlu0 %366, %v26
    %v368 = vpop.permute.xlu0 %367
    %369 = vset.pattern.permute.xlu0 1
    %370 = vperm.xlu0 %369, %v27
    %v371 = vpop.permute.xlu0 %370
    %372 = vset.pattern.permute.xlu0 1
    %373 = vperm.xlu0 %372, %v28
    %v374 = vpop.permute.xlu0 %373
    %375 = vset.pattern.permute.xlu0 1
    %376 = vperm.xlu0 %375, %v29
    %v377 = vpop.permute.xlu0 %376
    %378 = vset.pattern.permute.xlu0 1
    %379 = vperm.xlu0 %378, %v30
    %v380 = vpop.permute.xlu0 %379
    %381 = vset.pattern.permute.xlu0 1
    %382 = vperm.xlu0 %381, %v31
    %v383 = vpop.permute.xlu0 %382
    %384 = vset.pattern.permute.xlu0 1
    %385 = vperm.xlu0 %384, %v32
    %v386 = vpop.permute.xlu0 %385
    %387 = vset.pattern.permute.xlu0 1
    %388 = vperm.xlu0 %387, %v33
    %v389 = vpop.permute.xlu0 %388
    %390 = vset.pattern.permute.xlu0 1
    %391 = vperm.xlu0 %390, %v34
    %v392 = vpop.permute.xlu0 %391
    %393 = vset.pattern.permute.xlu0 1
    %394 = vperm.xlu0 %393, %v35
    %v395 = vpop.permute.xlu0 %394
    %396 = vset.pattern.permute.xlu0 1
    %397 = vperm.xlu0 %396, %v36
    %v398 = vpop.permute.xlu0 %397
    %399 = vset.pattern.permute.xlu0 1
    %400 = vperm.xlu0 %399, %v37
    %v401 = vpop.permute.xlu0 %400
    %402 = vset.pattern.permute.xlu0 1
    %403 = vperm.xlu0 %402, %v38
    %v404 = vpop.permute.xlu0 %403
    %405 = vset.pattern.permute.xlu0 1
    %406 = vperm.xlu0 %405, %v39
    %v407 = vpop.permute.xlu0 %406
    %408 = vset.pattern.permute.xlu0 1
    %409 = vperm.xlu0 %408, %v40
    %v410 = vpop.permute.xlu0 %409
    %411 = vset.pattern.permute.xlu0 1
    %412 = vperm.xlu0 %411, %v41
    %v413 = vpop.permute.xlu0 %412
    %414 = vset.pattern.permute.xlu0 1
    %415 = vperm.xlu0 %414, %v42
    %v416 = vpop.permute.xlu0 %415
    %417 = vset.pattern.permute.xlu0 1
    %418 = vperm.xlu0 %417, %v43
    %v419 = vpop.permute.xlu0 %418
    %420 = vset.pattern.permute.xlu0 1
    %421 = vperm.xlu0 %420, %v44
    %v422 = vpop.permute.xlu0 %421
    %423 = vset.pattern.permute.xlu0 1
    %424 = vperm.xlu0 %423, %v45
    %v425 = vpop.permute.xlu0 %424
    %426 = vset.pattern.permute.xlu0 1
    %427 = vperm.xlu0 %426, %v46
    %v428 = vpop.permute.xlu0 %427
    %429 = vset.pattern.permute.xlu0 1
    %430 = vperm.xlu0 %429, %v47
    %v431 = vpop.permute.xlu0 %430
    %432 = vset.pattern.permute.xlu0 1
    %433 = vperm.xlu0 %432, %v48
    %v434 = vpop.permute.xlu0 %433
    %435 = vset.pattern.permute.xlu0 1
    %436 = vperm.xlu0 %435, %v49
    %v437 = vpop.permute.xlu0 %436
    %438 = vset.pattern.permute.xlu0 1
    %439 = vperm.xlu0 %438, %v50
    %v440 = vpop.permute.xlu0 %439
    %441 = vset.pattern.permute.xlu0 1
    %442 = vperm.xlu0 %441, %v51
    %v443 = vpop.permute.xlu0 %442
    %444 = vset.pattern.permute.xlu0 1
    %445 = vperm.xlu0 %444, %v52
    %v446 = vpop.permute.xlu0 %445
    %447 = vset.pattern.permute.xlu0 1
    %448 = vperm.xlu0 %447, %v53
    %v449 = vpop.permute.xlu0 %448
    %450 = vset.pattern.permute.xlu0 1
    %451 = vperm.xlu0 %450, %v54
    %v452 = vpop.permute.xlu0 %451
    %453 = vset.pattern.permute.xlu0 1
    %454 = vperm.xlu0 %453, %v55
    %v455 = vpop.permute.xlu0 %454
    %456 = vset.pattern.permute.xlu0 1
    %457 = vperm.xlu0 %456, %v56
    %v458 = vpop.permute.xlu0 %457
    %459 = vset.pattern.permute.xlu0 1
    %460 = vperm.xlu0 %459, %v57
    %v461 = vpop.permute.xlu0 %460
    %462 = vset.pattern.permute.xlu0 1
    %463 = vperm.xlu0 %462, %v58
    %v464 = vpop.permute.xlu0 %463
    %465 = vset.pattern.permute.xlu0 1
    %466 = vperm.xlu0 %465, %v59
    %v467 = vpop.permute.xlu0 %466
    %468 = vset.pattern.permute.xlu0 1
    %469 = vperm.xlu0 %468, %v60
    %v470 = vpop.permute.xlu0 %469
    %471 = vset.pattern.permute.xlu0 1
    %472 = vperm.xlu0 %471, %v61
    %v473 = vpop.permute.xlu0 %472
    %474 = vset.pattern.permute.xlu0 1
    %475 = vperm.xlu0 %474, %v62
    %v476 = vpop.permute.xlu0 %475
    %477 = vset.pattern.permute.xlu0 1
    %478 = vperm.xlu0 %477, %v63
    %v479 = vpop.permute.xlu0 %478
    %480 = vset.pattern.permute.xlu0 1
    %481 = vperm.xlu0 %480, %v64
    %v482 = vpop.permute.xlu0 %481
    %483 = vset.pattern.permute.xlu0 1
    %484 = vperm.xlu0 %483, %v65
    %v485 = vpop.permute.xlu0 %484
    %486 = vset.pattern.permute.xlu0 1
    %487 = vperm.xlu0 %486, %v66
    %v488 = vpop.permute.xlu0 %487
    %489 = vset.pattern.permute.xlu0 1
    %490 = vperm.xlu0 %489, %v67
    %v491 = vpop.permute.xlu0 %490
    %492 = vset.pattern.permute.xlu0 1
    %493 = vperm.xlu0 %492, %v68
    %v494 = vpop.permute.xlu0 %493
    %495 = vset.pattern.permute.xlu0 1
    %496 = vperm.xlu0 %495, %v69
    %v497 = vpop.permute.xlu0 %496
    %498 = vset.pattern.permute.xlu0 1
    %499 = vperm.xlu0 %498, %v70
    %v500 = vpop.permute.xlu0 %499
    %501 = vset.pattern.permute.xlu0 1
    %502 = vperm.xlu0 %501, %v71
    %v503 = vpop.permute.xlu0 %502
    %504 = vset.pattern.permute.xlu0 1
    %505 = vperm.xlu0 %504, %v72
    %v506 = vpop.permute.xlu0 %505
    %vm507 = vcmp.eq.s32.totalorder %v365, %v74
    %vm508 = vcmp.eq.s32.totalorder %v368, %v74
    %vm509 = vcmp.eq.s32.totalorder %v371, %v74
    %vm510 = vcmp.eq.s32.totalorder %v374, %v74
    %vm511 = vcmp.eq.s32.totalorder %v377, %v74
    %vm512 = vcmp.eq.s32.totalorder %v380, %v74
    %vm513 = vcmp.eq.s32.totalorder %v383, %v74
    %vm514 = vcmp.eq.s32.totalorder %v386, %v74
    %vm515 = vcmp.eq.s32.totalorder %v389, %v74
    %vm516 = vcmp.eq.s32.totalorder %v392, %v74
    %vm517 = vcmp.eq.s32.totalorder %v395, %v74
    %vm518 = vcmp.eq.s32.totalorder %v398, %v74
    %vm519 = vcmp.eq.s32.totalorder %v401, %v74
    %vm520 = vcmp.eq.s32.totalorder %v404, %v74
    %vm521 = vcmp.eq.s32.totalorder %v407, %v74
    %vm522 = vcmp.eq.s32.totalorder %v410, %v74
    %vm523 = vcmp.eq.s32.totalorder %v413, %v74
    %vm524 = vcmp.eq.s32.totalorder %v416, %v74
    %vm525 = vcmp.eq.s32.totalorder %v419, %v74
    %vm526 = vcmp.eq.s32.totalorder %v422, %v74
    %vm527 = vcmp.eq.s32.totalorder %v425, %v74
    %vm528 = vcmp.eq.s32.totalorder %v428, %v74
    %vm529 = vcmp.eq.s32.totalorder %v431, %v74
    %vm530 = vcmp.eq.s32.totalorder %v434, %v74
    %vm531 = vcmp.eq.s32.totalorder %v437, %v74
    %vm532 = vcmp.eq.s32.totalorder %v440, %v74
    %vm533 = vcmp.eq.s32.totalorder %v443, %v74
    %vm534 = vcmp.eq.s32.totalorder %v446, %v74
    %vm535 = vcmp.eq.s32.totalorder %v449, %v74
    %vm536 = vcmp.eq.s32.totalorder %v452, %v74
    %vm537 = vcmp.eq.s32.totalorder %v455, %v74
    %vm538 = vcmp.eq.s32.totalorder %v458, %v74
    %vm539 = vcmp.eq.s32.totalorder %v461, %v74
    %vm540 = vcmp.eq.s32.totalorder %v464, %v74
    %vm541 = vcmp.eq.s32.totalorder %v467, %v74
    %vm542 = vcmp.eq.s32.totalorder %v470, %v74
    %vm543 = vcmp.eq.s32.totalorder %v473, %v74
    %vm544 = vcmp.eq.s32.totalorder %v476, %v74
    %vm545 = vcmp.eq.s32.totalorder %v479, %v74
    %vm546 = vcmp.eq.s32.totalorder %v482, %v74
    %vm547 = vcmp.eq.s32.totalorder %v485, %v74
    %vm548 = vcmp.eq.s32.totalorder %v488, %v74
    %vm549 = vcmp.eq.s32.totalorder %v491, %v74
    %vm550 = vcmp.eq.s32.totalorder %v494, %v74
    %vm551 = vcmp.eq.s32.totalorder %v497, %v74
    %vm552 = vcmp.eq.s32.totalorder %v500, %v74
    %vm553 = vcmp.eq.s32.totalorder %v503, %v74
    %vm554 = vcmp.eq.s32.totalorder %v506, %v74
    %v555 = vsel %vm507, 1, 0
    %v556 = vsel %vm508, 1, 0
    %v557 = vsel %vm509, 1, 0
    %v558 = vsel %vm510, 1, 0
    %v559 = vsel %vm511, 1, 0
    %v560 = vsel %vm512, 1, 0
    %v561 = vsel %vm513, 1, 0
    %v562 = vsel %vm514, 1, 0
    %v563 = vsel %vm515, 1, 0
    %v564 = vsel %vm516, 1, 0
    %v565 = vsel %vm517, 1, 0
    %v566 = vsel %vm518, 1, 0
    %v567 = vsel %vm519, 1, 0
    %v568 = vsel %vm520, 1, 0
    %v569 = vsel %vm521, 1, 0
    %v570 = vsel %vm522, 1, 0
    %v571 = vsel %vm523, 1, 0
    %v572 = vsel %vm524, 1, 0
    %v573 = vsel %vm525, 1, 0
    %v574 = vsel %vm526, 1, 0
    %v575 = vsel %vm527, 1, 0
    %v576 = vsel %vm528, 1, 0
    %v577 = vsel %vm529, 1, 0
    %v578 = vsel %vm530, 1, 0
    %v579 = vsel %vm531, 1, 0
    %v580 = vsel %vm532, 1, 0
    %v581 = vsel %vm533, 1, 0
    %v582 = vsel %vm534, 1, 0
    %v583 = vsel %vm535, 1, 0
    %v584 = vsel %vm536, 1, 0
    %v585 = vsel %vm537, 1, 0
    %v586 = vsel %vm538, 1, 0
    %v587 = vsel %vm539, 1, 0
    %v588 = vsel %vm540, 1, 0
    %v589 = vsel %vm541, 1, 0
    %v590 = vsel %vm542, 1, 0
    %v591 = vsel %vm543, 1, 0
    %v592 = vsel %vm544, 1, 0
    %v593 = vsel %vm545, 1, 0
    %v594 = vsel %vm546, 1, 0
    %v595 = vsel %vm547, 1, 0
    %v596 = vsel %vm548, 1, 0
    %v597 = vsel %vm549, 1, 0
    %v598 = vsel %vm550, 1, 0
    %v599 = vsel %vm551, 1, 0
    %v600 = vsel %vm552, 1, 0
    %v601 = vsel %vm553, 1, 0
    %v602 = vsel %vm554, 1, 0
    %v603 = vcvt.s32.f32 %v555
    %v604 = vcvt.s32.f32 %v556
    %v605 = vcvt.s32.f32 %v557
    %v606 = vcvt.s32.f32 %v558
    %v607 = vcvt.s32.f32 %v559
    %v608 = vcvt.s32.f32 %v560
    %v609 = vcvt.s32.f32 %v561
    %v610 = vcvt.s32.f32 %v562
    %v611 = vcvt.s32.f32 %v563
    %v612 = vcvt.s32.f32 %v564
    %v613 = vcvt.s32.f32 %v565
    %v614 = vcvt.s32.f32 %v566
    %v615 = vcvt.s32.f32 %v567
    %v616 = vcvt.s32.f32 %v568
    %v617 = vcvt.s32.f32 %v569
    %v618 = vcvt.s32.f32 %v570
    %v619 = vcvt.s32.f32 %v571
    %v620 = vcvt.s32.f32 %v572
    %v621 = vcvt.s32.f32 %v573
    %v622 = vcvt.s32.f32 %v574
    %v623 = vcvt.s32.f32 %v575
    %v624 = vcvt.s32.f32 %v576
    %v625 = vcvt.s32.f32 %v577
    %v626 = vcvt.s32.f32 %v578
    %v627 = vcvt.s32.f32 %v579
    %v628 = vcvt.s32.f32 %v580
    %v629 = vcvt.s32.f32 %v581
    %v630 = vcvt.s32.f32 %v582
    %v631 = vcvt.s32.f32 %v583
    %v632 = vcvt.s32.f32 %v584
    %v633 = vcvt.s32.f32 %v585
    %v634 = vcvt.s32.f32 %v586
    %v635 = vcvt.s32.f32 %v587
    %v636 = vcvt.s32.f32 %v588
    %v637 = vcvt.s32.f32 %v589
    %v638 = vcvt.s32.f32 %v590
    %v639 = vcvt.s32.f32 %v591
    %v640 = vcvt.s32.f32 %v592
    %v641 = vcvt.s32.f32 %v593
    %v642 = vcvt.s32.f32 %v594
    %v643 = vcvt.s32.f32 %v595
    %v644 = vcvt.s32.f32 %v596
    %v645 = vcvt.s32.f32 %v597
    %v646 = vcvt.s32.f32 %v598
    %v647 = vcvt.s32.f32 %v599
    %v648 = vcvt.s32.f32 %v600
    %v649 = vcvt.s32.f32 %v601
    %v650 = vcvt.s32.f32 %v602
    %v651 = vlaneseq
    %v652 = vshrl.u32 %v651, 7
    %v653 = vadd.s32 %v652, 8
    %v654 = vadd.s32 %v652, 16
    %v655 = vadd.s32 %v652, 24
    %v656 = vadd.s32 %v652, 32
    %v657 = vadd.s32 %v652, 40
    %v658 = vadd.s32 %v652, 48
    %v659 = vadd.s32 %v652, 56
    %v660 = vadd.s32 %v652, 64
    %v661 = vadd.s32 %v652, 72
    %v662 = vadd.s32 %v652, 80
    %v663 = vadd.s32 %v652, 88
    %v664 = vadd.s32 %v652, 96
    %v665 = vadd.s32 %v652, 104
    %v666 = vadd.s32 %v652, 112
    %v667 = vadd.s32 %v652, 120
    %v668 = vld [vmem:[%s3] sm:$0x7]
    %v669 = vlaneseq
    %v670 = vshrl.u32 %v669, 7
    %v671 = vsub.s32 0, %v670
    %v672 = vrot.slane %v668, %v671
    %v673 = vlaneseq
    %v674 = vshrl.u32 %v673, 7
    %v675 = vsub.s32 1, %v674
    %v676 = vrot.slane %v668, %v675
    %v677 = vlaneseq
    %v678 = vshrl.u32 %v677, 7
    %v679 = vsub.s32 2, %v678
    %v680 = vrot.slane %v668, %v679
    %vm681 = vcmp.eq.s32.totalorder %v672, %v652
    %vm682 = vcmp.eq.s32.totalorder %v676, %v652
    %vm683 = vcmp.eq.s32.totalorder %v680, %v652
    %vm684 = vcmp.eq.s32.totalorder %v672, %v653
    %vm685 = vcmp.eq.s32.totalorder %v676, %v653
    %vm686 = vcmp.eq.s32.totalorder %v680, %v653
    %vm687 = vcmp.eq.s32.totalorder %v672, %v654
    %vm688 = vcmp.eq.s32.totalorder %v676, %v654
    %vm689 = vcmp.eq.s32.totalorder %v680, %v654
    %vm690 = vcmp.eq.s32.totalorder %v672, %v655
    %vm691 = vcmp.eq.s32.totalorder %v676, %v655
    %vm692 = vcmp.eq.s32.totalorder %v680, %v655
    %vm693 = vcmp.eq.s32.totalorder %v672, %v656
    %vm694 = vcmp.eq.s32.totalorder %v676, %v656
    %vm695 = vcmp.eq.s32.totalorder %v680, %v656
    %vm696 = vcmp.eq.s32.totalorder %v672, %v657
    %vm697 = vcmp.eq.s32.totalorder %v676, %v657
    %vm698 = vcmp.eq.s32.totalorder %v680, %v657
    %vm699 = vcmp.eq.s32.totalorder %v672, %v658
    %vm700 = vcmp.eq.s32.totalorder %v676, %v658
    %vm701 = vcmp.eq.s32.totalorder %v680, %v658
    %vm702 = vcmp.eq.s32.totalorder %v672, %v659
    %vm703 = vcmp.eq.s32.totalorder %v676, %v659
    %vm704 = vcmp.eq.s32.totalorder %v680, %v659
    %vm705 = vcmp.eq.s32.totalorder %v672, %v660
    %vm706 = vcmp.eq.s32.totalorder %v676, %v660
    %vm707 = vcmp.eq.s32.totalorder %v680, %v660
    %vm708 = vcmp.eq.s32.totalorder %v672, %v661
    %vm709 = vcmp.eq.s32.totalorder %v676, %v661
    %vm710 = vcmp.eq.s32.totalorder %v680, %v661
    %vm711 = vcmp.eq.s32.totalorder %v672, %v662
    %vm712 = vcmp.eq.s32.totalorder %v676, %v662
    %vm713 = vcmp.eq.s32.totalorder %v680, %v662
    %vm714 = vcmp.eq.s32.totalorder %v672, %v663
    %vm715 = vcmp.eq.s32.totalorder %v676, %v663
    %vm716 = vcmp.eq.s32.totalorder %v680, %v663
    %vm717 = vcmp.eq.s32.totalorder %v672, %v664
    %vm718 = vcmp.eq.s32.totalorder %v676, %v664
    %vm719 = vcmp.eq.s32.totalorder %v680, %v664
    %vm720 = vcmp.eq.s32.totalorder %v672, %v665
    %vm721 = vcmp.eq.s32.totalorder %v676, %v665
    %vm722 = vcmp.eq.s32.totalorder %v680, %v665
    %vm723 = vcmp.eq.s32.totalorder %v672, %v666
    %vm724 = vcmp.eq.s32.totalorder %v676, %v666
    %vm725 = vcmp.eq.s32.totalorder %v680, %v666
    %vm726 = vcmp.eq.s32.totalorder %v672, %v667
    %vm727 = vcmp.eq.s32.totalorder %v676, %v667
    %vm728 = vcmp.eq.s32.totalorder %v680, %v667
    %v729 = vsel %vm681, 1, 0
    %v730 = vsel %vm682, 1, 0
    %v731 = vsel %vm683, 1, 0
    %v732 = vsel %vm684, 1, 0
    %v733 = vsel %vm685, 1, 0
    %v734 = vsel %vm686, 1, 0
    %v735 = vsel %vm687, 1, 0
    %v736 = vsel %vm688, 1, 0
    %v737 = vsel %vm689, 1, 0
    %v738 = vsel %vm690, 1, 0
    %v739 = vsel %vm691, 1, 0
    %v740 = vsel %vm692, 1, 0
    %v741 = vsel %vm693, 1, 0
    %v742 = vsel %vm694, 1, 0
    %v743 = vsel %vm695, 1, 0
    %v744 = vsel %vm696, 1, 0
    %v745 = vsel %vm697, 1, 0
    %v746 = vsel %vm698, 1, 0
    %v747 = vsel %vm699, 1, 0
    %v748 = vsel %vm700, 1, 0
    %v749 = vsel %vm701, 1, 0
    %v750 = vsel %vm702, 1, 0
    %v751 = vsel %vm703, 1, 0
    %v752 = vsel %vm704, 1, 0
    %v753 = vsel %vm705, 1, 0
    %v754 = vsel %vm706, 1, 0
    %v755 = vsel %vm707, 1, 0
    %v756 = vsel %vm708, 1, 0
    %v757 = vsel %vm709, 1, 0
    %v758 = vsel %vm710, 1, 0
    %v759 = vsel %vm711, 1, 0
    %v760 = vsel %vm712, 1, 0
    %v761 = vsel %vm713, 1, 0
    %v762 = vsel %vm714, 1, 0
    %v763 = vsel %vm715, 1, 0
    %v764 = vsel %vm716, 1, 0
    %v765 = vsel %vm717, 1, 0
    %v766 = vsel %vm718, 1, 0
    %v767 = vsel %vm719, 1, 0
    %v768 = vsel %vm720, 1, 0
    %v769 = vsel %vm721, 1, 0
    %v770 = vsel %vm722, 1, 0
    %v771 = vsel %vm723, 1, 0
    %v772 = vsel %vm724, 1, 0
    %v773 = vsel %vm725, 1, 0
    %v774 = vsel %vm726, 1, 0
    %v775 = vsel %vm727, 1, 0
    %v776 = vsel %vm728, 1, 0
    %v777 = vcvt.s32.f32 %v729
    %v778 = vcvt.s32.f32 %v730
    %v779 = vcvt.s32.f32 %v731
    %v780 = vcvt.s32.f32 %v732
    %v781 = vcvt.s32.f32 %v733
    %v782 = vcvt.s32.f32 %v734
    %v783 = vcvt.s32.f32 %v735
    %v784 = vcvt.s32.f32 %v736
    %v785 = vcvt.s32.f32 %v737
    %v786 = vcvt.s32.f32 %v738
    %v787 = vcvt.s32.f32 %v739
    %v788 = vcvt.s32.f32 %v740
    %v789 = vcvt.s32.f32 %v741
    %v790 = vcvt.s32.f32 %v742
    %v791 = vcvt.s32.f32 %v743
    %v792 = vcvt.s32.f32 %v744
    %v793 = vcvt.s32.f32 %v745
    %v794 = vcvt.s32.f32 %v746
    %v795 = vcvt.s32.f32 %v747
    %v796 = vcvt.s32.f32 %v748
    %v797 = vcvt.s32.f32 %v749
    %v798 = vcvt.s32.f32 %v750
    %v799 = vcvt.s32.f32 %v751
    %v800 = vcvt.s32.f32 %v752
    %v801 = vcvt.s32.f32 %v753
    %v802 = vcvt.s32.f32 %v754
    %v803 = vcvt.s32.f32 %v755
    %v804 = vcvt.s32.f32 %v756
    %v805 = vcvt.s32.f32 %v757
    %v806 = vcvt.s32.f32 %v758
    %v807 = vcvt.s32.f32 %v759
    %v808 = vcvt.s32.f32 %v760
    %v809 = vcvt.s32.f32 %v761
    %v810 = vcvt.s32.f32 %v762
    %v811 = vcvt.s32.f32 %v763
    %v812 = vcvt.s32.f32 %v764
    %v813 = vcvt.s32.f32 %v765
    %v814 = vcvt.s32.f32 %v766
    %v815 = vcvt.s32.f32 %v767
    %v816 = vcvt.s32.f32 %v768
    %v817 = vcvt.s32.f32 %v769
    %v818 = vcvt.s32.f32 %v770
    %v819 = vcvt.s32.f32 %v771
    %v820 = vcvt.s32.f32 %v772
    %v821 = vcvt.s32.f32 %v773
    %v822 = vcvt.s32.f32 %v774
    %v823 = vcvt.s32.f32 %v775
    %v824 = vcvt.s32.f32 %v776
    %v825 = vld [vmem:[%s0] sm:$0xff]
    %v826 = vld [vmem:[%s0 + $0x8] sm:$0xff]
    %v827 = vld [vmem:[%s0 + $0x10] sm:$0xff]
    %v828 = vld [vmem:[%s0 + $0x18] sm:$0xff]
    %v829 = vld [vmem:[%s0 + $0x20] sm:$0xff]
    %v830 = vld [vmem:[%s0 + $0x28] sm:$0xff]
    %v831 = vld [vmem:[%s0 + $0x30] sm:$0xff]
    %v832 = vld [vmem:[%s0 + $0x38] sm:$0xff]
    %v833 = vld [vmem:[%s0 + $0x40] sm:$0xff]
    %v834 = vld [vmem:[%s0 + $0x48] sm:$0xff]
    %v835 = vld [vmem:[%s0 + $0x50] sm:$0xff]
    %v836 = vld [vmem:[%s0 + $0x58] sm:$0xff]
    %v837 = vld [vmem:[%s0 + $0x60] sm:$0xff]
    %v838 = vld [vmem:[%s0 + $0x68] sm:$0xff]
    %v839 = vld [vmem:[%s0 + $0x70] sm:$0xff]
    %v840 = vld [vmem:[%s0 + $0x78] sm:$0xff]
    %v841 = vld [vmem:[%s4] sm:$0x3f]
    %v842 = vlaneseq
    %v843 = vshrl.u32 %v842, 7
    %v844 = vsub.s32 0, %v843
    %v845 = vrot.slane %v24, %v844
    %vm846 = vcmask 48128
    %v848 = vsel %vm846, %v825, 0
    %v851 = vsel %vm846, %v826, 0
    %v854 = vsel %vm846, %v827, 0
    %v857 = vsel %vm846, %v828, 0
    %v860 = vsel %vm846, %v829, 0
    %v863 = vsel %vm846, %v830, 0
    %v866 = vsel %vm846, %v831, 0
    %v869 = vsel %vm846, %v832, 0
    %v872 = vsel %vm846, %v833, 0
    %v875 = vsel %vm846, %v834, 0
    %v878 = vsel %vm846, %v835, 0
    %v881 = vsel %vm846, %v836, 0
    %v884 = vsel %vm846, %v837, 0
    %v887 = vsel %vm846, %v838, 0
    %v890 = vsel %vm846, %v839, 0
    %v893 = vsel %vm846, %v840, 0
    %vm895 = vcmask 1045504
    %v897 = vsel %vm895, %v841, 0
    %899 = vmatprep.subr.mxu0 0.0
    %900 = vmatpush1.msra.mxu0 %v897
    %901 = vmatprep.subr.mxu0 0.0
    %902 = vmatpush1.msra.mxu0 0.0
    %903 = vmatprep.subr.mxu0 0.0
    %904 = vmatpush1.msra.mxu0 0.0
    %905 = vmatprep.subr.mxu0 0.0
    %906 = vmatpush1.msra.mxu0 0.0
    %907 = vmatprep.subr.mxu0 0.0
    %908 = vmatpush1.msra.mxu0 0.0
    %909 = vmatprep.subr.mxu0 0.0
    %910 = vmatpush1.msra.mxu0 0.0
    %911 = vmatprep.subr.mxu0 0.0
    %912 = vmatpush1.msra.mxu0 0.0
    %913 = vmatprep.subr.mxu0 0.0
    %914 = vmatpush1.msra.mxu0 0.0
    %915 = vmatprep.subr.mxu0 0.0
    %916 = vmatpush1.msra.mxu0 0.0
    %917 = vmatprep.subr.mxu0 0.0
    %918 = vmatpush1.msra.mxu0 0.0
    %919 = vmatprep.subr.mxu0 0.0
    %920 = vmatpush1.msra.mxu0 0.0
    %921 = vmatprep.subr.mxu0 0.0
    %922 = vmatpush1.msra.mxu0 0.0
    %923 = vmatprep.subr.mxu0 0.0
    %924 = vmatpush1.msra.mxu0 0.0
    %925 = vmatprep.subr.mxu0 0.0
    %926 = vmatpush1.msra.mxu0 0.0
    %927 = vmatprep.subr.mxu0 0.0
    %928 = vmatpush1.msra.mxu0 0.0
    %929 = vmatprep.subr.mxu0 0.0
    %930 = vmatpush1.msra.mxu0 0.0
    %931 = vmatprep.subr.mxu0 0.0
    %932 = vmatpush1.msra.mxu0 0.0
    %933 = vmatprep.subr.mxu0 0.0
    %934 = vmatpush1.msra.mxu0 0.0
    %935 = vmatprep.subr.mxu0 0.0
    %936 = vmatpush1.msra.mxu0 0.0
    %937 = vmatprep.subr.mxu0 0.0
    %938 = vmatpush1.msra.mxu0 0.0
    %939 = vmatprep.subr.mxu0 0.0
    %940 = vmatpush1.msra.mxu0 0.0
    %941 = vmatprep.subr.mxu0 0.0
    %942 = vmatpush1.msra.mxu0 0.0
    %943 = vmatprep.subr.mxu0 0.0
    %944 = vmatpush1.msra.mxu0 0.0
    %945 = vmatprep.subr.mxu0 0.0
    %946 = vmatpush1.msra.mxu0 0.0
    %947 = vmatprep.subr.mxu0 0.0
    %948 = vmatpush1.msra.mxu0 0.0
    %949 = vmatprep.subr.mxu0 0.0
    %950 = vmatpush1.msra.mxu0 0.0
    %951 = vmatprep.subr.mxu0 0.0
    %952 = vmatpush1.msra.mxu0 0.0
    %953 = vmatprep.subr.mxu0 0.0
    %954 = vmatpush1.msra.mxu0 0.0
    %955 = vmatprep.subr.mxu0 0.0
    %956 = vmatpush1.msra.mxu0 0.0
    %957 = vmatprep.subr.mxu0 0.0
    %958 = vmatpush1.msra.mxu0 0.0
    %959 = vmatprep.subr.mxu0 0.0
    %960 = vmatpush1.msra.mxu0 0.0
    %961 = vmatprep.subr.mxu0 0.0
    %962 = vmatpush1.msra.mxu0 0.0
    %963 = vmatprep.mubr.f32.mxu0 0.0
    %964 = vmatmul.mubr.f32.gmra.mrb[0].mxu0 %v848
    %v965 = vpop.f32.mrb[0].mxu0
    %v966 = vadd.f32 %v845, %v965
    %v967 = vpop.f32.mrb[0].mxu0
    %968 = vmatprep.mubr.f32.mxu0 0.0
    %969 = vmatmul.mubr.f32.gmra.mrb[0].mxu0 %v851
    %v970 = vpop.f32.mrb[0].mxu0
    %v971 = vadd.f32 %v845, %v970
    %v972 = vpop.f32.mrb[0].mxu0
    %973 = vmatprep.mubr.f32.mxu0 0.0
    %974 = vmatmul.mubr.f32.gmra.mrb[0].mxu0 %v854
    %v975 = vpop.f32.mrb[0].mxu0
    %v976 = vadd.f32 %v845, %v975
    %v977 = vpop.f32.mrb[0].mxu0
    %978 = vmatprep.mubr.f32.mxu0 0.0
    %979 = vmatmul.mubr.f32.gmra.mrb[0].mxu0 %v857
    %v980 = vpop.f32.mrb[0].mxu0
    %v981 = vadd.f32 %v845, %v980
    %v982 = vpop.f32.mrb[0].mxu0
    %983 = vmatprep.mubr.f32.mxu0 0.0
    %984 = vmatmul.mubr.f32.gmra.mrb[0].mxu0 %v860
    %v985 = vpop.f32.mrb[0].mxu0
    %v986 = vadd.f32 %v845, %v985
    %v987 = vpop.f32.mrb[0].mxu0
    %988 = vmatprep.mubr.f32.mxu0 0.0
    %989 = vmatmul.mubr.f32.gmra.mrb[0].mxu0 %v863
    %v990 = vpop.f32.mrb[0].mxu0
    %v991 = vadd.f32 %v845, %v990
    %v992 = vpop.f32.mrb[0].mxu0
    %993 = vmatprep.mubr.f32.mxu0 0.0
    %994 = vmatmul.mubr.f32.gmra.mrb[0].mxu0 %v866
    %v995 = vpop.f32.mrb[0].mxu0
    %v996 = vadd.f32 %v845, %v995
    %v997 = vpop.f32.mrb[0].mxu0
    %998 = vmatprep.mubr.f32.mxu0 0.0
    %999 = vmatmul.mubr.f32.gmra.mrb[0].mxu0 %v869
    %v1000 = vpop.f32.mrb[0].mxu0
    %v1001 = vadd.f32 %v845, %v1000
    %v1002 = vpop.f32.mrb[0].mxu0
    %1003 = vmatprep.mubr.f32.mxu0 0.0
    %1004 = vmatmul.mubr.f32.gmra.mrb[0].mxu0 %v872
    %v1005 = vpop.f32.mrb[0].mxu0
    %v1006 = vadd.f32 %v845, %v1005
    %v1007 = vpop.f32.mrb[0].mxu0
    %1008 = vmatprep.mubr.f32.mxu0 0.0
    %1009 = vmatmul.mubr.f32.gmra.mrb[0].mxu0 %v875
    %v1010 = vpop.f32.mrb[0].mxu0
    %v1011 = vadd.f32 %v845, %v1010
    %v1012 = vpop.f32.mrb[0].mxu0
    %1013 = vmatprep.mubr.f32.mxu0 0.0
    %1014 = vmatmul.mubr.f32.gmra.mrb[0].mxu0 %v878
    %v1015 = vpop.f32.mrb[0].mxu0
    %v1016 = vadd.f32 %v845, %v1015
    %v1017 = vpop.f32.mrb[0].mxu0
    %1018 = vmatprep.mubr.f32.mxu0 0.0
    %1019 = vmatmul.mubr.f32.gmra.mrb[0].mxu0 %v881
    %v1020 = vpop.f32.mrb[0].mxu0
    %v1021 = vadd.f32 %v845, %v1020
    %v1022 = vpop.f32.mrb[0].mxu0
    %1023 = vmatprep.mubr.f32.mxu0 0.0
    %1024 = vmatmul.mubr.f32.gmra.mrb[0].mxu0 %v884
    %v1025 = vpop.f32.mrb[0].mxu0
    %v1026 = vadd.f32 %v845, %v1025
    %v1027 = vpop.f32.mrb[0].mxu0
    %1028 = vmatprep.mubr.f32.mxu0 0.0
    %1029 = vmatmul.mubr.f32.gmra.mrb[0].mxu0 %v887
    %v1030 = vpop.f32.mrb[0].mxu0
    %v1031 = vadd.f32 %v845, %v1030
    %v1032 = vpop.f32.mrb[0].mxu0
    %1033 = vmatprep.mubr.f32.mxu0 0.0
    %1034 = vmatmul.mubr.f32.gmra.mrb[0].mxu0 %v890
    %v1035 = vpop.f32.mrb[0].mxu0
    %v1036 = vadd.f32 %v845, %v1035
    %v1037 = vpop.f32.mrb[0].mxu0
    %1038 = vmatprep.mubr.f32.mxu0 0.0
    %1039 = vmatmul.mubr.f32.gmra.mrb[0].mxu0 %v893
    %v1040 = vpop.f32.mrb[0].mxu0
    %v1041 = vadd.f32 %v845, %v1040
    %v1042 = vpop.f32.mrb[0].mxu0
    %1043 = vdwg.mxu0
    %v1044 = vmax.f32 %v966, 0.0
    %v1045 = vmax.f32 %v971, 0.0
    %v1046 = vmax.f32 %v976, 0.0
    %v1047 = vmax.f32 %v981, 0.0
    %v1048 = vmax.f32 %v986, 0.0
    %v1049 = vmax.f32 %v991, 0.0
    %v1050 = vmax.f32 %v996, 0.0
    %v1051 = vmax.f32 %v1001, 0.0
    %v1052 = vmax.f32 %v1006, 0.0
    %v1053 = vmax.f32 %v1011, 0.0
    %v1054 = vmax.f32 %v1016, 0.0
    %v1055 = vmax.f32 %v1021, 0.0
    %v1056 = vmax.f32 %v1026, 0.0
    %v1057 = vmax.f32 %v1031, 0.0
    %v1058 = vmax.f32 %v1036, 0.0
    %v1059 = vmax.f32 %v1041, 0.0
    %v1060 = vld [vmem:[%s1] sm:$0xff]
    %v1061 = vld [vmem:[%s1 + $0x8] sm:$0xff]
    %v1062 = vld [vmem:[%s1 + $0x10] sm:$0xff]
    %v1063 = vld [vmem:[%s1 + $0x18] sm:$0xff]
    %v1064 = vld [vmem:[%s1 + $0x20] sm:$0xff]
    %v1065 = vld [vmem:[%s1 + $0x28] sm:$0xff]
    %v1066 = vld [vmem:[%s1 + $0x30] sm:$0xff]
    %v1067 = vld [vmem:[%s1 + $0x38] sm:$0xff]
    %v1068 = vld [vmem:[%s1 + $0x40] sm:$0xff]
    %v1069 = vld [vmem:[%s1 + $0x48] sm:$0xff]
    %v1070 = vld [vmem:[%s1 + $0x50] sm:$0xff]
    %v1071 = vld [vmem:[%s1 + $0x58] sm:$0xff]
    %v1072 = vld [vmem:[%s1 + $0x60] sm:$0xff]
    %v1073 = vld [vmem:[%s1 + $0x68] sm:$0xff]
    %v1074 = vld [vmem:[%s1 + $0x70] sm:$0xff]
    %v1075 = vld [vmem:[%s1 + $0x78] sm:$0xff]
    %v1076 = vld [vmem:[%s1 + $0x80] sm:$0xff]
    %v1077 = vld [vmem:[%s1 + $0x88] sm:$0xff]
    %v1078 = vld [vmem:[%s1 + $0x90] sm:$0xff]
    %v1079 = vld [vmem:[%s1 + $0x98] sm:$0xff]
    %v1080 = vld [vmem:[%s1 + $0xa0] sm:$0xff]
    %v1081 = vld [vmem:[%s1 + $0xa8] sm:$0xff]
    %v1082 = vld [vmem:[%s1 + $0xb0] sm:$0xff]
    %v1083 = vld [vmem:[%s1 + $0xb8] sm:$0xff]
    %v1084 = vld [vmem:[%s1 + $0xc0] sm:$0xff]
    %v1085 = vld [vmem:[%s1 + $0xc8] sm:$0xff]
    %v1086 = vld [vmem:[%s1 + $0xd0] sm:$0xff]
    %v1087 = vld [vmem:[%s1 + $0xd8] sm:$0xff]
    %v1088 = vld [vmem:[%s1 + $0xe0] sm:$0xff]
    %v1089 = vld [vmem:[%s1 + $0xe8] sm:$0xff]
    %v1090 = vld [vmem:[%s1 + $0xf0] sm:$0xff]
    %v1091 = vld [vmem:[%s1 + $0xf8] sm:$0xff]
    %v1092 = vld [vmem:[%s1 + $0x100] sm:$0xff]
    %v1093 = vld [vmem:[%s1 + $0x108] sm:$0xff]
    %v1094 = vld [vmem:[%s1 + $0x110] sm:$0xff]
    %v1095 = vld [vmem:[%s1 + $0x118] sm:$0xff]
    %v1096 = vld [vmem:[%s1 + $0x120] sm:$0xff]
    %v1097 = vld [vmem:[%s1 + $0x128] sm:$0xff]
    %v1098 = vld [vmem:[%s1 + $0x130] sm:$0xff]
    %v1099 = vld [vmem:[%s1 + $0x138] sm:$0xff]
    %v1100 = vld [vmem:[%s1 + $0x140] sm:$0xff]
    %v1101 = vld [vmem:[%s1 + $0x148] sm:$0xff]
    %v1102 = vld [vmem:[%s1 + $0x150] sm:$0xff]
    %v1103 = vld [vmem:[%s1 + $0x158] sm:$0xff]
    %v1104 = vld [vmem:[%s1 + $0x160] sm:$0xff]
    %v1105 = vld [vmem:[%s1 + $0x168] sm:$0xff]
    %v1106 = vld [vmem:[%s1 + $0x170] sm:$0xff]
    %v1107 = vld [vmem:[%s1 + $0x178] sm:$0xff]
    %v1108 = vld [vmem:[%s4] sm:$0xf]
    %v1109 = vlaneseq
    %v1110 = vshrl.u32 %v1109, 7
    %v1111 = vsub.s32 1, %v1110
    %v1112 = vrot.slane %v24, %v1111
    %1114 = vrot.lane.b32.xlu0 %v1108, 96
    %v1115 = vpop.permute.xlu0 %1114
    %vm1116 = vcmask 31744
    %v1118 = vsel %vm1116, %v1060, 0
    %v1121 = vsel %vm1116, %v1061, 0
    %v1124 = vsel %vm1116, %v1062, 0
    %v1127 = vsel %vm1116, %v1063, 0
    %v1130 = vsel %vm1116, %v1064, 0
    %v1133 = vsel %vm1116, %v1065, 0
    %v1136 = vsel %vm1116, %v1066, 0
    %v1139 = vsel %vm1116, %v1067, 0
    %v1142 = vsel %vm1116, %v1068, 0
    %v1145 = vsel %vm1116, %v1069, 0
    %v1148 = vsel %vm1116, %v1070, 0
    %v1151 = vsel %vm1116, %v1071, 0
    %v1154 = vsel %vm1116, %v1072, 0
    %v1157 = vsel %vm1116, %v1073, 0
    %v1160 = vsel %vm1116, %v1074, 0
    %v1163 = vsel %vm1116, %v1075, 0
    %v1166 = vsel %vm1116, %v1076, 0
    %v1169 = vsel %vm1116, %v1077, 0
    %v1172 = vsel %vm1116, %v1078, 0
    %v1175 = vsel %vm1116, %v1079, 0
    %v1178 = vsel %vm1116, %v1080, 0
    %v1181 = vsel %vm1116, %v1081, 0
    %v1184 = vsel %vm1116, %v1082, 0
    %v1187 = vsel %vm1116, %v1083, 0
    %v1190 = vsel %vm1116, %v1084, 0
    %v1193 = vsel %vm1116, %v1085, 0
    %v1196 = vsel %vm1116, %v1086, 0
    %v1199 = vsel %vm1116, %v1087, 0
    %v1202 = vsel %vm1116, %v1088, 0
    %v1205 = vsel %vm1116, %v1089, 0
    %v1208 = vsel %vm1116, %v1090, 0
    %v1211 = vsel %vm1116, %v1091, 0
    %v1214 = vsel %vm1116, %v1092, 0
    %v1217 = vsel %vm1116, %v1093, 0
    %v1220 = vsel %vm1116, %v1094, 0
    %v1223 = vsel %vm1116, %v1095, 0
    %v1226 = vsel %vm1116, %v1096, 0
    %v1229 = vsel %vm1116, %v1097, 0
    %v1232 = vsel %vm1116, %v1098, 0
    %v1235 = vsel %vm1116, %v1099, 0
    %v1238 = vsel %vm1116, %v1100, 0
    %v1241 = vsel %vm1116, %v1101, 0
    %v1244 = vsel %vm1116, %v1102, 0
    %v1247 = vsel %vm1116, %v1103, 0
    %v1250 = vsel %vm1116, %v1104, 0
    %v1253 = vsel %vm1116, %v1105, 0
    %v1256 = vsel %vm1116, %v1106, 0
    %v1259 = vsel %vm1116, %v1107, 0
    %vm1261 = vcmask 1043456
    %v1262 = vsel %vm1261, %v1115, 0
    %1264 = vmatprep.subr.mxu0 0.0
    %1265 = vmatpush1.msra.mxu0 %v1262
    %1266 = vmatprep.subr.mxu0 0.0
    %1267 = vmatpush1.msra.mxu0 0.0
    %1268 = vmatprep.subr.mxu0 0.0
    %1269 = vmatpush1.msra.mxu0 0.0
    %1270 = vmatprep.subr.mxu0 0.0
    %1271 = vmatpush1.msra.mxu0 0.0
    %1272 = vmatprep.subr.mxu0 0.0
    %1273 = vmatpush1.msra.mxu0 0.0
    %1274 = vmatprep.subr.mxu0 0.0
    %1275 = vmatpush1.msra.mxu0 0.0
    %1276 = vmatprep.subr.mxu0 0.0
    %1277 = vmatpush1.msra.mxu0 0.0
    %1278 = vmatprep.subr.mxu0 0.0
    %1279 = vmatpush1.msra.mxu0 0.0
    %1280 = vmatprep.subr.mxu0 0.0
    %1281 = vmatpush1.msra.mxu0 0.0
    %1282 = vmatprep.subr.mxu0 0.0
    %1283 = vmatpush1.msra.mxu0 0.0
    %1284 = vmatprep.subr.mxu0 0.0
    %1285 = vmatpush1.msra.mxu0 0.0
    %1286 = vmatprep.subr.mxu0 0.0
    %1287 = vmatpush1.msra.mxu0 0.0
    %1288 = vmatprep.subr.mxu0 0.0
    %1289 = vmatpush1.msra.mxu0 0.0
    %1290 = vmatprep.subr.mxu0 0.0
    %1291 = vmatpush1.msra.mxu0 0.0
    %1292 = vmatprep.subr.mxu0 0.0
    %1293 = vmatpush1.msra.mxu0 0.0
    %1294 = vmatprep.subr.mxu0 0.0
    %1295 = vmatpush1.msra.mxu0 0.0
    %1296 = vmatprep.subr.mxu0 0.0
    %1297 = vmatpush1.msra.mxu0 0.0
    %1298 = vmatprep.subr.mxu0 0.0
    %1299 = vmatpush1.msra.mxu0 0.0
    %1300 = vmatprep.subr.mxu0 0.0
    %1301 = vmatpush1.msra.mxu0 0.0
    %1302 = vmatprep.subr.mxu0 0.0
    %1303 = vmatpush1.msra.mxu0 0.0
    %1304 = vmatprep.subr.mxu0 0.0
    %1305 = vmatpush1.msra.mxu0 0.0
    %1306 = vmatprep.subr.mxu0 0.0
    %1307 = vmatpush1.msra.mxu0 0.0
    %1308 = vmatprep.subr.mxu0 0.0
    %1309 = vmatpush1.msra.mxu0 0.0
    %1310 = vmatprep.subr.mxu0 0.0
    %1311 = vmatpush1.msra.mxu0 0.0
    %1312 = vmatprep.subr.mxu0 0.0
    %1313 = vmatpush1.msra.mxu0 0.0
    %1314 = vmatprep.subr.mxu0 0.0
    %1315 = vmatpush1.msra.mxu0 0.0
    %1316 = vmatprep.subr.mxu0 0.0
    %1317 = vmatpush1.msra.mxu0 0.0
    %1318 = vmatprep.subr.mxu0 0.0
    %1319 = vmatpush1.msra.mxu0 0.0
    %1320 = vmatprep.subr.mxu0 0.0
    %1321 = vmatpush1.msra.mxu0 0.0
    %1322 = vmatprep.subr.mxu0 0.0
    %1323 = vmatpush1.msra.mxu0 0.0
    %1324 = vmatprep.subr.mxu0 0.0
    %1325 = vmatpush1.msra.mxu0 0.0
    %1326 = vmatprep.subr.mxu0 0.0
    %1327 = vmatpush1.msra.mxu0 0.0
    %1328 = vmatprep.mubr.f32.mxu0 0.0
    %1329 = vmatmul.mubr.f32.gmra.mrb[0].mxu0 %v1118
    %v1330 = vpop.f32.mrb[0].mxu0
    %v1331 = vadd.f32 %v1112, %v1330
    %v1332 = vpop.f32.mrb[0].mxu0
    %1333 = vmatprep.mubr.f32.mxu0 0.0
    %1334 = vmatmul.mubr.f32.gmra.mrb[0].mxu0 %v1121
    %v1335 = vpop.f32.mrb[0].mxu0
    %v1336 = vadd.f32 %v1112, %v1335
    %v1337 = vpop.f32.mrb[0].mxu0
    %1338 = vmatprep.mubr.f32.mxu0 0.0
    %1339 = vmatmul.mubr.f32.gmra.mrb[0].mxu0 %v1124
    %v1340 = vpop.f32.mrb[0].mxu0
    %v1341 = vadd.f32 %v1112, %v1340
    %v1342 = vpop.f32.mrb[0].mxu0
    %1343 = vmatprep.mubr.f32.mxu0 0.0
    %1344 = vmatmul.mubr.f32.gmra.mrb[0].mxu0 %v1127
    %v1345 = vpop.f32.mrb[0].mxu0
    %v1346 = vadd.f32 %v1112, %v1345
    %v1347 = vpop.f32.mrb[0].mxu0
    %1348 = vmatprep.mubr.f32.mxu0 0.0
    %1349 = vmatmul.mubr.f32.gmra.mrb[0].mxu0 %v1130
    %v1350 = vpop.f32.mrb[0].mxu0
    %v1351 = vadd.f32 %v1112, %v1350
    %v1352 = vpop.f32.mrb[0].mxu0
    %1353 = vmatprep.mubr.f32.mxu0 0.0
    %1354 = vmatmul.mubr.f32.gmra.mrb[0].mxu0 %v1133
    %v1355 = vpop.f32.mrb[0].mxu0
    %v1356 = vadd.f32 %v1112, %v1355
    %v1357 = vpop.f32.mrb[0].mxu0
    %1358 = vmatprep.mubr.f32.mxu0 0.0
    %1359 = vmatmul.mubr.f32.gmra.mrb[0].mxu0 %v1136
    %v1360 = vpop.f32.mrb[0].mxu0
    %v1361 = vadd.f32 %v1112, %v1360
    %v1362 = vpop.f32.mrb[0].mxu0
    %1363 = vmatprep.mubr.f32.mxu0 0.0
    %1364 = vmatmul.mubr.f32.gmra.mrb[0].mxu0 %v1139
    %v1365 = vpop.f32.mrb[0].mxu0
    %v1366 = vadd.f32 %v1112, %v1365
    %v1367 = vpop.f32.mrb[0].mxu0
    %1368 = vmatprep.mubr.f32.mxu0 0.0
    %1369 = vmatmul.mubr.f32.gmra.mrb[0].mxu0 %v1142
    %v1370 = vpop.f32.mrb[0].mxu0
    %v1371 = vadd.f32 %v1112, %v1370
    %v1372 = vpop.f32.mrb[0].mxu0
    %1373 = vmatprep.mubr.f32.mxu0 0.0
    %1374 = vmatmul.mubr.f32.gmra.mrb[0].mxu0 %v1145
    %v1375 = vpop.f32.mrb[0].mxu0
    %v1376 = vadd.f32 %v1112, %v1375
    %v1377 = vpop.f32.mrb[0].mxu0
    %1378 = vmatprep.mubr.f32.mxu0 0.0
    %1379 = vmatmul.mubr.f32.gmra.mrb[0].mxu0 %v1148
    %v1380 = vpop.f32.mrb[0].mxu0
    %v1381 = vadd.f32 %v1112, %v1380
    %v1382 = vpop.f32.mrb[0].mxu0
    %1383 = vmatprep.mubr.f32.mxu0 0.0
    %1384 = vmatmul.mubr.f32.gmra.mrb[0].mxu0 %v1151
    %v1385 = vpop.f32.mrb[0].mxu0
    %v1386 = vadd.f32 %v1112, %v1385
    %v1387 = vpop.f32.mrb[0].mxu0
    %1388 = vmatprep.mubr.f32.mxu0 0.0
    %1389 = vmatmul.mubr.f32.gmra.mrb[0].mxu0 %v1154
    %v1390 = vpop.f32.mrb[0].mxu0
    %v1391 = vadd.f32 %v1112, %v1390
    %v1392 = vpop.f32.mrb[0].mxu0
    %1393 = vmatprep.mubr.f32.mxu0 0.0
    %1394 = vmatmul.mubr.f32.gmra.mrb[0].mxu0 %v1157
    %v1395 = vpop.f32.mrb[0].mxu0
    %v1396 = vadd.f32 %v1112, %v1395
    %v1397 = vpop.f32.mrb[0].mxu0
    %1398 = vmatprep.mubr.f32.mxu0 0.0
    %1399 = vmatmul.mubr.f32.gmra.mrb[0].mxu0 %v1160
    %v1400 = vpop.f32.mrb[0].mxu0
    %v1401 = vadd.f32 %v1112, %v1400
    %v1402 = vpop.f32.mrb[0].mxu0
    %1403 = vmatprep.mubr.f32.mxu0 0.0
    %1404 = vmatmul.mubr.f32.gmra.mrb[0].mxu0 %v1163
    %v1405 = vpop.f32.mrb[0].mxu0
    %v1406 = vadd.f32 %v1112, %v1405
    %v1407 = vpop.f32.mrb[0].mxu0
    %1408 = vmatprep.mubr.f32.mxu0 0.0
    %1409 = vmatmul.mubr.f32.gmra.mrb[0].mxu0 %v1166
    %v1410 = vpop.f32.mrb[0].mxu0
    %v1411 = vadd.f32 %v1112, %v1410
    %v1412 = vpop.f32.mrb[0].mxu0
    %1413 = vmatprep.mubr.f32.mxu0 0.0
    %1414 = vmatmul.mubr.f32.gmra.mrb[0].mxu0 %v1169
    %v1415 = vpop.f32.mrb[0].mxu0
    %v1416 = vadd.f32 %v1112, %v1415
    %v1417 = vpop.f32.mrb[0].mxu0
    %1418 = vmatprep.mubr.f32.mxu0 0.0
    %1419 = vmatmul.mubr.f32.gmra.mrb[0].mxu0 %v1172
    %v1420 = vpop.f32.mrb[0].mxu0
    %v1421 = vadd.f32 %v1112, %v1420
    %v1422 = vpop.f32.mrb[0].mxu0
    %1423 = vmatprep.mubr.f32.mxu0 0.0
    %1424 = vmatmul.mubr.f32.gmra.mrb[0].mxu0 %v1175
    %v1425 = vpop.f32.mrb[0].mxu0
    %v1426 = vadd.f32 %v1112, %v1425
    %v1427 = vpop.f32.mrb[0].mxu0
    %1428 = vmatprep.mubr.f32.mxu0 0.0
    %1429 = vmatmul.mubr.f32.gmra.mrb[0].mxu0 %v1178
    %v1430 = vpop.f32.mrb[0].mxu0
    %v1431 = vadd.f32 %v1112, %v1430
    %v1432 = vpop.f32.mrb[0].mxu0
    %1433 = vmatprep.mubr.f32.mxu0 0.0
    %1434 = vmatmul.mubr.f32.gmra.mrb[0].mxu0 %v1181
    %v1435 = vpop.f32.mrb[0].mxu0
    %v1436 = vadd.f32 %v1112, %v1435
    %v1437 = vpop.f32.mrb[0].mxu0
    %1438 = vmatprep.mubr.f32.mxu0 0.0
    %1439 = vmatmul.mubr.f32.gmra.mrb[0].mxu0 %v1184
    %v1440 = vpop.f32.mrb[0].mxu0
    %v1441 = vadd.f32 %v1112, %v1440
    %v1442 = vpop.f32.mrb[0].mxu0
    %1443 = vmatprep.mubr.f32.mxu0 0.0
    %1444 = vmatmul.mubr.f32.gmra.mrb[0].mxu0 %v1187
    %v1445 = vpop.f32.mrb[0].mxu0
    %v1446 = vadd.f32 %v1112, %v1445
    %v1447 = vpop.f32.mrb[0].mxu0
    %1448 = vmatprep.mubr.f32.mxu0 0.0
    %1449 = vmatmul.mubr.f32.gmra.mrb[0].mxu0 %v1190
    %v1450 = vpop.f32.mrb[0].mxu0
    %v1451 = vadd.f32 %v1112, %v1450
    %v1452 = vpop.f32.mrb[0].mxu0
    %1453 = vmatprep.mubr.f32.mxu0 0.0
    %1454 = vmatmul.mubr.f32.gmra.mrb[0].mxu0 %v1193
    %v1455 = vpop.f32.mrb[0].mxu0
    %v1456 = vadd.f32 %v1112, %v1455
    %v1457 = vpop.f32.mrb[0].mxu0
    %1458 = vmatprep.mubr.f32.mxu0 0.0
    %1459 = vmatmul.mubr.f32.gmra.mrb[0].mxu0 %v1196
    %v1460 = vpop.f32.mrb[0].mxu0
    %v1461 = vadd.f32 %v1112, %v1460
    %v1462 = vpop.f32.mrb[0].mxu0
    %1463 = vmatprep.mubr.f32.mxu0 0.0
    %1464 = vmatmul.mubr.f32.gmra.mrb[0].mxu0 %v1199
    %v1465 = vpop.f32.mrb[0].mxu0
    %v1466 = vadd.f32 %v1112, %v1465
    %v1467 = vpop.f32.mrb[0].mxu0
    %1468 = vmatprep.mubr.f32.mxu0 0.0
    %1469 = vmatmul.mubr.f32.gmra.mrb[0].mxu0 %v1202
    %v1470 = vpop.f32.mrb[0].mxu0
    %v1471 = vadd.f32 %v1112, %v1470
    %v1472 = vpop.f32.mrb[0].mxu0
    %1473 = vmatprep.mubr.f32.mxu0 0.0
    %1474 = vmatmul.mubr.f32.gmra.mrb[0].mxu0 %v1205
    %v1475 = vpop.f32.mrb[0].mxu0
    %v1476 = vadd.f32 %v1112, %v1475
    %v1477 = vpop.f32.mrb[0].mxu0
    %1478 = vmatprep.mubr.f32.mxu0 0.0
    %1479 = vmatmul.mubr.f32.gmra.mrb[0].mxu0 %v1208
    %v1480 = vpop.f32.mrb[0].mxu0
    %v1481 = vadd.f32 %v1112, %v1480
    %v1482 = vpop.f32.mrb[0].mxu0
    %1483 = vmatprep.mubr.f32.mxu0 0.0
    %1484 = vmatmul.mubr.f32.gmra.mrb[0].mxu0 %v1211
    %v1485 = vpop.f32.mrb[0].mxu0
    %v1486 = vadd.f32 %v1112, %v1485
    %v1487 = vpop.f32.mrb[0].mxu0
    %1488 = vmatprep.mubr.f32.mxu0 0.0
    %1489 = vmatmul.mubr.f32.gmra.mrb[0].mxu0 %v1214
    %v1490 = vpop.f32.mrb[0].mxu0
    %v1491 = vadd.f32 %v1112, %v1490
    %v1492 = vpop.f32.mrb[0].mxu0
    %1493 = vmatprep.mubr.f32.mxu0 0.0
    %1494 = vmatmul.mubr.f32.gmra.mrb[0].mxu0 %v1217
    %v1495 = vpop.f32.mrb[0].mxu0
    %v1496 = vadd.f32 %v1112, %v1495
    %v1497 = vpop.f32.mrb[0].mxu0
    %1498 = vmatprep.mubr.f32.mxu0 0.0
    %1499 = vmatmul.mubr.f32.gmra.mrb[0].mxu0 %v1220
    %v1500 = vpop.f32.mrb[0].mxu0
    %v1501 = vadd.f32 %v1112, %v1500
    %v1502 = vpop.f32.mrb[0].mxu0
    %1503 = vmatprep.mubr.f32.mxu0 0.0
    %1504 = vmatmul.mubr.f32.gmra.mrb[0].mxu0 %v1223
    %v1505 = vpop.f32.mrb[0].mxu0
    %v1506 = vadd.f32 %v1112, %v1505
    %v1507 = vpop.f32.mrb[0].mxu0
    %1508 = vmatprep.mubr.f32.mxu0 0.0
    %1509 = vmatmul.mubr.f32.gmra.mrb[0].mxu0 %v1226
    %v1510 = vpop.f32.mrb[0].mxu0
    %v1511 = vadd.f32 %v1112, %v1510
    %v1512 = vpop.f32.mrb[0].mxu0
    %1513 = vmatprep.mubr.f32.mxu0 0.0
    %1514 = vmatmul.mubr.f32.gmra.mrb[0].mxu0 %v1229
    %v1515 = vpop.f32.mrb[0].mxu0
    %v1516 = vadd.f32 %v1112, %v1515
    %v1517 = vpop.f32.mrb[0].mxu0
    %1518 = vmatprep.mubr.f32.mxu0 0.0
    %1519 = vmatmul.mubr.f32.gmra.mrb[0].mxu0 %v1232
    %v1520 = vpop.f32.mrb[0].mxu0
    %v1521 = vadd.f32 %v1112, %v1520
    %v1522 = vpop.f32.mrb[0].mxu0
    %1523 = vmatprep.mubr.f32.mxu0 0.0
    %1524 = vmatmul.mubr.f32.gmra.mrb[0].mxu0 %v1235
    %v1525 = vpop.f32.mrb[0].mxu0
    %v1526 = vadd.f32 %v1112, %v1525
    %v1527 = vpop.f32.mrb[0].mxu0
    %1528 = vmatprep.mubr.f32.mxu0 0.0
    %1529 = vmatmul.mubr.f32.gmra.mrb[0].mxu0 %v1238
    %v1530 = vpop.f32.mrb[0].mxu0
    %v1531 = vadd.f32 %v1112, %v1530
    %v1532 = vpop.f32.mrb[0].mxu0
    %1533 = vmatprep.mubr.f32.mxu0 0.0
    %1534 = vmatmul.mubr.f32.gmra.mrb[0].mxu0 %v1241
    %v1535 = vpop.f32.mrb[0].mxu0
    %v1536 = vadd.f32 %v1112, %v1535
    %v1537 = vpop.f32.mrb[0].mxu0
    %1538 = vmatprep.mubr.f32.mxu0 0.0
    %1539 = vmatmul.mubr.f32.gmra.mrb[0].mxu0 %v1244
    %v1540 = vpop.f32.mrb[0].mxu0
    %v1541 = vadd.f32 %v1112, %v1540
    %v1542 = vpop.f32.mrb[0].mxu0
    %1543 = vmatprep.mubr.f32.mxu0 0.0
    %1544 = vmatmul.mubr.f32.gmra.mrb[0].mxu0 %v1247
    %v1545 = vpop.f32.mrb[0].mxu0
    %v1546 = vadd.f32 %v1112, %v1545
    %v1547 = vpop.f32.mrb[0].mxu0
    %1548 = vmatprep.mubr.f32.mxu0 0.0
    %1549 = vmatmul.mubr.f32.gmra.mrb[0].mxu0 %v1250
    %v1550 = vpop.f32.mrb[0].mxu0
    %v1551 = vadd.f32 %v1112, %v1550
    %v1552 = vpop.f32.mrb[0].mxu0
    %1553 = vmatprep.mubr.f32.mxu0 0.0
    %1554 = vmatmul.mubr.f32.gmra.mrb[0].mxu0 %v1253
    %v1555 = vpop.f32.mrb[0].mxu0
    %v1556 = vadd.f32 %v1112, %v1555
    %v1557 = vpop.f32.mrb[0].mxu0
    %1558 = vmatprep.mubr.f32.mxu0 0.0
    %1559 = vmatmul.mubr.f32.gmra.mrb[0].mxu0 %v1256
    %v1560 = vpop.f32.mrb[0].mxu0
    %v1561 = vadd.f32 %v1112, %v1560
    %v1562 = vpop.f32.mrb[0].mxu0
    %1563 = vmatprep.mubr.f32.mxu0 0.0
    %1564 = vmatmul.mubr.f32.gmra.mrb[0].mxu0 %v1259
    %v1565 = vpop.f32.mrb[0].mxu0
    %v1566 = vadd.f32 %v1112, %v1565
    %v1567 = vpop.f32.mrb[0].mxu0
    %1568 = vdwg.mxu0
    %v1569 = vmax.f32 %v1331, 0.0
    %v1570 = vmax.f32 %v1336, 0.0
    %v1571 = vmax.f32 %v1341, 0.0
    %v1572 = vmax.f32 %v1346, 0.0
    %v1573 = vmax.f32 %v1351, 0.0
    %v1574 = vmax.f32 %v1356, 0.0
    %v1575 = vmax.f32 %v1361, 0.0
    %v1576 = vmax.f32 %v1366, 0.0
    %v1577 = vmax.f32 %v1371, 0.0
    %v1578 = vmax.f32 %v1376, 0.0
    %v1579 = vmax.f32 %v1381, 0.0
    %v1580 = vmax.f32 %v1386, 0.0
    %v1581 = vmax.f32 %v1391, 0.0
    %v1582 = vmax.f32 %v1396, 0.0
    %v1583 = vmax.f32 %v1401, 0.0
    %v1584 = vmax.f32 %v1406, 0.0
    %v1585 = vmax.f32 %v1411, 0.0
    %v1586 = vmax.f32 %v1416, 0.0
    %v1587 = vmax.f32 %v1421, 0.0
    %v1588 = vmax.f32 %v1426, 0.0
    %v1589 = vmax.f32 %v1431, 0.0
    %v1590 = vmax.f32 %v1436, 0.0
    %v1591 = vmax.f32 %v1441, 0.0
    %v1592 = vmax.f32 %v1446, 0.0
    %v1593 = vmax.f32 %v1451, 0.0
    %v1594 = vmax.f32 %v1456, 0.0
    %v1595 = vmax.f32 %v1461, 0.0
    %v1596 = vmax.f32 %v1466, 0.0
    %v1597 = vmax.f32 %v1471, 0.0
    %v1598 = vmax.f32 %v1476, 0.0
    %v1599 = vmax.f32 %v1481, 0.0
    %v1600 = vmax.f32 %v1486, 0.0
    %v1601 = vmax.f32 %v1491, 0.0
    %v1602 = vmax.f32 %v1496, 0.0
    %v1603 = vmax.f32 %v1501, 0.0
    %v1604 = vmax.f32 %v1506, 0.0
    %v1605 = vmax.f32 %v1511, 0.0
    %v1606 = vmax.f32 %v1516, 0.0
    %v1607 = vmax.f32 %v1521, 0.0
    %v1608 = vmax.f32 %v1526, 0.0
    %v1609 = vmax.f32 %v1531, 0.0
    %v1610 = vmax.f32 %v1536, 0.0
    %v1611 = vmax.f32 %v1541, 0.0
    %v1612 = vmax.f32 %v1546, 0.0
    %v1613 = vmax.f32 %v1551, 0.0
    %v1614 = vmax.f32 %v1556, 0.0
    %v1615 = vmax.f32 %v1561, 0.0
    %v1616 = vmax.f32 %v1566, 0.0
    %v1617 = vld [vmem:[%s4 + $0x20] sm:$0xff]
    %v1618 = vld [vmem:[%s4 + $0x28] sm:$0xff]
    %v1619 = vld [vmem:[%s4 + $0x30] sm:$0xff]
    %v1620 = vld [vmem:[%s4 + $0x38] sm:$0xff]
    %vm1621 = vcmask 261120
    %v1623 = vsel %vm1621, %v1044, 0
    %v1626 = vsel %vm1621, %v1045, 0
    %v1629 = vsel %vm1621, %v1046, 0
    %v1632 = vsel %vm1621, %v1047, 0
    %v1635 = vsel %vm1621, %v1048, 0
    %v1638 = vsel %vm1621, %v1049, 0
    %v1641 = vsel %vm1621, %v1050, 0
    %v1644 = vsel %vm1621, %v1051, 0
    %v1647 = vsel %vm1621, %v1052, 0
    %v1650 = vsel %vm1621, %v1053, 0
    %v1653 = vsel %vm1621, %v1054, 0
    %v1656 = vsel %vm1621, %v1055, 0
    %v1659 = vsel %vm1621, %v1056, 0
    %v1662 = vsel %vm1621, %v1057, 0
    %v1665 = vsel %vm1621, %v1058, 0
    %v1668 = vsel %vm1621, %v1059, 0
    %1670 = vmatprep.subr.mxu0 0.0
    %1671 = vmatpush1.msra.mxu0 %v1617
    %1672 = vmatprep.subr.mxu0 0.0
    %1673 = vmatpush1.msra.mxu0 %v1618
    %1674 = vmatprep.subr.mxu0 0.0
    %1675 = vmatpush1.msra.mxu0 %v1619
    %1676 = vmatprep.subr.mxu0 0.0
    %1677 = vmatpush1.msra.mxu0 %v1620
    %1678 = vmatprep.subr.mxu0 0.0
    %1679 = vmatpush1.msra.mxu0 0.0
    %1680 = vmatprep.subr.mxu0 0.0
    %1681 = vmatpush1.msra.mxu0 0.0
    %1682 = vmatprep.subr.mxu0 0.0
    %1683 = vmatpush1.msra.mxu0 0.0
    %1684 = vmatprep.subr.mxu0 0.0
    %1685 = vmatpush1.msra.mxu0 0.0
    %1686 = vmatprep.subr.mxu0 0.0
    %1687 = vmatpush1.msra.mxu0 0.0
    %1688 = vmatprep.subr.mxu0 0.0
    %1689 = vmatpush1.msra.mxu0 0.0
    %1690 = vmatprep.subr.mxu0 0.0
    %1691 = vmatpush1.msra.mxu0 0.0
    %1692 = vmatprep.subr.mxu0 0.0
    %1693 = vmatpush1.msra.mxu0 0.0
    %1694 = vmatprep.subr.mxu0 0.0
    %1695 = vmatpush1.msra.mxu0 0.0
    %1696 = vmatprep.subr.mxu0 0.0
    %1697 = vmatpush1.msra.mxu0 0.0
    %1698 = vmatprep.subr.mxu0 0.0
    %1699 = vmatpush1.msra.mxu0 0.0
    %1700 = vmatprep.subr.mxu0 0.0
    %1701 = vmatpush1.msra.mxu0 0.0
    %1702 = vmatprep.subr.mxu0 0.0
    %1703 = vmatpush1.msra.mxu0 0.0
    %1704 = vmatprep.subr.mxu0 0.0
    %1705 = vmatpush1.msra.mxu0 0.0
    %1706 = vmatprep.subr.mxu0 0.0
    %1707 = vmatpush1.msra.mxu0 0.0
    %1708 = vmatprep.subr.mxu0 0.0
    %1709 = vmatpush1.msra.mxu0 0.0
    %1710 = vmatprep.subr.mxu0 0.0
    %1711 = vmatpush1.msra.mxu0 0.0
    %1712 = vmatprep.subr.mxu0 0.0
    %1713 = vmatpush1.msra.mxu0 0.0
    %1714 = vmatprep.subr.mxu0 0.0
    %1715 = vmatpush1.msra.mxu0 0.0
    %1716 = vmatprep.subr.mxu0 0.0
    %1717 = vmatpush1.msra.mxu0 0.0
    %1718 = vmatprep.subr.mxu0 0.0
    %1719 = vmatpush1.msra.mxu0 0.0
    %1720 = vmatprep.subr.mxu0 0.0
    %1721 = vmatpush1.msra.mxu0 0.0
    %1722 = vmatprep.subr.mxu0 0.0
    %1723 = vmatpush1.msra.mxu0 0.0
    %1724 = vmatprep.subr.mxu0 0.0
    %1725 = vmatpush1.msra.mxu0 0.0
    %1726 = vmatprep.subr.mxu0 0.0
    %1727 = vmatpush1.msra.mxu0 0.0
    %1728 = vmatprep.subr.mxu0 0.0
    %1729 = vmatpush1.msra.mxu0 0.0
    %1730 = vmatprep.subr.mxu0 0.0
    %1731 = vmatpush1.msra.mxu0 0.0
    %1732 = vmatprep.subr.mxu0 0.0
    %1733 = vmatpush1.msra.mxu0 0.0
    %1734 = vmatprep.mubr.f32.mxu0 0.0
    %1735 = vmatmul.mubr.f32.gmra.mrb[0].mxu0 %v1623
    %v1736 = vpop.f32.mrb[0].mxu0
    %v1737 = vadd.f32 0.0, %v1736
    %v1738 = vpop.f32.mrb[0].mxu0
    %1739 = vmatprep.mubr.f32.mxu0 0.0
    %1740 = vmatmul.mubr.f32.gmra.mrb[0].mxu0 %v1626
    %v1741 = vpop.f32.mrb[0].mxu0
    %v1742 = vadd.f32 0.0, %v1741
    %v1743 = vpop.f32.mrb[0].mxu0
    %1744 = vmatprep.mubr.f32.mxu0 0.0
    %1745 = vmatmul.mubr.f32.gmra.mrb[0].mxu0 %v1629
    %v1746 = vpop.f32.mrb[0].mxu0
    %v1747 = vadd.f32 0.0, %v1746
    %v1748 = vpop.f32.mrb[0].mxu0
    %1749 = vmatprep.mubr.f32.mxu0 0.0
    %1750 = vmatmul.mubr.f32.gmra.mrb[0].mxu0 %v1632
    %v1751 = vpop.f32.mrb[0].mxu0
    %v1752 = vadd.f32 0.0, %v1751
    %v1753 = vpop.f32.mrb[0].mxu0
    %1754 = vmatprep.mubr.f32.mxu0 0.0
    %1755 = vmatmul.mubr.f32.gmra.mrb[0].mxu0 %v1635
    %v1756 = vpop.f32.mrb[0].mxu0
    %v1757 = vadd.f32 0.0, %v1756
    %v1758 = vpop.f32.mrb[0].mxu0
    %1759 = vmatprep.mubr.f32.mxu0 0.0
    %1760 = vmatmul.mubr.f32.gmra.mrb[0].mxu0 %v1638
    %v1761 = vpop.f32.mrb[0].mxu0
    %v1762 = vadd.f32 0.0, %v1761
    %v1763 = vpop.f32.mrb[0].mxu0
    %1764 = vmatprep.mubr.f32.mxu0 0.0
    %1765 = vmatmul.mubr.f32.gmra.mrb[0].mxu0 %v1641
    %v1766 = vpop.f32.mrb[0].mxu0
    %v1767 = vadd.f32 0.0, %v1766
    %v1768 = vpop.f32.mrb[0].mxu0
    %1769 = vmatprep.mubr.f32.mxu0 0.0
    %1770 = vmatmul.mubr.f32.gmra.mrb[0].mxu0 %v1644
    %v1771 = vpop.f32.mrb[0].mxu0
    %v1772 = vadd.f32 0.0, %v1771
    %v1773 = vpop.f32.mrb[0].mxu0
    %1774 = vmatprep.mubr.f32.mxu0 0.0
    %1775 = vmatmul.mubr.f32.gmra.mrb[0].mxu0 %v1647
    %v1776 = vpop.f32.mrb[0].mxu0
    %v1777 = vadd.f32 0.0, %v1776
    %v1778 = vpop.f32.mrb[0].mxu0
    %1779 = vmatprep.mubr.f32.mxu0 0.0
    %1780 = vmatmul.mubr.f32.gmra.mrb[0].mxu0 %v1650
    %v1781 = vpop.f32.mrb[0].mxu0
    %v1782 = vadd.f32 0.0, %v1781
    %v1783 = vpop.f32.mrb[0].mxu0
    %1784 = vmatprep.mubr.f32.mxu0 0.0
    %1785 = vmatmul.mubr.f32.gmra.mrb[0].mxu0 %v1653
    %v1786 = vpop.f32.mrb[0].mxu0
    %v1787 = vadd.f32 0.0, %v1786
    %v1788 = vpop.f32.mrb[0].mxu0
    %1789 = vmatprep.mubr.f32.mxu0 0.0
    %1790 = vmatmul.mubr.f32.gmra.mrb[0].mxu0 %v1656
    %v1791 = vpop.f32.mrb[0].mxu0
    %v1792 = vadd.f32 0.0, %v1791
    %v1793 = vpop.f32.mrb[0].mxu0
    %1794 = vmatprep.mubr.f32.mxu0 0.0
    %1795 = vmatmul.mubr.f32.gmra.mrb[0].mxu0 %v1659
    %v1796 = vpop.f32.mrb[0].mxu0
    %v1797 = vadd.f32 0.0, %v1796
    %v1798 = vpop.f32.mrb[0].mxu0
    %1799 = vmatprep.mubr.f32.mxu0 0.0
    %1800 = vmatmul.mubr.f32.gmra.mrb[0].mxu0 %v1662
    %v1801 = vpop.f32.mrb[0].mxu0
    %v1802 = vadd.f32 0.0, %v1801
    %v1803 = vpop.f32.mrb[0].mxu0
    %1804 = vmatprep.mubr.f32.mxu0 0.0
    %1805 = vmatmul.mubr.f32.gmra.mrb[0].mxu0 %v1665
    %v1806 = vpop.f32.mrb[0].mxu0
    %v1807 = vadd.f32 0.0, %v1806
    %v1808 = vpop.f32.mrb[0].mxu0
    %1809 = vmatprep.mubr.f32.mxu0 0.0
    %1810 = vmatmul.mubr.f32.gmra.mrb[0].mxu0 %v1668
    %v1811 = vpop.f32.mrb[0].mxu0
    %v1812 = vadd.f32 0.0, %v1811
    %v1813 = vpop.f32.mrb[0].mxu0
    %1814 = vdwg.mxu0
    %1819 = vrot.lane.b32.xlu0 %v1617, 96
    %v1820 = vpop.permute.xlu0 %1819
    %1821 = vrot.lane.b32.xlu0 %v1618, 96
    %v1822 = vpop.permute.xlu0 %1821
    %1823 = vrot.lane.b32.xlu0 %v1619, 96
    %v1824 = vpop.permute.xlu0 %1823
    %1825 = vrot.lane.b32.xlu0 %v1620, 96
    %v1826 = vpop.permute.xlu0 %1825
    %1831 = vmatprep.subr.mxu0 0.0
    %1832 = vmatpush1.msra.mxu0 %v1820
    %1833 = vmatprep.subr.mxu0 0.0
    %1834 = vmatpush1.msra.mxu0 %v1822
    %1835 = vmatprep.subr.mxu0 0.0
    %1836 = vmatpush1.msra.mxu0 %v1824
    %1837 = vmatprep.subr.mxu0 0.0
    %1838 = vmatpush1.msra.mxu0 %v1826
    %1839 = vmatprep.subr.mxu0 0.0
    %1840 = vmatpush1.msra.mxu0 0.0
    %1841 = vmatprep.subr.mxu0 0.0
    %1842 = vmatpush1.msra.mxu0 0.0
    %1843 = vmatprep.subr.mxu0 0.0
    %1844 = vmatpush1.msra.mxu0 0.0
    %1845 = vmatprep.subr.mxu0 0.0
    %1846 = vmatpush1.msra.mxu0 0.0
    %1847 = vmatprep.subr.mxu0 0.0
    %1848 = vmatpush1.msra.mxu0 0.0
    %1849 = vmatprep.subr.mxu0 0.0
    %1850 = vmatpush1.msra.mxu0 0.0
    %1851 = vmatprep.subr.mxu0 0.0
    %1852 = vmatpush1.msra.mxu0 0.0
    %1853 = vmatprep.subr.mxu0 0.0
    %1854 = vmatpush1.msra.mxu0 0.0
    %1855 = vmatprep.subr.mxu0 0.0
    %1856 = vmatpush1.msra.mxu0 0.0
    %1857 = vmatprep.subr.mxu0 0.0
    %1858 = vmatpush1.msra.mxu0 0.0
    %1859 = vmatprep.subr.mxu0 0.0
    %1860 = vmatpush1.msra.mxu0 0.0
    %1861 = vmatprep.subr.mxu0 0.0
    %1862 = vmatpush1.msra.mxu0 0.0
    %1863 = vmatprep.subr.mxu0 0.0
    %1864 = vmatpush1.msra.mxu0 0.0
    %1865 = vmatprep.subr.mxu0 0.0
    %1866 = vmatpush1.msra.mxu0 0.0
    %1867 = vmatprep.subr.mxu0 0.0
    %1868 = vmatpush1.msra.mxu0 0.0
    %1869 = vmatprep.subr.mxu0 0.0
    %1870 = vmatpush1.msra.mxu0 0.0
    %1871 = vmatprep.subr.mxu0 0.0
    %1872 = vmatpush1.msra.mxu0 0.0
    %1873 = vmatprep.subr.mxu0 0.0
    %1874 = vmatpush1.msra.mxu0 0.0
    %1875 = vmatprep.subr.mxu0 0.0
    %1876 = vmatpush1.msra.mxu0 0.0
    %1877 = vmatprep.subr.mxu0 0.0
    %1878 = vmatpush1.msra.mxu0 0.0
    %1879 = vmatprep.subr.mxu0 0.0
    %1880 = vmatpush1.msra.mxu0 0.0
    %1881 = vmatprep.subr.mxu0 0.0
    %1882 = vmatpush1.msra.mxu0 0.0
    %1883 = vmatprep.subr.mxu0 0.0
    %1884 = vmatpush1.msra.mxu0 0.0
    %1885 = vmatprep.subr.mxu0 0.0
    %1886 = vmatpush1.msra.mxu0 0.0
    %1887 = vmatprep.subr.mxu0 0.0
    %1888 = vmatpush1.msra.mxu0 0.0
    %1889 = vmatprep.subr.mxu0 0.0
    %1890 = vmatpush1.msra.mxu0 0.0
    %1891 = vmatprep.subr.mxu0 0.0
    %1892 = vmatpush1.msra.mxu0 0.0
    %1893 = vmatprep.subr.mxu0 0.0
    %1894 = vmatpush1.msra.mxu0 0.0
    %1895 = vmatprep.mubr.f32.mxu0 0.0
    %1896 = vmatmul.mubr.f32.gmra.mrb[0].mxu0 %v1623
    %v1897 = vpop.f32.mrb[0].mxu0
    %v1898 = vadd.f32 0.0, %v1897
    %v1899 = vpop.f32.mrb[0].mxu0
    %1900 = vmatprep.mubr.f32.mxu0 0.0
    %1901 = vmatmul.mubr.f32.gmra.mrb[0].mxu0 %v1626
    %v1902 = vpop.f32.mrb[0].mxu0
    %v1903 = vadd.f32 0.0, %v1902
    %v1904 = vpop.f32.mrb[0].mxu0
    %1905 = vmatprep.mubr.f32.mxu0 0.0
    %1906 = vmatmul.mubr.f32.gmra.mrb[0].mxu0 %v1629
    %v1907 = vpop.f32.mrb[0].mxu0
    %v1908 = vadd.f32 0.0, %v1907
    %v1909 = vpop.f32.mrb[0].mxu0
    %1910 = vmatprep.mubr.f32.mxu0 0.0
    %1911 = vmatmul.mubr.f32.gmra.mrb[0].mxu0 %v1632
    %v1912 = vpop.f32.mrb[0].mxu0
    %v1913 = vadd.f32 0.0, %v1912
    %v1914 = vpop.f32.mrb[0].mxu0
    %1915 = vmatprep.mubr.f32.mxu0 0.0
    %1916 = vmatmul.mubr.f32.gmra.mrb[0].mxu0 %v1635
    %v1917 = vpop.f32.mrb[0].mxu0
    %v1918 = vadd.f32 0.0, %v1917
    %v1919 = vpop.f32.mrb[0].mxu0
    %1920 = vmatprep.mubr.f32.mxu0 0.0
    %1921 = vmatmul.mubr.f32.gmra.mrb[0].mxu0 %v1638
    %v1922 = vpop.f32.mrb[0].mxu0
    %v1923 = vadd.f32 0.0, %v1922
    %v1924 = vpop.f32.mrb[0].mxu0
    %1925 = vmatprep.mubr.f32.mxu0 0.0
    %1926 = vmatmul.mubr.f32.gmra.mrb[0].mxu0 %v1641
    %v1927 = vpop.f32.mrb[0].mxu0
    %v1928 = vadd.f32 0.0, %v1927
    %v1929 = vpop.f32.mrb[0].mxu0
    %1930 = vmatprep.mubr.f32.mxu0 0.0
    %1931 = vmatmul.mubr.f32.gmra.mrb[0].mxu0 %v1644
    %v1932 = vpop.f32.mrb[0].mxu0
    %v1933 = vadd.f32 0.0, %v1932
    %v1934 = vpop.f32.mrb[0].mxu0
    %1935 = vmatprep.mubr.f32.mxu0 0.0
    %1936 = vmatmul.mubr.f32.gmra.mrb[0].mxu0 %v1647
    %v1937 = vpop.f32.mrb[0].mxu0
    %v1938 = vadd.f32 0.0, %v1937
    %v1939 = vpop.f32.mrb[0].mxu0
    %1940 = vmatprep.mubr.f32.mxu0 0.0
    %1941 = vmatmul.mubr.f32.gmra.mrb[0].mxu0 %v1650
    %v1942 = vpop.f32.mrb[0].mxu0
    %v1943 = vadd.f32 0.0, %v1942
    %v1944 = vpop.f32.mrb[0].mxu0
    %1945 = vmatprep.mubr.f32.mxu0 0.0
    %1946 = vmatmul.mubr.f32.gmra.mrb[0].mxu0 %v1653
    %v1947 = vpop.f32.mrb[0].mxu0
    %v1948 = vadd.f32 0.0, %v1947
    %v1949 = vpop.f32.mrb[0].mxu0
    %1950 = vmatprep.mubr.f32.mxu0 0.0
    %1951 = vmatmul.mubr.f32.gmra.mrb[0].mxu0 %v1656
    %v1952 = vpop.f32.mrb[0].mxu0
    %v1953 = vadd.f32 0.0, %v1952
    %v1954 = vpop.f32.mrb[0].mxu0
    %1955 = vmatprep.mubr.f32.mxu0 0.0
    %1956 = vmatmul.mubr.f32.gmra.mrb[0].mxu0 %v1659
    %v1957 = vpop.f32.mrb[0].mxu0
    %v1958 = vadd.f32 0.0, %v1957
    %v1959 = vpop.f32.mrb[0].mxu0
    %1960 = vmatprep.mubr.f32.mxu0 0.0
    %1961 = vmatmul.mubr.f32.gmra.mrb[0].mxu0 %v1662
    %v1962 = vpop.f32.mrb[0].mxu0
    %v1963 = vadd.f32 0.0, %v1962
    %v1964 = vpop.f32.mrb[0].mxu0
    %1965 = vmatprep.mubr.f32.mxu0 0.0
    %1966 = vmatmul.mubr.f32.gmra.mrb[0].mxu0 %v1665
    %v1967 = vpop.f32.mrb[0].mxu0
    %v1968 = vadd.f32 0.0, %v1967
    %v1969 = vpop.f32.mrb[0].mxu0
    %1970 = vmatprep.mubr.f32.mxu0 0.0
    %1971 = vmatmul.mubr.f32.gmra.mrb[0].mxu0 %v1668
    %v1972 = vpop.f32.mrb[0].mxu0
    %v1973 = vadd.f32 0.0, %v1972
    %v1974 = vpop.f32.mrb[0].mxu0
    %1975 = vdwg.mxu0
    %1976 = vmatprep.subr.mxu0 0.0
    %1977 = vmatpush1.msra.mxu0 %v1898
    %1978 = vmatprep.subr.mxu0 0.0
    %1979 = vmatpush1.msra.mxu0 %v1903
    %1980 = vmatprep.subr.mxu0 0.0
    %1981 = vmatpush1.msra.mxu0 %v1908
    %1982 = vmatprep.subr.mxu0 0.0
    %1983 = vmatpush1.msra.mxu0 %v1913
    %1984 = vmatprep.subr.mxu0 0.0
    %1985 = vmatpush1.msra.mxu0 %v1918
    %1986 = vmatprep.subr.mxu0 0.0
    %1987 = vmatpush1.msra.mxu0 %v1923
    %1988 = vmatprep.subr.mxu0 0.0
    %1989 = vmatpush1.msra.mxu0 %v1928
    %1990 = vmatprep.subr.mxu0 0.0
    %1991 = vmatpush1.msra.mxu0 %v1933
    %1992 = vmatprep.subr.mxu0 0.0
    %1993 = vmatpush1.msra.mxu0 %v1938
    %1994 = vmatprep.subr.mxu0 0.0
    %1995 = vmatpush1.msra.mxu0 %v1943
    %1996 = vmatprep.subr.mxu0 0.0
    %1997 = vmatpush1.msra.mxu0 %v1948
    %1998 = vmatprep.subr.mxu0 0.0
    %1999 = vmatpush1.msra.mxu0 %v1953
    %2000 = vmatprep.subr.mxu0 0.0
    %2001 = vmatpush1.msra.mxu0 %v1958
    %2002 = vmatprep.subr.mxu0 0.0
    %2003 = vmatpush1.msra.mxu0 %v1963
    %2004 = vmatprep.subr.mxu0 0.0
    %2005 = vmatpush1.msra.mxu0 %v1968
    %2006 = vmatprep.subr.mxu0 0.0
    %2007 = vmatpush1.msra.mxu0 %v1973
    %2008 = vmatprep.subr.mxu0 0.0
    %2009 = vmatpush1.msra.mxu0 0.0
    %2010 = vmatprep.subr.mxu0 0.0
    %2011 = vmatpush1.msra.mxu0 0.0
    %2012 = vmatprep.subr.mxu0 0.0
    %2013 = vmatpush1.msra.mxu0 0.0
    %2014 = vmatprep.subr.mxu0 0.0
    %2015 = vmatpush1.msra.mxu0 0.0
    %2016 = vmatprep.subr.mxu0 0.0
    %2017 = vmatpush1.msra.mxu0 0.0
    %2018 = vmatprep.subr.mxu0 0.0
    %2019 = vmatpush1.msra.mxu0 0.0
    %2020 = vmatprep.subr.mxu0 0.0
    %2021 = vmatpush1.msra.mxu0 0.0
    %2022 = vmatprep.subr.mxu0 0.0
    %2023 = vmatpush1.msra.mxu0 0.0
    %2024 = vmatprep.subr.mxu0 0.0
    %2025 = vmatpush1.msra.mxu0 0.0
    %2026 = vmatprep.subr.mxu0 0.0
    %2027 = vmatpush1.msra.mxu0 0.0
    %2028 = vmatprep.subr.mxu0 0.0
    %2029 = vmatpush1.msra.mxu0 0.0
    %2030 = vmatprep.subr.mxu0 0.0
    %2031 = vmatpush1.msra.mxu0 0.0
    %2032 = vmatprep.subr.mxu0 0.0
    %2033 = vmatpush1.msra.mxu0 0.0
    %2034 = vmatprep.subr.mxu0 0.0
    %2035 = vmatpush1.msra.mxu0 0.0
    %2036 = vmatprep.subr.mxu0 0.0
    %2037 = vmatpush1.msra.mxu0 0.0
    %2038 = vmatprep.subr.mxu0 0.0
    %2039 = vmatpush1.msra.mxu0 0.0
    %2040 = vmatprep.mubr.f32.mxu0 0.0
    %2041 = vmatmul.mubr.f32.gmra.mrb[0].mxu0 %v603
    %v2042 = vpop.f32.mrb[0].mxu0
    %v2043 = vadd.f32 0.0, %v2042
    %v2044 = vpop.f32.mrb[0].mxu0
    %2045 = vmatprep.mubr.f32.mxu0 0.0
    %2046 = vmatmul.mubr.f32.gmra.mrb[0].mxu0 %v604
    %v2047 = vpop.f32.mrb[0].mxu0
    %v2048 = vadd.f32 0.0, %v2047
    %v2049 = vpop.f32.mrb[0].mxu0
    %2050 = vmatprep.mubr.f32.mxu0 0.0
    %2051 = vmatmul.mubr.f32.gmra.mrb[0].mxu0 %v605
    %v2052 = vpop.f32.mrb[0].mxu0
    %v2053 = vadd.f32 0.0, %v2052
    %v2054 = vpop.f32.mrb[0].mxu0
    %2055 = vmatprep.mubr.f32.mxu0 0.0
    %2056 = vmatmul.mubr.f32.gmra.mrb[0].mxu0 %v606
    %v2057 = vpop.f32.mrb[0].mxu0
    %v2058 = vadd.f32 0.0, %v2057
    %v2059 = vpop.f32.mrb[0].mxu0
    %2060 = vmatprep.mubr.f32.mxu0 0.0
    %2061 = vmatmul.mubr.f32.gmra.mrb[0].mxu0 %v607
    %v2062 = vpop.f32.mrb[0].mxu0
    %v2063 = vadd.f32 0.0, %v2062
    %v2064 = vpop.f32.mrb[0].mxu0
    %2065 = vmatprep.mubr.f32.mxu0 0.0
    %2066 = vmatmul.mubr.f32.gmra.mrb[0].mxu0 %v608
    %v2067 = vpop.f32.mrb[0].mxu0
    %v2068 = vadd.f32 0.0, %v2067
    %v2069 = vpop.f32.mrb[0].mxu0
    %2070 = vmatprep.mubr.f32.mxu0 0.0
    %2071 = vmatmul.mubr.f32.gmra.mrb[0].mxu0 %v609
    %v2072 = vpop.f32.mrb[0].mxu0
    %v2073 = vadd.f32 0.0, %v2072
    %v2074 = vpop.f32.mrb[0].mxu0
    %2075 = vmatprep.mubr.f32.mxu0 0.0
    %2076 = vmatmul.mubr.f32.gmra.mrb[0].mxu0 %v610
    %v2077 = vpop.f32.mrb[0].mxu0
    %v2078 = vadd.f32 0.0, %v2077
    %v2079 = vpop.f32.mrb[0].mxu0
    %2080 = vmatprep.mubr.f32.mxu0 0.0
    %2081 = vmatmul.mubr.f32.gmra.mrb[0].mxu0 %v611
    %v2082 = vpop.f32.mrb[0].mxu0
    %v2083 = vadd.f32 0.0, %v2082
    %v2084 = vpop.f32.mrb[0].mxu0
    %2085 = vmatprep.mubr.f32.mxu0 0.0
    %2086 = vmatmul.mubr.f32.gmra.mrb[0].mxu0 %v612
    %v2087 = vpop.f32.mrb[0].mxu0
    %v2088 = vadd.f32 0.0, %v2087
    %v2089 = vpop.f32.mrb[0].mxu0
    %2090 = vmatprep.mubr.f32.mxu0 0.0
    %2091 = vmatmul.mubr.f32.gmra.mrb[0].mxu0 %v613
    %v2092 = vpop.f32.mrb[0].mxu0
    %v2093 = vadd.f32 0.0, %v2092
    %v2094 = vpop.f32.mrb[0].mxu0
    %2095 = vmatprep.mubr.f32.mxu0 0.0
    %2096 = vmatmul.mubr.f32.gmra.mrb[0].mxu0 %v614
    %v2097 = vpop.f32.mrb[0].mxu0
    %v2098 = vadd.f32 0.0, %v2097
    %v2099 = vpop.f32.mrb[0].mxu0
    %2100 = vmatprep.mubr.f32.mxu0 0.0
    %2101 = vmatmul.mubr.f32.gmra.mrb[0].mxu0 %v615
    %v2102 = vpop.f32.mrb[0].mxu0
    %v2103 = vadd.f32 0.0, %v2102
    %v2104 = vpop.f32.mrb[0].mxu0
    %2105 = vmatprep.mubr.f32.mxu0 0.0
    %2106 = vmatmul.mubr.f32.gmra.mrb[0].mxu0 %v616
    %v2107 = vpop.f32.mrb[0].mxu0
    %v2108 = vadd.f32 0.0, %v2107
    %v2109 = vpop.f32.mrb[0].mxu0
    %2110 = vmatprep.mubr.f32.mxu0 0.0
    %2111 = vmatmul.mubr.f32.gmra.mrb[0].mxu0 %v617
    %v2112 = vpop.f32.mrb[0].mxu0
    %v2113 = vadd.f32 0.0, %v2112
    %v2114 = vpop.f32.mrb[0].mxu0
    %2115 = vmatprep.mubr.f32.mxu0 0.0
    %2116 = vmatmul.mubr.f32.gmra.mrb[0].mxu0 %v618
    %v2117 = vpop.f32.mrb[0].mxu0
    %v2118 = vadd.f32 0.0, %v2117
    %v2119 = vpop.f32.mrb[0].mxu0
    %2120 = vmatprep.mubr.f32.mxu0 0.0
    %2121 = vmatmul.mubr.f32.gmra.mrb[0].mxu0 %v619
    %v2122 = vpop.f32.mrb[0].mxu0
    %v2123 = vadd.f32 0.0, %v2122
    %v2124 = vpop.f32.mrb[0].mxu0
    %2125 = vmatprep.mubr.f32.mxu0 0.0
    %2126 = vmatmul.mubr.f32.gmra.mrb[0].mxu0 %v620
    %v2127 = vpop.f32.mrb[0].mxu0
    %v2128 = vadd.f32 0.0, %v2127
    %v2129 = vpop.f32.mrb[0].mxu0
    %2130 = vmatprep.mubr.f32.mxu0 0.0
    %2131 = vmatmul.mubr.f32.gmra.mrb[0].mxu0 %v621
    %v2132 = vpop.f32.mrb[0].mxu0
    %v2133 = vadd.f32 0.0, %v2132
    %v2134 = vpop.f32.mrb[0].mxu0
    %2135 = vmatprep.mubr.f32.mxu0 0.0
    %2136 = vmatmul.mubr.f32.gmra.mrb[0].mxu0 %v622
    %v2137 = vpop.f32.mrb[0].mxu0
    %v2138 = vadd.f32 0.0, %v2137
    %v2139 = vpop.f32.mrb[0].mxu0
    %2140 = vmatprep.mubr.f32.mxu0 0.0
    %2141 = vmatmul.mubr.f32.gmra.mrb[0].mxu0 %v623
    %v2142 = vpop.f32.mrb[0].mxu0
    %v2143 = vadd.f32 0.0, %v2142
    %v2144 = vpop.f32.mrb[0].mxu0
    %2145 = vmatprep.mubr.f32.mxu0 0.0
    %2146 = vmatmul.mubr.f32.gmra.mrb[0].mxu0 %v624
    %v2147 = vpop.f32.mrb[0].mxu0
    %v2148 = vadd.f32 0.0, %v2147
    %v2149 = vpop.f32.mrb[0].mxu0
    %2150 = vmatprep.mubr.f32.mxu0 0.0
    %2151 = vmatmul.mubr.f32.gmra.mrb[0].mxu0 %v625
    %v2152 = vpop.f32.mrb[0].mxu0
    %v2153 = vadd.f32 0.0, %v2152
    %v2154 = vpop.f32.mrb[0].mxu0
    %2155 = vmatprep.mubr.f32.mxu0 0.0
    %2156 = vmatmul.mubr.f32.gmra.mrb[0].mxu0 %v626
    %v2157 = vpop.f32.mrb[0].mxu0
    %v2158 = vadd.f32 0.0, %v2157
    %v2159 = vpop.f32.mrb[0].mxu0
    %2160 = vmatprep.mubr.f32.mxu0 0.0
    %2161 = vmatmul.mubr.f32.gmra.mrb[0].mxu0 %v627
    %v2162 = vpop.f32.mrb[0].mxu0
    %v2163 = vadd.f32 0.0, %v2162
    %v2164 = vpop.f32.mrb[0].mxu0
    %2165 = vmatprep.mubr.f32.mxu0 0.0
    %2166 = vmatmul.mubr.f32.gmra.mrb[0].mxu0 %v628
    %v2167 = vpop.f32.mrb[0].mxu0
    %v2168 = vadd.f32 0.0, %v2167
    %v2169 = vpop.f32.mrb[0].mxu0
    %2170 = vmatprep.mubr.f32.mxu0 0.0
    %2171 = vmatmul.mubr.f32.gmra.mrb[0].mxu0 %v629
    %v2172 = vpop.f32.mrb[0].mxu0
    %v2173 = vadd.f32 0.0, %v2172
    %v2174 = vpop.f32.mrb[0].mxu0
    %2175 = vmatprep.mubr.f32.mxu0 0.0
    %2176 = vmatmul.mubr.f32.gmra.mrb[0].mxu0 %v630
    %v2177 = vpop.f32.mrb[0].mxu0
    %v2178 = vadd.f32 0.0, %v2177
    %v2179 = vpop.f32.mrb[0].mxu0
    %2180 = vmatprep.mubr.f32.mxu0 0.0
    %2181 = vmatmul.mubr.f32.gmra.mrb[0].mxu0 %v631
    %v2182 = vpop.f32.mrb[0].mxu0
    %v2183 = vadd.f32 0.0, %v2182
    %v2184 = vpop.f32.mrb[0].mxu0
    %2185 = vmatprep.mubr.f32.mxu0 0.0
    %2186 = vmatmul.mubr.f32.gmra.mrb[0].mxu0 %v632
    %v2187 = vpop.f32.mrb[0].mxu0
    %v2188 = vadd.f32 0.0, %v2187
    %v2189 = vpop.f32.mrb[0].mxu0
    %2190 = vmatprep.mubr.f32.mxu0 0.0
    %2191 = vmatmul.mubr.f32.gmra.mrb[0].mxu0 %v633
    %v2192 = vpop.f32.mrb[0].mxu0
    %v2193 = vadd.f32 0.0, %v2192
    %v2194 = vpop.f32.mrb[0].mxu0
    %2195 = vmatprep.mubr.f32.mxu0 0.0
    %2196 = vmatmul.mubr.f32.gmra.mrb[0].mxu0 %v634
    %v2197 = vpop.f32.mrb[0].mxu0
    %v2198 = vadd.f32 0.0, %v2197
    %v2199 = vpop.f32.mrb[0].mxu0
    %2200 = vmatprep.mubr.f32.mxu0 0.0
    %2201 = vmatmul.mubr.f32.gmra.mrb[0].mxu0 %v635
    %v2202 = vpop.f32.mrb[0].mxu0
    %v2203 = vadd.f32 0.0, %v2202
    %v2204 = vpop.f32.mrb[0].mxu0
    %2205 = vmatprep.mubr.f32.mxu0 0.0
    %2206 = vmatmul.mubr.f32.gmra.mrb[0].mxu0 %v636
    %v2207 = vpop.f32.mrb[0].mxu0
    %v2208 = vadd.f32 0.0, %v2207
    %v2209 = vpop.f32.mrb[0].mxu0
    %2210 = vmatprep.mubr.f32.mxu0 0.0
    %2211 = vmatmul.mubr.f32.gmra.mrb[0].mxu0 %v637
    %v2212 = vpop.f32.mrb[0].mxu0
    %v2213 = vadd.f32 0.0, %v2212
    %v2214 = vpop.f32.mrb[0].mxu0
    %2215 = vmatprep.mubr.f32.mxu0 0.0
    %2216 = vmatmul.mubr.f32.gmra.mrb[0].mxu0 %v638
    %v2217 = vpop.f32.mrb[0].mxu0
    %v2218 = vadd.f32 0.0, %v2217
    %v2219 = vpop.f32.mrb[0].mxu0
    %2220 = vmatprep.mubr.f32.mxu0 0.0
    %2221 = vmatmul.mubr.f32.gmra.mrb[0].mxu0 %v639
    %v2222 = vpop.f32.mrb[0].mxu0
    %v2223 = vadd.f32 0.0, %v2222
    %v2224 = vpop.f32.mrb[0].mxu0
    %2225 = vmatprep.mubr.f32.mxu0 0.0
    %2226 = vmatmul.mubr.f32.gmra.mrb[0].mxu0 %v640
    %v2227 = vpop.f32.mrb[0].mxu0
    %v2228 = vadd.f32 0.0, %v2227
    %v2229 = vpop.f32.mrb[0].mxu0
    %2230 = vmatprep.mubr.f32.mxu0 0.0
    %2231 = vmatmul.mubr.f32.gmra.mrb[0].mxu0 %v641
    %v2232 = vpop.f32.mrb[0].mxu0
    %v2233 = vadd.f32 0.0, %v2232
    %v2234 = vpop.f32.mrb[0].mxu0
    %2235 = vmatprep.mubr.f32.mxu0 0.0
    %2236 = vmatmul.mubr.f32.gmra.mrb[0].mxu0 %v642
    %v2237 = vpop.f32.mrb[0].mxu0
    %v2238 = vadd.f32 0.0, %v2237
    %v2239 = vpop.f32.mrb[0].mxu0
    %2240 = vmatprep.mubr.f32.mxu0 0.0
    %2241 = vmatmul.mubr.f32.gmra.mrb[0].mxu0 %v643
    %v2242 = vpop.f32.mrb[0].mxu0
    %v2243 = vadd.f32 0.0, %v2242
    %v2244 = vpop.f32.mrb[0].mxu0
    %2245 = vmatprep.mubr.f32.mxu0 0.0
    %2246 = vmatmul.mubr.f32.gmra.mrb[0].mxu0 %v644
    %v2247 = vpop.f32.mrb[0].mxu0
    %v2248 = vadd.f32 0.0, %v2247
    %v2249 = vpop.f32.mrb[0].mxu0
    %2250 = vmatprep.mubr.f32.mxu0 0.0
    %2251 = vmatmul.mubr.f32.gmra.mrb[0].mxu0 %v645
    %v2252 = vpop.f32.mrb[0].mxu0
    %v2253 = vadd.f32 0.0, %v2252
    %v2254 = vpop.f32.mrb[0].mxu0
    %2255 = vmatprep.mubr.f32.mxu0 0.0
    %2256 = vmatmul.mubr.f32.gmra.mrb[0].mxu0 %v646
    %v2257 = vpop.f32.mrb[0].mxu0
    %v2258 = vadd.f32 0.0, %v2257
    %v2259 = vpop.f32.mrb[0].mxu0
    %2260 = vmatprep.mubr.f32.mxu0 0.0
    %2261 = vmatmul.mubr.f32.gmra.mrb[0].mxu0 %v647
    %v2262 = vpop.f32.mrb[0].mxu0
    %v2263 = vadd.f32 0.0, %v2262
    %v2264 = vpop.f32.mrb[0].mxu0
    %2265 = vmatprep.mubr.f32.mxu0 0.0
    %2266 = vmatmul.mubr.f32.gmra.mrb[0].mxu0 %v648
    %v2267 = vpop.f32.mrb[0].mxu0
    %v2268 = vadd.f32 0.0, %v2267
    %v2269 = vpop.f32.mrb[0].mxu0
    %2270 = vmatprep.mubr.f32.mxu0 0.0
    %2271 = vmatmul.mubr.f32.gmra.mrb[0].mxu0 %v649
    %v2272 = vpop.f32.mrb[0].mxu0
    %v2273 = vadd.f32 0.0, %v2272
    %v2274 = vpop.f32.mrb[0].mxu0
    %2275 = vmatprep.mubr.f32.mxu0 0.0
    %2276 = vmatmul.mubr.f32.gmra.mrb[0].mxu0 %v650
    %v2277 = vpop.f32.mrb[0].mxu0
    %v2278 = vadd.f32 0.0, %v2277
    %v2279 = vpop.f32.mrb[0].mxu0
    %2280 = vdwg.mxu0
    %2281 = vmatprep.subr.mxu0 0.0
    %2282 = vmatpush1.msra.mxu0 %v1737
    %2283 = vmatprep.subr.mxu0 0.0
    %2284 = vmatpush1.msra.mxu0 %v1742
    %2285 = vmatprep.subr.mxu0 0.0
    %2286 = vmatpush1.msra.mxu0 %v1747
    %2287 = vmatprep.subr.mxu0 0.0
    %2288 = vmatpush1.msra.mxu0 %v1752
    %2289 = vmatprep.subr.mxu0 0.0
    %2290 = vmatpush1.msra.mxu0 %v1757
    %2291 = vmatprep.subr.mxu0 0.0
    %2292 = vmatpush1.msra.mxu0 %v1762
    %2293 = vmatprep.subr.mxu0 0.0
    %2294 = vmatpush1.msra.mxu0 %v1767
    %2295 = vmatprep.subr.mxu0 0.0
    %2296 = vmatpush1.msra.mxu0 %v1772
    %2297 = vmatprep.subr.mxu0 0.0
    %2298 = vmatpush1.msra.mxu0 %v1777
    %2299 = vmatprep.subr.mxu0 0.0
    %2300 = vmatpush1.msra.mxu0 %v1782
    %2301 = vmatprep.subr.mxu0 0.0
    %2302 = vmatpush1.msra.mxu0 %v1787
    %2303 = vmatprep.subr.mxu0 0.0
    %2304 = vmatpush1.msra.mxu0 %v1792
    %2305 = vmatprep.subr.mxu0 0.0
    %2306 = vmatpush1.msra.mxu0 %v1797
    %2307 = vmatprep.subr.mxu0 0.0
    %2308 = vmatpush1.msra.mxu0 %v1802
    %2309 = vmatprep.subr.mxu0 0.0
    %2310 = vmatpush1.msra.mxu0 %v1807
    %2311 = vmatprep.subr.mxu0 0.0
    %2312 = vmatpush1.msra.mxu0 %v1812
    %2313 = vmatprep.subr.mxu0 0.0
    %2314 = vmatpush1.msra.mxu0 0.0
    %2315 = vmatprep.subr.mxu0 0.0
    %2316 = vmatpush1.msra.mxu0 0.0
    %2317 = vmatprep.subr.mxu0 0.0
    %2318 = vmatpush1.msra.mxu0 0.0
    %2319 = vmatprep.subr.mxu0 0.0
    %2320 = vmatpush1.msra.mxu0 0.0
    %2321 = vmatprep.subr.mxu0 0.0
    %2322 = vmatpush1.msra.mxu0 0.0
    %2323 = vmatprep.subr.mxu0 0.0
    %2324 = vmatpush1.msra.mxu0 0.0
    %2325 = vmatprep.subr.mxu0 0.0
    %2326 = vmatpush1.msra.mxu0 0.0
    %2327 = vmatprep.subr.mxu0 0.0
    %2328 = vmatpush1.msra.mxu0 0.0
    %2329 = vmatprep.subr.mxu0 0.0
    %2330 = vmatpush1.msra.mxu0 0.0
    %2331 = vmatprep.subr.mxu0 0.0
    %2332 = vmatpush1.msra.mxu0 0.0
    %2333 = vmatprep.subr.mxu0 0.0
    %2334 = vmatpush1.msra.mxu0 0.0
    %2335 = vmatprep.subr.mxu0 0.0
    %2336 = vmatpush1.msra.mxu0 0.0
    %2337 = vmatprep.subr.mxu0 0.0
    %2338 = vmatpush1.msra.mxu0 0.0
    %2339 = vmatprep.subr.mxu0 0.0
    %2340 = vmatpush1.msra.mxu0 0.0
    %2341 = vmatprep.subr.mxu0 0.0
    %2342 = vmatpush1.msra.mxu0 0.0
    %2343 = vmatprep.subr.mxu0 0.0
    %2344 = vmatpush1.msra.mxu0 0.0
    %2345 = vmatprep.mubr.f32.mxu0 0.0
    %2346 = vmatmul.mubr.f32.gmra.mrb[0].mxu0 %v315
    %v2347 = vpop.f32.mrb[0].mxu0
    %v2348 = vadd.f32 %v2043, %v2347
    %v2349 = vpop.f32.mrb[0].mxu0
    %2350 = vmatprep.mubr.f32.mxu0 0.0
    %2351 = vmatmul.mubr.f32.gmra.mrb[0].mxu0 %v316
    %v2352 = vpop.f32.mrb[0].mxu0
    %v2353 = vadd.f32 %v2048, %v2352
    %v2354 = vpop.f32.mrb[0].mxu0
    %2355 = vmatprep.mubr.f32.mxu0 0.0
    %2356 = vmatmul.mubr.f32.gmra.mrb[0].mxu0 %v317
    %v2357 = vpop.f32.mrb[0].mxu0
    %v2358 = vadd.f32 %v2053, %v2357
    %v2359 = vpop.f32.mrb[0].mxu0
    %2360 = vmatprep.mubr.f32.mxu0 0.0
    %2361 = vmatmul.mubr.f32.gmra.mrb[0].mxu0 %v318
    %v2362 = vpop.f32.mrb[0].mxu0
    %v2363 = vadd.f32 %v2058, %v2362
    %v2364 = vpop.f32.mrb[0].mxu0
    %2365 = vmatprep.mubr.f32.mxu0 0.0
    %2366 = vmatmul.mubr.f32.gmra.mrb[0].mxu0 %v319
    %v2367 = vpop.f32.mrb[0].mxu0
    %v2368 = vadd.f32 %v2063, %v2367
    %v2369 = vpop.f32.mrb[0].mxu0
    %2370 = vmatprep.mubr.f32.mxu0 0.0
    %2371 = vmatmul.mubr.f32.gmra.mrb[0].mxu0 %v320
    %v2372 = vpop.f32.mrb[0].mxu0
    %v2373 = vadd.f32 %v2068, %v2372
    %v2374 = vpop.f32.mrb[0].mxu0
    %2375 = vmatprep.mubr.f32.mxu0 0.0
    %2376 = vmatmul.mubr.f32.gmra.mrb[0].mxu0 %v321
    %v2377 = vpop.f32.mrb[0].mxu0
    %v2378 = vadd.f32 %v2073, %v2377
    %v2379 = vpop.f32.mrb[0].mxu0
    %2380 = vmatprep.mubr.f32.mxu0 0.0
    %2381 = vmatmul.mubr.f32.gmra.mrb[0].mxu0 %v322
    %v2382 = vpop.f32.mrb[0].mxu0
    %v2383 = vadd.f32 %v2078, %v2382
    %v2384 = vpop.f32.mrb[0].mxu0
    %2385 = vmatprep.mubr.f32.mxu0 0.0
    %2386 = vmatmul.mubr.f32.gmra.mrb[0].mxu0 %v323
    %v2387 = vpop.f32.mrb[0].mxu0
    %v2388 = vadd.f32 %v2083, %v2387
    %v2389 = vpop.f32.mrb[0].mxu0
    %2390 = vmatprep.mubr.f32.mxu0 0.0
    %2391 = vmatmul.mubr.f32.gmra.mrb[0].mxu0 %v324
    %v2392 = vpop.f32.mrb[0].mxu0
    %v2393 = vadd.f32 %v2088, %v2392
    %v2394 = vpop.f32.mrb[0].mxu0
    %2395 = vmatprep.mubr.f32.mxu0 0.0
    %2396 = vmatmul.mubr.f32.gmra.mrb[0].mxu0 %v325
    %v2397 = vpop.f32.mrb[0].mxu0
    %v2398 = vadd.f32 %v2093, %v2397
    %v2399 = vpop.f32.mrb[0].mxu0
    %2400 = vmatprep.mubr.f32.mxu0 0.0
    %2401 = vmatmul.mubr.f32.gmra.mrb[0].mxu0 %v326
    %v2402 = vpop.f32.mrb[0].mxu0
    %v2403 = vadd.f32 %v2098, %v2402
    %v2404 = vpop.f32.mrb[0].mxu0
    %2405 = vmatprep.mubr.f32.mxu0 0.0
    %2406 = vmatmul.mubr.f32.gmra.mrb[0].mxu0 %v327
    %v2407 = vpop.f32.mrb[0].mxu0
    %v2408 = vadd.f32 %v2103, %v2407
    %v2409 = vpop.f32.mrb[0].mxu0
    %2410 = vmatprep.mubr.f32.mxu0 0.0
    %2411 = vmatmul.mubr.f32.gmra.mrb[0].mxu0 %v328
    %v2412 = vpop.f32.mrb[0].mxu0
    %v2413 = vadd.f32 %v2108, %v2412
    %v2414 = vpop.f32.mrb[0].mxu0
    %2415 = vmatprep.mubr.f32.mxu0 0.0
    %2416 = vmatmul.mubr.f32.gmra.mrb[0].mxu0 %v329
    %v2417 = vpop.f32.mrb[0].mxu0
    %v2418 = vadd.f32 %v2113, %v2417
    %v2419 = vpop.f32.mrb[0].mxu0
    %2420 = vmatprep.mubr.f32.mxu0 0.0
    %2421 = vmatmul.mubr.f32.gmra.mrb[0].mxu0 %v330
    %v2422 = vpop.f32.mrb[0].mxu0
    %v2423 = vadd.f32 %v2118, %v2422
    %v2424 = vpop.f32.mrb[0].mxu0
    %2425 = vmatprep.mubr.f32.mxu0 0.0
    %2426 = vmatmul.mubr.f32.gmra.mrb[0].mxu0 %v331
    %v2427 = vpop.f32.mrb[0].mxu0
    %v2428 = vadd.f32 %v2123, %v2427
    %v2429 = vpop.f32.mrb[0].mxu0
    %2430 = vmatprep.mubr.f32.mxu0 0.0
    %2431 = vmatmul.mubr.f32.gmra.mrb[0].mxu0 %v332
    %v2432 = vpop.f32.mrb[0].mxu0
    %v2433 = vadd.f32 %v2128, %v2432
    %v2434 = vpop.f32.mrb[0].mxu0
    %2435 = vmatprep.mubr.f32.mxu0 0.0
    %2436 = vmatmul.mubr.f32.gmra.mrb[0].mxu0 %v333
    %v2437 = vpop.f32.mrb[0].mxu0
    %v2438 = vadd.f32 %v2133, %v2437
    %v2439 = vpop.f32.mrb[0].mxu0
    %2440 = vmatprep.mubr.f32.mxu0 0.0
    %2441 = vmatmul.mubr.f32.gmra.mrb[0].mxu0 %v334
    %v2442 = vpop.f32.mrb[0].mxu0
    %v2443 = vadd.f32 %v2138, %v2442
    %v2444 = vpop.f32.mrb[0].mxu0
    %2445 = vmatprep.mubr.f32.mxu0 0.0
    %2446 = vmatmul.mubr.f32.gmra.mrb[0].mxu0 %v335
    %v2447 = vpop.f32.mrb[0].mxu0
    %v2448 = vadd.f32 %v2143, %v2447
    %v2449 = vpop.f32.mrb[0].mxu0
    %2450 = vmatprep.mubr.f32.mxu0 0.0
    %2451 = vmatmul.mubr.f32.gmra.mrb[0].mxu0 %v336
    %v2452 = vpop.f32.mrb[0].mxu0
    %v2453 = vadd.f32 %v2148, %v2452
    %v2454 = vpop.f32.mrb[0].mxu0
    %2455 = vmatprep.mubr.f32.mxu0 0.0
    %2456 = vmatmul.mubr.f32.gmra.mrb[0].mxu0 %v337
    %v2457 = vpop.f32.mrb[0].mxu0
    %v2458 = vadd.f32 %v2153, %v2457
    %v2459 = vpop.f32.mrb[0].mxu0
    %2460 = vmatprep.mubr.f32.mxu0 0.0
    %2461 = vmatmul.mubr.f32.gmra.mrb[0].mxu0 %v338
    %v2462 = vpop.f32.mrb[0].mxu0
    %v2463 = vadd.f32 %v2158, %v2462
    %v2464 = vpop.f32.mrb[0].mxu0
    %2465 = vmatprep.mubr.f32.mxu0 0.0
    %2466 = vmatmul.mubr.f32.gmra.mrb[0].mxu0 %v339
    %v2467 = vpop.f32.mrb[0].mxu0
    %v2468 = vadd.f32 %v2163, %v2467
    %v2469 = vpop.f32.mrb[0].mxu0
    %2470 = vmatprep.mubr.f32.mxu0 0.0
    %2471 = vmatmul.mubr.f32.gmra.mrb[0].mxu0 %v340
    %v2472 = vpop.f32.mrb[0].mxu0
    %v2473 = vadd.f32 %v2168, %v2472
    %v2474 = vpop.f32.mrb[0].mxu0
    %2475 = vmatprep.mubr.f32.mxu0 0.0
    %2476 = vmatmul.mubr.f32.gmra.mrb[0].mxu0 %v341
    %v2477 = vpop.f32.mrb[0].mxu0
    %v2478 = vadd.f32 %v2173, %v2477
    %v2479 = vpop.f32.mrb[0].mxu0
    %2480 = vmatprep.mubr.f32.mxu0 0.0
    %2481 = vmatmul.mubr.f32.gmra.mrb[0].mxu0 %v342
    %v2482 = vpop.f32.mrb[0].mxu0
    %v2483 = vadd.f32 %v2178, %v2482
    %v2484 = vpop.f32.mrb[0].mxu0
    %2485 = vmatprep.mubr.f32.mxu0 0.0
    %2486 = vmatmul.mubr.f32.gmra.mrb[0].mxu0 %v343
    %v2487 = vpop.f32.mrb[0].mxu0
    %v2488 = vadd.f32 %v2183, %v2487
    %v2489 = vpop.f32.mrb[0].mxu0
    %2490 = vmatprep.mubr.f32.mxu0 0.0
    %2491 = vmatmul.mubr.f32.gmra.mrb[0].mxu0 %v344
    %v2492 = vpop.f32.mrb[0].mxu0
    %v2493 = vadd.f32 %v2188, %v2492
    %v2494 = vpop.f32.mrb[0].mxu0
    %2495 = vmatprep.mubr.f32.mxu0 0.0
    %2496 = vmatmul.mubr.f32.gmra.mrb[0].mxu0 %v345
    %v2497 = vpop.f32.mrb[0].mxu0
    %v2498 = vadd.f32 %v2193, %v2497
    %v2499 = vpop.f32.mrb[0].mxu0
    %2500 = vmatprep.mubr.f32.mxu0 0.0
    %2501 = vmatmul.mubr.f32.gmra.mrb[0].mxu0 %v346
    %v2502 = vpop.f32.mrb[0].mxu0
    %v2503 = vadd.f32 %v2198, %v2502
    %v2504 = vpop.f32.mrb[0].mxu0
    %2505 = vmatprep.mubr.f32.mxu0 0.0
    %2506 = vmatmul.mubr.f32.gmra.mrb[0].mxu0 %v347
    %v2507 = vpop.f32.mrb[0].mxu0
    %v2508 = vadd.f32 %v2203, %v2507
    %v2509 = vpop.f32.mrb[0].mxu0
    %2510 = vmatprep.mubr.f32.mxu0 0.0
    %2511 = vmatmul.mubr.f32.gmra.mrb[0].mxu0 %v348
    %v2512 = vpop.f32.mrb[0].mxu0
    %v2513 = vadd.f32 %v2208, %v2512
    %v2514 = vpop.f32.mrb[0].mxu0
    %2515 = vmatprep.mubr.f32.mxu0 0.0
    %2516 = vmatmul.mubr.f32.gmra.mrb[0].mxu0 %v349
    %v2517 = vpop.f32.mrb[0].mxu0
    %v2518 = vadd.f32 %v2213, %v2517
    %v2519 = vpop.f32.mrb[0].mxu0
    %2520 = vmatprep.mubr.f32.mxu0 0.0
    %2521 = vmatmul.mubr.f32.gmra.mrb[0].mxu0 %v350
    %v2522 = vpop.f32.mrb[0].mxu0
    %v2523 = vadd.f32 %v2218, %v2522
    %v2524 = vpop.f32.mrb[0].mxu0
    %2525 = vmatprep.mubr.f32.mxu0 0.0
    %2526 = vmatmul.mubr.f32.gmra.mrb[0].mxu0 %v351
    %v2527 = vpop.f32.mrb[0].mxu0
    %v2528 = vadd.f32 %v2223, %v2527
    %v2529 = vpop.f32.mrb[0].mxu0
    %2530 = vmatprep.mubr.f32.mxu0 0.0
    %2531 = vmatmul.mubr.f32.gmra.mrb[0].mxu0 %v352
    %v2532 = vpop.f32.mrb[0].mxu0
    %v2533 = vadd.f32 %v2228, %v2532
    %v2534 = vpop.f32.mrb[0].mxu0
    %2535 = vmatprep.mubr.f32.mxu0 0.0
    %2536 = vmatmul.mubr.f32.gmra.mrb[0].mxu0 %v353
    %v2537 = vpop.f32.mrb[0].mxu0
    %v2538 = vadd.f32 %v2233, %v2537
    %v2539 = vpop.f32.mrb[0].mxu0
    %2540 = vmatprep.mubr.f32.mxu0 0.0
    %2541 = vmatmul.mubr.f32.gmra.mrb[0].mxu0 %v354
    %v2542 = vpop.f32.mrb[0].mxu0
    %v2543 = vadd.f32 %v2238, %v2542
    %v2544 = vpop.f32.mrb[0].mxu0
    %2545 = vmatprep.mubr.f32.mxu0 0.0
    %2546 = vmatmul.mubr.f32.gmra.mrb[0].mxu0 %v355
    %v2547 = vpop.f32.mrb[0].mxu0
    %v2548 = vadd.f32 %v2243, %v2547
    %v2549 = vpop.f32.mrb[0].mxu0
    %2550 = vmatprep.mubr.f32.mxu0 0.0
    %2551 = vmatmul.mubr.f32.gmra.mrb[0].mxu0 %v356
    %v2552 = vpop.f32.mrb[0].mxu0
    %v2553 = vadd.f32 %v2248, %v2552
    %v2554 = vpop.f32.mrb[0].mxu0
    %2555 = vmatprep.mubr.f32.mxu0 0.0
    %2556 = vmatmul.mubr.f32.gmra.mrb[0].mxu0 %v357
    %v2557 = vpop.f32.mrb[0].mxu0
    %v2558 = vadd.f32 %v2253, %v2557
    %v2559 = vpop.f32.mrb[0].mxu0
    %2560 = vmatprep.mubr.f32.mxu0 0.0
    %2561 = vmatmul.mubr.f32.gmra.mrb[0].mxu0 %v358
    %v2562 = vpop.f32.mrb[0].mxu0
    %v2563 = vadd.f32 %v2258, %v2562
    %v2564 = vpop.f32.mrb[0].mxu0
    %2565 = vmatprep.mubr.f32.mxu0 0.0
    %2566 = vmatmul.mubr.f32.gmra.mrb[0].mxu0 %v359
    %v2567 = vpop.f32.mrb[0].mxu0
    %v2568 = vadd.f32 %v2263, %v2567
    %v2569 = vpop.f32.mrb[0].mxu0
    %2570 = vmatprep.mubr.f32.mxu0 0.0
    %2571 = vmatmul.mubr.f32.gmra.mrb[0].mxu0 %v360
    %v2572 = vpop.f32.mrb[0].mxu0
    %v2573 = vadd.f32 %v2268, %v2572
    %v2574 = vpop.f32.mrb[0].mxu0
    %2575 = vmatprep.mubr.f32.mxu0 0.0
    %2576 = vmatmul.mubr.f32.gmra.mrb[0].mxu0 %v361
    %v2577 = vpop.f32.mrb[0].mxu0
    %v2578 = vadd.f32 %v2273, %v2577
    %v2579 = vpop.f32.mrb[0].mxu0
    %2580 = vmatprep.mubr.f32.mxu0 0.0
    %2581 = vmatmul.mubr.f32.gmra.mrb[0].mxu0 %v362
    %v2582 = vpop.f32.mrb[0].mxu0
    %v2583 = vadd.f32 %v2278, %v2582
    %v2584 = vpop.f32.mrb[0].mxu0
    %2585 = vdwg.mxu0
    %2586 = vrot.lane.b32.xlu0 %v1617, 64
    %v2587 = vpop.permute.xlu0 %2586
    %2588 = vrot.lane.b32.xlu0 %v1618, 64
    %v2589 = vpop.permute.xlu0 %2588
    %2590 = vrot.lane.b32.xlu0 %v1619, 64
    %v2591 = vpop.permute.xlu0 %2590
    %2592 = vrot.lane.b32.xlu0 %v1620, 64
    %v2593 = vpop.permute.xlu0 %2592
    %v2599 = vsel %vm1621, %v1569, 0
    %v2602 = vsel %vm1621, %v1570, 0
    %v2605 = vsel %vm1621, %v1571, 0
    %v2608 = vsel %vm1621, %v1572, 0
    %v2611 = vsel %vm1621, %v1573, 0
    %v2614 = vsel %vm1621, %v1574, 0
    %v2617 = vsel %vm1621, %v1575, 0
    %v2620 = vsel %vm1621, %v1576, 0
    %v2623 = vsel %vm1621, %v1577, 0
    %v2626 = vsel %vm1621, %v1578, 0
    %v2629 = vsel %vm1621, %v1579, 0
    %v2632 = vsel %vm1621, %v1580, 0
    %v2635 = vsel %vm1621, %v1581, 0
    %v2638 = vsel %vm1621, %v1582, 0
    %v2641 = vsel %vm1621, %v1583, 0
    %v2644 = vsel %vm1621, %v1584, 0
    %v2647 = vsel %vm1621, %v1585, 0
    %v2650 = vsel %vm1621, %v1586, 0
    %v2653 = vsel %vm1621, %v1587, 0
    %v2656 = vsel %vm1621, %v1588, 0
    %v2659 = vsel %vm1621, %v1589, 0
    %v2662 = vsel %vm1621, %v1590, 0
    %v2665 = vsel %vm1621, %v1591, 0
    %v2668 = vsel %vm1621, %v1592, 0
    %v2671 = vsel %vm1621, %v1593, 0
    %v2674 = vsel %vm1621, %v1594, 0
    %v2677 = vsel %vm1621, %v1595, 0
    %v2680 = vsel %vm1621, %v1596, 0
    %v2683 = vsel %vm1621, %v1597, 0
    %v2686 = vsel %vm1621, %v1598, 0
    %v2689 = vsel %vm1621, %v1599, 0
    %v2692 = vsel %vm1621, %v1600, 0
    %v2695 = vsel %vm1621, %v1601, 0
    %v2698 = vsel %vm1621, %v1602, 0
    %v2701 = vsel %vm1621, %v1603, 0
    %v2704 = vsel %vm1621, %v1604, 0
    %v2707 = vsel %vm1621, %v1605, 0
    %v2710 = vsel %vm1621, %v1606, 0
    %v2713 = vsel %vm1621, %v1607, 0
    %v2716 = vsel %vm1621, %v1608, 0
    %v2719 = vsel %vm1621, %v1609, 0
    %v2722 = vsel %vm1621, %v1610, 0
    %v2725 = vsel %vm1621, %v1611, 0
    %v2728 = vsel %vm1621, %v1612, 0
    %v2731 = vsel %vm1621, %v1613, 0
    %v2734 = vsel %vm1621, %v1614, 0
    %v2737 = vsel %vm1621, %v1615, 0
    %v2740 = vsel %vm1621, %v1616, 0
    %2742 = vmatprep.subr.mxu0 0.0
    %2743 = vmatpush1.msra.mxu0 %v2587
    %2744 = vmatprep.subr.mxu0 0.0
    %2745 = vmatpush1.msra.mxu0 %v2589
    %2746 = vmatprep.subr.mxu0 0.0
    %2747 = vmatpush1.msra.mxu0 %v2591
    %2748 = vmatprep.subr.mxu0 0.0
    %2749 = vmatpush1.msra.mxu0 %v2593
    %2750 = vmatprep.subr.mxu0 0.0
    %2751 = vmatpush1.msra.mxu0 0.0
    %2752 = vmatprep.subr.mxu0 0.0
    %2753 = vmatpush1.msra.mxu0 0.0
    %2754 = vmatprep.subr.mxu0 0.0
    %2755 = vmatpush1.msra.mxu0 0.0
    %2756 = vmatprep.subr.mxu0 0.0
    %2757 = vmatpush1.msra.mxu0 0.0
    %2758 = vmatprep.subr.mxu0 0.0
    %2759 = vmatpush1.msra.mxu0 0.0
    %2760 = vmatprep.subr.mxu0 0.0
    %2761 = vmatpush1.msra.mxu0 0.0
    %2762 = vmatprep.subr.mxu0 0.0
    %2763 = vmatpush1.msra.mxu0 0.0
    %2764 = vmatprep.subr.mxu0 0.0
    %2765 = vmatpush1.msra.mxu0 0.0
    %2766 = vmatprep.subr.mxu0 0.0
    %2767 = vmatpush1.msra.mxu0 0.0
    %2768 = vmatprep.subr.mxu0 0.0
    %2769 = vmatpush1.msra.mxu0 0.0
    %2770 = vmatprep.subr.mxu0 0.0
    %2771 = vmatpush1.msra.mxu0 0.0
    %2772 = vmatprep.subr.mxu0 0.0
    %2773 = vmatpush1.msra.mxu0 0.0
    %2774 = vmatprep.subr.mxu0 0.0
    %2775 = vmatpush1.msra.mxu0 0.0
    %2776 = vmatprep.subr.mxu0 0.0
    %2777 = vmatpush1.msra.mxu0 0.0
    %2778 = vmatprep.subr.mxu0 0.0
    %2779 = vmatpush1.msra.mxu0 0.0
    %2780 = vmatprep.subr.mxu0 0.0
    %2781 = vmatpush1.msra.mxu0 0.0
    %2782 = vmatprep.subr.mxu0 0.0
    %2783 = vmatpush1.msra.mxu0 0.0
    %2784 = vmatprep.subr.mxu0 0.0
    %2785 = vmatpush1.msra.mxu0 0.0
    %2786 = vmatprep.subr.mxu0 0.0
    %2787 = vmatpush1.msra.mxu0 0.0
    %2788 = vmatprep.subr.mxu0 0.0
    %2789 = vmatpush1.msra.mxu0 0.0
    %2790 = vmatprep.subr.mxu0 0.0
    %2791 = vmatpush1.msra.mxu0 0.0
    %2792 = vmatprep.subr.mxu0 0.0
    %2793 = vmatpush1.msra.mxu0 0.0
    %2794 = vmatprep.subr.mxu0 0.0
    %2795 = vmatpush1.msra.mxu0 0.0
    %2796 = vmatprep.subr.mxu0 0.0
    %2797 = vmatpush1.msra.mxu0 0.0
    %2798 = vmatprep.subr.mxu0 0.0
    %2799 = vmatpush1.msra.mxu0 0.0
    %2800 = vmatprep.subr.mxu0 0.0
    %2801 = vmatpush1.msra.mxu0 0.0
    %2802 = vmatprep.subr.mxu0 0.0
    %2803 = vmatpush1.msra.mxu0 0.0
    %2804 = vmatprep.subr.mxu0 0.0
    %2805 = vmatpush1.msra.mxu0 0.0
    %2806 = vmatprep.mubr.f32.mxu0 0.0
    %2807 = vmatmul.mubr.f32.gmra.mrb[0].mxu0 %v2599
    %v2808 = vpop.f32.mrb[0].mxu0
    %v2809 = vadd.f32 0.0, %v2808
    %v2810 = vpop.f32.mrb[0].mxu0
    %2811 = vmatprep.mubr.f32.mxu0 0.0
    %2812 = vmatmul.mubr.f32.gmra.mrb[0].mxu0 %v2602
    %v2813 = vpop.f32.mrb[0].mxu0
    %v2814 = vadd.f32 0.0, %v2813
    %v2815 = vpop.f32.mrb[0].mxu0
    %2816 = vmatprep.mubr.f32.mxu0 0.0
    %2817 = vmatmul.mubr.f32.gmra.mrb[0].mxu0 %v2605
    %v2818 = vpop.f32.mrb[0].mxu0
    %v2819 = vadd.f32 0.0, %v2818
    %v2820 = vpop.f32.mrb[0].mxu0
    %2821 = vmatprep.mubr.f32.mxu0 0.0
    %2822 = vmatmul.mubr.f32.gmra.mrb[0].mxu0 %v2608
    %v2823 = vpop.f32.mrb[0].mxu0
    %v2824 = vadd.f32 0.0, %v2823
    %v2825 = vpop.f32.mrb[0].mxu0
    %2826 = vmatprep.mubr.f32.mxu0 0.0
    %2827 = vmatmul.mubr.f32.gmra.mrb[0].mxu0 %v2611
    %v2828 = vpop.f32.mrb[0].mxu0
    %v2829 = vadd.f32 0.0, %v2828
    %v2830 = vpop.f32.mrb[0].mxu0
    %2831 = vmatprep.mubr.f32.mxu0 0.0
    %2832 = vmatmul.mubr.f32.gmra.mrb[0].mxu0 %v2614
    %v2833 = vpop.f32.mrb[0].mxu0
    %v2834 = vadd.f32 0.0, %v2833
    %v2835 = vpop.f32.mrb[0].mxu0
    %2836 = vmatprep.mubr.f32.mxu0 0.0
    %2837 = vmatmul.mubr.f32.gmra.mrb[0].mxu0 %v2617
    %v2838 = vpop.f32.mrb[0].mxu0
    %v2839 = vadd.f32 0.0, %v2838
    %v2840 = vpop.f32.mrb[0].mxu0
    %2841 = vmatprep.mubr.f32.mxu0 0.0
    %2842 = vmatmul.mubr.f32.gmra.mrb[0].mxu0 %v2620
    %v2843 = vpop.f32.mrb[0].mxu0
    %v2844 = vadd.f32 0.0, %v2843
    %v2845 = vpop.f32.mrb[0].mxu0
    %2846 = vmatprep.mubr.f32.mxu0 0.0
    %2847 = vmatmul.mubr.f32.gmra.mrb[0].mxu0 %v2623
    %v2848 = vpop.f32.mrb[0].mxu0
    %v2849 = vadd.f32 0.0, %v2848
    %v2850 = vpop.f32.mrb[0].mxu0
    %2851 = vmatprep.mubr.f32.mxu0 0.0
    %2852 = vmatmul.mubr.f32.gmra.mrb[0].mxu0 %v2626
    %v2853 = vpop.f32.mrb[0].mxu0
    %v2854 = vadd.f32 0.0, %v2853
    %v2855 = vpop.f32.mrb[0].mxu0
    %2856 = vmatprep.mubr.f32.mxu0 0.0
    %2857 = vmatmul.mubr.f32.gmra.mrb[0].mxu0 %v2629
    %v2858 = vpop.f32.mrb[0].mxu0
    %v2859 = vadd.f32 0.0, %v2858
    %v2860 = vpop.f32.mrb[0].mxu0
    %2861 = vmatprep.mubr.f32.mxu0 0.0
    %2862 = vmatmul.mubr.f32.gmra.mrb[0].mxu0 %v2632
    %v2863 = vpop.f32.mrb[0].mxu0
    %v2864 = vadd.f32 0.0, %v2863
    %v2865 = vpop.f32.mrb[0].mxu0
    %2866 = vmatprep.mubr.f32.mxu0 0.0
    %2867 = vmatmul.mubr.f32.gmra.mrb[0].mxu0 %v2635
    %v2868 = vpop.f32.mrb[0].mxu0
    %v2869 = vadd.f32 0.0, %v2868
    %v2870 = vpop.f32.mrb[0].mxu0
    %2871 = vmatprep.mubr.f32.mxu0 0.0
    %2872 = vmatmul.mubr.f32.gmra.mrb[0].mxu0 %v2638
    %v2873 = vpop.f32.mrb[0].mxu0
    %v2874 = vadd.f32 0.0, %v2873
    %v2875 = vpop.f32.mrb[0].mxu0
    %2876 = vmatprep.mubr.f32.mxu0 0.0
    %2877 = vmatmul.mubr.f32.gmra.mrb[0].mxu0 %v2641
    %v2878 = vpop.f32.mrb[0].mxu0
    %v2879 = vadd.f32 0.0, %v2878
    %v2880 = vpop.f32.mrb[0].mxu0
    %2881 = vmatprep.mubr.f32.mxu0 0.0
    %2882 = vmatmul.mubr.f32.gmra.mrb[0].mxu0 %v2644
    %v2883 = vpop.f32.mrb[0].mxu0
    %v2884 = vadd.f32 0.0, %v2883
    %v2885 = vpop.f32.mrb[0].mxu0
    %2886 = vmatprep.mubr.f32.mxu0 0.0
    %2887 = vmatmul.mubr.f32.gmra.mrb[0].mxu0 %v2647
    %v2888 = vpop.f32.mrb[0].mxu0
    %v2889 = vadd.f32 0.0, %v2888
    %v2890 = vpop.f32.mrb[0].mxu0
    %2891 = vmatprep.mubr.f32.mxu0 0.0
    %2892 = vmatmul.mubr.f32.gmra.mrb[0].mxu0 %v2650
    %v2893 = vpop.f32.mrb[0].mxu0
    %v2894 = vadd.f32 0.0, %v2893
    %v2895 = vpop.f32.mrb[0].mxu0
    %2896 = vmatprep.mubr.f32.mxu0 0.0
    %2897 = vmatmul.mubr.f32.gmra.mrb[0].mxu0 %v2653
    %v2898 = vpop.f32.mrb[0].mxu0
    %v2899 = vadd.f32 0.0, %v2898
    %v2900 = vpop.f32.mrb[0].mxu0
    %2901 = vmatprep.mubr.f32.mxu0 0.0
    %2902 = vmatmul.mubr.f32.gmra.mrb[0].mxu0 %v2656
    %v2903 = vpop.f32.mrb[0].mxu0
    %v2904 = vadd.f32 0.0, %v2903
    %v2905 = vpop.f32.mrb[0].mxu0
    %2906 = vmatprep.mubr.f32.mxu0 0.0
    %2907 = vmatmul.mubr.f32.gmra.mrb[0].mxu0 %v2659
    %v2908 = vpop.f32.mrb[0].mxu0
    %v2909 = vadd.f32 0.0, %v2908
    %v2910 = vpop.f32.mrb[0].mxu0
    %2911 = vmatprep.mubr.f32.mxu0 0.0
    %2912 = vmatmul.mubr.f32.gmra.mrb[0].mxu0 %v2662
    %v2913 = vpop.f32.mrb[0].mxu0
    %v2914 = vadd.f32 0.0, %v2913
    %v2915 = vpop.f32.mrb[0].mxu0
    %2916 = vmatprep.mubr.f32.mxu0 0.0
    %2917 = vmatmul.mubr.f32.gmra.mrb[0].mxu0 %v2665
    %v2918 = vpop.f32.mrb[0].mxu0
    %v2919 = vadd.f32 0.0, %v2918
    %v2920 = vpop.f32.mrb[0].mxu0
    %2921 = vmatprep.mubr.f32.mxu0 0.0
    %2922 = vmatmul.mubr.f32.gmra.mrb[0].mxu0 %v2668
    %v2923 = vpop.f32.mrb[0].mxu0
    %v2924 = vadd.f32 0.0, %v2923
    %v2925 = vpop.f32.mrb[0].mxu0
    %2926 = vmatprep.mubr.f32.mxu0 0.0
    %2927 = vmatmul.mubr.f32.gmra.mrb[0].mxu0 %v2671
    %v2928 = vpop.f32.mrb[0].mxu0
    %v2929 = vadd.f32 0.0, %v2928
    %v2930 = vpop.f32.mrb[0].mxu0
    %2931 = vmatprep.mubr.f32.mxu0 0.0
    %2932 = vmatmul.mubr.f32.gmra.mrb[0].mxu0 %v2674
    %v2933 = vpop.f32.mrb[0].mxu0
    %v2934 = vadd.f32 0.0, %v2933
    %v2935 = vpop.f32.mrb[0].mxu0
    %2936 = vmatprep.mubr.f32.mxu0 0.0
    %2937 = vmatmul.mubr.f32.gmra.mrb[0].mxu0 %v2677
    %v2938 = vpop.f32.mrb[0].mxu0
    %v2939 = vadd.f32 0.0, %v2938
    %v2940 = vpop.f32.mrb[0].mxu0
    %2941 = vmatprep.mubr.f32.mxu0 0.0
    %2942 = vmatmul.mubr.f32.gmra.mrb[0].mxu0 %v2680
    %v2943 = vpop.f32.mrb[0].mxu0
    %v2944 = vadd.f32 0.0, %v2943
    %v2945 = vpop.f32.mrb[0].mxu0
    %2946 = vmatprep.mubr.f32.mxu0 0.0
    %2947 = vmatmul.mubr.f32.gmra.mrb[0].mxu0 %v2683
    %v2948 = vpop.f32.mrb[0].mxu0
    %v2949 = vadd.f32 0.0, %v2948
    %v2950 = vpop.f32.mrb[0].mxu0
    %2951 = vmatprep.mubr.f32.mxu0 0.0
    %2952 = vmatmul.mubr.f32.gmra.mrb[0].mxu0 %v2686
    %v2953 = vpop.f32.mrb[0].mxu0
    %v2954 = vadd.f32 0.0, %v2953
    %v2955 = vpop.f32.mrb[0].mxu0
    %2956 = vmatprep.mubr.f32.mxu0 0.0
    %2957 = vmatmul.mubr.f32.gmra.mrb[0].mxu0 %v2689
    %v2958 = vpop.f32.mrb[0].mxu0
    %v2959 = vadd.f32 0.0, %v2958
    %v2960 = vpop.f32.mrb[0].mxu0
    %2961 = vmatprep.mubr.f32.mxu0 0.0
    %2962 = vmatmul.mubr.f32.gmra.mrb[0].mxu0 %v2692
    %v2963 = vpop.f32.mrb[0].mxu0
    %v2964 = vadd.f32 0.0, %v2963
    %v2965 = vpop.f32.mrb[0].mxu0
    %2966 = vmatprep.mubr.f32.mxu0 0.0
    %2967 = vmatmul.mubr.f32.gmra.mrb[0].mxu0 %v2695
    %v2968 = vpop.f32.mrb[0].mxu0
    %v2969 = vadd.f32 0.0, %v2968
    %v2970 = vpop.f32.mrb[0].mxu0
    %2971 = vmatprep.mubr.f32.mxu0 0.0
    %2972 = vmatmul.mubr.f32.gmra.mrb[0].mxu0 %v2698
    %v2973 = vpop.f32.mrb[0].mxu0
    %v2974 = vadd.f32 0.0, %v2973
    %v2975 = vpop.f32.mrb[0].mxu0
    %2976 = vmatprep.mubr.f32.mxu0 0.0
    %2977 = vmatmul.mubr.f32.gmra.mrb[0].mxu0 %v2701
    %v2978 = vpop.f32.mrb[0].mxu0
    %v2979 = vadd.f32 0.0, %v2978
    %v2980 = vpop.f32.mrb[0].mxu0
    %2981 = vmatprep.mubr.f32.mxu0 0.0
    %2982 = vmatmul.mubr.f32.gmra.mrb[0].mxu0 %v2704
    %v2983 = vpop.f32.mrb[0].mxu0
    %v2984 = vadd.f32 0.0, %v2983
    %v2985 = vpop.f32.mrb[0].mxu0
    %2986 = vmatprep.mubr.f32.mxu0 0.0
    %2987 = vmatmul.mubr.f32.gmra.mrb[0].mxu0 %v2707
    %v2988 = vpop.f32.mrb[0].mxu0
    %v2989 = vadd.f32 0.0, %v2988
    %v2990 = vpop.f32.mrb[0].mxu0
    %2991 = vmatprep.mubr.f32.mxu0 0.0
    %2992 = vmatmul.mubr.f32.gmra.mrb[0].mxu0 %v2710
    %v2993 = vpop.f32.mrb[0].mxu0
    %v2994 = vadd.f32 0.0, %v2993
    %v2995 = vpop.f32.mrb[0].mxu0
    %2996 = vmatprep.mubr.f32.mxu0 0.0
    %2997 = vmatmul.mubr.f32.gmra.mrb[0].mxu0 %v2713
    %v2998 = vpop.f32.mrb[0].mxu0
    %v2999 = vadd.f32 0.0, %v2998
    %v3000 = vpop.f32.mrb[0].mxu0
    %3001 = vmatprep.mubr.f32.mxu0 0.0
    %3002 = vmatmul.mubr.f32.gmra.mrb[0].mxu0 %v2716
    %v3003 = vpop.f32.mrb[0].mxu0
    %v3004 = vadd.f32 0.0, %v3003
    %v3005 = vpop.f32.mrb[0].mxu0
    %3006 = vmatprep.mubr.f32.mxu0 0.0
    %3007 = vmatmul.mubr.f32.gmra.mrb[0].mxu0 %v2719
    %v3008 = vpop.f32.mrb[0].mxu0
    %v3009 = vadd.f32 0.0, %v3008
    %v3010 = vpop.f32.mrb[0].mxu0
    %3011 = vmatprep.mubr.f32.mxu0 0.0
    %3012 = vmatmul.mubr.f32.gmra.mrb[0].mxu0 %v2722
    %v3013 = vpop.f32.mrb[0].mxu0
    %v3014 = vadd.f32 0.0, %v3013
    %v3015 = vpop.f32.mrb[0].mxu0
    %3016 = vmatprep.mubr.f32.mxu0 0.0
    %3017 = vmatmul.mubr.f32.gmra.mrb[0].mxu0 %v2725
    %v3018 = vpop.f32.mrb[0].mxu0
    %v3019 = vadd.f32 0.0, %v3018
    %v3020 = vpop.f32.mrb[0].mxu0
    %3021 = vmatprep.mubr.f32.mxu0 0.0
    %3022 = vmatmul.mubr.f32.gmra.mrb[0].mxu0 %v2728
    %v3023 = vpop.f32.mrb[0].mxu0
    %v3024 = vadd.f32 0.0, %v3023
    %v3025 = vpop.f32.mrb[0].mxu0
    %3026 = vmatprep.mubr.f32.mxu0 0.0
    %3027 = vmatmul.mubr.f32.gmra.mrb[0].mxu0 %v2731
    %v3028 = vpop.f32.mrb[0].mxu0
    %v3029 = vadd.f32 0.0, %v3028
    %v3030 = vpop.f32.mrb[0].mxu0
    %3031 = vmatprep.mubr.f32.mxu0 0.0
    %3032 = vmatmul.mubr.f32.gmra.mrb[0].mxu0 %v2734
    %v3033 = vpop.f32.mrb[0].mxu0
    %v3034 = vadd.f32 0.0, %v3033
    %v3035 = vpop.f32.mrb[0].mxu0
    %3036 = vmatprep.mubr.f32.mxu0 0.0
    %3037 = vmatmul.mubr.f32.gmra.mrb[0].mxu0 %v2737
    %v3038 = vpop.f32.mrb[0].mxu0
    %v3039 = vadd.f32 0.0, %v3038
    %v3040 = vpop.f32.mrb[0].mxu0
    %3041 = vmatprep.mubr.f32.mxu0 0.0
    %3042 = vmatmul.mubr.f32.gmra.mrb[0].mxu0 %v2740
    %v3043 = vpop.f32.mrb[0].mxu0
    %v3044 = vadd.f32 0.0, %v3043
    %v3045 = vpop.f32.mrb[0].mxu0
    %3046 = vdwg.mxu0
    %v3047 = vadd.f32 %v2348, %v2809
    %v3048 = vadd.f32 %v2353, %v2814
    %v3049 = vadd.f32 %v2358, %v2819
    %v3050 = vadd.f32 %v2363, %v2824
    %v3051 = vadd.f32 %v2368, %v2829
    %v3052 = vadd.f32 %v2373, %v2834
    %v3053 = vadd.f32 %v2378, %v2839
    %v3054 = vadd.f32 %v2383, %v2844
    %v3055 = vadd.f32 %v2388, %v2849
    %v3056 = vadd.f32 %v2393, %v2854
    %v3057 = vadd.f32 %v2398, %v2859
    %v3058 = vadd.f32 %v2403, %v2864
    %v3059 = vadd.f32 %v2408, %v2869
    %v3060 = vadd.f32 %v2413, %v2874
    %v3061 = vadd.f32 %v2418, %v2879
    %v3062 = vadd.f32 %v2423, %v2884
    %v3063 = vadd.f32 %v2428, %v2889
    %v3064 = vadd.f32 %v2433, %v2894
    %v3065 = vadd.f32 %v2438, %v2899
    %v3066 = vadd.f32 %v2443, %v2904
    %v3067 = vadd.f32 %v2448, %v2909
    %v3068 = vadd.f32 %v2453, %v2914
    %v3069 = vadd.f32 %v2458, %v2919
    %v3070 = vadd.f32 %v2463, %v2924
    %v3071 = vadd.f32 %v2468, %v2929
    %v3072 = vadd.f32 %v2473, %v2934
    %v3073 = vadd.f32 %v2478, %v2939
    %v3074 = vadd.f32 %v2483, %v2944
    %v3075 = vadd.f32 %v2488, %v2949
    %v3076 = vadd.f32 %v2493, %v2954
    %v3077 = vadd.f32 %v2498, %v2959
    %v3078 = vadd.f32 %v2503, %v2964
    %v3079 = vadd.f32 %v2508, %v2969
    %v3080 = vadd.f32 %v2513, %v2974
    %v3081 = vadd.f32 %v2518, %v2979
    %v3082 = vadd.f32 %v2523, %v2984
    %v3083 = vadd.f32 %v2528, %v2989
    %v3084 = vadd.f32 %v2533, %v2994
    %v3085 = vadd.f32 %v2538, %v2999
    %v3086 = vadd.f32 %v2543, %v3004
    %v3087 = vadd.f32 %v2548, %v3009
    %v3088 = vadd.f32 %v2553, %v3014
    %v3089 = vadd.f32 %v2558, %v3019
    %v3090 = vadd.f32 %v2563, %v3024
    %v3091 = vadd.f32 %v2568, %v3029
    %v3092 = vadd.f32 %v2573, %v3034
    %v3093 = vadd.f32 %v2578, %v3039
    %v3094 = vadd.f32 %v2583, %v3044
    %v3095 = vlaneseq
    %v3096 = vshrl.u32 %v3095, 7
    %v3097 = vsub.s32 2, %v3096
    %v3098 = vrot.slane %v24, %v3097
    %v3099 = vadd.f32 %v3047, %v3098
    %v3100 = vadd.f32 %v3048, %v3098
    %v3101 = vadd.f32 %v3049, %v3098
    %v3102 = vadd.f32 %v3050, %v3098
    %v3103 = vadd.f32 %v3051, %v3098
    %v3104 = vadd.f32 %v3052, %v3098
    %v3105 = vadd.f32 %v3053, %v3098
    %v3106 = vadd.f32 %v3054, %v3098
    %v3107 = vadd.f32 %v3055, %v3098
    %v3108 = vadd.f32 %v3056, %v3098
    %v3109 = vadd.f32 %v3057, %v3098
    %v3110 = vadd.f32 %v3058, %v3098
    %v3111 = vadd.f32 %v3059, %v3098
    %v3112 = vadd.f32 %v3060, %v3098
    %v3113 = vadd.f32 %v3061, %v3098
    %v3114 = vadd.f32 %v3062, %v3098
    %v3115 = vadd.f32 %v3063, %v3098
    %v3116 = vadd.f32 %v3064, %v3098
    %v3117 = vadd.f32 %v3065, %v3098
    %v3118 = vadd.f32 %v3066, %v3098
    %v3119 = vadd.f32 %v3067, %v3098
    %v3120 = vadd.f32 %v3068, %v3098
    %v3121 = vadd.f32 %v3069, %v3098
    %v3122 = vadd.f32 %v3070, %v3098
    %v3123 = vadd.f32 %v3071, %v3098
    %v3124 = vadd.f32 %v3072, %v3098
    %v3125 = vadd.f32 %v3073, %v3098
    %v3126 = vadd.f32 %v3074, %v3098
    %v3127 = vadd.f32 %v3075, %v3098
    %v3128 = vadd.f32 %v3076, %v3098
    %v3129 = vadd.f32 %v3077, %v3098
    %v3130 = vadd.f32 %v3078, %v3098
    %v3131 = vadd.f32 %v3079, %v3098
    %v3132 = vadd.f32 %v3080, %v3098
    %v3133 = vadd.f32 %v3081, %v3098
    %v3134 = vadd.f32 %v3082, %v3098
    %v3135 = vadd.f32 %v3083, %v3098
    %v3136 = vadd.f32 %v3084, %v3098
    %v3137 = vadd.f32 %v3085, %v3098
    %v3138 = vadd.f32 %v3086, %v3098
    %v3139 = vadd.f32 %v3087, %v3098
    %v3140 = vadd.f32 %v3088, %v3098
    %v3141 = vadd.f32 %v3089, %v3098
    %v3142 = vadd.f32 %v3090, %v3098
    %v3143 = vadd.f32 %v3091, %v3098
    %v3144 = vadd.f32 %v3092, %v3098
    %v3145 = vadd.f32 %v3093, %v3098
    %v3146 = vadd.f32 %v3094, %v3098
    %v3147 = vmax.f32 %v3099, 0.0
    %v3148 = vmax.f32 %v3100, 0.0
    %v3149 = vmax.f32 %v3101, 0.0
    %v3150 = vmax.f32 %v3102, 0.0
    %v3151 = vmax.f32 %v3103, 0.0
    %v3152 = vmax.f32 %v3104, 0.0
    %v3153 = vmax.f32 %v3105, 0.0
    %v3154 = vmax.f32 %v3106, 0.0
    %v3155 = vmax.f32 %v3107, 0.0
    %v3156 = vmax.f32 %v3108, 0.0
    %v3157 = vmax.f32 %v3109, 0.0
    %v3158 = vmax.f32 %v3110, 0.0
    %v3159 = vmax.f32 %v3111, 0.0
    %v3160 = vmax.f32 %v3112, 0.0
    %v3161 = vmax.f32 %v3113, 0.0
    %v3162 = vmax.f32 %v3114, 0.0
    %v3163 = vmax.f32 %v3115, 0.0
    %v3164 = vmax.f32 %v3116, 0.0
    %v3165 = vmax.f32 %v3117, 0.0
    %v3166 = vmax.f32 %v3118, 0.0
    %v3167 = vmax.f32 %v3119, 0.0
    %v3168 = vmax.f32 %v3120, 0.0
    %v3169 = vmax.f32 %v3121, 0.0
    %v3170 = vmax.f32 %v3122, 0.0
    %v3171 = vmax.f32 %v3123, 0.0
    %v3172 = vmax.f32 %v3124, 0.0
    %v3173 = vmax.f32 %v3125, 0.0
    %v3174 = vmax.f32 %v3126, 0.0
    %v3175 = vmax.f32 %v3127, 0.0
    %v3176 = vmax.f32 %v3128, 0.0
    %v3177 = vmax.f32 %v3129, 0.0
    %v3178 = vmax.f32 %v3130, 0.0
    %v3179 = vmax.f32 %v3131, 0.0
    %v3180 = vmax.f32 %v3132, 0.0
    %v3181 = vmax.f32 %v3133, 0.0
    %v3182 = vmax.f32 %v3134, 0.0
    %v3183 = vmax.f32 %v3135, 0.0
    %v3184 = vmax.f32 %v3136, 0.0
    %v3185 = vmax.f32 %v3137, 0.0
    %v3186 = vmax.f32 %v3138, 0.0
    %v3187 = vmax.f32 %v3139, 0.0
    %v3188 = vmax.f32 %v3140, 0.0
    %v3189 = vmax.f32 %v3141, 0.0
    %v3190 = vmax.f32 %v3142, 0.0
    %v3191 = vmax.f32 %v3143, 0.0
    %v3192 = vmax.f32 %v3144, 0.0
    %v3193 = vmax.f32 %v3145, 0.0
    %v3194 = vmax.f32 %v3146, 0.0
    %3195 = vmatprep.subr.mxu0 0.0
    %3196 = vmatpush1.msra.mxu0 %v3147
    %3197 = vmatprep.subr.mxu0 0.0
    %3198 = vmatpush1.msra.mxu0 %v3148
    %3199 = vmatprep.subr.mxu0 0.0
    %3200 = vmatpush1.msra.mxu0 %v3149
    %3201 = vmatprep.subr.mxu0 0.0
    %3202 = vmatpush1.msra.mxu0 %v3150
    %3203 = vmatprep.subr.mxu0 0.0
    %3204 = vmatpush1.msra.mxu0 %v3151
    %3205 = vmatprep.subr.mxu0 0.0
    %3206 = vmatpush1.msra.mxu0 %v3152
    %3207 = vmatprep.subr.mxu0 0.0
    %3208 = vmatpush1.msra.mxu0 %v3153
    %3209 = vmatprep.subr.mxu0 0.0
    %3210 = vmatpush1.msra.mxu0 %v3154
    %3211 = vmatprep.subr.mxu0 0.0
    %3212 = vmatpush1.msra.mxu0 %v3155
    %3213 = vmatprep.subr.mxu0 0.0
    %3214 = vmatpush1.msra.mxu0 %v3156
    %3215 = vmatprep.subr.mxu0 0.0
    %3216 = vmatpush1.msra.mxu0 %v3157
    %3217 = vmatprep.subr.mxu0 0.0
    %3218 = vmatpush1.msra.mxu0 %v3158
    %3219 = vmatprep.subr.mxu0 0.0
    %3220 = vmatpush1.msra.mxu0 %v3159
    %3221 = vmatprep.subr.mxu0 0.0
    %3222 = vmatpush1.msra.mxu0 %v3160
    %3223 = vmatprep.subr.mxu0 0.0
    %3224 = vmatpush1.msra.mxu0 %v3161
    %3225 = vmatprep.subr.mxu0 0.0
    %3226 = vmatpush1.msra.mxu0 %v3162
    %3227 = vmatprep.subr.mxu0 0.0
    %3228 = vmatpush1.msra.mxu0 %v3163
    %3229 = vmatprep.subr.mxu0 0.0
    %3230 = vmatpush1.msra.mxu0 %v3164
    %3231 = vmatprep.subr.mxu0 0.0
    %3232 = vmatpush1.msra.mxu0 %v3165
    %3233 = vmatprep.subr.mxu0 0.0
    %3234 = vmatpush1.msra.mxu0 %v3166
    %3235 = vmatprep.subr.mxu0 0.0
    %3236 = vmatpush1.msra.mxu0 %v3167
    %3237 = vmatprep.subr.mxu0 0.0
    %3238 = vmatpush1.msra.mxu0 %v3168
    %3239 = vmatprep.subr.mxu0 0.0
    %3240 = vmatpush1.msra.mxu0 %v3169
    %3241 = vmatprep.subr.mxu0 0.0
    %3242 = vmatpush1.msra.mxu0 %v3170
    %3243 = vmatprep.subr.mxu0 0.0
    %3244 = vmatpush1.msra.mxu0 %v3171
    %3245 = vmatprep.subr.mxu0 0.0
    %3246 = vmatpush1.msra.mxu0 %v3172
    %3247 = vmatprep.subr.mxu0 0.0
    %3248 = vmatpush1.msra.mxu0 %v3173
    %3249 = vmatprep.subr.mxu0 0.0
    %3250 = vmatpush1.msra.mxu0 %v3174
    %3251 = vmatprep.subr.mxu0 0.0
    %3252 = vmatpush1.msra.mxu0 %v3175
    %3253 = vmatprep.subr.mxu0 0.0
    %3254 = vmatpush1.msra.mxu0 %v3176
    %3255 = vmatprep.subr.mxu0 0.0
    %3256 = vmatpush1.msra.mxu0 %v3177
    %3257 = vmatprep.subr.mxu0 0.0
    %3258 = vmatpush1.msra.mxu0 %v3178
    %3259 = vmatprep.mubr.f32.mxu0 %v778
    %3260 = vmatmul.mubr.f32.gmra.mrb[0].mxu0 %v777
    %v3261 = vpop.f32.mrb[0].mxu0
    %v3262 = vadd.f32 0.0, %v3261
    %v3263 = vpop.f32.mrb[0].mxu0
    %3264 = vmatprep.mubr.f32.mxu0 %v781
    %3265 = vmatmul.mubr.f32.gmra.mrb[0].mxu0 %v780
    %v3266 = vpop.f32.mrb[0].mxu0
    %v3267 = vadd.f32 0.0, %v3266
    %v3268 = vpop.f32.mrb[0].mxu0
    %3269 = vmatprep.mubr.f32.mxu0 %v784
    %3270 = vmatmul.mubr.f32.gmra.mrb[0].mxu0 %v783
    %v3271 = vpop.f32.mrb[0].mxu0
    %v3272 = vadd.f32 0.0, %v3271
    %v3273 = vpop.f32.mrb[0].mxu0
    %3274 = vmatprep.mubr.f32.mxu0 %v787
    %3275 = vmatmul.mubr.f32.gmra.mrb[0].mxu0 %v786
    %v3276 = vpop.f32.mrb[0].mxu0
    %v3277 = vadd.f32 0.0, %v3276
    %v3278 = vpop.f32.mrb[0].mxu0
    %3279 = vmatprep.mubr.f32.mxu0 %v790
    %3280 = vmatmul.mubr.f32.gmra.mrb[0].mxu0 %v789
    %v3281 = vpop.f32.mrb[0].mxu0
    %v3282 = vadd.f32 0.0, %v3281
    %v3283 = vpop.f32.mrb[0].mxu0
    %3284 = vmatprep.mubr.f32.mxu0 %v793
    %3285 = vmatmul.mubr.f32.gmra.mrb[0].mxu0 %v792
    %v3286 = vpop.f32.mrb[0].mxu0
    %v3287 = vadd.f32 0.0, %v3286
    %v3288 = vpop.f32.mrb[0].mxu0
    %3289 = vmatprep.mubr.f32.mxu0 %v796
    %3290 = vmatmul.mubr.f32.gmra.mrb[0].mxu0 %v795
    %v3291 = vpop.f32.mrb[0].mxu0
    %v3292 = vadd.f32 0.0, %v3291
    %v3293 = vpop.f32.mrb[0].mxu0
    %3294 = vmatprep.mubr.f32.mxu0 %v799
    %3295 = vmatmul.mubr.f32.gmra.mrb[0].mxu0 %v798
    %v3296 = vpop.f32.mrb[0].mxu0
    %v3297 = vadd.f32 0.0, %v3296
    %v3298 = vpop.f32.mrb[0].mxu0
    %3299 = vmatprep.mubr.f32.mxu0 %v802
    %3300 = vmatmul.mubr.f32.gmra.mrb[0].mxu0 %v801
    %v3301 = vpop.f32.mrb[0].mxu0
    %v3302 = vadd.f32 0.0, %v3301
    %v3303 = vpop.f32.mrb[0].mxu0
    %3304 = vmatprep.mubr.f32.mxu0 %v805
    %3305 = vmatmul.mubr.f32.gmra.mrb[0].mxu0 %v804
    %v3306 = vpop.f32.mrb[0].mxu0
    %v3307 = vadd.f32 0.0, %v3306
    %v3308 = vpop.f32.mrb[0].mxu0
    %3309 = vmatprep.mubr.f32.mxu0 %v808
    %3310 = vmatmul.mubr.f32.gmra.mrb[0].mxu0 %v807
    %v3311 = vpop.f32.mrb[0].mxu0
    %v3312 = vadd.f32 0.0, %v3311
    %v3313 = vpop.f32.mrb[0].mxu0
    %3314 = vmatprep.mubr.f32.mxu0 %v811
    %3315 = vmatmul.mubr.f32.gmra.mrb[0].mxu0 %v810
    %v3316 = vpop.f32.mrb[0].mxu0
    %v3317 = vadd.f32 0.0, %v3316
    %v3318 = vpop.f32.mrb[0].mxu0
    %3319 = vmatprep.mubr.f32.mxu0 %v814
    %3320 = vmatmul.mubr.f32.gmra.mrb[0].mxu0 %v813
    %v3321 = vpop.f32.mrb[0].mxu0
    %v3322 = vadd.f32 0.0, %v3321
    %v3323 = vpop.f32.mrb[0].mxu0
    %3324 = vmatprep.mubr.f32.mxu0 %v817
    %3325 = vmatmul.mubr.f32.gmra.mrb[0].mxu0 %v816
    %v3326 = vpop.f32.mrb[0].mxu0
    %v3327 = vadd.f32 0.0, %v3326
    %v3328 = vpop.f32.mrb[0].mxu0
    %3329 = vmatprep.mubr.f32.mxu0 %v820
    %3330 = vmatmul.mubr.f32.gmra.mrb[0].mxu0 %v819
    %v3331 = vpop.f32.mrb[0].mxu0
    %v3332 = vadd.f32 0.0, %v3331
    %v3333 = vpop.f32.mrb[0].mxu0
    %3334 = vmatprep.mubr.f32.mxu0 %v823
    %3335 = vmatmul.mubr.f32.gmra.mrb[0].mxu0 %v822
    %v3336 = vpop.f32.mrb[0].mxu0
    %v3337 = vadd.f32 0.0, %v3336
    %v3338 = vpop.f32.mrb[0].mxu0
    %3339 = vdwg.mxu0
    %3340 = vmatprep.subr.mxu0 0.0
    %3341 = vmatpush1.msra.mxu0 %v3179
    %3342 = vmatprep.subr.mxu0 0.0
    %3343 = vmatpush1.msra.mxu0 %v3180
    %3344 = vmatprep.subr.mxu0 0.0
    %3345 = vmatpush1.msra.mxu0 %v3181
    %3346 = vmatprep.subr.mxu0 0.0
    %3347 = vmatpush1.msra.mxu0 %v3182
    %3348 = vmatprep.subr.mxu0 0.0
    %3349 = vmatpush1.msra.mxu0 %v3183
    %3350 = vmatprep.subr.mxu0 0.0
    %3351 = vmatpush1.msra.mxu0 %v3184
    %3352 = vmatprep.subr.mxu0 0.0
    %3353 = vmatpush1.msra.mxu0 %v3185
    %3354 = vmatprep.subr.mxu0 0.0
    %3355 = vmatpush1.msra.mxu0 %v3186
    %3356 = vmatprep.subr.mxu0 0.0
    %3357 = vmatpush1.msra.mxu0 %v3187
    %3358 = vmatprep.subr.mxu0 0.0
    %3359 = vmatpush1.msra.mxu0 %v3188
    %3360 = vmatprep.subr.mxu0 0.0
    %3361 = vmatpush1.msra.mxu0 %v3189
    %3362 = vmatprep.subr.mxu0 0.0
    %3363 = vmatpush1.msra.mxu0 %v3190
    %3364 = vmatprep.subr.mxu0 0.0
    %3365 = vmatpush1.msra.mxu0 %v3191
    %3366 = vmatprep.subr.mxu0 0.0
    %3367 = vmatpush1.msra.mxu0 %v3192
    %3368 = vmatprep.subr.mxu0 0.0
    %3369 = vmatpush1.msra.mxu0 %v3193
    %3370 = vmatprep.subr.mxu0 0.0
    %3371 = vmatpush1.msra.mxu0 %v3194
    %3372 = vmatprep.subr.mxu0 0.0
    %3373 = vmatpush1.msra.mxu0 0.0
    %3374 = vmatprep.subr.mxu0 0.0
    %3375 = vmatpush1.msra.mxu0 0.0
    %3376 = vmatprep.subr.mxu0 0.0
    %3377 = vmatpush1.msra.mxu0 0.0
    %3378 = vmatprep.subr.mxu0 0.0
    %3379 = vmatpush1.msra.mxu0 0.0
    %3380 = vmatprep.subr.mxu0 0.0
    %3381 = vmatpush1.msra.mxu0 0.0
    %3382 = vmatprep.subr.mxu0 0.0
    %3383 = vmatpush1.msra.mxu0 0.0
    %3384 = vmatprep.subr.mxu0 0.0
    %3385 = vmatpush1.msra.mxu0 0.0
    %3386 = vmatprep.subr.mxu0 0.0
    %3387 = vmatpush1.msra.mxu0 0.0
    %3388 = vmatprep.subr.mxu0 0.0
    %3389 = vmatpush1.msra.mxu0 0.0
    %3390 = vmatprep.subr.mxu0 0.0
    %3391 = vmatpush1.msra.mxu0 0.0
    %3392 = vmatprep.subr.mxu0 0.0
    %3393 = vmatpush1.msra.mxu0 0.0
    %3394 = vmatprep.subr.mxu0 0.0
    %3395 = vmatpush1.msra.mxu0 0.0
    %3396 = vmatprep.subr.mxu0 0.0
    %3397 = vmatpush1.msra.mxu0 0.0
    %3398 = vmatprep.subr.mxu0 0.0
    %3399 = vmatpush1.msra.mxu0 0.0
    %3400 = vmatprep.subr.mxu0 0.0
    %3401 = vmatpush1.msra.mxu0 0.0
    %3402 = vmatprep.subr.mxu0 0.0
    %3403 = vmatpush1.msra.mxu0 0.0
    %3404 = vmatprep.mubr.f32.mxu0 0.0
    %3405 = vmatmul.mubr.f32.gmra.mrb[0].mxu0 %v779
    %v3406 = vpop.f32.mrb[0].mxu0
    %v3407 = vadd.f32 %v3262, %v3406
    %v3408 = vpop.f32.mrb[0].mxu0
    %3409 = vmatprep.mubr.f32.mxu0 0.0
    %3410 = vmatmul.mubr.f32.gmra.mrb[0].mxu0 %v782
    %v3411 = vpop.f32.mrb[0].mxu0
    %v3412 = vadd.f32 %v3267, %v3411
    %v3413 = vpop.f32.mrb[0].mxu0
    %3414 = vmatprep.mubr.f32.mxu0 0.0
    %3415 = vmatmul.mubr.f32.gmra.mrb[0].mxu0 %v785
    %v3416 = vpop.f32.mrb[0].mxu0
    %v3417 = vadd.f32 %v3272, %v3416
    %v3418 = vpop.f32.mrb[0].mxu0
    %3419 = vmatprep.mubr.f32.mxu0 0.0
    %3420 = vmatmul.mubr.f32.gmra.mrb[0].mxu0 %v788
    %v3421 = vpop.f32.mrb[0].mxu0
    %v3422 = vadd.f32 %v3277, %v3421
    %v3423 = vpop.f32.mrb[0].mxu0
    %3424 = vmatprep.mubr.f32.mxu0 0.0
    %3425 = vmatmul.mubr.f32.gmra.mrb[0].mxu0 %v791
    %v3426 = vpop.f32.mrb[0].mxu0
    %v3427 = vadd.f32 %v3282, %v3426
    %v3428 = vpop.f32.mrb[0].mxu0
    %3429 = vmatprep.mubr.f32.mxu0 0.0
    %3430 = vmatmul.mubr.f32.gmra.mrb[0].mxu0 %v794
    %v3431 = vpop.f32.mrb[0].mxu0
    %v3432 = vadd.f32 %v3287, %v3431
    %v3433 = vpop.f32.mrb[0].mxu0
    %3434 = vmatprep.mubr.f32.mxu0 0.0
    %3435 = vmatmul.mubr.f32.gmra.mrb[0].mxu0 %v797
    %v3436 = vpop.f32.mrb[0].mxu0
    %v3437 = vadd.f32 %v3292, %v3436
    %v3438 = vpop.f32.mrb[0].mxu0
    %3439 = vmatprep.mubr.f32.mxu0 0.0
    %3440 = vmatmul.mubr.f32.gmra.mrb[0].mxu0 %v800
    %v3441 = vpop.f32.mrb[0].mxu0
    %v3442 = vadd.f32 %v3297, %v3441
    %v3443 = vpop.f32.mrb[0].mxu0
    %3444 = vmatprep.mubr.f32.mxu0 0.0
    %3445 = vmatmul.mubr.f32.gmra.mrb[0].mxu0 %v803
    %v3446 = vpop.f32.mrb[0].mxu0
    %v3447 = vadd.f32 %v3302, %v3446
    %v3448 = vpop.f32.mrb[0].mxu0
    %3449 = vmatprep.mubr.f32.mxu0 0.0
    %3450 = vmatmul.mubr.f32.gmra.mrb[0].mxu0 %v806
    %v3451 = vpop.f32.mrb[0].mxu0
    %v3452 = vadd.f32 %v3307, %v3451
    %v3453 = vpop.f32.mrb[0].mxu0
    %3454 = vmatprep.mubr.f32.mxu0 0.0
    %3455 = vmatmul.mubr.f32.gmra.mrb[0].mxu0 %v809
    %v3456 = vpop.f32.mrb[0].mxu0
    %v3457 = vadd.f32 %v3312, %v3456
    %v3458 = vpop.f32.mrb[0].mxu0
    %3459 = vmatprep.mubr.f32.mxu0 0.0
    %3460 = vmatmul.mubr.f32.gmra.mrb[0].mxu0 %v812
    %v3461 = vpop.f32.mrb[0].mxu0
    %v3462 = vadd.f32 %v3317, %v3461
    %v3463 = vpop.f32.mrb[0].mxu0
    %3464 = vmatprep.mubr.f32.mxu0 0.0
    %3465 = vmatmul.mubr.f32.gmra.mrb[0].mxu0 %v815
    %v3466 = vpop.f32.mrb[0].mxu0
    %v3467 = vadd.f32 %v3322, %v3466
    %v3468 = vpop.f32.mrb[0].mxu0
    %3469 = vmatprep.mubr.f32.mxu0 0.0
    %3470 = vmatmul.mubr.f32.gmra.mrb[0].mxu0 %v818
    %v3471 = vpop.f32.mrb[0].mxu0
    %v3472 = vadd.f32 %v3327, %v3471
    %v3473 = vpop.f32.mrb[0].mxu0
    %3474 = vmatprep.mubr.f32.mxu0 0.0
    %3475 = vmatmul.mubr.f32.gmra.mrb[0].mxu0 %v821
    %v3476 = vpop.f32.mrb[0].mxu0
    %v3477 = vadd.f32 %v3332, %v3476
    %v3478 = vpop.f32.mrb[0].mxu0
    %3479 = vmatprep.mubr.f32.mxu0 0.0
    %3480 = vmatmul.mubr.f32.gmra.mrb[0].mxu0 %v824
    %v3481 = vpop.f32.mrb[0].mxu0
    %v3482 = vadd.f32 %v3337, %v3481
    %v3483 = vpop.f32.mrb[0].mxu0
    %3484 = vdwg.mxu0
    %v3485 = vld [vmem:[%s4 + $0x40] sm:$0xff]
    %v3486 = vld [vmem:[%s4 + $0x48] sm:$0xff]
    %v3487 = vld [vmem:[%s4 + $0x50] sm:$0xff]
    %v3488 = vld [vmem:[%s4 + $0x58] sm:$0xff]
    %v3490 = vsel %vm1621, %v3407, 0
    %v3493 = vsel %vm1621, %v3412, 0
    %v3496 = vsel %vm1621, %v3417, 0
    %v3499 = vsel %vm1621, %v3422, 0
    %v3502 = vsel %vm1621, %v3427, 0
    %v3505 = vsel %vm1621, %v3432, 0
    %v3508 = vsel %vm1621, %v3437, 0
    %v3511 = vsel %vm1621, %v3442, 0
    %v3514 = vsel %vm1621, %v3447, 0
    %v3517 = vsel %vm1621, %v3452, 0
    %v3520 = vsel %vm1621, %v3457, 0
    %v3523 = vsel %vm1621, %v3462, 0
    %v3526 = vsel %vm1621, %v3467, 0
    %v3529 = vsel %vm1621, %v3472, 0
    %v3532 = vsel %vm1621, %v3477, 0
    %v3535 = vsel %vm1621, %v3482, 0
    %3537 = vmatprep.subr.mxu0 0.0
    %3538 = vmatpush1.msra.mxu0 %v3485
    %3539 = vmatprep.subr.mxu0 0.0
    %3540 = vmatpush1.msra.mxu0 %v3486
    %3541 = vmatprep.subr.mxu0 0.0
    %3542 = vmatpush1.msra.mxu0 %v3487
    %3543 = vmatprep.subr.mxu0 0.0
    %3544 = vmatpush1.msra.mxu0 %v3488
    %3545 = vmatprep.subr.mxu0 0.0
    %3546 = vmatpush1.msra.mxu0 0.0
    %3547 = vmatprep.subr.mxu0 0.0
    %3548 = vmatpush1.msra.mxu0 0.0
    %3549 = vmatprep.subr.mxu0 0.0
    %3550 = vmatpush1.msra.mxu0 0.0
    %3551 = vmatprep.subr.mxu0 0.0
    %3552 = vmatpush1.msra.mxu0 0.0
    %3553 = vmatprep.subr.mxu0 0.0
    %3554 = vmatpush1.msra.mxu0 0.0
    %3555 = vmatprep.subr.mxu0 0.0
    %3556 = vmatpush1.msra.mxu0 0.0
    %3557 = vmatprep.subr.mxu0 0.0
    %3558 = vmatpush1.msra.mxu0 0.0
    %3559 = vmatprep.subr.mxu0 0.0
    %3560 = vmatpush1.msra.mxu0 0.0
    %3561 = vmatprep.subr.mxu0 0.0
    %3562 = vmatpush1.msra.mxu0 0.0
    %3563 = vmatprep.subr.mxu0 0.0
    %3564 = vmatpush1.msra.mxu0 0.0
    %3565 = vmatprep.subr.mxu0 0.0
    %3566 = vmatpush1.msra.mxu0 0.0
    %3567 = vmatprep.subr.mxu0 0.0
    %3568 = vmatpush1.msra.mxu0 0.0
    %3569 = vmatprep.subr.mxu0 0.0
    %3570 = vmatpush1.msra.mxu0 0.0
    %3571 = vmatprep.subr.mxu0 0.0
    %3572 = vmatpush1.msra.mxu0 0.0
    %3573 = vmatprep.subr.mxu0 0.0
    %3574 = vmatpush1.msra.mxu0 0.0
    %3575 = vmatprep.subr.mxu0 0.0
    %3576 = vmatpush1.msra.mxu0 0.0
    %3577 = vmatprep.subr.mxu0 0.0
    %3578 = vmatpush1.msra.mxu0 0.0
    %3579 = vmatprep.subr.mxu0 0.0
    %3580 = vmatpush1.msra.mxu0 0.0
    %3581 = vmatprep.subr.mxu0 0.0
    %3582 = vmatpush1.msra.mxu0 0.0
    %3583 = vmatprep.subr.mxu0 0.0
    %3584 = vmatpush1.msra.mxu0 0.0
    %3585 = vmatprep.subr.mxu0 0.0
    %3586 = vmatpush1.msra.mxu0 0.0
    %3587 = vmatprep.subr.mxu0 0.0
    %3588 = vmatpush1.msra.mxu0 0.0
    %3589 = vmatprep.subr.mxu0 0.0
    %3590 = vmatpush1.msra.mxu0 0.0
    %3591 = vmatprep.subr.mxu0 0.0
    %3592 = vmatpush1.msra.mxu0 0.0
    %3593 = vmatprep.subr.mxu0 0.0
    %3594 = vmatpush1.msra.mxu0 0.0
    %3595 = vmatprep.subr.mxu0 0.0
    %3596 = vmatpush1.msra.mxu0 0.0
    %3597 = vmatprep.subr.mxu0 0.0
    %3598 = vmatpush1.msra.mxu0 0.0
    %3599 = vmatprep.subr.mxu0 0.0
    %3600 = vmatpush1.msra.mxu0 0.0
    %3601 = vmatprep.mubr.f32.mxu0 0.0
    %3602 = vmatmul.mubr.f32.gmra.mrb[0].mxu0 %v3490
    %v3603 = vpop.f32.mrb[0].mxu0
    %v3604 = vadd.f32 0.0, %v3603
    %v3605 = vpop.f32.mrb[0].mxu0
    %3606 = vmatprep.mubr.f32.mxu0 0.0
    %3607 = vmatmul.mubr.f32.gmra.mrb[0].mxu0 %v3493
    %v3608 = vpop.f32.mrb[0].mxu0
    %v3609 = vadd.f32 0.0, %v3608
    %v3610 = vpop.f32.mrb[0].mxu0
    %3611 = vmatprep.mubr.f32.mxu0 0.0
    %3612 = vmatmul.mubr.f32.gmra.mrb[0].mxu0 %v3496
    %v3613 = vpop.f32.mrb[0].mxu0
    %v3614 = vadd.f32 0.0, %v3613
    %v3615 = vpop.f32.mrb[0].mxu0
    %3616 = vmatprep.mubr.f32.mxu0 0.0
    %3617 = vmatmul.mubr.f32.gmra.mrb[0].mxu0 %v3499
    %v3618 = vpop.f32.mrb[0].mxu0
    %v3619 = vadd.f32 0.0, %v3618
    %v3620 = vpop.f32.mrb[0].mxu0
    %3621 = vmatprep.mubr.f32.mxu0 0.0
    %3622 = vmatmul.mubr.f32.gmra.mrb[0].mxu0 %v3502
    %v3623 = vpop.f32.mrb[0].mxu0
    %v3624 = vadd.f32 0.0, %v3623
    %v3625 = vpop.f32.mrb[0].mxu0
    %3626 = vmatprep.mubr.f32.mxu0 0.0
    %3627 = vmatmul.mubr.f32.gmra.mrb[0].mxu0 %v3505
    %v3628 = vpop.f32.mrb[0].mxu0
    %v3629 = vadd.f32 0.0, %v3628
    %v3630 = vpop.f32.mrb[0].mxu0
    %3631 = vmatprep.mubr.f32.mxu0 0.0
    %3632 = vmatmul.mubr.f32.gmra.mrb[0].mxu0 %v3508
    %v3633 = vpop.f32.mrb[0].mxu0
    %v3634 = vadd.f32 0.0, %v3633
    %v3635 = vpop.f32.mrb[0].mxu0
    %3636 = vmatprep.mubr.f32.mxu0 0.0
    %3637 = vmatmul.mubr.f32.gmra.mrb[0].mxu0 %v3511
    %v3638 = vpop.f32.mrb[0].mxu0
    %v3639 = vadd.f32 0.0, %v3638
    %v3640 = vpop.f32.mrb[0].mxu0
    %3641 = vmatprep.mubr.f32.mxu0 0.0
    %3642 = vmatmul.mubr.f32.gmra.mrb[0].mxu0 %v3514
    %v3643 = vpop.f32.mrb[0].mxu0
    %v3644 = vadd.f32 0.0, %v3643
    %v3645 = vpop.f32.mrb[0].mxu0
    %3646 = vmatprep.mubr.f32.mxu0 0.0
    %3647 = vmatmul.mubr.f32.gmra.mrb[0].mxu0 %v3517
    %v3648 = vpop.f32.mrb[0].mxu0
    %v3649 = vadd.f32 0.0, %v3648
    %v3650 = vpop.f32.mrb[0].mxu0
    %3651 = vmatprep.mubr.f32.mxu0 0.0
    %3652 = vmatmul.mubr.f32.gmra.mrb[0].mxu0 %v3520
    %v3653 = vpop.f32.mrb[0].mxu0
    %v3654 = vadd.f32 0.0, %v3653
    %v3655 = vpop.f32.mrb[0].mxu0
    %3656 = vmatprep.mubr.f32.mxu0 0.0
    %3657 = vmatmul.mubr.f32.gmra.mrb[0].mxu0 %v3523
    %v3658 = vpop.f32.mrb[0].mxu0
    %v3659 = vadd.f32 0.0, %v3658
    %v3660 = vpop.f32.mrb[0].mxu0
    %3661 = vmatprep.mubr.f32.mxu0 0.0
    %3662 = vmatmul.mubr.f32.gmra.mrb[0].mxu0 %v3526
    %v3663 = vpop.f32.mrb[0].mxu0
    %v3664 = vadd.f32 0.0, %v3663
    %v3665 = vpop.f32.mrb[0].mxu0
    %3666 = vmatprep.mubr.f32.mxu0 0.0
    %3667 = vmatmul.mubr.f32.gmra.mrb[0].mxu0 %v3529
    %v3668 = vpop.f32.mrb[0].mxu0
    %v3669 = vadd.f32 0.0, %v3668
    %v3670 = vpop.f32.mrb[0].mxu0
    %3671 = vmatprep.mubr.f32.mxu0 0.0
    %3672 = vmatmul.mubr.f32.gmra.mrb[0].mxu0 %v3532
    %v3673 = vpop.f32.mrb[0].mxu0
    %v3674 = vadd.f32 0.0, %v3673
    %v3675 = vpop.f32.mrb[0].mxu0
    %3676 = vmatprep.mubr.f32.mxu0 0.0
    %3677 = vmatmul.mubr.f32.gmra.mrb[0].mxu0 %v3535
    %v3678 = vpop.f32.mrb[0].mxu0
    %v3679 = vadd.f32 0.0, %v3678
    %v3680 = vpop.f32.mrb[0].mxu0
    %3681 = vdwg.mxu0
    %3682 = vrot.lane.b32.xlu0 %v1617, 32
    %v3683 = vpop.permute.xlu0 %3682
    %3684 = vrot.lane.b32.xlu0 %v1618, 32
    %v3685 = vpop.permute.xlu0 %3684
    %3686 = vrot.lane.b32.xlu0 %v1619, 32
    %v3687 = vpop.permute.xlu0 %3686
    %3688 = vrot.lane.b32.xlu0 %v1620, 32
    %v3689 = vpop.permute.xlu0 %3688
    %3694 = vmatprep.subr.mxu0 0.0
    %3695 = vmatpush1.msra.mxu0 %v3683
    %3696 = vmatprep.subr.mxu0 0.0
    %3697 = vmatpush1.msra.mxu0 %v3685
    %3698 = vmatprep.subr.mxu0 0.0
    %3699 = vmatpush1.msra.mxu0 %v3687
    %3700 = vmatprep.subr.mxu0 0.0
    %3701 = vmatpush1.msra.mxu0 %v3689
    %3702 = vmatprep.subr.mxu0 0.0
    %3703 = vmatpush1.msra.mxu0 0.0
    %3704 = vmatprep.subr.mxu0 0.0
    %3705 = vmatpush1.msra.mxu0 0.0
    %3706 = vmatprep.subr.mxu0 0.0
    %3707 = vmatpush1.msra.mxu0 0.0
    %3708 = vmatprep.subr.mxu0 0.0
    %3709 = vmatpush1.msra.mxu0 0.0
    %3710 = vmatprep.subr.mxu0 0.0
    %3711 = vmatpush1.msra.mxu0 0.0
    %3712 = vmatprep.subr.mxu0 0.0
    %3713 = vmatpush1.msra.mxu0 0.0
    %3714 = vmatprep.subr.mxu0 0.0
    %3715 = vmatpush1.msra.mxu0 0.0
    %3716 = vmatprep.subr.mxu0 0.0
    %3717 = vmatpush1.msra.mxu0 0.0
    %3718 = vmatprep.subr.mxu0 0.0
    %3719 = vmatpush1.msra.mxu0 0.0
    %3720 = vmatprep.subr.mxu0 0.0
    %3721 = vmatpush1.msra.mxu0 0.0
    %3722 = vmatprep.subr.mxu0 0.0
    %3723 = vmatpush1.msra.mxu0 0.0
    %3724 = vmatprep.subr.mxu0 0.0
    %3725 = vmatpush1.msra.mxu0 0.0
    %3726 = vmatprep.subr.mxu0 0.0
    %3727 = vmatpush1.msra.mxu0 0.0
    %3728 = vmatprep.subr.mxu0 0.0
    %3729 = vmatpush1.msra.mxu0 0.0
    %3730 = vmatprep.subr.mxu0 0.0
    %3731 = vmatpush1.msra.mxu0 0.0
    %3732 = vmatprep.subr.mxu0 0.0
    %3733 = vmatpush1.msra.mxu0 0.0
    %3734 = vmatprep.subr.mxu0 0.0
    %3735 = vmatpush1.msra.mxu0 0.0
    %3736 = vmatprep.subr.mxu0 0.0
    %3737 = vmatpush1.msra.mxu0 0.0
    %3738 = vmatprep.subr.mxu0 0.0
    %3739 = vmatpush1.msra.mxu0 0.0
    %3740 = vmatprep.subr.mxu0 0.0
    %3741 = vmatpush1.msra.mxu0 0.0
    %3742 = vmatprep.subr.mxu0 0.0
    %3743 = vmatpush1.msra.mxu0 0.0
    %3744 = vmatprep.subr.mxu0 0.0
    %3745 = vmatpush1.msra.mxu0 0.0
    %3746 = vmatprep.subr.mxu0 0.0
    %3747 = vmatpush1.msra.mxu0 0.0
    %3748 = vmatprep.subr.mxu0 0.0
    %3749 = vmatpush1.msra.mxu0 0.0
    %3750 = vmatprep.subr.mxu0 0.0
    %3751 = vmatpush1.msra.mxu0 0.0
    %3752 = vmatprep.subr.mxu0 0.0
    %3753 = vmatpush1.msra.mxu0 0.0
    %3754 = vmatprep.subr.mxu0 0.0
    %3755 = vmatpush1.msra.mxu0 0.0
    %3756 = vmatprep.subr.mxu0 0.0
    %3757 = vmatpush1.msra.mxu0 0.0
    %3758 = vmatprep.mubr.f32.mxu0 0.0
    %3759 = vmatmul.mubr.f32.gmra.mrb[0].mxu0 %v1623
    %v3760 = vpop.f32.mrb[0].mxu0
    %v3761 = vadd.f32 %v3604, %v3760
    %v3762 = vpop.f32.mrb[0].mxu0
    %3763 = vmatprep.mubr.f32.mxu0 0.0
    %3764 = vmatmul.mubr.f32.gmra.mrb[0].mxu0 %v1626
    %v3765 = vpop.f32.mrb[0].mxu0
    %v3766 = vadd.f32 %v3609, %v3765
    %v3767 = vpop.f32.mrb[0].mxu0
    %3768 = vmatprep.mubr.f32.mxu0 0.0
    %3769 = vmatmul.mubr.f32.gmra.mrb[0].mxu0 %v1629
    %v3770 = vpop.f32.mrb[0].mxu0
    %v3771 = vadd.f32 %v3614, %v3770
    %v3772 = vpop.f32.mrb[0].mxu0
    %3773 = vmatprep.mubr.f32.mxu0 0.0
    %3774 = vmatmul.mubr.f32.gmra.mrb[0].mxu0 %v1632
    %v3775 = vpop.f32.mrb[0].mxu0
    %v3776 = vadd.f32 %v3619, %v3775
    %v3777 = vpop.f32.mrb[0].mxu0
    %3778 = vmatprep.mubr.f32.mxu0 0.0
    %3779 = vmatmul.mubr.f32.gmra.mrb[0].mxu0 %v1635
    %v3780 = vpop.f32.mrb[0].mxu0
    %v3781 = vadd.f32 %v3624, %v3780
    %v3782 = vpop.f32.mrb[0].mxu0
    %3783 = vmatprep.mubr.f32.mxu0 0.0
    %3784 = vmatmul.mubr.f32.gmra.mrb[0].mxu0 %v1638
    %v3785 = vpop.f32.mrb[0].mxu0
    %v3786 = vadd.f32 %v3629, %v3785
    %v3787 = vpop.f32.mrb[0].mxu0
    %3788 = vmatprep.mubr.f32.mxu0 0.0
    %3789 = vmatmul.mubr.f32.gmra.mrb[0].mxu0 %v1641
    %v3790 = vpop.f32.mrb[0].mxu0
    %v3791 = vadd.f32 %v3634, %v3790
    %v3792 = vpop.f32.mrb[0].mxu0
    %3793 = vmatprep.mubr.f32.mxu0 0.0
    %3794 = vmatmul.mubr.f32.gmra.mrb[0].mxu0 %v1644
    %v3795 = vpop.f32.mrb[0].mxu0
    %v3796 = vadd.f32 %v3639, %v3795
    %v3797 = vpop.f32.mrb[0].mxu0
    %3798 = vmatprep.mubr.f32.mxu0 0.0
    %3799 = vmatmul.mubr.f32.gmra.mrb[0].mxu0 %v1647
    %v3800 = vpop.f32.mrb[0].mxu0
    %v3801 = vadd.f32 %v3644, %v3800
    %v3802 = vpop.f32.mrb[0].mxu0
    %3803 = vmatprep.mubr.f32.mxu0 0.0
    %3804 = vmatmul.mubr.f32.gmra.mrb[0].mxu0 %v1650
    %v3805 = vpop.f32.mrb[0].mxu0
    %v3806 = vadd.f32 %v3649, %v3805
    %v3807 = vpop.f32.mrb[0].mxu0
    %3808 = vmatprep.mubr.f32.mxu0 0.0
    %3809 = vmatmul.mubr.f32.gmra.mrb[0].mxu0 %v1653
    %v3810 = vpop.f32.mrb[0].mxu0
    %v3811 = vadd.f32 %v3654, %v3810
    %v3812 = vpop.f32.mrb[0].mxu0
    %3813 = vmatprep.mubr.f32.mxu0 0.0
    %3814 = vmatmul.mubr.f32.gmra.mrb[0].mxu0 %v1656
    %v3815 = vpop.f32.mrb[0].mxu0
    %v3816 = vadd.f32 %v3659, %v3815
    %v3817 = vpop.f32.mrb[0].mxu0
    %3818 = vmatprep.mubr.f32.mxu0 0.0
    %3819 = vmatmul.mubr.f32.gmra.mrb[0].mxu0 %v1659
    %v3820 = vpop.f32.mrb[0].mxu0
    %v3821 = vadd.f32 %v3664, %v3820
    %v3822 = vpop.f32.mrb[0].mxu0
    %3823 = vmatprep.mubr.f32.mxu0 0.0
    %3824 = vmatmul.mubr.f32.gmra.mrb[0].mxu0 %v1662
    %v3825 = vpop.f32.mrb[0].mxu0
    %v3826 = vadd.f32 %v3669, %v3825
    %v3827 = vpop.f32.mrb[0].mxu0
    %3828 = vmatprep.mubr.f32.mxu0 0.0
    %3829 = vmatmul.mubr.f32.gmra.mrb[0].mxu0 %v1665
    %v3830 = vpop.f32.mrb[0].mxu0
    %v3831 = vadd.f32 %v3674, %v3830
    %v3832 = vpop.f32.mrb[0].mxu0
    %3833 = vmatprep.mubr.f32.mxu0 0.0
    %3834 = vmatmul.mubr.f32.gmra.mrb[0].mxu0 %v1668
    %v3835 = vpop.f32.mrb[0].mxu0
    %v3836 = vadd.f32 %v3679, %v3835
    %v3837 = vpop.f32.mrb[0].mxu0
    %3838 = vdwg.mxu0
    %v3839 = vlaneseq
    %v3840 = vshrl.u32 %v3839, 7
    %v3841 = vsub.s32 3, %v3840
    %v3842 = vrot.slane %v24, %v3841
    %v3843 = vadd.f32 %v3761, %v3842
    %v3844 = vadd.f32 %v3766, %v3842
    %v3845 = vadd.f32 %v3771, %v3842
    %v3846 = vadd.f32 %v3776, %v3842
    %v3847 = vadd.f32 %v3781, %v3842
    %v3848 = vadd.f32 %v3786, %v3842
    %v3849 = vadd.f32 %v3791, %v3842
    %v3850 = vadd.f32 %v3796, %v3842
    %v3851 = vadd.f32 %v3801, %v3842
    %v3852 = vadd.f32 %v3806, %v3842
    %v3853 = vadd.f32 %v3811, %v3842
    %v3854 = vadd.f32 %v3816, %v3842
    %v3855 = vadd.f32 %v3821, %v3842
    %v3856 = vadd.f32 %v3826, %v3842
    %v3857 = vadd.f32 %v3831, %v3842
    %v3858 = vadd.f32 %v3836, %v3842
    %v3859 = vmax.f32 %v3843, 0.0
    %v3860 = vmax.f32 %v3844, 0.0
    %v3861 = vmax.f32 %v3845, 0.0
    %v3862 = vmax.f32 %v3846, 0.0
    %v3863 = vmax.f32 %v3847, 0.0
    %v3864 = vmax.f32 %v3848, 0.0
    %v3865 = vmax.f32 %v3849, 0.0
    %v3866 = vmax.f32 %v3850, 0.0
    %v3867 = vmax.f32 %v3851, 0.0
    %v3868 = vmax.f32 %v3852, 0.0
    %v3869 = vmax.f32 %v3853, 0.0
    %v3870 = vmax.f32 %v3854, 0.0
    %v3871 = vmax.f32 %v3855, 0.0
    %v3872 = vmax.f32 %v3856, 0.0
    %v3873 = vmax.f32 %v3857, 0.0
    %v3874 = vmax.f32 %v3858, 0.0
    %3879 = vrot.lane.b32.xlu0 %v3485, 96
    %v3880 = vpop.permute.xlu0 %3879
    %3881 = vrot.lane.b32.xlu0 %v3486, 96
    %v3882 = vpop.permute.xlu0 %3881
    %3883 = vrot.lane.b32.xlu0 %v3487, 96
    %v3884 = vpop.permute.xlu0 %3883
    %3885 = vrot.lane.b32.xlu0 %v3488, 96
    %v3886 = vpop.permute.xlu0 %3885
    %v3892 = vsel %vm1621, %v3859, 0
    %v3895 = vsel %vm1621, %v3860, 0
    %v3898 = vsel %vm1621, %v3861, 0
    %v3901 = vsel %vm1621, %v3862, 0
    %v3904 = vsel %vm1621, %v3863, 0
    %v3907 = vsel %vm1621, %v3864, 0
    %v3910 = vsel %vm1621, %v3865, 0
    %v3913 = vsel %vm1621, %v3866, 0
    %v3916 = vsel %vm1621, %v3867, 0
    %v3919 = vsel %vm1621, %v3868, 0
    %v3922 = vsel %vm1621, %v3869, 0
    %v3925 = vsel %vm1621, %v3870, 0
    %v3928 = vsel %vm1621, %v3871, 0
    %v3931 = vsel %vm1621, %v3872, 0
    %v3934 = vsel %vm1621, %v3873, 0
    %v3937 = vsel %vm1621, %v3874, 0
    %3939 = vmatprep.subr.mxu0 0.0
    %3940 = vmatpush1.msra.mxu0 %v3880
    %3941 = vmatprep.subr.mxu0 0.0
    %3942 = vmatpush1.msra.mxu0 %v3882
    %3943 = vmatprep.subr.mxu0 0.0
    %3944 = vmatpush1.msra.mxu0 %v3884
    %3945 = vmatprep.subr.mxu0 0.0
    %3946 = vmatpush1.msra.mxu0 %v3886
    %3947 = vmatprep.subr.mxu0 0.0
    %3948 = vmatpush1.msra.mxu0 0.0
    %3949 = vmatprep.subr.mxu0 0.0
    %3950 = vmatpush1.msra.mxu0 0.0
    %3951 = vmatprep.subr.mxu0 0.0
    %3952 = vmatpush1.msra.mxu0 0.0
    %3953 = vmatprep.subr.mxu0 0.0
    %3954 = vmatpush1.msra.mxu0 0.0
    %3955 = vmatprep.subr.mxu0 0.0
    %3956 = vmatpush1.msra.mxu0 0.0
    %3957 = vmatprep.subr.mxu0 0.0
    %3958 = vmatpush1.msra.mxu0 0.0
    %3959 = vmatprep.subr.mxu0 0.0
    %3960 = vmatpush1.msra.mxu0 0.0
    %3961 = vmatprep.subr.mxu0 0.0
    %3962 = vmatpush1.msra.mxu0 0.0
    %3963 = vmatprep.subr.mxu0 0.0
    %3964 = vmatpush1.msra.mxu0 0.0
    %3965 = vmatprep.subr.mxu0 0.0
    %3966 = vmatpush1.msra.mxu0 0.0
    %3967 = vmatprep.subr.mxu0 0.0
    %3968 = vmatpush1.msra.mxu0 0.0
    %3969 = vmatprep.subr.mxu0 0.0
    %3970 = vmatpush1.msra.mxu0 0.0
    %3971 = vmatprep.subr.mxu0 0.0
    %3972 = vmatpush1.msra.mxu0 0.0
    %3973 = vmatprep.subr.mxu0 0.0
    %3974 = vmatpush1.msra.mxu0 0.0
    %3975 = vmatprep.subr.mxu0 0.0
    %3976 = vmatpush1.msra.mxu0 0.0
    %3977 = vmatprep.subr.mxu0 0.0
    %3978 = vmatpush1.msra.mxu0 0.0
    %3979 = vmatprep.subr.mxu0 0.0
    %3980 = vmatpush1.msra.mxu0 0.0
    %3981 = vmatprep.subr.mxu0 0.0
    %3982 = vmatpush1.msra.mxu0 0.0
    %3983 = vmatprep.subr.mxu0 0.0
    %3984 = vmatpush1.msra.mxu0 0.0
    %3985 = vmatprep.subr.mxu0 0.0
    %3986 = vmatpush1.msra.mxu0 0.0
    %3987 = vmatprep.subr.mxu0 0.0
    %3988 = vmatpush1.msra.mxu0 0.0
    %3989 = vmatprep.subr.mxu0 0.0
    %3990 = vmatpush1.msra.mxu0 0.0
    %3991 = vmatprep.subr.mxu0 0.0
    %3992 = vmatpush1.msra.mxu0 0.0
    %3993 = vmatprep.subr.mxu0 0.0
    %3994 = vmatpush1.msra.mxu0 0.0
    %3995 = vmatprep.subr.mxu0 0.0
    %3996 = vmatpush1.msra.mxu0 0.0
    %3997 = vmatprep.subr.mxu0 0.0
    %3998 = vmatpush1.msra.mxu0 0.0
    %3999 = vmatprep.subr.mxu0 0.0
    %4000 = vmatpush1.msra.mxu0 0.0
    %4001 = vmatprep.subr.mxu0 0.0
    %4002 = vmatpush1.msra.mxu0 0.0
    %4003 = vmatprep.mubr.f32.mxu0 0.0
    %4004 = vmatmul.mubr.f32.gmra.mrb[0].mxu0 %v3892
    %v4005 = vpop.f32.mrb[0].mxu0
    %v4006 = vadd.f32 0.0, %v4005
    %v4007 = vpop.f32.mrb[0].mxu0
    %4008 = vmatprep.mubr.f32.mxu0 0.0
    %4009 = vmatmul.mubr.f32.gmra.mrb[0].mxu0 %v3895
    %v4010 = vpop.f32.mrb[0].mxu0
    %v4011 = vadd.f32 0.0, %v4010
    %v4012 = vpop.f32.mrb[0].mxu0
    %4013 = vmatprep.mubr.f32.mxu0 0.0
    %4014 = vmatmul.mubr.f32.gmra.mrb[0].mxu0 %v3898
    %v4015 = vpop.f32.mrb[0].mxu0
    %v4016 = vadd.f32 0.0, %v4015
    %v4017 = vpop.f32.mrb[0].mxu0
    %4018 = vmatprep.mubr.f32.mxu0 0.0
    %4019 = vmatmul.mubr.f32.gmra.mrb[0].mxu0 %v3901
    %v4020 = vpop.f32.mrb[0].mxu0
    %v4021 = vadd.f32 0.0, %v4020
    %v4022 = vpop.f32.mrb[0].mxu0
    %4023 = vmatprep.mubr.f32.mxu0 0.0
    %4024 = vmatmul.mubr.f32.gmra.mrb[0].mxu0 %v3904
    %v4025 = vpop.f32.mrb[0].mxu0
    %v4026 = vadd.f32 0.0, %v4025
    %v4027 = vpop.f32.mrb[0].mxu0
    %4028 = vmatprep.mubr.f32.mxu0 0.0
    %4029 = vmatmul.mubr.f32.gmra.mrb[0].mxu0 %v3907
    %v4030 = vpop.f32.mrb[0].mxu0
    %v4031 = vadd.f32 0.0, %v4030
    %v4032 = vpop.f32.mrb[0].mxu0
    %4033 = vmatprep.mubr.f32.mxu0 0.0
    %4034 = vmatmul.mubr.f32.gmra.mrb[0].mxu0 %v3910
    %v4035 = vpop.f32.mrb[0].mxu0
    %v4036 = vadd.f32 0.0, %v4035
    %v4037 = vpop.f32.mrb[0].mxu0
    %4038 = vmatprep.mubr.f32.mxu0 0.0
    %4039 = vmatmul.mubr.f32.gmra.mrb[0].mxu0 %v3913
    %v4040 = vpop.f32.mrb[0].mxu0
    %v4041 = vadd.f32 0.0, %v4040
    %v4042 = vpop.f32.mrb[0].mxu0
    %4043 = vmatprep.mubr.f32.mxu0 0.0
    %4044 = vmatmul.mubr.f32.gmra.mrb[0].mxu0 %v3916
    %v4045 = vpop.f32.mrb[0].mxu0
    %v4046 = vadd.f32 0.0, %v4045
    %v4047 = vpop.f32.mrb[0].mxu0
    %4048 = vmatprep.mubr.f32.mxu0 0.0
    %4049 = vmatmul.mubr.f32.gmra.mrb[0].mxu0 %v3919
    %v4050 = vpop.f32.mrb[0].mxu0
    %v4051 = vadd.f32 0.0, %v4050
    %v4052 = vpop.f32.mrb[0].mxu0
    %4053 = vmatprep.mubr.f32.mxu0 0.0
    %4054 = vmatmul.mubr.f32.gmra.mrb[0].mxu0 %v3922
    %v4055 = vpop.f32.mrb[0].mxu0
    %v4056 = vadd.f32 0.0, %v4055
    %v4057 = vpop.f32.mrb[0].mxu0
    %4058 = vmatprep.mubr.f32.mxu0 0.0
    %4059 = vmatmul.mubr.f32.gmra.mrb[0].mxu0 %v3925
    %v4060 = vpop.f32.mrb[0].mxu0
    %v4061 = vadd.f32 0.0, %v4060
    %v4062 = vpop.f32.mrb[0].mxu0
    %4063 = vmatprep.mubr.f32.mxu0 0.0
    %4064 = vmatmul.mubr.f32.gmra.mrb[0].mxu0 %v3928
    %v4065 = vpop.f32.mrb[0].mxu0
    %v4066 = vadd.f32 0.0, %v4065
    %v4067 = vpop.f32.mrb[0].mxu0
    %4068 = vmatprep.mubr.f32.mxu0 0.0
    %4069 = vmatmul.mubr.f32.gmra.mrb[0].mxu0 %v3931
    %v4070 = vpop.f32.mrb[0].mxu0
    %v4071 = vadd.f32 0.0, %v4070
    %v4072 = vpop.f32.mrb[0].mxu0
    %4073 = vmatprep.mubr.f32.mxu0 0.0
    %4074 = vmatmul.mubr.f32.gmra.mrb[0].mxu0 %v3934
    %v4075 = vpop.f32.mrb[0].mxu0
    %v4076 = vadd.f32 0.0, %v4075
    %v4077 = vpop.f32.mrb[0].mxu0
    %4078 = vmatprep.mubr.f32.mxu0 0.0
    %4079 = vmatmul.mubr.f32.gmra.mrb[0].mxu0 %v3937
    %v4080 = vpop.f32.mrb[0].mxu0
    %v4081 = vadd.f32 0.0, %v4080
    %v4082 = vpop.f32.mrb[0].mxu0
    %4083 = vdwg.mxu0
    %4084 = vrot.lane.b32.xlu0 %v3485, 64
    %v4085 = vpop.permute.xlu0 %4084
    %4086 = vrot.lane.b32.xlu0 %v3486, 64
    %v4087 = vpop.permute.xlu0 %4086
    %4088 = vrot.lane.b32.xlu0 %v3487, 64
    %v4089 = vpop.permute.xlu0 %4088
    %4090 = vrot.lane.b32.xlu0 %v3488, 64
    %v4091 = vpop.permute.xlu0 %4090
    %4096 = vmatprep.subr.mxu0 0.0
    %4097 = vmatpush1.msra.mxu0 %v4085
    %4098 = vmatprep.subr.mxu0 0.0
    %4099 = vmatpush1.msra.mxu0 %v4087
    %4100 = vmatprep.subr.mxu0 0.0
    %4101 = vmatpush1.msra.mxu0 %v4089
    %4102 = vmatprep.subr.mxu0 0.0
    %4103 = vmatpush1.msra.mxu0 %v4091
    %4104 = vmatprep.subr.mxu0 0.0
    %4105 = vmatpush1.msra.mxu0 0.0
    %4106 = vmatprep.subr.mxu0 0.0
    %4107 = vmatpush1.msra.mxu0 0.0
    %4108 = vmatprep.subr.mxu0 0.0
    %4109 = vmatpush1.msra.mxu0 0.0
    %4110 = vmatprep.subr.mxu0 0.0
    %4111 = vmatpush1.msra.mxu0 0.0
    %4112 = vmatprep.subr.mxu0 0.0
    %4113 = vmatpush1.msra.mxu0 0.0
    %4114 = vmatprep.subr.mxu0 0.0
    %4115 = vmatpush1.msra.mxu0 0.0
    %4116 = vmatprep.subr.mxu0 0.0
    %4117 = vmatpush1.msra.mxu0 0.0
    %4118 = vmatprep.subr.mxu0 0.0
    %4119 = vmatpush1.msra.mxu0 0.0
    %4120 = vmatprep.subr.mxu0 0.0
    %4121 = vmatpush1.msra.mxu0 0.0
    %4122 = vmatprep.subr.mxu0 0.0
    %4123 = vmatpush1.msra.mxu0 0.0
    %4124 = vmatprep.subr.mxu0 0.0
    %4125 = vmatpush1.msra.mxu0 0.0
    %4126 = vmatprep.subr.mxu0 0.0
    %4127 = vmatpush1.msra.mxu0 0.0
    %4128 = vmatprep.subr.mxu0 0.0
    %4129 = vmatpush1.msra.mxu0 0.0
    %4130 = vmatprep.subr.mxu0 0.0
    %4131 = vmatpush1.msra.mxu0 0.0
    %4132 = vmatprep.subr.mxu0 0.0
    %4133 = vmatpush1.msra.mxu0 0.0
    %4134 = vmatprep.subr.mxu0 0.0
    %4135 = vmatpush1.msra.mxu0 0.0
    %4136 = vmatprep.subr.mxu0 0.0
    %4137 = vmatpush1.msra.mxu0 0.0
    %4138 = vmatprep.subr.mxu0 0.0
    %4139 = vmatpush1.msra.mxu0 0.0
    %4140 = vmatprep.subr.mxu0 0.0
    %4141 = vmatpush1.msra.mxu0 0.0
    %4142 = vmatprep.subr.mxu0 0.0
    %4143 = vmatpush1.msra.mxu0 0.0
    %4144 = vmatprep.subr.mxu0 0.0
    %4145 = vmatpush1.msra.mxu0 0.0
    %4146 = vmatprep.subr.mxu0 0.0
    %4147 = vmatpush1.msra.mxu0 0.0
    %4148 = vmatprep.subr.mxu0 0.0
    %4149 = vmatpush1.msra.mxu0 0.0
    %4150 = vmatprep.subr.mxu0 0.0
    %4151 = vmatpush1.msra.mxu0 0.0
    %4152 = vmatprep.subr.mxu0 0.0
    %4153 = vmatpush1.msra.mxu0 0.0
    %4154 = vmatprep.subr.mxu0 0.0
    %4155 = vmatpush1.msra.mxu0 0.0
    %4156 = vmatprep.subr.mxu0 0.0
    %4157 = vmatpush1.msra.mxu0 0.0
    %4158 = vmatprep.subr.mxu0 0.0
    %4159 = vmatpush1.msra.mxu0 0.0
    %4160 = vmatprep.mubr.f32.mxu0 0.0
    %4161 = vmatmul.mubr.f32.gmra.mrb[0].mxu0 %v3892
    %v4162 = vpop.f32.mrb[0].mxu0
    %v4163 = vadd.f32 0.0, %v4162
    %v4164 = vpop.f32.mrb[0].mxu0
    %4165 = vmatprep.mubr.f32.mxu0 0.0
    %4166 = vmatmul.mubr.f32.gmra.mrb[0].mxu0 %v3895
    %v4167 = vpop.f32.mrb[0].mxu0
    %v4168 = vadd.f32 0.0, %v4167
    %v4169 = vpop.f32.mrb[0].mxu0
    %4170 = vmatprep.mubr.f32.mxu0 0.0
    %4171 = vmatmul.mubr.f32.gmra.mrb[0].mxu0 %v3898
    %v4172 = vpop.f32.mrb[0].mxu0
    %v4173 = vadd.f32 0.0, %v4172
    %v4174 = vpop.f32.mrb[0].mxu0
    %4175 = vmatprep.mubr.f32.mxu0 0.0
    %4176 = vmatmul.mubr.f32.gmra.mrb[0].mxu0 %v3901
    %v4177 = vpop.f32.mrb[0].mxu0
    %v4178 = vadd.f32 0.0, %v4177
    %v4179 = vpop.f32.mrb[0].mxu0
    %4180 = vmatprep.mubr.f32.mxu0 0.0
    %4181 = vmatmul.mubr.f32.gmra.mrb[0].mxu0 %v3904
    %v4182 = vpop.f32.mrb[0].mxu0
    %v4183 = vadd.f32 0.0, %v4182
    %v4184 = vpop.f32.mrb[0].mxu0
    %4185 = vmatprep.mubr.f32.mxu0 0.0
    %4186 = vmatmul.mubr.f32.gmra.mrb[0].mxu0 %v3907
    %v4187 = vpop.f32.mrb[0].mxu0
    %v4188 = vadd.f32 0.0, %v4187
    %v4189 = vpop.f32.mrb[0].mxu0
    %4190 = vmatprep.mubr.f32.mxu0 0.0
    %4191 = vmatmul.mubr.f32.gmra.mrb[0].mxu0 %v3910
    %v4192 = vpop.f32.mrb[0].mxu0
    %v4193 = vadd.f32 0.0, %v4192
    %v4194 = vpop.f32.mrb[0].mxu0
    %4195 = vmatprep.mubr.f32.mxu0 0.0
    %4196 = vmatmul.mubr.f32.gmra.mrb[0].mxu0 %v3913
    %v4197 = vpop.f32.mrb[0].mxu0
    %v4198 = vadd.f32 0.0, %v4197
    %v4199 = vpop.f32.mrb[0].mxu0
    %4200 = vmatprep.mubr.f32.mxu0 0.0
    %4201 = vmatmul.mubr.f32.gmra.mrb[0].mxu0 %v3916
    %v4202 = vpop.f32.mrb[0].mxu0
    %v4203 = vadd.f32 0.0, %v4202
    %v4204 = vpop.f32.mrb[0].mxu0
    %4205 = vmatprep.mubr.f32.mxu0 0.0
    %4206 = vmatmul.mubr.f32.gmra.mrb[0].mxu0 %v3919
    %v4207 = vpop.f32.mrb[0].mxu0
    %v4208 = vadd.f32 0.0, %v4207
    %v4209 = vpop.f32.mrb[0].mxu0
    %4210 = vmatprep.mubr.f32.mxu0 0.0
    %4211 = vmatmul.mubr.f32.gmra.mrb[0].mxu0 %v3922
    %v4212 = vpop.f32.mrb[0].mxu0
    %v4213 = vadd.f32 0.0, %v4212
    %v4214 = vpop.f32.mrb[0].mxu0
    %4215 = vmatprep.mubr.f32.mxu0 0.0
    %4216 = vmatmul.mubr.f32.gmra.mrb[0].mxu0 %v3925
    %v4217 = vpop.f32.mrb[0].mxu0
    %v4218 = vadd.f32 0.0, %v4217
    %v4219 = vpop.f32.mrb[0].mxu0
    %4220 = vmatprep.mubr.f32.mxu0 0.0
    %4221 = vmatmul.mubr.f32.gmra.mrb[0].mxu0 %v3928
    %v4222 = vpop.f32.mrb[0].mxu0
    %v4223 = vadd.f32 0.0, %v4222
    %v4224 = vpop.f32.mrb[0].mxu0
    %4225 = vmatprep.mubr.f32.mxu0 0.0
    %4226 = vmatmul.mubr.f32.gmra.mrb[0].mxu0 %v3931
    %v4227 = vpop.f32.mrb[0].mxu0
    %v4228 = vadd.f32 0.0, %v4227
    %v4229 = vpop.f32.mrb[0].mxu0
    %4230 = vmatprep.mubr.f32.mxu0 0.0
    %4231 = vmatmul.mubr.f32.gmra.mrb[0].mxu0 %v3934
    %v4232 = vpop.f32.mrb[0].mxu0
    %v4233 = vadd.f32 0.0, %v4232
    %v4234 = vpop.f32.mrb[0].mxu0
    %4235 = vmatprep.mubr.f32.mxu0 0.0
    %4236 = vmatmul.mubr.f32.gmra.mrb[0].mxu0 %v3937
    %v4237 = vpop.f32.mrb[0].mxu0
    %v4238 = vadd.f32 0.0, %v4237
    %v4239 = vpop.f32.mrb[0].mxu0
    %4240 = vdwg.mxu0
    %4241 = vmatprep.subr.mxu0 0.0
    %4242 = vmatpush1.msra.mxu0 %v4163
    %4243 = vmatprep.subr.mxu0 0.0
    %4244 = vmatpush1.msra.mxu0 %v4168
    %4245 = vmatprep.subr.mxu0 0.0
    %4246 = vmatpush1.msra.mxu0 %v4173
    %4247 = vmatprep.subr.mxu0 0.0
    %4248 = vmatpush1.msra.mxu0 %v4178
    %4249 = vmatprep.subr.mxu0 0.0
    %4250 = vmatpush1.msra.mxu0 %v4183
    %4251 = vmatprep.subr.mxu0 0.0
    %4252 = vmatpush1.msra.mxu0 %v4188
    %4253 = vmatprep.subr.mxu0 0.0
    %4254 = vmatpush1.msra.mxu0 %v4193
    %4255 = vmatprep.subr.mxu0 0.0
    %4256 = vmatpush1.msra.mxu0 %v4198
    %4257 = vmatprep.subr.mxu0 0.0
    %4258 = vmatpush1.msra.mxu0 %v4203
    %4259 = vmatprep.subr.mxu0 0.0
    %4260 = vmatpush1.msra.mxu0 %v4208
    %4261 = vmatprep.subr.mxu0 0.0
    %4262 = vmatpush1.msra.mxu0 %v4213
    %4263 = vmatprep.subr.mxu0 0.0
    %4264 = vmatpush1.msra.mxu0 %v4218
    %4265 = vmatprep.subr.mxu0 0.0
    %4266 = vmatpush1.msra.mxu0 %v4223
    %4267 = vmatprep.subr.mxu0 0.0
    %4268 = vmatpush1.msra.mxu0 %v4228
    %4269 = vmatprep.subr.mxu0 0.0
    %4270 = vmatpush1.msra.mxu0 %v4233
    %4271 = vmatprep.subr.mxu0 0.0
    %4272 = vmatpush1.msra.mxu0 %v4238
    %4273 = vmatprep.subr.mxu0 0.0
    %4274 = vmatpush1.msra.mxu0 0.0
    %4275 = vmatprep.subr.mxu0 0.0
    %4276 = vmatpush1.msra.mxu0 0.0
    %4277 = vmatprep.subr.mxu0 0.0
    %4278 = vmatpush1.msra.mxu0 0.0
    %4279 = vmatprep.subr.mxu0 0.0
    %4280 = vmatpush1.msra.mxu0 0.0
    %4281 = vmatprep.subr.mxu0 0.0
    %4282 = vmatpush1.msra.mxu0 0.0
    %4283 = vmatprep.subr.mxu0 0.0
    %4284 = vmatpush1.msra.mxu0 0.0
    %4285 = vmatprep.subr.mxu0 0.0
    %4286 = vmatpush1.msra.mxu0 0.0
    %4287 = vmatprep.subr.mxu0 0.0
    %4288 = vmatpush1.msra.mxu0 0.0
    %4289 = vmatprep.subr.mxu0 0.0
    %4290 = vmatpush1.msra.mxu0 0.0
    %4291 = vmatprep.subr.mxu0 0.0
    %4292 = vmatpush1.msra.mxu0 0.0
    %4293 = vmatprep.subr.mxu0 0.0
    %4294 = vmatpush1.msra.mxu0 0.0
    %4295 = vmatprep.subr.mxu0 0.0
    %4296 = vmatpush1.msra.mxu0 0.0
    %4297 = vmatprep.subr.mxu0 0.0
    %4298 = vmatpush1.msra.mxu0 0.0
    %4299 = vmatprep.subr.mxu0 0.0
    %4300 = vmatpush1.msra.mxu0 0.0
    %4301 = vmatprep.subr.mxu0 0.0
    %4302 = vmatpush1.msra.mxu0 0.0
    %4303 = vmatprep.subr.mxu0 0.0
    %4304 = vmatpush1.msra.mxu0 0.0
    %4305 = vmatprep.mubr.f32.mxu0 0.0
    %4306 = vmatmul.mubr.f32.gmra.mrb[0].mxu0 %v603
    %v4307 = vpop.f32.mrb[0].mxu0
    %v4308 = vadd.f32 0.0, %v4307
    %v4309 = vpop.f32.mrb[0].mxu0
    %4310 = vmatprep.mubr.f32.mxu0 0.0
    %4311 = vmatmul.mubr.f32.gmra.mrb[0].mxu0 %v604
    %v4312 = vpop.f32.mrb[0].mxu0
    %v4313 = vadd.f32 0.0, %v4312
    %v4314 = vpop.f32.mrb[0].mxu0
    %4315 = vmatprep.mubr.f32.mxu0 0.0
    %4316 = vmatmul.mubr.f32.gmra.mrb[0].mxu0 %v605
    %v4317 = vpop.f32.mrb[0].mxu0
    %v4318 = vadd.f32 0.0, %v4317
    %v4319 = vpop.f32.mrb[0].mxu0
    %4320 = vmatprep.mubr.f32.mxu0 0.0
    %4321 = vmatmul.mubr.f32.gmra.mrb[0].mxu0 %v606
    %v4322 = vpop.f32.mrb[0].mxu0
    %v4323 = vadd.f32 0.0, %v4322
    %v4324 = vpop.f32.mrb[0].mxu0
    %4325 = vmatprep.mubr.f32.mxu0 0.0
    %4326 = vmatmul.mubr.f32.gmra.mrb[0].mxu0 %v607
    %v4327 = vpop.f32.mrb[0].mxu0
    %v4328 = vadd.f32 0.0, %v4327
    %v4329 = vpop.f32.mrb[0].mxu0
    %4330 = vmatprep.mubr.f32.mxu0 0.0
    %4331 = vmatmul.mubr.f32.gmra.mrb[0].mxu0 %v608
    %v4332 = vpop.f32.mrb[0].mxu0
    %v4333 = vadd.f32 0.0, %v4332
    %v4334 = vpop.f32.mrb[0].mxu0
    %4335 = vmatprep.mubr.f32.mxu0 0.0
    %4336 = vmatmul.mubr.f32.gmra.mrb[0].mxu0 %v609
    %v4337 = vpop.f32.mrb[0].mxu0
    %v4338 = vadd.f32 0.0, %v4337
    %v4339 = vpop.f32.mrb[0].mxu0
    %4340 = vmatprep.mubr.f32.mxu0 0.0
    %4341 = vmatmul.mubr.f32.gmra.mrb[0].mxu0 %v610
    %v4342 = vpop.f32.mrb[0].mxu0
    %v4343 = vadd.f32 0.0, %v4342
    %v4344 = vpop.f32.mrb[0].mxu0
    %4345 = vmatprep.mubr.f32.mxu0 0.0
    %4346 = vmatmul.mubr.f32.gmra.mrb[0].mxu0 %v611
    %v4347 = vpop.f32.mrb[0].mxu0
    %v4348 = vadd.f32 0.0, %v4347
    %v4349 = vpop.f32.mrb[0].mxu0
    %4350 = vmatprep.mubr.f32.mxu0 0.0
    %4351 = vmatmul.mubr.f32.gmra.mrb[0].mxu0 %v612
    %v4352 = vpop.f32.mrb[0].mxu0
    %v4353 = vadd.f32 0.0, %v4352
    %v4354 = vpop.f32.mrb[0].mxu0
    %4355 = vmatprep.mubr.f32.mxu0 0.0
    %4356 = vmatmul.mubr.f32.gmra.mrb[0].mxu0 %v613
    %v4357 = vpop.f32.mrb[0].mxu0
    %v4358 = vadd.f32 0.0, %v4357
    %v4359 = vpop.f32.mrb[0].mxu0
    %4360 = vmatprep.mubr.f32.mxu0 0.0
    %4361 = vmatmul.mubr.f32.gmra.mrb[0].mxu0 %v614
    %v4362 = vpop.f32.mrb[0].mxu0
    %v4363 = vadd.f32 0.0, %v4362
    %v4364 = vpop.f32.mrb[0].mxu0
    %4365 = vmatprep.mubr.f32.mxu0 0.0
    %4366 = vmatmul.mubr.f32.gmra.mrb[0].mxu0 %v615
    %v4367 = vpop.f32.mrb[0].mxu0
    %v4368 = vadd.f32 0.0, %v4367
    %v4369 = vpop.f32.mrb[0].mxu0
    %4370 = vmatprep.mubr.f32.mxu0 0.0
    %4371 = vmatmul.mubr.f32.gmra.mrb[0].mxu0 %v616
    %v4372 = vpop.f32.mrb[0].mxu0
    %v4373 = vadd.f32 0.0, %v4372
    %v4374 = vpop.f32.mrb[0].mxu0
    %4375 = vmatprep.mubr.f32.mxu0 0.0
    %4376 = vmatmul.mubr.f32.gmra.mrb[0].mxu0 %v617
    %v4377 = vpop.f32.mrb[0].mxu0
    %v4378 = vadd.f32 0.0, %v4377
    %v4379 = vpop.f32.mrb[0].mxu0
    %4380 = vmatprep.mubr.f32.mxu0 0.0
    %4381 = vmatmul.mubr.f32.gmra.mrb[0].mxu0 %v618
    %v4382 = vpop.f32.mrb[0].mxu0
    %v4383 = vadd.f32 0.0, %v4382
    %v4384 = vpop.f32.mrb[0].mxu0
    %4385 = vmatprep.mubr.f32.mxu0 0.0
    %4386 = vmatmul.mubr.f32.gmra.mrb[0].mxu0 %v619
    %v4387 = vpop.f32.mrb[0].mxu0
    %v4388 = vadd.f32 0.0, %v4387
    %v4389 = vpop.f32.mrb[0].mxu0
    %4390 = vmatprep.mubr.f32.mxu0 0.0
    %4391 = vmatmul.mubr.f32.gmra.mrb[0].mxu0 %v620
    %v4392 = vpop.f32.mrb[0].mxu0
    %v4393 = vadd.f32 0.0, %v4392
    %v4394 = vpop.f32.mrb[0].mxu0
    %4395 = vmatprep.mubr.f32.mxu0 0.0
    %4396 = vmatmul.mubr.f32.gmra.mrb[0].mxu0 %v621
    %v4397 = vpop.f32.mrb[0].mxu0
    %v4398 = vadd.f32 0.0, %v4397
    %v4399 = vpop.f32.mrb[0].mxu0
    %4400 = vmatprep.mubr.f32.mxu0 0.0
    %4401 = vmatmul.mubr.f32.gmra.mrb[0].mxu0 %v622
    %v4402 = vpop.f32.mrb[0].mxu0
    %v4403 = vadd.f32 0.0, %v4402
    %v4404 = vpop.f32.mrb[0].mxu0
    %4405 = vmatprep.mubr.f32.mxu0 0.0
    %4406 = vmatmul.mubr.f32.gmra.mrb[0].mxu0 %v623
    %v4407 = vpop.f32.mrb[0].mxu0
    %v4408 = vadd.f32 0.0, %v4407
    %v4409 = vpop.f32.mrb[0].mxu0
    %4410 = vmatprep.mubr.f32.mxu0 0.0
    %4411 = vmatmul.mubr.f32.gmra.mrb[0].mxu0 %v624
    %v4412 = vpop.f32.mrb[0].mxu0
    %v4413 = vadd.f32 0.0, %v4412
    %v4414 = vpop.f32.mrb[0].mxu0
    %4415 = vmatprep.mubr.f32.mxu0 0.0
    %4416 = vmatmul.mubr.f32.gmra.mrb[0].mxu0 %v625
    %v4417 = vpop.f32.mrb[0].mxu0
    %v4418 = vadd.f32 0.0, %v4417
    %v4419 = vpop.f32.mrb[0].mxu0
    %4420 = vmatprep.mubr.f32.mxu0 0.0
    %4421 = vmatmul.mubr.f32.gmra.mrb[0].mxu0 %v626
    %v4422 = vpop.f32.mrb[0].mxu0
    %v4423 = vadd.f32 0.0, %v4422
    %v4424 = vpop.f32.mrb[0].mxu0
    %4425 = vmatprep.mubr.f32.mxu0 0.0
    %4426 = vmatmul.mubr.f32.gmra.mrb[0].mxu0 %v627
    %v4427 = vpop.f32.mrb[0].mxu0
    %v4428 = vadd.f32 0.0, %v4427
    %v4429 = vpop.f32.mrb[0].mxu0
    %4430 = vmatprep.mubr.f32.mxu0 0.0
    %4431 = vmatmul.mubr.f32.gmra.mrb[0].mxu0 %v628
    %v4432 = vpop.f32.mrb[0].mxu0
    %v4433 = vadd.f32 0.0, %v4432
    %v4434 = vpop.f32.mrb[0].mxu0
    %4435 = vmatprep.mubr.f32.mxu0 0.0
    %4436 = vmatmul.mubr.f32.gmra.mrb[0].mxu0 %v629
    %v4437 = vpop.f32.mrb[0].mxu0
    %v4438 = vadd.f32 0.0, %v4437
    %v4439 = vpop.f32.mrb[0].mxu0
    %4440 = vmatprep.mubr.f32.mxu0 0.0
    %4441 = vmatmul.mubr.f32.gmra.mrb[0].mxu0 %v630
    %v4442 = vpop.f32.mrb[0].mxu0
    %v4443 = vadd.f32 0.0, %v4442
    %v4444 = vpop.f32.mrb[0].mxu0
    %4445 = vmatprep.mubr.f32.mxu0 0.0
    %4446 = vmatmul.mubr.f32.gmra.mrb[0].mxu0 %v631
    %v4447 = vpop.f32.mrb[0].mxu0
    %v4448 = vadd.f32 0.0, %v4447
    %v4449 = vpop.f32.mrb[0].mxu0
    %4450 = vmatprep.mubr.f32.mxu0 0.0
    %4451 = vmatmul.mubr.f32.gmra.mrb[0].mxu0 %v632
    %v4452 = vpop.f32.mrb[0].mxu0
    %v4453 = vadd.f32 0.0, %v4452
    %v4454 = vpop.f32.mrb[0].mxu0
    %4455 = vmatprep.mubr.f32.mxu0 0.0
    %4456 = vmatmul.mubr.f32.gmra.mrb[0].mxu0 %v633
    %v4457 = vpop.f32.mrb[0].mxu0
    %v4458 = vadd.f32 0.0, %v4457
    %v4459 = vpop.f32.mrb[0].mxu0
    %4460 = vmatprep.mubr.f32.mxu0 0.0
    %4461 = vmatmul.mubr.f32.gmra.mrb[0].mxu0 %v634
    %v4462 = vpop.f32.mrb[0].mxu0
    %v4463 = vadd.f32 0.0, %v4462
    %v4464 = vpop.f32.mrb[0].mxu0
    %4465 = vmatprep.mubr.f32.mxu0 0.0
    %4466 = vmatmul.mubr.f32.gmra.mrb[0].mxu0 %v635
    %v4467 = vpop.f32.mrb[0].mxu0
    %v4468 = vadd.f32 0.0, %v4467
    %v4469 = vpop.f32.mrb[0].mxu0
    %4470 = vmatprep.mubr.f32.mxu0 0.0
    %4471 = vmatmul.mubr.f32.gmra.mrb[0].mxu0 %v636
    %v4472 = vpop.f32.mrb[0].mxu0
    %v4473 = vadd.f32 0.0, %v4472
    %v4474 = vpop.f32.mrb[0].mxu0
    %4475 = vmatprep.mubr.f32.mxu0 0.0
    %4476 = vmatmul.mubr.f32.gmra.mrb[0].mxu0 %v637
    %v4477 = vpop.f32.mrb[0].mxu0
    %v4478 = vadd.f32 0.0, %v4477
    %v4479 = vpop.f32.mrb[0].mxu0
    %4480 = vmatprep.mubr.f32.mxu0 0.0
    %4481 = vmatmul.mubr.f32.gmra.mrb[0].mxu0 %v638
    %v4482 = vpop.f32.mrb[0].mxu0
    %v4483 = vadd.f32 0.0, %v4482
    %v4484 = vpop.f32.mrb[0].mxu0
    %4485 = vmatprep.mubr.f32.mxu0 0.0
    %4486 = vmatmul.mubr.f32.gmra.mrb[0].mxu0 %v639
    %v4487 = vpop.f32.mrb[0].mxu0
    %v4488 = vadd.f32 0.0, %v4487
    %v4489 = vpop.f32.mrb[0].mxu0
    %4490 = vmatprep.mubr.f32.mxu0 0.0
    %4491 = vmatmul.mubr.f32.gmra.mrb[0].mxu0 %v640
    %v4492 = vpop.f32.mrb[0].mxu0
    %v4493 = vadd.f32 0.0, %v4492
    %v4494 = vpop.f32.mrb[0].mxu0
    %4495 = vmatprep.mubr.f32.mxu0 0.0
    %4496 = vmatmul.mubr.f32.gmra.mrb[0].mxu0 %v641
    %v4497 = vpop.f32.mrb[0].mxu0
    %v4498 = vadd.f32 0.0, %v4497
    %v4499 = vpop.f32.mrb[0].mxu0
    %4500 = vmatprep.mubr.f32.mxu0 0.0
    %4501 = vmatmul.mubr.f32.gmra.mrb[0].mxu0 %v642
    %v4502 = vpop.f32.mrb[0].mxu0
    %v4503 = vadd.f32 0.0, %v4502
    %v4504 = vpop.f32.mrb[0].mxu0
    %4505 = vmatprep.mubr.f32.mxu0 0.0
    %4506 = vmatmul.mubr.f32.gmra.mrb[0].mxu0 %v643
    %v4507 = vpop.f32.mrb[0].mxu0
    %v4508 = vadd.f32 0.0, %v4507
    %v4509 = vpop.f32.mrb[0].mxu0
    %4510 = vmatprep.mubr.f32.mxu0 0.0
    %4511 = vmatmul.mubr.f32.gmra.mrb[0].mxu0 %v644
    %v4512 = vpop.f32.mrb[0].mxu0
    %v4513 = vadd.f32 0.0, %v4512
    %v4514 = vpop.f32.mrb[0].mxu0
    %4515 = vmatprep.mubr.f32.mxu0 0.0
    %4516 = vmatmul.mubr.f32.gmra.mrb[0].mxu0 %v645
    %v4517 = vpop.f32.mrb[0].mxu0
    %v4518 = vadd.f32 0.0, %v4517
    %v4519 = vpop.f32.mrb[0].mxu0
    %4520 = vmatprep.mubr.f32.mxu0 0.0
    %4521 = vmatmul.mubr.f32.gmra.mrb[0].mxu0 %v646
    %v4522 = vpop.f32.mrb[0].mxu0
    %v4523 = vadd.f32 0.0, %v4522
    %v4524 = vpop.f32.mrb[0].mxu0
    %4525 = vmatprep.mubr.f32.mxu0 0.0
    %4526 = vmatmul.mubr.f32.gmra.mrb[0].mxu0 %v647
    %v4527 = vpop.f32.mrb[0].mxu0
    %v4528 = vadd.f32 0.0, %v4527
    %v4529 = vpop.f32.mrb[0].mxu0
    %4530 = vmatprep.mubr.f32.mxu0 0.0
    %4531 = vmatmul.mubr.f32.gmra.mrb[0].mxu0 %v648
    %v4532 = vpop.f32.mrb[0].mxu0
    %v4533 = vadd.f32 0.0, %v4532
    %v4534 = vpop.f32.mrb[0].mxu0
    %4535 = vmatprep.mubr.f32.mxu0 0.0
    %4536 = vmatmul.mubr.f32.gmra.mrb[0].mxu0 %v649
    %v4537 = vpop.f32.mrb[0].mxu0
    %v4538 = vadd.f32 0.0, %v4537
    %v4539 = vpop.f32.mrb[0].mxu0
    %4540 = vmatprep.mubr.f32.mxu0 0.0
    %4541 = vmatmul.mubr.f32.gmra.mrb[0].mxu0 %v650
    %v4542 = vpop.f32.mrb[0].mxu0
    %v4543 = vadd.f32 0.0, %v4542
    %v4544 = vpop.f32.mrb[0].mxu0
    %4545 = vdwg.mxu0
    %4546 = vmatprep.subr.mxu0 0.0
    %4547 = vmatpush1.msra.mxu0 %v4006
    %4548 = vmatprep.subr.mxu0 0.0
    %4549 = vmatpush1.msra.mxu0 %v4011
    %4550 = vmatprep.subr.mxu0 0.0
    %4551 = vmatpush1.msra.mxu0 %v4016
    %4552 = vmatprep.subr.mxu0 0.0
    %4553 = vmatpush1.msra.mxu0 %v4021
    %4554 = vmatprep.subr.mxu0 0.0
    %4555 = vmatpush1.msra.mxu0 %v4026
    %4556 = vmatprep.subr.mxu0 0.0
    %4557 = vmatpush1.msra.mxu0 %v4031
    %4558 = vmatprep.subr.mxu0 0.0
    %4559 = vmatpush1.msra.mxu0 %v4036
    %4560 = vmatprep.subr.mxu0 0.0
    %4561 = vmatpush1.msra.mxu0 %v4041
    %4562 = vmatprep.subr.mxu0 0.0
    %4563 = vmatpush1.msra.mxu0 %v4046
    %4564 = vmatprep.subr.mxu0 0.0
    %4565 = vmatpush1.msra.mxu0 %v4051
    %4566 = vmatprep.subr.mxu0 0.0
    %4567 = vmatpush1.msra.mxu0 %v4056
    %4568 = vmatprep.subr.mxu0 0.0
    %4569 = vmatpush1.msra.mxu0 %v4061
    %4570 = vmatprep.subr.mxu0 0.0
    %4571 = vmatpush1.msra.mxu0 %v4066
    %4572 = vmatprep.subr.mxu0 0.0
    %4573 = vmatpush1.msra.mxu0 %v4071
    %4574 = vmatprep.subr.mxu0 0.0
    %4575 = vmatpush1.msra.mxu0 %v4076
    %4576 = vmatprep.subr.mxu0 0.0
    %4577 = vmatpush1.msra.mxu0 %v4081
    %4578 = vmatprep.subr.mxu0 0.0
    %4579 = vmatpush1.msra.mxu0 0.0
    %4580 = vmatprep.subr.mxu0 0.0
    %4581 = vmatpush1.msra.mxu0 0.0
    %4582 = vmatprep.subr.mxu0 0.0
    %4583 = vmatpush1.msra.mxu0 0.0
    %4584 = vmatprep.subr.mxu0 0.0
    %4585 = vmatpush1.msra.mxu0 0.0
    %4586 = vmatprep.subr.mxu0 0.0
    %4587 = vmatpush1.msra.mxu0 0.0
    %4588 = vmatprep.subr.mxu0 0.0
    %4589 = vmatpush1.msra.mxu0 0.0
    %4590 = vmatprep.subr.mxu0 0.0
    %4591 = vmatpush1.msra.mxu0 0.0
    %4592 = vmatprep.subr.mxu0 0.0
    %4593 = vmatpush1.msra.mxu0 0.0
    %4594 = vmatprep.subr.mxu0 0.0
    %4595 = vmatpush1.msra.mxu0 0.0
    %4596 = vmatprep.subr.mxu0 0.0
    %4597 = vmatpush1.msra.mxu0 0.0
    %4598 = vmatprep.subr.mxu0 0.0
    %4599 = vmatpush1.msra.mxu0 0.0
    %4600 = vmatprep.subr.mxu0 0.0
    %4601 = vmatpush1.msra.mxu0 0.0
    %4602 = vmatprep.subr.mxu0 0.0
    %4603 = vmatpush1.msra.mxu0 0.0
    %4604 = vmatprep.subr.mxu0 0.0
    %4605 = vmatpush1.msra.mxu0 0.0
    %4606 = vmatprep.subr.mxu0 0.0
    %4607 = vmatpush1.msra.mxu0 0.0
    %4608 = vmatprep.subr.mxu0 0.0
    %4609 = vmatpush1.msra.mxu0 0.0
    %4610 = vmatprep.mubr.f32.mxu0 0.0
    %4611 = vmatmul.mubr.f32.gmra.mrb[0].mxu0 %v315
    %v4612 = vpop.f32.mrb[0].mxu0
    %v4613 = vadd.f32 %v4308, %v4612
    %v4614 = vpop.f32.mrb[0].mxu0
    %4615 = vmatprep.mubr.f32.mxu0 0.0
    %4616 = vmatmul.mubr.f32.gmra.mrb[0].mxu0 %v316
    %v4617 = vpop.f32.mrb[0].mxu0
    %v4618 = vadd.f32 %v4313, %v4617
    %v4619 = vpop.f32.mrb[0].mxu0
    %4620 = vmatprep.mubr.f32.mxu0 0.0
    %4621 = vmatmul.mubr.f32.gmra.mrb[0].mxu0 %v317
    %v4622 = vpop.f32.mrb[0].mxu0
    %v4623 = vadd.f32 %v4318, %v4622
    %v4624 = vpop.f32.mrb[0].mxu0
    %4625 = vmatprep.mubr.f32.mxu0 0.0
    %4626 = vmatmul.mubr.f32.gmra.mrb[0].mxu0 %v318
    %v4627 = vpop.f32.mrb[0].mxu0
    %v4628 = vadd.f32 %v4323, %v4627
    %v4629 = vpop.f32.mrb[0].mxu0
    %4630 = vmatprep.mubr.f32.mxu0 0.0
    %4631 = vmatmul.mubr.f32.gmra.mrb[0].mxu0 %v319
    %v4632 = vpop.f32.mrb[0].mxu0
    %v4633 = vadd.f32 %v4328, %v4632
    %v4634 = vpop.f32.mrb[0].mxu0
    %4635 = vmatprep.mubr.f32.mxu0 0.0
    %4636 = vmatmul.mubr.f32.gmra.mrb[0].mxu0 %v320
    %v4637 = vpop.f32.mrb[0].mxu0
    %v4638 = vadd.f32 %v4333, %v4637
    %v4639 = vpop.f32.mrb[0].mxu0
    %4640 = vmatprep.mubr.f32.mxu0 0.0
    %4641 = vmatmul.mubr.f32.gmra.mrb[0].mxu0 %v321
    %v4642 = vpop.f32.mrb[0].mxu0
    %v4643 = vadd.f32 %v4338, %v4642
    %v4644 = vpop.f32.mrb[0].mxu0
    %4645 = vmatprep.mubr.f32.mxu0 0.0
    %4646 = vmatmul.mubr.f32.gmra.mrb[0].mxu0 %v322
    %v4647 = vpop.f32.mrb[0].mxu0
    %v4648 = vadd.f32 %v4343, %v4647
    %v4649 = vpop.f32.mrb[0].mxu0
    %4650 = vmatprep.mubr.f32.mxu0 0.0
    %4651 = vmatmul.mubr.f32.gmra.mrb[0].mxu0 %v323
    %v4652 = vpop.f32.mrb[0].mxu0
    %v4653 = vadd.f32 %v4348, %v4652
    %v4654 = vpop.f32.mrb[0].mxu0
    %4655 = vmatprep.mubr.f32.mxu0 0.0
    %4656 = vmatmul.mubr.f32.gmra.mrb[0].mxu0 %v324
    %v4657 = vpop.f32.mrb[0].mxu0
    %v4658 = vadd.f32 %v4353, %v4657
    %v4659 = vpop.f32.mrb[0].mxu0
    %4660 = vmatprep.mubr.f32.mxu0 0.0
    %4661 = vmatmul.mubr.f32.gmra.mrb[0].mxu0 %v325
    %v4662 = vpop.f32.mrb[0].mxu0
    %v4663 = vadd.f32 %v4358, %v4662
    %v4664 = vpop.f32.mrb[0].mxu0
    %4665 = vmatprep.mubr.f32.mxu0 0.0
    %4666 = vmatmul.mubr.f32.gmra.mrb[0].mxu0 %v326
    %v4667 = vpop.f32.mrb[0].mxu0
    %v4668 = vadd.f32 %v4363, %v4667
    %v4669 = vpop.f32.mrb[0].mxu0
    %4670 = vmatprep.mubr.f32.mxu0 0.0
    %4671 = vmatmul.mubr.f32.gmra.mrb[0].mxu0 %v327
    %v4672 = vpop.f32.mrb[0].mxu0
    %v4673 = vadd.f32 %v4368, %v4672
    %v4674 = vpop.f32.mrb[0].mxu0
    %4675 = vmatprep.mubr.f32.mxu0 0.0
    %4676 = vmatmul.mubr.f32.gmra.mrb[0].mxu0 %v328
    %v4677 = vpop.f32.mrb[0].mxu0
    %v4678 = vadd.f32 %v4373, %v4677
    %v4679 = vpop.f32.mrb[0].mxu0
    %4680 = vmatprep.mubr.f32.mxu0 0.0
    %4681 = vmatmul.mubr.f32.gmra.mrb[0].mxu0 %v329
    %v4682 = vpop.f32.mrb[0].mxu0
    %v4683 = vadd.f32 %v4378, %v4682
    %v4684 = vpop.f32.mrb[0].mxu0
    %4685 = vmatprep.mubr.f32.mxu0 0.0
    %4686 = vmatmul.mubr.f32.gmra.mrb[0].mxu0 %v330
    %v4687 = vpop.f32.mrb[0].mxu0
    %v4688 = vadd.f32 %v4383, %v4687
    %v4689 = vpop.f32.mrb[0].mxu0
    %4690 = vmatprep.mubr.f32.mxu0 0.0
    %4691 = vmatmul.mubr.f32.gmra.mrb[0].mxu0 %v331
    %v4692 = vpop.f32.mrb[0].mxu0
    %v4693 = vadd.f32 %v4388, %v4692
    %v4694 = vpop.f32.mrb[0].mxu0
    %4695 = vmatprep.mubr.f32.mxu0 0.0
    %4696 = vmatmul.mubr.f32.gmra.mrb[0].mxu0 %v332
    %v4697 = vpop.f32.mrb[0].mxu0
    %v4698 = vadd.f32 %v4393, %v4697
    %v4699 = vpop.f32.mrb[0].mxu0
    %4700 = vmatprep.mubr.f32.mxu0 0.0
    %4701 = vmatmul.mubr.f32.gmra.mrb[0].mxu0 %v333
    %v4702 = vpop.f32.mrb[0].mxu0
    %v4703 = vadd.f32 %v4398, %v4702
    %v4704 = vpop.f32.mrb[0].mxu0
    %4705 = vmatprep.mubr.f32.mxu0 0.0
    %4706 = vmatmul.mubr.f32.gmra.mrb[0].mxu0 %v334
    %v4707 = vpop.f32.mrb[0].mxu0
    %v4708 = vadd.f32 %v4403, %v4707
    %v4709 = vpop.f32.mrb[0].mxu0
    %4710 = vmatprep.mubr.f32.mxu0 0.0
    %4711 = vmatmul.mubr.f32.gmra.mrb[0].mxu0 %v335
    %v4712 = vpop.f32.mrb[0].mxu0
    %v4713 = vadd.f32 %v4408, %v4712
    %v4714 = vpop.f32.mrb[0].mxu0
    %4715 = vmatprep.mubr.f32.mxu0 0.0
    %4716 = vmatmul.mubr.f32.gmra.mrb[0].mxu0 %v336
    %v4717 = vpop.f32.mrb[0].mxu0
    %v4718 = vadd.f32 %v4413, %v4717
    %v4719 = vpop.f32.mrb[0].mxu0
    %4720 = vmatprep.mubr.f32.mxu0 0.0
    %4721 = vmatmul.mubr.f32.gmra.mrb[0].mxu0 %v337
    %v4722 = vpop.f32.mrb[0].mxu0
    %v4723 = vadd.f32 %v4418, %v4722
    %v4724 = vpop.f32.mrb[0].mxu0
    %4725 = vmatprep.mubr.f32.mxu0 0.0
    %4726 = vmatmul.mubr.f32.gmra.mrb[0].mxu0 %v338
    %v4727 = vpop.f32.mrb[0].mxu0
    %v4728 = vadd.f32 %v4423, %v4727
    %v4729 = vpop.f32.mrb[0].mxu0
    %4730 = vmatprep.mubr.f32.mxu0 0.0
    %4731 = vmatmul.mubr.f32.gmra.mrb[0].mxu0 %v339
    %v4732 = vpop.f32.mrb[0].mxu0
    %v4733 = vadd.f32 %v4428, %v4732
    %v4734 = vpop.f32.mrb[0].mxu0
    %4735 = vmatprep.mubr.f32.mxu0 0.0
    %4736 = vmatmul.mubr.f32.gmra.mrb[0].mxu0 %v340
    %v4737 = vpop.f32.mrb[0].mxu0
    %v4738 = vadd.f32 %v4433, %v4737
    %v4739 = vpop.f32.mrb[0].mxu0
    %4740 = vmatprep.mubr.f32.mxu0 0.0
    %4741 = vmatmul.mubr.f32.gmra.mrb[0].mxu0 %v341
    %v4742 = vpop.f32.mrb[0].mxu0
    %v4743 = vadd.f32 %v4438, %v4742
    %v4744 = vpop.f32.mrb[0].mxu0
    %4745 = vmatprep.mubr.f32.mxu0 0.0
    %4746 = vmatmul.mubr.f32.gmra.mrb[0].mxu0 %v342
    %v4747 = vpop.f32.mrb[0].mxu0
    %v4748 = vadd.f32 %v4443, %v4747
    %v4749 = vpop.f32.mrb[0].mxu0
    %4750 = vmatprep.mubr.f32.mxu0 0.0
    %4751 = vmatmul.mubr.f32.gmra.mrb[0].mxu0 %v343
    %v4752 = vpop.f32.mrb[0].mxu0
    %v4753 = vadd.f32 %v4448, %v4752
    %v4754 = vpop.f32.mrb[0].mxu0
    %4755 = vmatprep.mubr.f32.mxu0 0.0
    %4756 = vmatmul.mubr.f32.gmra.mrb[0].mxu0 %v344
    %v4757 = vpop.f32.mrb[0].mxu0
    %v4758 = vadd.f32 %v4453, %v4757
    %v4759 = vpop.f32.mrb[0].mxu0
    %4760 = vmatprep.mubr.f32.mxu0 0.0
    %4761 = vmatmul.mubr.f32.gmra.mrb[0].mxu0 %v345
    %v4762 = vpop.f32.mrb[0].mxu0
    %v4763 = vadd.f32 %v4458, %v4762
    %v4764 = vpop.f32.mrb[0].mxu0
    %4765 = vmatprep.mubr.f32.mxu0 0.0
    %4766 = vmatmul.mubr.f32.gmra.mrb[0].mxu0 %v346
    %v4767 = vpop.f32.mrb[0].mxu0
    %v4768 = vadd.f32 %v4463, %v4767
    %v4769 = vpop.f32.mrb[0].mxu0
    %4770 = vmatprep.mubr.f32.mxu0 0.0
    %4771 = vmatmul.mubr.f32.gmra.mrb[0].mxu0 %v347
    %v4772 = vpop.f32.mrb[0].mxu0
    %v4773 = vadd.f32 %v4468, %v4772
    %v4774 = vpop.f32.mrb[0].mxu0
    %4775 = vmatprep.mubr.f32.mxu0 0.0
    %4776 = vmatmul.mubr.f32.gmra.mrb[0].mxu0 %v348
    %v4777 = vpop.f32.mrb[0].mxu0
    %v4778 = vadd.f32 %v4473, %v4777
    %v4779 = vpop.f32.mrb[0].mxu0
    %4780 = vmatprep.mubr.f32.mxu0 0.0
    %4781 = vmatmul.mubr.f32.gmra.mrb[0].mxu0 %v349
    %v4782 = vpop.f32.mrb[0].mxu0
    %v4783 = vadd.f32 %v4478, %v4782
    %v4784 = vpop.f32.mrb[0].mxu0
    %4785 = vmatprep.mubr.f32.mxu0 0.0
    %4786 = vmatmul.mubr.f32.gmra.mrb[0].mxu0 %v350
    %v4787 = vpop.f32.mrb[0].mxu0
    %v4788 = vadd.f32 %v4483, %v4787
    %v4789 = vpop.f32.mrb[0].mxu0
    %4790 = vmatprep.mubr.f32.mxu0 0.0
    %4791 = vmatmul.mubr.f32.gmra.mrb[0].mxu0 %v351
    %v4792 = vpop.f32.mrb[0].mxu0
    %v4793 = vadd.f32 %v4488, %v4792
    %v4794 = vpop.f32.mrb[0].mxu0
    %4795 = vmatprep.mubr.f32.mxu0 0.0
    %4796 = vmatmul.mubr.f32.gmra.mrb[0].mxu0 %v352
    %v4797 = vpop.f32.mrb[0].mxu0
    %v4798 = vadd.f32 %v4493, %v4797
    %v4799 = vpop.f32.mrb[0].mxu0
    %4800 = vmatprep.mubr.f32.mxu0 0.0
    %4801 = vmatmul.mubr.f32.gmra.mrb[0].mxu0 %v353
    %v4802 = vpop.f32.mrb[0].mxu0
    %v4803 = vadd.f32 %v4498, %v4802
    %v4804 = vpop.f32.mrb[0].mxu0
    %4805 = vmatprep.mubr.f32.mxu0 0.0
    %4806 = vmatmul.mubr.f32.gmra.mrb[0].mxu0 %v354
    %v4807 = vpop.f32.mrb[0].mxu0
    %v4808 = vadd.f32 %v4503, %v4807
    %v4809 = vpop.f32.mrb[0].mxu0
    %4810 = vmatprep.mubr.f32.mxu0 0.0
    %4811 = vmatmul.mubr.f32.gmra.mrb[0].mxu0 %v355
    %v4812 = vpop.f32.mrb[0].mxu0
    %v4813 = vadd.f32 %v4508, %v4812
    %v4814 = vpop.f32.mrb[0].mxu0
    %4815 = vmatprep.mubr.f32.mxu0 0.0
    %4816 = vmatmul.mubr.f32.gmra.mrb[0].mxu0 %v356
    %v4817 = vpop.f32.mrb[0].mxu0
    %v4818 = vadd.f32 %v4513, %v4817
    %v4819 = vpop.f32.mrb[0].mxu0
    %4820 = vmatprep.mubr.f32.mxu0 0.0
    %4821 = vmatmul.mubr.f32.gmra.mrb[0].mxu0 %v357
    %v4822 = vpop.f32.mrb[0].mxu0
    %v4823 = vadd.f32 %v4518, %v4822
    %v4824 = vpop.f32.mrb[0].mxu0
    %4825 = vmatprep.mubr.f32.mxu0 0.0
    %4826 = vmatmul.mubr.f32.gmra.mrb[0].mxu0 %v358
    %v4827 = vpop.f32.mrb[0].mxu0
    %v4828 = vadd.f32 %v4523, %v4827
    %v4829 = vpop.f32.mrb[0].mxu0
    %4830 = vmatprep.mubr.f32.mxu0 0.0
    %4831 = vmatmul.mubr.f32.gmra.mrb[0].mxu0 %v359
    %v4832 = vpop.f32.mrb[0].mxu0
    %v4833 = vadd.f32 %v4528, %v4832
    %v4834 = vpop.f32.mrb[0].mxu0
    %4835 = vmatprep.mubr.f32.mxu0 0.0
    %4836 = vmatmul.mubr.f32.gmra.mrb[0].mxu0 %v360
    %v4837 = vpop.f32.mrb[0].mxu0
    %v4838 = vadd.f32 %v4533, %v4837
    %v4839 = vpop.f32.mrb[0].mxu0
    %4840 = vmatprep.mubr.f32.mxu0 0.0
    %4841 = vmatmul.mubr.f32.gmra.mrb[0].mxu0 %v361
    %v4842 = vpop.f32.mrb[0].mxu0
    %v4843 = vadd.f32 %v4538, %v4842
    %v4844 = vpop.f32.mrb[0].mxu0
    %4845 = vmatprep.mubr.f32.mxu0 0.0
    %4846 = vmatmul.mubr.f32.gmra.mrb[0].mxu0 %v362
    %v4847 = vpop.f32.mrb[0].mxu0
    %v4848 = vadd.f32 %v4543, %v4847
    %v4849 = vpop.f32.mrb[0].mxu0
    %4850 = vdwg.mxu0
    %4851 = vrot.lane.b32.xlu0 %v3485, 32
    %v4852 = vpop.permute.xlu0 %4851
    %4853 = vrot.lane.b32.xlu0 %v3486, 32
    %v4854 = vpop.permute.xlu0 %4853
    %4855 = vrot.lane.b32.xlu0 %v3487, 32
    %v4856 = vpop.permute.xlu0 %4855
    %4857 = vrot.lane.b32.xlu0 %v3488, 32
    %v4858 = vpop.permute.xlu0 %4857
    %v4864 = vsel %vm1621, %v3147, 0
    %v4867 = vsel %vm1621, %v3148, 0
    %v4870 = vsel %vm1621, %v3149, 0
    %v4873 = vsel %vm1621, %v3150, 0
    %v4876 = vsel %vm1621, %v3151, 0
    %v4879 = vsel %vm1621, %v3152, 0
    %v4882 = vsel %vm1621, %v3153, 0
    %v4885 = vsel %vm1621, %v3154, 0
    %v4888 = vsel %vm1621, %v3155, 0
    %v4891 = vsel %vm1621, %v3156, 0
    %v4894 = vsel %vm1621, %v3157, 0
    %v4897 = vsel %vm1621, %v3158, 0
    %v4900 = vsel %vm1621, %v3159, 0
    %v4903 = vsel %vm1621, %v3160, 0
    %v4906 = vsel %vm1621, %v3161, 0
    %v4909 = vsel %vm1621, %v3162, 0
    %v4912 = vsel %vm1621, %v3163, 0
    %v4915 = vsel %vm1621, %v3164, 0
    %v4918 = vsel %vm1621, %v3165, 0
    %v4921 = vsel %vm1621, %v3166, 0
    %v4924 = vsel %vm1621, %v3167, 0
    %v4927 = vsel %vm1621, %v3168, 0
    %v4930 = vsel %vm1621, %v3169, 0
    %v4933 = vsel %vm1621, %v3170, 0
    %v4936 = vsel %vm1621, %v3171, 0
    %v4939 = vsel %vm1621, %v3172, 0
    %v4942 = vsel %vm1621, %v3173, 0
    %v4945 = vsel %vm1621, %v3174, 0
    %v4948 = vsel %vm1621, %v3175, 0
    %v4951 = vsel %vm1621, %v3176, 0
    %v4954 = vsel %vm1621, %v3177, 0
    %v4957 = vsel %vm1621, %v3178, 0
    %v4960 = vsel %vm1621, %v3179, 0
    %v4963 = vsel %vm1621, %v3180, 0
    %v4966 = vsel %vm1621, %v3181, 0
    %v4969 = vsel %vm1621, %v3182, 0
    %v4972 = vsel %vm1621, %v3183, 0
    %v4975 = vsel %vm1621, %v3184, 0
    %v4978 = vsel %vm1621, %v3185, 0
    %v4981 = vsel %vm1621, %v3186, 0
    %v4984 = vsel %vm1621, %v3187, 0
    %v4987 = vsel %vm1621, %v3188, 0
    %v4990 = vsel %vm1621, %v3189, 0
    %v4993 = vsel %vm1621, %v3190, 0
    %v4996 = vsel %vm1621, %v3191, 0
    %v4999 = vsel %vm1621, %v3192, 0
    %v5002 = vsel %vm1621, %v3193, 0
    %v5005 = vsel %vm1621, %v3194, 0
    %5007 = vmatprep.subr.mxu0 0.0
    %5008 = vmatpush1.msra.mxu0 %v4852
    %5009 = vmatprep.subr.mxu0 0.0
    %5010 = vmatpush1.msra.mxu0 %v4854
    %5011 = vmatprep.subr.mxu0 0.0
    %5012 = vmatpush1.msra.mxu0 %v4856
    %5013 = vmatprep.subr.mxu0 0.0
    %5014 = vmatpush1.msra.mxu0 %v4858
    %5015 = vmatprep.subr.mxu0 0.0
    %5016 = vmatpush1.msra.mxu0 0.0
    %5017 = vmatprep.subr.mxu0 0.0
    %5018 = vmatpush1.msra.mxu0 0.0
    %5019 = vmatprep.subr.mxu0 0.0
    %5020 = vmatpush1.msra.mxu0 0.0
    %5021 = vmatprep.subr.mxu0 0.0
    %5022 = vmatpush1.msra.mxu0 0.0
    %5023 = vmatprep.subr.mxu0 0.0
    %5024 = vmatpush1.msra.mxu0 0.0
    %5025 = vmatprep.subr.mxu0 0.0
    %5026 = vmatpush1.msra.mxu0 0.0
    %5027 = vmatprep.subr.mxu0 0.0
    %5028 = vmatpush1.msra.mxu0 0.0
    %5029 = vmatprep.subr.mxu0 0.0
    %5030 = vmatpush1.msra.mxu0 0.0
    %5031 = vmatprep.subr.mxu0 0.0
    %5032 = vmatpush1.msra.mxu0 0.0
    %5033 = vmatprep.subr.mxu0 0.0
    %5034 = vmatpush1.msra.mxu0 0.0
    %5035 = vmatprep.subr.mxu0 0.0
    %5036 = vmatpush1.msra.mxu0 0.0
    %5037 = vmatprep.subr.mxu0 0.0
    %5038 = vmatpush1.msra.mxu0 0.0
    %5039 = vmatprep.subr.mxu0 0.0
    %5040 = vmatpush1.msra.mxu0 0.0
    %5041 = vmatprep.subr.mxu0 0.0
    %5042 = vmatpush1.msra.mxu0 0.0
    %5043 = vmatprep.subr.mxu0 0.0
    %5044 = vmatpush1.msra.mxu0 0.0
    %5045 = vmatprep.subr.mxu0 0.0
    %5046 = vmatpush1.msra.mxu0 0.0
    %5047 = vmatprep.subr.mxu0 0.0
    %5048 = vmatpush1.msra.mxu0 0.0
    %5049 = vmatprep.subr.mxu0 0.0
    %5050 = vmatpush1.msra.mxu0 0.0
    %5051 = vmatprep.subr.mxu0 0.0
    %5052 = vmatpush1.msra.mxu0 0.0
    %5053 = vmatprep.subr.mxu0 0.0
    %5054 = vmatpush1.msra.mxu0 0.0
    %5055 = vmatprep.subr.mxu0 0.0
    %5056 = vmatpush1.msra.mxu0 0.0
    %5057 = vmatprep.subr.mxu0 0.0
    %5058 = vmatpush1.msra.mxu0 0.0
    %5059 = vmatprep.subr.mxu0 0.0
    %5060 = vmatpush1.msra.mxu0 0.0
    %5061 = vmatprep.subr.mxu0 0.0
    %5062 = vmatpush1.msra.mxu0 0.0
    %5063 = vmatprep.subr.mxu0 0.0
    %5064 = vmatpush1.msra.mxu0 0.0
    %5065 = vmatprep.subr.mxu0 0.0
    %5066 = vmatpush1.msra.mxu0 0.0
    %5067 = vmatprep.subr.mxu0 0.0
    %5068 = vmatpush1.msra.mxu0 0.0
    %5069 = vmatprep.subr.mxu0 0.0
    %5070 = vmatpush1.msra.mxu0 0.0
    %5071 = vmatprep.mubr.f32.mxu0 0.0
    %5072 = vmatmul.mubr.f32.gmra.mrb[0].mxu0 %v4864
    %v5073 = vpop.f32.mrb[0].mxu0
    %v5074 = vadd.f32 0.0, %v5073
    %v5075 = vpop.f32.mrb[0].mxu0
    %5076 = vmatprep.mubr.f32.mxu0 0.0
    %5077 = vmatmul.mubr.f32.gmra.mrb[0].mxu0 %v4867
    %v5078 = vpop.f32.mrb[0].mxu0
    %v5079 = vadd.f32 0.0, %v5078
    %v5080 = vpop.f32.mrb[0].mxu0
    %5081 = vmatprep.mubr.f32.mxu0 0.0
    %5082 = vmatmul.mubr.f32.gmra.mrb[0].mxu0 %v4870
    %v5083 = vpop.f32.mrb[0].mxu0
    %v5084 = vadd.f32 0.0, %v5083
    %v5085 = vpop.f32.mrb[0].mxu0
    %5086 = vmatprep.mubr.f32.mxu0 0.0
    %5087 = vmatmul.mubr.f32.gmra.mrb[0].mxu0 %v4873
    %v5088 = vpop.f32.mrb[0].mxu0
    %v5089 = vadd.f32 0.0, %v5088
    %v5090 = vpop.f32.mrb[0].mxu0
    %5091 = vmatprep.mubr.f32.mxu0 0.0
    %5092 = vmatmul.mubr.f32.gmra.mrb[0].mxu0 %v4876
    %v5093 = vpop.f32.mrb[0].mxu0
    %v5094 = vadd.f32 0.0, %v5093
    %v5095 = vpop.f32.mrb[0].mxu0
    %5096 = vmatprep.mubr.f32.mxu0 0.0
    %5097 = vmatmul.mubr.f32.gmra.mrb[0].mxu0 %v4879
    %v5098 = vpop.f32.mrb[0].mxu0
    %v5099 = vadd.f32 0.0, %v5098
    %v5100 = vpop.f32.mrb[0].mxu0
    %5101 = vmatprep.mubr.f32.mxu0 0.0
    %5102 = vmatmul.mubr.f32.gmra.mrb[0].mxu0 %v4882
    %v5103 = vpop.f32.mrb[0].mxu0
    %v5104 = vadd.f32 0.0, %v5103
    %v5105 = vpop.f32.mrb[0].mxu0
    %5106 = vmatprep.mubr.f32.mxu0 0.0
    %5107 = vmatmul.mubr.f32.gmra.mrb[0].mxu0 %v4885
    %v5108 = vpop.f32.mrb[0].mxu0
    %v5109 = vadd.f32 0.0, %v5108
    %v5110 = vpop.f32.mrb[0].mxu0
    %5111 = vmatprep.mubr.f32.mxu0 0.0
    %5112 = vmatmul.mubr.f32.gmra.mrb[0].mxu0 %v4888
    %v5113 = vpop.f32.mrb[0].mxu0
    %v5114 = vadd.f32 0.0, %v5113
    %v5115 = vpop.f32.mrb[0].mxu0
    %5116 = vmatprep.mubr.f32.mxu0 0.0
    %5117 = vmatmul.mubr.f32.gmra.mrb[0].mxu0 %v4891
    %v5118 = vpop.f32.mrb[0].mxu0
    %v5119 = vadd.f32 0.0, %v5118
    %v5120 = vpop.f32.mrb[0].mxu0
    %5121 = vmatprep.mubr.f32.mxu0 0.0
    %5122 = vmatmul.mubr.f32.gmra.mrb[0].mxu0 %v4894
    %v5123 = vpop.f32.mrb[0].mxu0
    %v5124 = vadd.f32 0.0, %v5123
    %v5125 = vpop.f32.mrb[0].mxu0
    %5126 = vmatprep.mubr.f32.mxu0 0.0
    %5127 = vmatmul.mubr.f32.gmra.mrb[0].mxu0 %v4897
    %v5128 = vpop.f32.mrb[0].mxu0
    %v5129 = vadd.f32 0.0, %v5128
    %v5130 = vpop.f32.mrb[0].mxu0
    %5131 = vmatprep.mubr.f32.mxu0 0.0
    %5132 = vmatmul.mubr.f32.gmra.mrb[0].mxu0 %v4900
    %v5133 = vpop.f32.mrb[0].mxu0
    %v5134 = vadd.f32 0.0, %v5133
    %v5135 = vpop.f32.mrb[0].mxu0
    %5136 = vmatprep.mubr.f32.mxu0 0.0
    %5137 = vmatmul.mubr.f32.gmra.mrb[0].mxu0 %v4903
    %v5138 = vpop.f32.mrb[0].mxu0
    %v5139 = vadd.f32 0.0, %v5138
    %v5140 = vpop.f32.mrb[0].mxu0
    %5141 = vmatprep.mubr.f32.mxu0 0.0
    %5142 = vmatmul.mubr.f32.gmra.mrb[0].mxu0 %v4906
    %v5143 = vpop.f32.mrb[0].mxu0
    %v5144 = vadd.f32 0.0, %v5143
    %v5145 = vpop.f32.mrb[0].mxu0
    %5146 = vmatprep.mubr.f32.mxu0 0.0
    %5147 = vmatmul.mubr.f32.gmra.mrb[0].mxu0 %v4909
    %v5148 = vpop.f32.mrb[0].mxu0
    %v5149 = vadd.f32 0.0, %v5148
    %v5150 = vpop.f32.mrb[0].mxu0
    %5151 = vmatprep.mubr.f32.mxu0 0.0
    %5152 = vmatmul.mubr.f32.gmra.mrb[0].mxu0 %v4912
    %v5153 = vpop.f32.mrb[0].mxu0
    %v5154 = vadd.f32 0.0, %v5153
    %v5155 = vpop.f32.mrb[0].mxu0
    %5156 = vmatprep.mubr.f32.mxu0 0.0
    %5157 = vmatmul.mubr.f32.gmra.mrb[0].mxu0 %v4915
    %v5158 = vpop.f32.mrb[0].mxu0
    %v5159 = vadd.f32 0.0, %v5158
    %v5160 = vpop.f32.mrb[0].mxu0
    %5161 = vmatprep.mubr.f32.mxu0 0.0
    %5162 = vmatmul.mubr.f32.gmra.mrb[0].mxu0 %v4918
    %v5163 = vpop.f32.mrb[0].mxu0
    %v5164 = vadd.f32 0.0, %v5163
    %v5165 = vpop.f32.mrb[0].mxu0
    %5166 = vmatprep.mubr.f32.mxu0 0.0
    %5167 = vmatmul.mubr.f32.gmra.mrb[0].mxu0 %v4921
    %v5168 = vpop.f32.mrb[0].mxu0
    %v5169 = vadd.f32 0.0, %v5168
    %v5170 = vpop.f32.mrb[0].mxu0
    %5171 = vmatprep.mubr.f32.mxu0 0.0
    %5172 = vmatmul.mubr.f32.gmra.mrb[0].mxu0 %v4924
    %v5173 = vpop.f32.mrb[0].mxu0
    %v5174 = vadd.f32 0.0, %v5173
    %v5175 = vpop.f32.mrb[0].mxu0
    %5176 = vmatprep.mubr.f32.mxu0 0.0
    %5177 = vmatmul.mubr.f32.gmra.mrb[0].mxu0 %v4927
    %v5178 = vpop.f32.mrb[0].mxu0
    %v5179 = vadd.f32 0.0, %v5178
    %v5180 = vpop.f32.mrb[0].mxu0
    %5181 = vmatprep.mubr.f32.mxu0 0.0
    %5182 = vmatmul.mubr.f32.gmra.mrb[0].mxu0 %v4930
    %v5183 = vpop.f32.mrb[0].mxu0
    %v5184 = vadd.f32 0.0, %v5183
    %v5185 = vpop.f32.mrb[0].mxu0
    %5186 = vmatprep.mubr.f32.mxu0 0.0
    %5187 = vmatmul.mubr.f32.gmra.mrb[0].mxu0 %v4933
    %v5188 = vpop.f32.mrb[0].mxu0
    %v5189 = vadd.f32 0.0, %v5188
    %v5190 = vpop.f32.mrb[0].mxu0
    %5191 = vmatprep.mubr.f32.mxu0 0.0
    %5192 = vmatmul.mubr.f32.gmra.mrb[0].mxu0 %v4936
    %v5193 = vpop.f32.mrb[0].mxu0
    %v5194 = vadd.f32 0.0, %v5193
    %v5195 = vpop.f32.mrb[0].mxu0
    %5196 = vmatprep.mubr.f32.mxu0 0.0
    %5197 = vmatmul.mubr.f32.gmra.mrb[0].mxu0 %v4939
    %v5198 = vpop.f32.mrb[0].mxu0
    %v5199 = vadd.f32 0.0, %v5198
    %v5200 = vpop.f32.mrb[0].mxu0
    %5201 = vmatprep.mubr.f32.mxu0 0.0
    %5202 = vmatmul.mubr.f32.gmra.mrb[0].mxu0 %v4942
    %v5203 = vpop.f32.mrb[0].mxu0
    %v5204 = vadd.f32 0.0, %v5203
    %v5205 = vpop.f32.mrb[0].mxu0
    %5206 = vmatprep.mubr.f32.mxu0 0.0
    %5207 = vmatmul.mubr.f32.gmra.mrb[0].mxu0 %v4945
    %v5208 = vpop.f32.mrb[0].mxu0
    %v5209 = vadd.f32 0.0, %v5208
    %v5210 = vpop.f32.mrb[0].mxu0
    %5211 = vmatprep.mubr.f32.mxu0 0.0
    %5212 = vmatmul.mubr.f32.gmra.mrb[0].mxu0 %v4948
    %v5213 = vpop.f32.mrb[0].mxu0
    %v5214 = vadd.f32 0.0, %v5213
    %v5215 = vpop.f32.mrb[0].mxu0
    %5216 = vmatprep.mubr.f32.mxu0 0.0
    %5217 = vmatmul.mubr.f32.gmra.mrb[0].mxu0 %v4951
    %v5218 = vpop.f32.mrb[0].mxu0
    %v5219 = vadd.f32 0.0, %v5218
    %v5220 = vpop.f32.mrb[0].mxu0
    %5221 = vmatprep.mubr.f32.mxu0 0.0
    %5222 = vmatmul.mubr.f32.gmra.mrb[0].mxu0 %v4954
    %v5223 = vpop.f32.mrb[0].mxu0
    %v5224 = vadd.f32 0.0, %v5223
    %v5225 = vpop.f32.mrb[0].mxu0
    %5226 = vmatprep.mubr.f32.mxu0 0.0
    %5227 = vmatmul.mubr.f32.gmra.mrb[0].mxu0 %v4957
    %v5228 = vpop.f32.mrb[0].mxu0
    %v5229 = vadd.f32 0.0, %v5228
    %v5230 = vpop.f32.mrb[0].mxu0
    %5231 = vmatprep.mubr.f32.mxu0 0.0
    %5232 = vmatmul.mubr.f32.gmra.mrb[0].mxu0 %v4960
    %v5233 = vpop.f32.mrb[0].mxu0
    %v5234 = vadd.f32 0.0, %v5233
    %v5235 = vpop.f32.mrb[0].mxu0
    %5236 = vmatprep.mubr.f32.mxu0 0.0
    %5237 = vmatmul.mubr.f32.gmra.mrb[0].mxu0 %v4963
    %v5238 = vpop.f32.mrb[0].mxu0
    %v5239 = vadd.f32 0.0, %v5238
    %v5240 = vpop.f32.mrb[0].mxu0
    %5241 = vmatprep.mubr.f32.mxu0 0.0
    %5242 = vmatmul.mubr.f32.gmra.mrb[0].mxu0 %v4966
    %v5243 = vpop.f32.mrb[0].mxu0
    %v5244 = vadd.f32 0.0, %v5243
    %v5245 = vpop.f32.mrb[0].mxu0
    %5246 = vmatprep.mubr.f32.mxu0 0.0
    %5247 = vmatmul.mubr.f32.gmra.mrb[0].mxu0 %v4969
    %v5248 = vpop.f32.mrb[0].mxu0
    %v5249 = vadd.f32 0.0, %v5248
    %v5250 = vpop.f32.mrb[0].mxu0
    %5251 = vmatprep.mubr.f32.mxu0 0.0
    %5252 = vmatmul.mubr.f32.gmra.mrb[0].mxu0 %v4972
    %v5253 = vpop.f32.mrb[0].mxu0
    %v5254 = vadd.f32 0.0, %v5253
    %v5255 = vpop.f32.mrb[0].mxu0
    %5256 = vmatprep.mubr.f32.mxu0 0.0
    %5257 = vmatmul.mubr.f32.gmra.mrb[0].mxu0 %v4975
    %v5258 = vpop.f32.mrb[0].mxu0
    %v5259 = vadd.f32 0.0, %v5258
    %v5260 = vpop.f32.mrb[0].mxu0
    %5261 = vmatprep.mubr.f32.mxu0 0.0
    %5262 = vmatmul.mubr.f32.gmra.mrb[0].mxu0 %v4978
    %v5263 = vpop.f32.mrb[0].mxu0
    %v5264 = vadd.f32 0.0, %v5263
    %v5265 = vpop.f32.mrb[0].mxu0
    %5266 = vmatprep.mubr.f32.mxu0 0.0
    %5267 = vmatmul.mubr.f32.gmra.mrb[0].mxu0 %v4981
    %v5268 = vpop.f32.mrb[0].mxu0
    %v5269 = vadd.f32 0.0, %v5268
    %v5270 = vpop.f32.mrb[0].mxu0
    %5271 = vmatprep.mubr.f32.mxu0 0.0
    %5272 = vmatmul.mubr.f32.gmra.mrb[0].mxu0 %v4984
    %v5273 = vpop.f32.mrb[0].mxu0
    %v5274 = vadd.f32 0.0, %v5273
    %v5275 = vpop.f32.mrb[0].mxu0
    %5276 = vmatprep.mubr.f32.mxu0 0.0
    %5277 = vmatmul.mubr.f32.gmra.mrb[0].mxu0 %v4987
    %v5278 = vpop.f32.mrb[0].mxu0
    %v5279 = vadd.f32 0.0, %v5278
    %v5280 = vpop.f32.mrb[0].mxu0
    %5281 = vmatprep.mubr.f32.mxu0 0.0
    %5282 = vmatmul.mubr.f32.gmra.mrb[0].mxu0 %v4990
    %v5283 = vpop.f32.mrb[0].mxu0
    %v5284 = vadd.f32 0.0, %v5283
    %v5285 = vpop.f32.mrb[0].mxu0
    %5286 = vmatprep.mubr.f32.mxu0 0.0
    %5287 = vmatmul.mubr.f32.gmra.mrb[0].mxu0 %v4993
    %v5288 = vpop.f32.mrb[0].mxu0
    %v5289 = vadd.f32 0.0, %v5288
    %v5290 = vpop.f32.mrb[0].mxu0
    %5291 = vmatprep.mubr.f32.mxu0 0.0
    %5292 = vmatmul.mubr.f32.gmra.mrb[0].mxu0 %v4996
    %v5293 = vpop.f32.mrb[0].mxu0
    %v5294 = vadd.f32 0.0, %v5293
    %v5295 = vpop.f32.mrb[0].mxu0
    %5296 = vmatprep.mubr.f32.mxu0 0.0
    %5297 = vmatmul.mubr.f32.gmra.mrb[0].mxu0 %v4999
    %v5298 = vpop.f32.mrb[0].mxu0
    %v5299 = vadd.f32 0.0, %v5298
    %v5300 = vpop.f32.mrb[0].mxu0
    %5301 = vmatprep.mubr.f32.mxu0 0.0
    %5302 = vmatmul.mubr.f32.gmra.mrb[0].mxu0 %v5002
    %v5303 = vpop.f32.mrb[0].mxu0
    %v5304 = vadd.f32 0.0, %v5303
    %v5305 = vpop.f32.mrb[0].mxu0
    %5306 = vmatprep.mubr.f32.mxu0 0.0
    %5307 = vmatmul.mubr.f32.gmra.mrb[0].mxu0 %v5005
    %v5308 = vpop.f32.mrb[0].mxu0
    %v5309 = vadd.f32 0.0, %v5308
    %v5310 = vpop.f32.mrb[0].mxu0
    %5311 = vdwg.mxu0
    %v5312 = vadd.f32 %v4613, %v5074
    %v5313 = vadd.f32 %v4618, %v5079
    %v5314 = vadd.f32 %v4623, %v5084
    %v5315 = vadd.f32 %v4628, %v5089
    %v5316 = vadd.f32 %v4633, %v5094
    %v5317 = vadd.f32 %v4638, %v5099
    %v5318 = vadd.f32 %v4643, %v5104
    %v5319 = vadd.f32 %v4648, %v5109
    %v5320 = vadd.f32 %v4653, %v5114
    %v5321 = vadd.f32 %v4658, %v5119
    %v5322 = vadd.f32 %v4663, %v5124
    %v5323 = vadd.f32 %v4668, %v5129
    %v5324 = vadd.f32 %v4673, %v5134
    %v5325 = vadd.f32 %v4678, %v5139
    %v5326 = vadd.f32 %v4683, %v5144
    %v5327 = vadd.f32 %v4688, %v5149
    %v5328 = vadd.f32 %v4693, %v5154
    %v5329 = vadd.f32 %v4698, %v5159
    %v5330 = vadd.f32 %v4703, %v5164
    %v5331 = vadd.f32 %v4708, %v5169
    %v5332 = vadd.f32 %v4713, %v5174
    %v5333 = vadd.f32 %v4718, %v5179
    %v5334 = vadd.f32 %v4723, %v5184
    %v5335 = vadd.f32 %v4728, %v5189
    %v5336 = vadd.f32 %v4733, %v5194
    %v5337 = vadd.f32 %v4738, %v5199
    %v5338 = vadd.f32 %v4743, %v5204
    %v5339 = vadd.f32 %v4748, %v5209
    %v5340 = vadd.f32 %v4753, %v5214
    %v5341 = vadd.f32 %v4758, %v5219
    %v5342 = vadd.f32 %v4763, %v5224
    %v5343 = vadd.f32 %v4768, %v5229
    %v5344 = vadd.f32 %v4773, %v5234
    %v5345 = vadd.f32 %v4778, %v5239
    %v5346 = vadd.f32 %v4783, %v5244
    %v5347 = vadd.f32 %v4788, %v5249
    %v5348 = vadd.f32 %v4793, %v5254
    %v5349 = vadd.f32 %v4798, %v5259
    %v5350 = vadd.f32 %v4803, %v5264
    %v5351 = vadd.f32 %v4808, %v5269
    %v5352 = vadd.f32 %v4813, %v5274
    %v5353 = vadd.f32 %v4818, %v5279
    %v5354 = vadd.f32 %v4823, %v5284
    %v5355 = vadd.f32 %v4828, %v5289
    %v5356 = vadd.f32 %v4833, %v5294
    %v5357 = vadd.f32 %v4838, %v5299
    %v5358 = vadd.f32 %v4843, %v5304
    %v5359 = vadd.f32 %v4848, %v5309
    %v5360 = vlaneseq
    %v5361 = vshrl.u32 %v5360, 7
    %v5362 = vsub.s32 4, %v5361
    %v5363 = vrot.slane %v24, %v5362
    %v5364 = vadd.f32 %v5312, %v5363
    %v5365 = vadd.f32 %v5313, %v5363
    %v5366 = vadd.f32 %v5314, %v5363
    %v5367 = vadd.f32 %v5315, %v5363
    %v5368 = vadd.f32 %v5316, %v5363
    %v5369 = vadd.f32 %v5317, %v5363
    %v5370 = vadd.f32 %v5318, %v5363
    %v5371 = vadd.f32 %v5319, %v5363
    %v5372 = vadd.f32 %v5320, %v5363
    %v5373 = vadd.f32 %v5321, %v5363
    %v5374 = vadd.f32 %v5322, %v5363
    %v5375 = vadd.f32 %v5323, %v5363
    %v5376 = vadd.f32 %v5324, %v5363
    %v5377 = vadd.f32 %v5325, %v5363
    %v5378 = vadd.f32 %v5326, %v5363
    %v5379 = vadd.f32 %v5327, %v5363
    %v5380 = vadd.f32 %v5328, %v5363
    %v5381 = vadd.f32 %v5329, %v5363
    %v5382 = vadd.f32 %v5330, %v5363
    %v5383 = vadd.f32 %v5331, %v5363
    %v5384 = vadd.f32 %v5332, %v5363
    %v5385 = vadd.f32 %v5333, %v5363
    %v5386 = vadd.f32 %v5334, %v5363
    %v5387 = vadd.f32 %v5335, %v5363
    %v5388 = vadd.f32 %v5336, %v5363
    %v5389 = vadd.f32 %v5337, %v5363
    %v5390 = vadd.f32 %v5338, %v5363
    %v5391 = vadd.f32 %v5339, %v5363
    %v5392 = vadd.f32 %v5340, %v5363
    %v5393 = vadd.f32 %v5341, %v5363
    %v5394 = vadd.f32 %v5342, %v5363
    %v5395 = vadd.f32 %v5343, %v5363
    %v5396 = vadd.f32 %v5344, %v5363
    %v5397 = vadd.f32 %v5345, %v5363
    %v5398 = vadd.f32 %v5346, %v5363
    %v5399 = vadd.f32 %v5347, %v5363
    %v5400 = vadd.f32 %v5348, %v5363
    %v5401 = vadd.f32 %v5349, %v5363
    %v5402 = vadd.f32 %v5350, %v5363
    %v5403 = vadd.f32 %v5351, %v5363
    %v5404 = vadd.f32 %v5352, %v5363
    %v5405 = vadd.f32 %v5353, %v5363
    %v5406 = vadd.f32 %v5354, %v5363
    %v5407 = vadd.f32 %v5355, %v5363
    %v5408 = vadd.f32 %v5356, %v5363
    %v5409 = vadd.f32 %v5357, %v5363
    %v5410 = vadd.f32 %v5358, %v5363
    %v5411 = vadd.f32 %v5359, %v5363
    %v5412 = vmax.f32 %v5364, 0.0
    %v5413 = vmax.f32 %v5365, 0.0
    %v5414 = vmax.f32 %v5366, 0.0
    %v5415 = vmax.f32 %v5367, 0.0
    %v5416 = vmax.f32 %v5368, 0.0
    %v5417 = vmax.f32 %v5369, 0.0
    %v5418 = vmax.f32 %v5370, 0.0
    %v5419 = vmax.f32 %v5371, 0.0
    %v5420 = vmax.f32 %v5372, 0.0
    %v5421 = vmax.f32 %v5373, 0.0
    %v5422 = vmax.f32 %v5374, 0.0
    %v5423 = vmax.f32 %v5375, 0.0
    %v5424 = vmax.f32 %v5376, 0.0
    %v5425 = vmax.f32 %v5377, 0.0
    %v5426 = vmax.f32 %v5378, 0.0
    %v5427 = vmax.f32 %v5379, 0.0
    %v5428 = vmax.f32 %v5380, 0.0
    %v5429 = vmax.f32 %v5381, 0.0
    %v5430 = vmax.f32 %v5382, 0.0
    %v5431 = vmax.f32 %v5383, 0.0
    %v5432 = vmax.f32 %v5384, 0.0
    %v5433 = vmax.f32 %v5385, 0.0
    %v5434 = vmax.f32 %v5386, 0.0
    %v5435 = vmax.f32 %v5387, 0.0
    %v5436 = vmax.f32 %v5388, 0.0
    %v5437 = vmax.f32 %v5389, 0.0
    %v5438 = vmax.f32 %v5390, 0.0
    %v5439 = vmax.f32 %v5391, 0.0
    %v5440 = vmax.f32 %v5392, 0.0
    %v5441 = vmax.f32 %v5393, 0.0
    %v5442 = vmax.f32 %v5394, 0.0
    %v5443 = vmax.f32 %v5395, 0.0
    %v5444 = vmax.f32 %v5396, 0.0
    %v5445 = vmax.f32 %v5397, 0.0
    %v5446 = vmax.f32 %v5398, 0.0
    %v5447 = vmax.f32 %v5399, 0.0
    %v5448 = vmax.f32 %v5400, 0.0
    %v5449 = vmax.f32 %v5401, 0.0
    %v5450 = vmax.f32 %v5402, 0.0
    %v5451 = vmax.f32 %v5403, 0.0
    %v5452 = vmax.f32 %v5404, 0.0
    %v5453 = vmax.f32 %v5405, 0.0
    %v5454 = vmax.f32 %v5406, 0.0
    %v5455 = vmax.f32 %v5407, 0.0
    %v5456 = vmax.f32 %v5408, 0.0
    %v5457 = vmax.f32 %v5409, 0.0
    %v5458 = vmax.f32 %v5410, 0.0
    %v5459 = vmax.f32 %v5411, 0.0
    %5460 = vmatprep.subr.mxu0 0.0
    %5461 = vmatpush1.msra.mxu0 %v5412
    %5462 = vmatprep.subr.mxu0 0.0
    %5463 = vmatpush1.msra.mxu0 %v5413
    %5464 = vmatprep.subr.mxu0 0.0
    %5465 = vmatpush1.msra.mxu0 %v5414
    %5466 = vmatprep.subr.mxu0 0.0
    %5467 = vmatpush1.msra.mxu0 %v5415
    %5468 = vmatprep.subr.mxu0 0.0
    %5469 = vmatpush1.msra.mxu0 %v5416
    %5470 = vmatprep.subr.mxu0 0.0
    %5471 = vmatpush1.msra.mxu0 %v5417
    %5472 = vmatprep.subr.mxu0 0.0
    %5473 = vmatpush1.msra.mxu0 %v5418
    %5474 = vmatprep.subr.mxu0 0.0
    %5475 = vmatpush1.msra.mxu0 %v5419
    %5476 = vmatprep.subr.mxu0 0.0
    %5477 = vmatpush1.msra.mxu0 %v5420
    %5478 = vmatprep.subr.mxu0 0.0
    %5479 = vmatpush1.msra.mxu0 %v5421
    %5480 = vmatprep.subr.mxu0 0.0
    %5481 = vmatpush1.msra.mxu0 %v5422
    %5482 = vmatprep.subr.mxu0 0.0
    %5483 = vmatpush1.msra.mxu0 %v5423
    %5484 = vmatprep.subr.mxu0 0.0
    %5485 = vmatpush1.msra.mxu0 %v5424
    %5486 = vmatprep.subr.mxu0 0.0
    %5487 = vmatpush1.msra.mxu0 %v5425
    %5488 = vmatprep.subr.mxu0 0.0
    %5489 = vmatpush1.msra.mxu0 %v5426
    %5490 = vmatprep.subr.mxu0 0.0
    %5491 = vmatpush1.msra.mxu0 %v5427
    %5492 = vmatprep.subr.mxu0 0.0
    %5493 = vmatpush1.msra.mxu0 %v5428
    %5494 = vmatprep.subr.mxu0 0.0
    %5495 = vmatpush1.msra.mxu0 %v5429
    %5496 = vmatprep.subr.mxu0 0.0
    %5497 = vmatpush1.msra.mxu0 %v5430
    %5498 = vmatprep.subr.mxu0 0.0
    %5499 = vmatpush1.msra.mxu0 %v5431
    %5500 = vmatprep.subr.mxu0 0.0
    %5501 = vmatpush1.msra.mxu0 %v5432
    %5502 = vmatprep.subr.mxu0 0.0
    %5503 = vmatpush1.msra.mxu0 %v5433
    %5504 = vmatprep.subr.mxu0 0.0
    %5505 = vmatpush1.msra.mxu0 %v5434
    %5506 = vmatprep.subr.mxu0 0.0
    %5507 = vmatpush1.msra.mxu0 %v5435
    %5508 = vmatprep.subr.mxu0 0.0
    %5509 = vmatpush1.msra.mxu0 %v5436
    %5510 = vmatprep.subr.mxu0 0.0
    %5511 = vmatpush1.msra.mxu0 %v5437
    %5512 = vmatprep.subr.mxu0 0.0
    %5513 = vmatpush1.msra.mxu0 %v5438
    %5514 = vmatprep.subr.mxu0 0.0
    %5515 = vmatpush1.msra.mxu0 %v5439
    %5516 = vmatprep.subr.mxu0 0.0
    %5517 = vmatpush1.msra.mxu0 %v5440
    %5518 = vmatprep.subr.mxu0 0.0
    %5519 = vmatpush1.msra.mxu0 %v5441
    %5520 = vmatprep.subr.mxu0 0.0
    %5521 = vmatpush1.msra.mxu0 %v5442
    %5522 = vmatprep.subr.mxu0 0.0
    %5523 = vmatpush1.msra.mxu0 %v5443
    %5524 = vmatprep.mubr.f32.mxu0 %v778
    %5525 = vmatmul.mubr.f32.gmra.mrb[0].mxu0 %v777
    %v5526 = vpop.f32.mrb[0].mxu0
    %v5527 = vadd.f32 0.0, %v5526
    %v5528 = vpop.f32.mrb[0].mxu0
    %5529 = vmatprep.mubr.f32.mxu0 %v781
    %5530 = vmatmul.mubr.f32.gmra.mrb[0].mxu0 %v780
    %v5531 = vpop.f32.mrb[0].mxu0
    %v5532 = vadd.f32 0.0, %v5531
    %v5533 = vpop.f32.mrb[0].mxu0
    %5534 = vmatprep.mubr.f32.mxu0 %v784
    %5535 = vmatmul.mubr.f32.gmra.mrb[0].mxu0 %v783
    %v5536 = vpop.f32.mrb[0].mxu0
    %v5537 = vadd.f32 0.0, %v5536
    %v5538 = vpop.f32.mrb[0].mxu0
    %5539 = vmatprep.mubr.f32.mxu0 %v787
    %5540 = vmatmul.mubr.f32.gmra.mrb[0].mxu0 %v786
    %v5541 = vpop.f32.mrb[0].mxu0
    %v5542 = vadd.f32 0.0, %v5541
    %v5543 = vpop.f32.mrb[0].mxu0
    %5544 = vmatprep.mubr.f32.mxu0 %v790
    %5545 = vmatmul.mubr.f32.gmra.mrb[0].mxu0 %v789
    %v5546 = vpop.f32.mrb[0].mxu0
    %v5547 = vadd.f32 0.0, %v5546
    %v5548 = vpop.f32.mrb[0].mxu0
    %5549 = vmatprep.mubr.f32.mxu0 %v793
    %5550 = vmatmul.mubr.f32.gmra.mrb[0].mxu0 %v792
    %v5551 = vpop.f32.mrb[0].mxu0
    %v5552 = vadd.f32 0.0, %v5551
    %v5553 = vpop.f32.mrb[0].mxu0
    %5554 = vmatprep.mubr.f32.mxu0 %v796
    %5555 = vmatmul.mubr.f32.gmra.mrb[0].mxu0 %v795
    %v5556 = vpop.f32.mrb[0].mxu0
    %v5557 = vadd.f32 0.0, %v5556
    %v5558 = vpop.f32.mrb[0].mxu0
    %5559 = vmatprep.mubr.f32.mxu0 %v799
    %5560 = vmatmul.mubr.f32.gmra.mrb[0].mxu0 %v798
    %v5561 = vpop.f32.mrb[0].mxu0
    %v5562 = vadd.f32 0.0, %v5561
    %v5563 = vpop.f32.mrb[0].mxu0
    %5564 = vmatprep.mubr.f32.mxu0 %v802
    %5565 = vmatmul.mubr.f32.gmra.mrb[0].mxu0 %v801
    %v5566 = vpop.f32.mrb[0].mxu0
    %v5567 = vadd.f32 0.0, %v5566
    %v5568 = vpop.f32.mrb[0].mxu0
    %5569 = vmatprep.mubr.f32.mxu0 %v805
    %5570 = vmatmul.mubr.f32.gmra.mrb[0].mxu0 %v804
    %v5571 = vpop.f32.mrb[0].mxu0
    %v5572 = vadd.f32 0.0, %v5571
    %v5573 = vpop.f32.mrb[0].mxu0
    %5574 = vmatprep.mubr.f32.mxu0 %v808
    %5575 = vmatmul.mubr.f32.gmra.mrb[0].mxu0 %v807
    %v5576 = vpop.f32.mrb[0].mxu0
    %v5577 = vadd.f32 0.0, %v5576
    %v5578 = vpop.f32.mrb[0].mxu0
    %5579 = vmatprep.mubr.f32.mxu0 %v811
    %5580 = vmatmul.mubr.f32.gmra.mrb[0].mxu0 %v810
    %v5581 = vpop.f32.mrb[0].mxu0
    %v5582 = vadd.f32 0.0, %v5581
    %v5583 = vpop.f32.mrb[0].mxu0
    %5584 = vmatprep.mubr.f32.mxu0 %v814
    %5585 = vmatmul.mubr.f32.gmra.mrb[0].mxu0 %v813
    %v5586 = vpop.f32.mrb[0].mxu0
    %v5587 = vadd.f32 0.0, %v5586
    %v5588 = vpop.f32.mrb[0].mxu0
    %5589 = vmatprep.mubr.f32.mxu0 %v817
    %5590 = vmatmul.mubr.f32.gmra.mrb[0].mxu0 %v816
    %v5591 = vpop.f32.mrb[0].mxu0
    %v5592 = vadd.f32 0.0, %v5591
    %v5593 = vpop.f32.mrb[0].mxu0
    %5594 = vmatprep.mubr.f32.mxu0 %v820
    %5595 = vmatmul.mubr.f32.gmra.mrb[0].mxu0 %v819
    %v5596 = vpop.f32.mrb[0].mxu0
    %v5597 = vadd.f32 0.0, %v5596
    %v5598 = vpop.f32.mrb[0].mxu0
    %5599 = vmatprep.mubr.f32.mxu0 %v823
    %5600 = vmatmul.mubr.f32.gmra.mrb[0].mxu0 %v822
    %v5601 = vpop.f32.mrb[0].mxu0
    %v5602 = vadd.f32 0.0, %v5601
    %v5603 = vpop.f32.mrb[0].mxu0
    %5604 = vdwg.mxu0
    %5605 = vmatprep.subr.mxu0 0.0
    %5606 = vmatpush1.msra.mxu0 %v5444
    %5607 = vmatprep.subr.mxu0 0.0
    %5608 = vmatpush1.msra.mxu0 %v5445
    %5609 = vmatprep.subr.mxu0 0.0
    %5610 = vmatpush1.msra.mxu0 %v5446
    %5611 = vmatprep.subr.mxu0 0.0
    %5612 = vmatpush1.msra.mxu0 %v5447
    %5613 = vmatprep.subr.mxu0 0.0
    %5614 = vmatpush1.msra.mxu0 %v5448
    %5615 = vmatprep.subr.mxu0 0.0
    %5616 = vmatpush1.msra.mxu0 %v5449
    %5617 = vmatprep.subr.mxu0 0.0
    %5618 = vmatpush1.msra.mxu0 %v5450
    %5619 = vmatprep.subr.mxu0 0.0
    %5620 = vmatpush1.msra.mxu0 %v5451
    %5621 = vmatprep.subr.mxu0 0.0
    %5622 = vmatpush1.msra.mxu0 %v5452
    %5623 = vmatprep.subr.mxu0 0.0
    %5624 = vmatpush1.msra.mxu0 %v5453
    %5625 = vmatprep.subr.mxu0 0.0
    %5626 = vmatpush1.msra.mxu0 %v5454
    %5627 = vmatprep.subr.mxu0 0.0
    %5628 = vmatpush1.msra.mxu0 %v5455
    %5629 = vmatprep.subr.mxu0 0.0
    %5630 = vmatpush1.msra.mxu0 %v5456
    %5631 = vmatprep.subr.mxu0 0.0
    %5632 = vmatpush1.msra.mxu0 %v5457
    %5633 = vmatprep.subr.mxu0 0.0
    %5634 = vmatpush1.msra.mxu0 %v5458
    %5635 = vmatprep.subr.mxu0 0.0
    %5636 = vmatpush1.msra.mxu0 %v5459
    %5637 = vmatprep.subr.mxu0 0.0
    %5638 = vmatpush1.msra.mxu0 0.0
    %5639 = vmatprep.subr.mxu0 0.0
    %5640 = vmatpush1.msra.mxu0 0.0
    %5641 = vmatprep.subr.mxu0 0.0
    %5642 = vmatpush1.msra.mxu0 0.0
    %5643 = vmatprep.subr.mxu0 0.0
    %5644 = vmatpush1.msra.mxu0 0.0
    %5645 = vmatprep.subr.mxu0 0.0
    %5646 = vmatpush1.msra.mxu0 0.0
    %5647 = vmatprep.subr.mxu0 0.0
    %5648 = vmatpush1.msra.mxu0 0.0
    %5649 = vmatprep.subr.mxu0 0.0
    %5650 = vmatpush1.msra.mxu0 0.0
    %5651 = vmatprep.subr.mxu0 0.0
    %5652 = vmatpush1.msra.mxu0 0.0
    %5653 = vmatprep.subr.mxu0 0.0
    %5654 = vmatpush1.msra.mxu0 0.0
    %5655 = vmatprep.subr.mxu0 0.0
    %5656 = vmatpush1.msra.mxu0 0.0
    %5657 = vmatprep.subr.mxu0 0.0
    %5658 = vmatpush1.msra.mxu0 0.0
    %5659 = vmatprep.subr.mxu0 0.0
    %5660 = vmatpush1.msra.mxu0 0.0
    %5661 = vmatprep.subr.mxu0 0.0
    %5662 = vmatpush1.msra.mxu0 0.0
    %5663 = vmatprep.subr.mxu0 0.0
    %5664 = vmatpush1.msra.mxu0 0.0
    %5665 = vmatprep.subr.mxu0 0.0
    %5666 = vmatpush1.msra.mxu0 0.0
    %5667 = vmatprep.subr.mxu0 0.0
    %5668 = vmatpush1.msra.mxu0 0.0
    %5669 = vmatprep.mubr.f32.mxu0 0.0
    %5670 = vmatmul.mubr.f32.gmra.mrb[0].mxu0 %v779
    %v5671 = vpop.f32.mrb[0].mxu0
    %v5672 = vadd.f32 %v5527, %v5671
    %v5673 = vpop.f32.mrb[0].mxu0
    %5674 = vmatprep.mubr.f32.mxu0 0.0
    %5675 = vmatmul.mubr.f32.gmra.mrb[0].mxu0 %v782
    %v5676 = vpop.f32.mrb[0].mxu0
    %v5677 = vadd.f32 %v5532, %v5676
    %v5678 = vpop.f32.mrb[0].mxu0
    %5679 = vmatprep.mubr.f32.mxu0 0.0
    %5680 = vmatmul.mubr.f32.gmra.mrb[0].mxu0 %v785
    %v5681 = vpop.f32.mrb[0].mxu0
    %v5682 = vadd.f32 %v5537, %v5681
    %v5683 = vpop.f32.mrb[0].mxu0
    %5684 = vmatprep.mubr.f32.mxu0 0.0
    %5685 = vmatmul.mubr.f32.gmra.mrb[0].mxu0 %v788
    %v5686 = vpop.f32.mrb[0].mxu0
    %v5687 = vadd.f32 %v5542, %v5686
    %v5688 = vpop.f32.mrb[0].mxu0
    %5689 = vmatprep.mubr.f32.mxu0 0.0
    %5690 = vmatmul.mubr.f32.gmra.mrb[0].mxu0 %v791
    %v5691 = vpop.f32.mrb[0].mxu0
    %v5692 = vadd.f32 %v5547, %v5691
    %v5693 = vpop.f32.mrb[0].mxu0
    %5694 = vmatprep.mubr.f32.mxu0 0.0
    %5695 = vmatmul.mubr.f32.gmra.mrb[0].mxu0 %v794
    %v5696 = vpop.f32.mrb[0].mxu0
    %v5697 = vadd.f32 %v5552, %v5696
    %v5698 = vpop.f32.mrb[0].mxu0
    %5699 = vmatprep.mubr.f32.mxu0 0.0
    %5700 = vmatmul.mubr.f32.gmra.mrb[0].mxu0 %v797
    %v5701 = vpop.f32.mrb[0].mxu0
    %v5702 = vadd.f32 %v5557, %v5701
    %v5703 = vpop.f32.mrb[0].mxu0
    %5704 = vmatprep.mubr.f32.mxu0 0.0
    %5705 = vmatmul.mubr.f32.gmra.mrb[0].mxu0 %v800
    %v5706 = vpop.f32.mrb[0].mxu0
    %v5707 = vadd.f32 %v5562, %v5706
    %v5708 = vpop.f32.mrb[0].mxu0
    %5709 = vmatprep.mubr.f32.mxu0 0.0
    %5710 = vmatmul.mubr.f32.gmra.mrb[0].mxu0 %v803
    %v5711 = vpop.f32.mrb[0].mxu0
    %v5712 = vadd.f32 %v5567, %v5711
    %v5713 = vpop.f32.mrb[0].mxu0
    %5714 = vmatprep.mubr.f32.mxu0 0.0
    %5715 = vmatmul.mubr.f32.gmra.mrb[0].mxu0 %v806
    %v5716 = vpop.f32.mrb[0].mxu0
    %v5717 = vadd.f32 %v5572, %v5716
    %v5718 = vpop.f32.mrb[0].mxu0
    %5719 = vmatprep.mubr.f32.mxu0 0.0
    %5720 = vmatmul.mubr.f32.gmra.mrb[0].mxu0 %v809
    %v5721 = vpop.f32.mrb[0].mxu0
    %v5722 = vadd.f32 %v5577, %v5721
    %v5723 = vpop.f32.mrb[0].mxu0
    %5724 = vmatprep.mubr.f32.mxu0 0.0
    %5725 = vmatmul.mubr.f32.gmra.mrb[0].mxu0 %v812
    %v5726 = vpop.f32.mrb[0].mxu0
    %v5727 = vadd.f32 %v5582, %v5726
    %v5728 = vpop.f32.mrb[0].mxu0
    %5729 = vmatprep.mubr.f32.mxu0 0.0
    %5730 = vmatmul.mubr.f32.gmra.mrb[0].mxu0 %v815
    %v5731 = vpop.f32.mrb[0].mxu0
    %v5732 = vadd.f32 %v5587, %v5731
    %v5733 = vpop.f32.mrb[0].mxu0
    %5734 = vmatprep.mubr.f32.mxu0 0.0
    %5735 = vmatmul.mubr.f32.gmra.mrb[0].mxu0 %v818
    %v5736 = vpop.f32.mrb[0].mxu0
    %v5737 = vadd.f32 %v5592, %v5736
    %v5738 = vpop.f32.mrb[0].mxu0
    %5739 = vmatprep.mubr.f32.mxu0 0.0
    %5740 = vmatmul.mubr.f32.gmra.mrb[0].mxu0 %v821
    %v5741 = vpop.f32.mrb[0].mxu0
    %v5742 = vadd.f32 %v5597, %v5741
    %v5743 = vpop.f32.mrb[0].mxu0
    %5744 = vmatprep.mubr.f32.mxu0 0.0
    %5745 = vmatmul.mubr.f32.gmra.mrb[0].mxu0 %v824
    %v5746 = vpop.f32.mrb[0].mxu0
    %v5747 = vadd.f32 %v5602, %v5746
    %v5748 = vpop.f32.mrb[0].mxu0
    %5749 = vdwg.mxu0
    %v5750 = vld [vmem:[%s4 + $0x60] sm:$0xff]
    %v5751 = vld [vmem:[%s4 + $0x68] sm:$0xff]
    %v5752 = vld [vmem:[%s4 + $0x70] sm:$0xff]
    %v5753 = vld [vmem:[%s4 + $0x78] sm:$0xff]
    %5758 = vrot.lane.b32.xlu0 %v5750, 96
    %v5759 = vpop.permute.xlu0 %5758
    %5760 = vrot.lane.b32.xlu0 %v5751, 96
    %v5761 = vpop.permute.xlu0 %5760
    %5762 = vrot.lane.b32.xlu0 %v5752, 96
    %v5763 = vpop.permute.xlu0 %5762
    %5764 = vrot.lane.b32.xlu0 %v5753, 96
    %v5765 = vpop.permute.xlu0 %5764
    %v5771 = vsel %vm1621, %v5672, 0
    %v5774 = vsel %vm1621, %v5677, 0
    %v5777 = vsel %vm1621, %v5682, 0
    %v5780 = vsel %vm1621, %v5687, 0
    %v5783 = vsel %vm1621, %v5692, 0
    %v5786 = vsel %vm1621, %v5697, 0
    %v5789 = vsel %vm1621, %v5702, 0
    %v5792 = vsel %vm1621, %v5707, 0
    %v5795 = vsel %vm1621, %v5712, 0
    %v5798 = vsel %vm1621, %v5717, 0
    %v5801 = vsel %vm1621, %v5722, 0
    %v5804 = vsel %vm1621, %v5727, 0
    %v5807 = vsel %vm1621, %v5732, 0
    %v5810 = vsel %vm1621, %v5737, 0
    %v5813 = vsel %vm1621, %v5742, 0
    %v5816 = vsel %vm1621, %v5747, 0
    %5818 = vmatprep.subr.mxu0 0.0
    %5819 = vmatpush1.msra.mxu0 %v5759
    %5820 = vmatprep.subr.mxu0 0.0
    %5821 = vmatpush1.msra.mxu0 %v5761
    %5822 = vmatprep.subr.mxu0 0.0
    %5823 = vmatpush1.msra.mxu0 %v5763
    %5824 = vmatprep.subr.mxu0 0.0
    %5825 = vmatpush1.msra.mxu0 %v5765
    %5826 = vmatprep.subr.mxu0 0.0
    %5827 = vmatpush1.msra.mxu0 0.0
    %5828 = vmatprep.subr.mxu0 0.0
    %5829 = vmatpush1.msra.mxu0 0.0
    %5830 = vmatprep.subr.mxu0 0.0
    %5831 = vmatpush1.msra.mxu0 0.0
    %5832 = vmatprep.subr.mxu0 0.0
    %5833 = vmatpush1.msra.mxu0 0.0
    %5834 = vmatprep.subr.mxu0 0.0
    %5835 = vmatpush1.msra.mxu0 0.0
    %5836 = vmatprep.subr.mxu0 0.0
    %5837 = vmatpush1.msra.mxu0 0.0
    %5838 = vmatprep.subr.mxu0 0.0
    %5839 = vmatpush1.msra.mxu0 0.0
    %5840 = vmatprep.subr.mxu0 0.0
    %5841 = vmatpush1.msra.mxu0 0.0
    %5842 = vmatprep.subr.mxu0 0.0
    %5843 = vmatpush1.msra.mxu0 0.0
    %5844 = vmatprep.subr.mxu0 0.0
    %5845 = vmatpush1.msra.mxu0 0.0
    %5846 = vmatprep.subr.mxu0 0.0
    %5847 = vmatpush1.msra.mxu0 0.0
    %5848 = vmatprep.subr.mxu0 0.0
    %5849 = vmatpush1.msra.mxu0 0.0
    %5850 = vmatprep.subr.mxu0 0.0
    %5851 = vmatpush1.msra.mxu0 0.0
    %5852 = vmatprep.subr.mxu0 0.0
    %5853 = vmatpush1.msra.mxu0 0.0
    %5854 = vmatprep.subr.mxu0 0.0
    %5855 = vmatpush1.msra.mxu0 0.0
    %5856 = vmatprep.subr.mxu0 0.0
    %5857 = vmatpush1.msra.mxu0 0.0
    %5858 = vmatprep.subr.mxu0 0.0
    %5859 = vmatpush1.msra.mxu0 0.0
    %5860 = vmatprep.subr.mxu0 0.0
    %5861 = vmatpush1.msra.mxu0 0.0
    %5862 = vmatprep.subr.mxu0 0.0
    %5863 = vmatpush1.msra.mxu0 0.0
    %5864 = vmatprep.subr.mxu0 0.0
    %5865 = vmatpush1.msra.mxu0 0.0
    %5866 = vmatprep.subr.mxu0 0.0
    %5867 = vmatpush1.msra.mxu0 0.0
    %5868 = vmatprep.subr.mxu0 0.0
    %5869 = vmatpush1.msra.mxu0 0.0
    %5870 = vmatprep.subr.mxu0 0.0
    %5871 = vmatpush1.msra.mxu0 0.0
    %5872 = vmatprep.subr.mxu0 0.0
    %5873 = vmatpush1.msra.mxu0 0.0
    %5874 = vmatprep.subr.mxu0 0.0
    %5875 = vmatpush1.msra.mxu0 0.0
    %5876 = vmatprep.subr.mxu0 0.0
    %5877 = vmatpush1.msra.mxu0 0.0
    %5878 = vmatprep.subr.mxu0 0.0
    %5879 = vmatpush1.msra.mxu0 0.0
    %5880 = vmatprep.subr.mxu0 0.0
    %5881 = vmatpush1.msra.mxu0 0.0
    %5882 = vmatprep.mubr.f32.mxu0 0.0
    %5883 = vmatmul.mubr.f32.gmra.mrb[0].mxu0 %v5771
    %v5884 = vpop.f32.mrb[0].mxu0
    %v5885 = vadd.f32 0.0, %v5884
    %v5886 = vpop.f32.mrb[0].mxu0
    %5887 = vmatprep.mubr.f32.mxu0 0.0
    %5888 = vmatmul.mubr.f32.gmra.mrb[0].mxu0 %v5774
    %v5889 = vpop.f32.mrb[0].mxu0
    %v5890 = vadd.f32 0.0, %v5889
    %v5891 = vpop.f32.mrb[0].mxu0
    %5892 = vmatprep.mubr.f32.mxu0 0.0
    %5893 = vmatmul.mubr.f32.gmra.mrb[0].mxu0 %v5777
    %v5894 = vpop.f32.mrb[0].mxu0
    %v5895 = vadd.f32 0.0, %v5894
    %v5896 = vpop.f32.mrb[0].mxu0
    %5897 = vmatprep.mubr.f32.mxu0 0.0
    %5898 = vmatmul.mubr.f32.gmra.mrb[0].mxu0 %v5780
    %v5899 = vpop.f32.mrb[0].mxu0
    %v5900 = vadd.f32 0.0, %v5899
    %v5901 = vpop.f32.mrb[0].mxu0
    %5902 = vmatprep.mubr.f32.mxu0 0.0
    %5903 = vmatmul.mubr.f32.gmra.mrb[0].mxu0 %v5783
    %v5904 = vpop.f32.mrb[0].mxu0
    %v5905 = vadd.f32 0.0, %v5904
    %v5906 = vpop.f32.mrb[0].mxu0
    %5907 = vmatprep.mubr.f32.mxu0 0.0
    %5908 = vmatmul.mubr.f32.gmra.mrb[0].mxu0 %v5786
    %v5909 = vpop.f32.mrb[0].mxu0
    %v5910 = vadd.f32 0.0, %v5909
    %v5911 = vpop.f32.mrb[0].mxu0
    %5912 = vmatprep.mubr.f32.mxu0 0.0
    %5913 = vmatmul.mubr.f32.gmra.mrb[0].mxu0 %v5789
    %v5914 = vpop.f32.mrb[0].mxu0
    %v5915 = vadd.f32 0.0, %v5914
    %v5916 = vpop.f32.mrb[0].mxu0
    %5917 = vmatprep.mubr.f32.mxu0 0.0
    %5918 = vmatmul.mubr.f32.gmra.mrb[0].mxu0 %v5792
    %v5919 = vpop.f32.mrb[0].mxu0
    %v5920 = vadd.f32 0.0, %v5919
    %v5921 = vpop.f32.mrb[0].mxu0
    %5922 = vmatprep.mubr.f32.mxu0 0.0
    %5923 = vmatmul.mubr.f32.gmra.mrb[0].mxu0 %v5795
    %v5924 = vpop.f32.mrb[0].mxu0
    %v5925 = vadd.f32 0.0, %v5924
    %v5926 = vpop.f32.mrb[0].mxu0
    %5927 = vmatprep.mubr.f32.mxu0 0.0
    %5928 = vmatmul.mubr.f32.gmra.mrb[0].mxu0 %v5798
    %v5929 = vpop.f32.mrb[0].mxu0
    %v5930 = vadd.f32 0.0, %v5929
    %v5931 = vpop.f32.mrb[0].mxu0
    %5932 = vmatprep.mubr.f32.mxu0 0.0
    %5933 = vmatmul.mubr.f32.gmra.mrb[0].mxu0 %v5801
    %v5934 = vpop.f32.mrb[0].mxu0
    %v5935 = vadd.f32 0.0, %v5934
    %v5936 = vpop.f32.mrb[0].mxu0
    %5937 = vmatprep.mubr.f32.mxu0 0.0
    %5938 = vmatmul.mubr.f32.gmra.mrb[0].mxu0 %v5804
    %v5939 = vpop.f32.mrb[0].mxu0
    %v5940 = vadd.f32 0.0, %v5939
    %v5941 = vpop.f32.mrb[0].mxu0
    %5942 = vmatprep.mubr.f32.mxu0 0.0
    %5943 = vmatmul.mubr.f32.gmra.mrb[0].mxu0 %v5807
    %v5944 = vpop.f32.mrb[0].mxu0
    %v5945 = vadd.f32 0.0, %v5944
    %v5946 = vpop.f32.mrb[0].mxu0
    %5947 = vmatprep.mubr.f32.mxu0 0.0
    %5948 = vmatmul.mubr.f32.gmra.mrb[0].mxu0 %v5810
    %v5949 = vpop.f32.mrb[0].mxu0
    %v5950 = vadd.f32 0.0, %v5949
    %v5951 = vpop.f32.mrb[0].mxu0
    %5952 = vmatprep.mubr.f32.mxu0 0.0
    %5953 = vmatmul.mubr.f32.gmra.mrb[0].mxu0 %v5813
    %v5954 = vpop.f32.mrb[0].mxu0
    %v5955 = vadd.f32 0.0, %v5954
    %v5956 = vpop.f32.mrb[0].mxu0
    %5957 = vmatprep.mubr.f32.mxu0 0.0
    %5958 = vmatmul.mubr.f32.gmra.mrb[0].mxu0 %v5816
    %v5959 = vpop.f32.mrb[0].mxu0
    %v5960 = vadd.f32 0.0, %v5959
    %v5961 = vpop.f32.mrb[0].mxu0
    %5962 = vdwg.mxu0
    %5963 = vmatprep.subr.mxu0 0.0
    %5964 = vmatpush1.msra.mxu0 %v5750
    %5965 = vmatprep.subr.mxu0 0.0
    %5966 = vmatpush1.msra.mxu0 %v5751
    %5967 = vmatprep.subr.mxu0 0.0
    %5968 = vmatpush1.msra.mxu0 %v5752
    %5969 = vmatprep.subr.mxu0 0.0
    %5970 = vmatpush1.msra.mxu0 %v5753
    %5971 = vmatprep.subr.mxu0 0.0
    %5972 = vmatpush1.msra.mxu0 0.0
    %5973 = vmatprep.subr.mxu0 0.0
    %5974 = vmatpush1.msra.mxu0 0.0
    %5975 = vmatprep.subr.mxu0 0.0
    %5976 = vmatpush1.msra.mxu0 0.0
    %5977 = vmatprep.subr.mxu0 0.0
    %5978 = vmatpush1.msra.mxu0 0.0
    %5979 = vmatprep.subr.mxu0 0.0
    %5980 = vmatpush1.msra.mxu0 0.0
    %5981 = vmatprep.subr.mxu0 0.0
    %5982 = vmatpush1.msra.mxu0 0.0
    %5983 = vmatprep.subr.mxu0 0.0
    %5984 = vmatpush1.msra.mxu0 0.0
    %5985 = vmatprep.subr.mxu0 0.0
    %5986 = vmatpush1.msra.mxu0 0.0
    %5987 = vmatprep.subr.mxu0 0.0
    %5988 = vmatpush1.msra.mxu0 0.0
    %5989 = vmatprep.subr.mxu0 0.0
    %5990 = vmatpush1.msra.mxu0 0.0
    %5991 = vmatprep.subr.mxu0 0.0
    %5992 = vmatpush1.msra.mxu0 0.0
    %5993 = vmatprep.subr.mxu0 0.0
    %5994 = vmatpush1.msra.mxu0 0.0
    %5995 = vmatprep.subr.mxu0 0.0
    %5996 = vmatpush1.msra.mxu0 0.0
    %5997 = vmatprep.subr.mxu0 0.0
    %5998 = vmatpush1.msra.mxu0 0.0
    %5999 = vmatprep.subr.mxu0 0.0
    %6000 = vmatpush1.msra.mxu0 0.0
    %6001 = vmatprep.subr.mxu0 0.0
    %6002 = vmatpush1.msra.mxu0 0.0
    %6003 = vmatprep.subr.mxu0 0.0
    %6004 = vmatpush1.msra.mxu0 0.0
    %6005 = vmatprep.subr.mxu0 0.0
    %6006 = vmatpush1.msra.mxu0 0.0
    %6007 = vmatprep.subr.mxu0 0.0
    %6008 = vmatpush1.msra.mxu0 0.0
    %6009 = vmatprep.subr.mxu0 0.0
    %6010 = vmatpush1.msra.mxu0 0.0
    %6011 = vmatprep.subr.mxu0 0.0
    %6012 = vmatpush1.msra.mxu0 0.0
    %6013 = vmatprep.subr.mxu0 0.0
    %6014 = vmatpush1.msra.mxu0 0.0
    %6015 = vmatprep.subr.mxu0 0.0
    %6016 = vmatpush1.msra.mxu0 0.0
    %6017 = vmatprep.subr.mxu0 0.0
    %6018 = vmatpush1.msra.mxu0 0.0
    %6019 = vmatprep.subr.mxu0 0.0
    %6020 = vmatpush1.msra.mxu0 0.0
    %6021 = vmatprep.subr.mxu0 0.0
    %6022 = vmatpush1.msra.mxu0 0.0
    %6023 = vmatprep.subr.mxu0 0.0
    %6024 = vmatpush1.msra.mxu0 0.0
    %6025 = vmatprep.subr.mxu0 0.0
    %6026 = vmatpush1.msra.mxu0 0.0
    %6027 = vmatprep.mubr.f32.mxu0 0.0
    %6028 = vmatmul.mubr.f32.gmra.mrb[0].mxu0 %v3892
    %v6029 = vpop.f32.mrb[0].mxu0
    %v6030 = vadd.f32 %v5885, %v6029
    %v6031 = vpop.f32.mrb[0].mxu0
    %6032 = vmatprep.mubr.f32.mxu0 0.0
    %6033 = vmatmul.mubr.f32.gmra.mrb[0].mxu0 %v3895
    %v6034 = vpop.f32.mrb[0].mxu0
    %v6035 = vadd.f32 %v5890, %v6034
    %v6036 = vpop.f32.mrb[0].mxu0
    %6037 = vmatprep.mubr.f32.mxu0 0.0
    %6038 = vmatmul.mubr.f32.gmra.mrb[0].mxu0 %v3898
    %v6039 = vpop.f32.mrb[0].mxu0
    %v6040 = vadd.f32 %v5895, %v6039
    %v6041 = vpop.f32.mrb[0].mxu0
    %6042 = vmatprep.mubr.f32.mxu0 0.0
    %6043 = vmatmul.mubr.f32.gmra.mrb[0].mxu0 %v3901
    %v6044 = vpop.f32.mrb[0].mxu0
    %v6045 = vadd.f32 %v5900, %v6044
    %v6046 = vpop.f32.mrb[0].mxu0
    %6047 = vmatprep.mubr.f32.mxu0 0.0
    %6048 = vmatmul.mubr.f32.gmra.mrb[0].mxu0 %v3904
    %v6049 = vpop.f32.mrb[0].mxu0
    %v6050 = vadd.f32 %v5905, %v6049
    %v6051 = vpop.f32.mrb[0].mxu0
    %6052 = vmatprep.mubr.f32.mxu0 0.0
    %6053 = vmatmul.mubr.f32.gmra.mrb[0].mxu0 %v3907
    %v6054 = vpop.f32.mrb[0].mxu0
    %v6055 = vadd.f32 %v5910, %v6054
    %v6056 = vpop.f32.mrb[0].mxu0
    %6057 = vmatprep.mubr.f32.mxu0 0.0
    %6058 = vmatmul.mubr.f32.gmra.mrb[0].mxu0 %v3910
    %v6059 = vpop.f32.mrb[0].mxu0
    %v6060 = vadd.f32 %v5915, %v6059
    %v6061 = vpop.f32.mrb[0].mxu0
    %6062 = vmatprep.mubr.f32.mxu0 0.0
    %6063 = vmatmul.mubr.f32.gmra.mrb[0].mxu0 %v3913
    %v6064 = vpop.f32.mrb[0].mxu0
    %v6065 = vadd.f32 %v5920, %v6064
    %v6066 = vpop.f32.mrb[0].mxu0
    %6067 = vmatprep.mubr.f32.mxu0 0.0
    %6068 = vmatmul.mubr.f32.gmra.mrb[0].mxu0 %v3916
    %v6069 = vpop.f32.mrb[0].mxu0
    %v6070 = vadd.f32 %v5925, %v6069
    %v6071 = vpop.f32.mrb[0].mxu0
    %6072 = vmatprep.mubr.f32.mxu0 0.0
    %6073 = vmatmul.mubr.f32.gmra.mrb[0].mxu0 %v3919
    %v6074 = vpop.f32.mrb[0].mxu0
    %v6075 = vadd.f32 %v5930, %v6074
    %v6076 = vpop.f32.mrb[0].mxu0
    %6077 = vmatprep.mubr.f32.mxu0 0.0
    %6078 = vmatmul.mubr.f32.gmra.mrb[0].mxu0 %v3922
    %v6079 = vpop.f32.mrb[0].mxu0
    %v6080 = vadd.f32 %v5935, %v6079
    %v6081 = vpop.f32.mrb[0].mxu0
    %6082 = vmatprep.mubr.f32.mxu0 0.0
    %6083 = vmatmul.mubr.f32.gmra.mrb[0].mxu0 %v3925
    %v6084 = vpop.f32.mrb[0].mxu0
    %v6085 = vadd.f32 %v5940, %v6084
    %v6086 = vpop.f32.mrb[0].mxu0
    %6087 = vmatprep.mubr.f32.mxu0 0.0
    %6088 = vmatmul.mubr.f32.gmra.mrb[0].mxu0 %v3928
    %v6089 = vpop.f32.mrb[0].mxu0
    %v6090 = vadd.f32 %v5945, %v6089
    %v6091 = vpop.f32.mrb[0].mxu0
    %6092 = vmatprep.mubr.f32.mxu0 0.0
    %6093 = vmatmul.mubr.f32.gmra.mrb[0].mxu0 %v3931
    %v6094 = vpop.f32.mrb[0].mxu0
    %v6095 = vadd.f32 %v5950, %v6094
    %v6096 = vpop.f32.mrb[0].mxu0
    %6097 = vmatprep.mubr.f32.mxu0 0.0
    %6098 = vmatmul.mubr.f32.gmra.mrb[0].mxu0 %v3934
    %v6099 = vpop.f32.mrb[0].mxu0
    %v6100 = vadd.f32 %v5955, %v6099
    %v6101 = vpop.f32.mrb[0].mxu0
    %6102 = vmatprep.mubr.f32.mxu0 0.0
    %6103 = vmatmul.mubr.f32.gmra.mrb[0].mxu0 %v3937
    %v6104 = vpop.f32.mrb[0].mxu0
    %v6105 = vadd.f32 %v5960, %v6104
    %v6106 = vpop.f32.mrb[0].mxu0
    %6107 = vdwg.mxu0
    %v6108 = vlaneseq
    %v6109 = vshrl.u32 %v6108, 7
    %v6110 = vsub.s32 5, %v6109
    %v6111 = vrot.slane %v24, %v6110
    %v6112 = vadd.f32 %v6030, %v6111
    %v6113 = vadd.f32 %v6035, %v6111
    %v6114 = vadd.f32 %v6040, %v6111
    %v6115 = vadd.f32 %v6045, %v6111
    %v6116 = vadd.f32 %v6050, %v6111
    %v6117 = vadd.f32 %v6055, %v6111
    %v6118 = vadd.f32 %v6060, %v6111
    %v6119 = vadd.f32 %v6065, %v6111
    %v6120 = vadd.f32 %v6070, %v6111
    %v6121 = vadd.f32 %v6075, %v6111
    %v6122 = vadd.f32 %v6080, %v6111
    %v6123 = vadd.f32 %v6085, %v6111
    %v6124 = vadd.f32 %v6090, %v6111
    %v6125 = vadd.f32 %v6095, %v6111
    %v6126 = vadd.f32 %v6100, %v6111
    %v6127 = vadd.f32 %v6105, %v6111
    %v6128 = vmax.f32 %v6112, 0.0
    %v6129 = vmax.f32 %v6113, 0.0
    %v6130 = vmax.f32 %v6114, 0.0
    %v6131 = vmax.f32 %v6115, 0.0
    %v6132 = vmax.f32 %v6116, 0.0
    %v6133 = vmax.f32 %v6117, 0.0
    %v6134 = vmax.f32 %v6118, 0.0
    %v6135 = vmax.f32 %v6119, 0.0
    %v6136 = vmax.f32 %v6120, 0.0
    %v6137 = vmax.f32 %v6121, 0.0
    %v6138 = vmax.f32 %v6122, 0.0
    %v6139 = vmax.f32 %v6123, 0.0
    %v6140 = vmax.f32 %v6124, 0.0
    %v6141 = vmax.f32 %v6125, 0.0
    %v6142 = vmax.f32 %v6126, 0.0
    %v6143 = vmax.f32 %v6127, 0.0
    %v6144 = vld [vmem:[%s4] sm:$0xff]
    %v6145 = vld [vmem:[%s4 + $0x8] sm:$0xff]
    %v6146 = vld [vmem:[%s4 + $0x10] sm:$0xff]
    %v6147 = vld [vmem:[%s4 + $0x18] sm:$0xff]
    %v6148 = vlaneseq
    %v6149 = vshrl.u32 %v6148, 7
    %v6150 = vsub.s32 6, %v6149
    %v6151 = vrot.slane %v24, %v6150
    %6156 = vrot.lane.b32.xlu0 %v6144, 64
    %v6157 = vpop.permute.xlu0 %6156
    %6158 = vrot.lane.b32.xlu0 %v6145, 64
    %v6159 = vpop.permute.xlu0 %6158
    %6160 = vrot.lane.b32.xlu0 %v6146, 64
    %v6161 = vpop.permute.xlu0 %6160
    %6162 = vrot.lane.b32.xlu0 %v6147, 64
    %v6163 = vpop.permute.xlu0 %6162
    %v6169 = vsel %vm1621, %v6128, 0
    %v6172 = vsel %vm1621, %v6129, 0
    %v6175 = vsel %vm1621, %v6130, 0
    %v6178 = vsel %vm1621, %v6131, 0
    %v6181 = vsel %vm1621, %v6132, 0
    %v6184 = vsel %vm1621, %v6133, 0
    %v6187 = vsel %vm1621, %v6134, 0
    %v6190 = vsel %vm1621, %v6135, 0
    %v6193 = vsel %vm1621, %v6136, 0
    %v6196 = vsel %vm1621, %v6137, 0
    %v6199 = vsel %vm1621, %v6138, 0
    %v6202 = vsel %vm1621, %v6139, 0
    %v6205 = vsel %vm1621, %v6140, 0
    %v6208 = vsel %vm1621, %v6141, 0
    %v6211 = vsel %vm1621, %v6142, 0
    %v6214 = vsel %vm1621, %v6143, 0
    %6216 = vmatprep.subr.mxu0 0.0
    %6217 = vmatpush1.msra.mxu0 %v6157
    %6218 = vmatprep.subr.mxu0 0.0
    %6219 = vmatpush1.msra.mxu0 %v6159
    %6220 = vmatprep.subr.mxu0 0.0
    %6221 = vmatpush1.msra.mxu0 %v6161
    %6222 = vmatprep.subr.mxu0 0.0
    %6223 = vmatpush1.msra.mxu0 %v6163
    %6224 = vmatprep.subr.mxu0 0.0
    %6225 = vmatpush1.msra.mxu0 0.0
    %6226 = vmatprep.subr.mxu0 0.0
    %6227 = vmatpush1.msra.mxu0 0.0
    %6228 = vmatprep.subr.mxu0 0.0
    %6229 = vmatpush1.msra.mxu0 0.0
    %6230 = vmatprep.subr.mxu0 0.0
    %6231 = vmatpush1.msra.mxu0 0.0
    %6232 = vmatprep.subr.mxu0 0.0
    %6233 = vmatpush1.msra.mxu0 0.0
    %6234 = vmatprep.subr.mxu0 0.0
    %6235 = vmatpush1.msra.mxu0 0.0
    %6236 = vmatprep.subr.mxu0 0.0
    %6237 = vmatpush1.msra.mxu0 0.0
    %6238 = vmatprep.subr.mxu0 0.0
    %6239 = vmatpush1.msra.mxu0 0.0
    %6240 = vmatprep.subr.mxu0 0.0
    %6241 = vmatpush1.msra.mxu0 0.0
    %6242 = vmatprep.subr.mxu0 0.0
    %6243 = vmatpush1.msra.mxu0 0.0
    %6244 = vmatprep.subr.mxu0 0.0
    %6245 = vmatpush1.msra.mxu0 0.0
    %6246 = vmatprep.subr.mxu0 0.0
    %6247 = vmatpush1.msra.mxu0 0.0
    %6248 = vmatprep.subr.mxu0 0.0
    %6249 = vmatpush1.msra.mxu0 0.0
    %6250 = vmatprep.subr.mxu0 0.0
    %6251 = vmatpush1.msra.mxu0 0.0
    %6252 = vmatprep.subr.mxu0 0.0
    %6253 = vmatpush1.msra.mxu0 0.0
    %6254 = vmatprep.subr.mxu0 0.0
    %6255 = vmatpush1.msra.mxu0 0.0
    %6256 = vmatprep.subr.mxu0 0.0
    %6257 = vmatpush1.msra.mxu0 0.0
    %6258 = vmatprep.subr.mxu0 0.0
    %6259 = vmatpush1.msra.mxu0 0.0
    %6260 = vmatprep.subr.mxu0 0.0
    %6261 = vmatpush1.msra.mxu0 0.0
    %6262 = vmatprep.subr.mxu0 0.0
    %6263 = vmatpush1.msra.mxu0 0.0
    %6264 = vmatprep.subr.mxu0 0.0
    %6265 = vmatpush1.msra.mxu0 0.0
    %6266 = vmatprep.subr.mxu0 0.0
    %6267 = vmatpush1.msra.mxu0 0.0
    %6268 = vmatprep.subr.mxu0 0.0
    %6269 = vmatpush1.msra.mxu0 0.0
    %6270 = vmatprep.subr.mxu0 0.0
    %6271 = vmatpush1.msra.mxu0 0.0
    %6272 = vmatprep.subr.mxu0 0.0
    %6273 = vmatpush1.msra.mxu0 0.0
    %6274 = vmatprep.subr.mxu0 0.0
    %6275 = vmatpush1.msra.mxu0 0.0
    %6276 = vmatprep.subr.mxu0 0.0
    %6277 = vmatpush1.msra.mxu0 0.0
    %6278 = vmatprep.subr.mxu0 0.0
    %6279 = vmatpush1.msra.mxu0 0.0
    %6280 = vmatprep.mubr.f32.mxu0 0.0
    %6281 = vmatmul.mubr.f32.gmra.mrb[0].mxu0 %v6169
    %v6282 = vpop.f32.mrb[0].mxu0
    %v6283 = vadd.f32 %v6151, %v6282
    %v6284 = vpop.f32.mrb[0].mxu0
    %6285 = vmatprep.mubr.f32.mxu0 0.0
    %6286 = vmatmul.mubr.f32.gmra.mrb[0].mxu0 %v6172
    %v6287 = vpop.f32.mrb[0].mxu0
    %v6288 = vadd.f32 %v6151, %v6287
    %v6289 = vpop.f32.mrb[0].mxu0
    %6290 = vmatprep.mubr.f32.mxu0 0.0
    %6291 = vmatmul.mubr.f32.gmra.mrb[0].mxu0 %v6175
    %v6292 = vpop.f32.mrb[0].mxu0
    %v6293 = vadd.f32 %v6151, %v6292
    %v6294 = vpop.f32.mrb[0].mxu0
    %6295 = vmatprep.mubr.f32.mxu0 0.0
    %6296 = vmatmul.mubr.f32.gmra.mrb[0].mxu0 %v6178
    %v6297 = vpop.f32.mrb[0].mxu0
    %v6298 = vadd.f32 %v6151, %v6297
    %v6299 = vpop.f32.mrb[0].mxu0
    %6300 = vmatprep.mubr.f32.mxu0 0.0
    %6301 = vmatmul.mubr.f32.gmra.mrb[0].mxu0 %v6181
    %v6302 = vpop.f32.mrb[0].mxu0
    %v6303 = vadd.f32 %v6151, %v6302
    %v6304 = vpop.f32.mrb[0].mxu0
    %6305 = vmatprep.mubr.f32.mxu0 0.0
    %6306 = vmatmul.mubr.f32.gmra.mrb[0].mxu0 %v6184
    %v6307 = vpop.f32.mrb[0].mxu0
    %v6308 = vadd.f32 %v6151, %v6307
    %v6309 = vpop.f32.mrb[0].mxu0
    %6310 = vmatprep.mubr.f32.mxu0 0.0
    %6311 = vmatmul.mubr.f32.gmra.mrb[0].mxu0 %v6187
    %v6312 = vpop.f32.mrb[0].mxu0
    %v6313 = vadd.f32 %v6151, %v6312
    %v6314 = vpop.f32.mrb[0].mxu0
    %6315 = vmatprep.mubr.f32.mxu0 0.0
    %6316 = vmatmul.mubr.f32.gmra.mrb[0].mxu0 %v6190
    %v6317 = vpop.f32.mrb[0].mxu0
    %v6318 = vadd.f32 %v6151, %v6317
    %v6319 = vpop.f32.mrb[0].mxu0
    %6320 = vmatprep.mubr.f32.mxu0 0.0
    %6321 = vmatmul.mubr.f32.gmra.mrb[0].mxu0 %v6193
    %v6322 = vpop.f32.mrb[0].mxu0
    %v6323 = vadd.f32 %v6151, %v6322
    %v6324 = vpop.f32.mrb[0].mxu0
    %6325 = vmatprep.mubr.f32.mxu0 0.0
    %6326 = vmatmul.mubr.f32.gmra.mrb[0].mxu0 %v6196
    %v6327 = vpop.f32.mrb[0].mxu0
    %v6328 = vadd.f32 %v6151, %v6327
    %v6329 = vpop.f32.mrb[0].mxu0
    %6330 = vmatprep.mubr.f32.mxu0 0.0
    %6331 = vmatmul.mubr.f32.gmra.mrb[0].mxu0 %v6199
    %v6332 = vpop.f32.mrb[0].mxu0
    %v6333 = vadd.f32 %v6151, %v6332
    %v6334 = vpop.f32.mrb[0].mxu0
    %6335 = vmatprep.mubr.f32.mxu0 0.0
    %6336 = vmatmul.mubr.f32.gmra.mrb[0].mxu0 %v6202
    %v6337 = vpop.f32.mrb[0].mxu0
    %v6338 = vadd.f32 %v6151, %v6337
    %v6339 = vpop.f32.mrb[0].mxu0
    %6340 = vmatprep.mubr.f32.mxu0 0.0
    %6341 = vmatmul.mubr.f32.gmra.mrb[0].mxu0 %v6205
    %v6342 = vpop.f32.mrb[0].mxu0
    %v6343 = vadd.f32 %v6151, %v6342
    %v6344 = vpop.f32.mrb[0].mxu0
    %6345 = vmatprep.mubr.f32.mxu0 0.0
    %6346 = vmatmul.mubr.f32.gmra.mrb[0].mxu0 %v6208
    %v6347 = vpop.f32.mrb[0].mxu0
    %v6348 = vadd.f32 %v6151, %v6347
    %v6349 = vpop.f32.mrb[0].mxu0
    %6350 = vmatprep.mubr.f32.mxu0 0.0
    %6351 = vmatmul.mubr.f32.gmra.mrb[0].mxu0 %v6211
    %v6352 = vpop.f32.mrb[0].mxu0
    %v6353 = vadd.f32 %v6151, %v6352
    %v6354 = vpop.f32.mrb[0].mxu0
    %6355 = vmatprep.mubr.f32.mxu0 0.0
    %6356 = vmatmul.mubr.f32.gmra.mrb[0].mxu0 %v6214
    %v6357 = vpop.f32.mrb[0].mxu0
    %v6358 = vadd.f32 %v6151, %v6357
    %v6359 = vpop.f32.mrb[0].mxu0
    %6360 = vdwg.mxu0
    %v6361 = vmax.f32 %v6283, 0.0
    %v6362 = vmax.f32 %v6288, 0.0
    %v6363 = vmax.f32 %v6293, 0.0
    %v6364 = vmax.f32 %v6298, 0.0
    %v6365 = vmax.f32 %v6303, 0.0
    %v6366 = vmax.f32 %v6308, 0.0
    %v6367 = vmax.f32 %v6313, 0.0
    %v6368 = vmax.f32 %v6318, 0.0
    %v6369 = vmax.f32 %v6323, 0.0
    %v6370 = vmax.f32 %v6328, 0.0
    %v6371 = vmax.f32 %v6333, 0.0
    %v6372 = vmax.f32 %v6338, 0.0
    %v6373 = vmax.f32 %v6343, 0.0
    %v6374 = vmax.f32 %v6348, 0.0
    %v6375 = vmax.f32 %v6353, 0.0
    %v6376 = vmax.f32 %v6358, 0.0
    %v6377 = vld [vmem:[%s4] sm:$0x1]
    %6379 = vset.pattern.permute.xlu0 0
    %6380 = vperm.xlu0 %6379, %v24
    %v6381 = vpop.permute.xlu0 %6380
    %6383 = vrot.lane.b32.xlu0 %v6377, 32
    %v6384 = vpop.permute.xlu0 %6383
    %v6385 = vrot.slane %v6381, 7
    %v6387 = vsel %vm1621, %v6384, 0
    %v6390 = vsel %vm1621, %v6361, 0
    %v6393 = vsel %vm1621, %v6362, 0
    %v6396 = vsel %vm1621, %v6363, 0
    %v6399 = vsel %vm1621, %v6364, 0
    %v6402 = vsel %vm1621, %v6365, 0
    %v6405 = vsel %vm1621, %v6366, 0
    %v6408 = vsel %vm1621, %v6367, 0
    %v6411 = vsel %vm1621, %v6368, 0
    %v6414 = vsel %vm1621, %v6369, 0
    %v6417 = vsel %vm1621, %v6370, 0
    %v6420 = vsel %vm1621, %v6371, 0
    %v6423 = vsel %vm1621, %v6372, 0
    %v6426 = vsel %vm1621, %v6373, 0
    %v6429 = vsel %vm1621, %v6374, 0
    %v6432 = vsel %vm1621, %v6375, 0
    %v6435 = vsel %vm1621, %v6376, 0
    %6437 = vmatprep.subr.mxu0 0.0
    %6438 = vmatpush1.xpose.msra.mxu0 %v6390
    %6439 = vmatprep.subr.mxu0 0.0
    %6440 = vmatpush1.xpose.msra.mxu0 %v6393
    %6441 = vmatprep.subr.mxu0 0.0
    %6442 = vmatpush1.xpose.msra.mxu0 %v6396
    %6443 = vmatprep.subr.mxu0 0.0
    %6444 = vmatpush1.xpose.msra.mxu0 %v6399
    %6445 = vmatprep.subr.mxu0 0.0
    %6446 = vmatpush1.xpose.msra.mxu0 %v6402
    %6447 = vmatprep.subr.mxu0 0.0
    %6448 = vmatpush1.xpose.msra.mxu0 %v6405
    %6449 = vmatprep.subr.mxu0 0.0
    %6450 = vmatpush1.xpose.msra.mxu0 %v6408
    %6451 = vmatprep.subr.mxu0 0.0
    %6452 = vmatpush1.xpose.msra.mxu0 %v6411
    %6453 = vmatprep.subr.mxu0 0.0
    %6454 = vmatpush1.xpose.msra.mxu0 %v6414
    %6455 = vmatprep.subr.mxu0 0.0
    %6456 = vmatpush1.xpose.msra.mxu0 %v6417
    %6457 = vmatprep.subr.mxu0 0.0
    %6458 = vmatpush1.xpose.msra.mxu0 %v6420
    %6459 = vmatprep.subr.mxu0 0.0
    %6460 = vmatpush1.xpose.msra.mxu0 %v6423
    %6461 = vmatprep.subr.mxu0 0.0
    %6462 = vmatpush1.xpose.msra.mxu0 %v6426
    %6463 = vmatprep.subr.mxu0 0.0
    %6464 = vmatpush1.xpose.msra.mxu0 %v6429
    %6465 = vmatprep.subr.mxu0 0.0
    %6466 = vmatpush1.xpose.msra.mxu0 %v6432
    %6467 = vmatprep.subr.mxu0 0.0
    %6468 = vmatpush1.xpose.msra.mxu0 %v6435
    %6469 = vmatprep.subr.mxu0 0.0
    %6470 = vmatpush1.xpose.msra.mxu0 0.0
    %6471 = vmatprep.subr.mxu0 0.0
    %6472 = vmatpush1.xpose.msra.mxu0 0.0
    %6473 = vmatprep.subr.mxu0 0.0
    %6474 = vmatpush1.xpose.msra.mxu0 0.0
    %6475 = vmatprep.subr.mxu0 0.0
    %6476 = vmatpush1.xpose.msra.mxu0 0.0
    %6477 = vmatprep.subr.mxu0 0.0
    %6478 = vmatpush1.xpose.msra.mxu0 0.0
    %6479 = vmatprep.subr.mxu0 0.0
    %6480 = vmatpush1.xpose.msra.mxu0 0.0
    %6481 = vmatprep.subr.mxu0 0.0
    %6482 = vmatpush1.xpose.msra.mxu0 0.0
    %6483 = vmatprep.subr.mxu0 0.0
    %6484 = vmatpush1.xpose.msra.mxu0 0.0
    %6485 = vmatprep.subr.mxu0 0.0
    %6486 = vmatpush1.xpose.msra.mxu0 0.0
    %6487 = vmatprep.subr.mxu0 0.0
    %6488 = vmatpush1.xpose.msra.mxu0 0.0
    %6489 = vmatprep.subr.mxu0 0.0
    %6490 = vmatpush1.xpose.msra.mxu0 0.0
    %6491 = vmatprep.subr.mxu0 0.0
    %6492 = vmatpush1.xpose.msra.mxu0 0.0
    %6493 = vmatprep.subr.mxu0 0.0
    %6494 = vmatpush1.xpose.msra.mxu0 0.0
    %6495 = vmatprep.subr.mxu0 0.0
    %6496 = vmatpush1.xpose.msra.mxu0 0.0
    %6497 = vmatprep.subr.mxu0 0.0
    %6498 = vmatpush1.xpose.msra.mxu0 0.0
    %6499 = vmatprep.subr.mxu0 0.0
    %6500 = vmatpush1.xpose.msra.mxu0 0.0
    %6501 = vmatprep.mubr.f32.mxu0 0.0
    %6502 = vmatmul.mubr.f32.gmra.mrb[0].mxu0 %v6387
    %v6503 = vpop.f32.mrb[0].mxu0
    %v6504 = vadd.f32 %v6385, %v6503
    %v6505 = vpop.f32.mrb[0].mxu0
    %6506 = vdwg.mxu0
    %v6507 = vxor.u32 %v6504, 2147483648
    %v6508 = vmul.f32 %v6507, 1.442695
    %v6509 = vpow.pop %v6508
    %v6510 = vadd.f32 %v6509, 1.0
    %v6511 = vrcp.pop %v6510
    %v6512 = vmul.f32 1.0, %v6511
    %6513 = vst [vmem:[#allocation2] sm:$0x1] %v6512
    // Predicated region
    $region26: #{independent_bc_agent_forward.1} parent=1 // pred_check
      _
    $region27: #{independent_bc_agent_forward.1} parent=1 // pred_check_branch
      %6515 = sbr.rel (0) target = $region29
    $region28: #{independent_bc_agent_forward.1} parent=1 // pred_region
      %s6517 = ssub.s32 16, 16
      %6518 = vsyncadd [#allocation3], %s6517
      %s6520 = sshll.u32 [#allocation2], 4
      %s6521 = int_to_ptr.vmem [resolvable:$true] %s6520
      %6523 = dma.vmem_to_hbm [thread:$0]  %s6521, 16, %s6, [#allocation3]
    $region29: #{independent_bc_agent_forward.1} parent=1 // pred_fallthru
      _
    // Predicated region
    $region30: #{independent_bc_agent_forward.1} parent=1 // pred_check
      _
    $region31: #{independent_bc_agent_forward.1} parent=1 // pred_check_branch
      %6525 = sbr.rel (0) target = $region33
    $region32: #{independent_bc_agent_forward.1} parent=1 // pred_region
      %6526 = dma.done [#allocation3], 16
    $region33: #{independent_bc_agent_forward.1} parent=1 // pred_fallthru
      _
    %6527 = vsyncpa [#allocation3], 1

</llo_original>
